<compile_context>
chip_gen: v6e
topology: v6e:2x2x1
jax: 0.10.0
libtpu: 0.0.40
codegen_flags: <defaults>
</compile_context>

<pallas_src>
import functools
import math

import jax
import jax.numpy as jnp
from jax.experimental import pallas as pl
from jax.experimental.pallas import tpu as pltpu

LANE = 128                       # TPU lane width
ACT_DTYPE = jnp.bfloat16         # activation storage / MXU input dtype
WEIGHT_DTYPE = jnp.bfloat16      # weight storage dtype (deliberate deviation
                                 # from torch f32; tiny matrices, f32 accumulate)


def _pad_to(n, m):
    return ((n + m - 1) // m) * m


@functools.lru_cache(maxsize=1)
def _vmem_limit_bytes():
    """Generation-aware scoped-VMEM cap: ~75% of physical VMEM (64 MiB on v7x,
    128 MiB on v5e/v6e), capped at 100 MiB, with a safe 32 MiB fallback."""
    default = 32 * 1024 * 1024
    try:
        cap = int(getattr(pltpu.get_tpu_info(), "vmem_capacity_bytes", 0))
    except Exception:
        return default
    if cap <= 0:
        return default
    return max(default, min(cap * 3 // 4, 100 * 1024 * 1024))


def choose_row_tile(n_rows, tm_max=1024, min_steps=4):
    """Row tile: large (amortize ~0.35us/grid-step), multiple of 16 (bf16
    sublane packing), and >=4 grid steps so megacore 'parallel' sharding on
    v7x's two TensorCores stays load-balanced even with a padded tail tile."""
    tm = max(16, -(-n_rows // min_steps))
    tm = min(tm_max, tm)
    return -(-tm // 16) * 16


# ----------------------------- Pallas kernel ------------------------------ #

def _mlp_kernel(*refs, n_in, layernorm, dout_valid, residual_index, message_rows):
    """Fused 3-layer MLP over one row tile.

    refs = x_0..x_{n_in-1}, w1_0..w1_{n_in-1}, b1, w2, b2, w3, b3,
           [gamma, beta], o_ref, [msg_ref]

    Layer 1 is evaluated as sum_k x_k @ W1_k (split weights), identical to
    concat(x_0..x_{n_in-1}) @ W1, so the concat never hits HBM.
    If `message_rows` is not None, a second output holds the pre-residual MLP
    output with rows >= message_rows zeroed (f32 scatter updates).
    If `residual_index` is not None, x_refs[residual_index] is added (in f32)
    to the result before the store.
    """
    n_out = 2 if message_rows is not None else 1
    out_refs = refs[-n_out:]
    in_refs = refs[:-n_out]

    x_refs = in_refs[:n_in]
    w1_refs = in_refs[n_in:2 * n_in]
    b1_ref, w2_ref, b2_ref, w3_ref, b3_ref = in_refs[2 * n_in:2 * n_in + 5]
    if layernorm:
        g_ref, bt_ref = in_refs[2 * n_in + 5:2 * n_in + 7]

    cdt = w2_ref.dtype  # MXU compute dtype (bf16)

    # Layer 1 (split inputs) + ReLU, f32 accumulate.
    # Note (v6e, low priority): the split K=128 dots under-feed the 256x256 MXU;
    # K-stacking would help only once the layer stops being HBM-bound.
    h = jnp.dot(x_refs[0][...].astype(w1_refs[0].dtype), w1_refs[0][...],
                preferred_element_type=jnp.float32)
    for k in range(1, n_in):
        h = h + jnp.dot(x_refs[k][...].astype(w1_refs[k].dtype), w1_refs[k][...],
                        preferred_element_type=jnp.float32)
    h = jnp.maximum(h + b1_ref[...], 0.0)

    # Layer 2 + ReLU.
    h = jnp.dot(h.astype(cdt), w2_ref[...],
                preferred_element_type=jnp.float32) + b2_ref[...]
    h = jnp.maximum(h, 0.0)

    # Layer 3.
    y = jnp.dot(h.astype(cdt), w3_ref[...],
                preferred_element_type=jnp.float32) + b3_ref[...]

    if layernorm:  # matches torch.nn.LayerNorm (biased variance, eps=1e-5)
        dpad = y.shape[-1]
        inv_d = 1.0 / float(dout_valid)
        if dout_valid == dpad:
            mu = jnp.mean(y, axis=-1, keepdims=True)
            diff = y - mu
        else:
            # Padded output lanes carry zero weights; mask them out of the stats.
            mask = (jax.lax.broadcasted_iota(jnp.int32, (1, dpad), 1)
                    < dout_valid).astype(jnp.float32)
            mu = jnp.sum(y * mask, axis=-1, keepdims=True) * inv_d
            diff = (y - mu) * mask
        var = jnp.sum(diff * diff, axis=-1, keepdims=True) * inv_d
        y = diff * jax.lax.rsqrt(var + 1e-5)
        y = y * g_ref[...] + bt_ref[...]

    if message_rows is not None:
        # Pre-residual messages for the scatter-add; padded edge rows zeroed in
        # the kernel so XLA needs neither an f32 cast nor an edge_valid multiply.
        tm = out_refs[0].shape[0]
        rows = pl.program_id(0) * tm + jax.lax.broadcasted_iota(jnp.int32, y.shape, 0)
        out_refs[1][...] = jnp.where(rows < message_rows, y, 0.0).astype(out_refs[1].dtype)

    if residual_index is not None:
        # Fused residual add, done in f32 before the single bf16 rounding.
        y = y + x_refs[residual_index][...].astype(jnp.float32)

    out_refs[0][...] = y.astype(out_refs[0].dtype)


def fused_mlp(xs, p, *, layernorm, tm, residual_index=None, message_rows=None,
              out_dtype=None):
    """Run the fused MLP over row-tiles of the (already row/lane padded) inputs.

    xs : list of [N, d_k_pad] arrays (the logical input is their concatenation).
    p  : padded parameter dict from init_mlp_params.
    Returns one array, or (features, masked_messages) if message_rows is set.
    """
    out_dtype = out_dtype or ACT_DTYPE
    n = xs[0].shape[0]
    assert n % tm == 0, (n, tm)
    n_in = len(xs)
    dh_p = p["w2"].shape[0]
    dout_p = p["w3"].shape[1]

    kernel = functools.partial(
        _mlp_kernel, n_in=n_in, layernorm=layernorm, dout_valid=p["dout"],
        residual_index=residual_index, message_rows=message_rows)

    row = lambda i: (i, 0)
    full = lambda i: (0, 0)

    in_specs = [pl.BlockSpec((tm, x.shape[1]), row) for x in xs]
    in_specs += [pl.BlockSpec(w.shape, full) for w in p["w1"]]
    in_specs += [pl.BlockSpec(p["b1"].shape, full),
                 pl.BlockSpec(p["w2"].shape, full),
                 pl.BlockSpec(p["b2"].shape, full),
                 pl.BlockSpec(p["w3"].shape, full),
                 pl.BlockSpec(p["b3"].shape, full)]
    args = list(xs) + list(p["w1"]) + [p["b1"], p["w2"], p["b2"], p["w3"], p["b3"]]
    if layernorm:
        in_specs += [pl.BlockSpec(p["gamma"].shape, full),
                     pl.BlockSpec(p["beta"].shape, full)]
        args += [p["gamma"], p["beta"]]

    out_shapes = [jax.ShapeDtypeStruct((n, dout_p), out_dtype)]
    out_specs = [pl.BlockSpec((tm, dout_p), row)]
    if message_rows is not None:
        out_shapes.append(jax.ShapeDtypeStruct((n, dout_p), jnp.float32))
        out_specs.append(pl.BlockSpec((tm, dout_p), row))

    flops = 2 * n * (sum(x.shape[1] * dh_p for x in xs) + dh_p * dh_p + dh_p * dout_p)
    in_bytes = sum(int(a.size) * a.dtype.itemsize for a in args)
    out_bytes = sum(math.prod(s.shape) * jnp.dtype(s.dtype).itemsize for s in out_shapes)
    cost = pl.CostEstimate(flops=int(flops),
                           transcendentals=int(n if layernorm else 0),
                           bytes_accessed=int(in_bytes + out_bytes))

    outs = pl.pallas_call(
        kernel,
        out_shape=tuple(out_shapes),
        grid=(n // tm,),
        in_specs=in_specs,
        out_specs=tuple(out_specs),
        compiler_params=pltpu.CompilerParams(
            dimension_semantics=("parallel",),
            vmem_limit_bytes=_vmem_limit_bytes()),
        cost_estimate=cost,
    )(*args)
    if message_rows is not None:
        return outs          # (new features, masked f32 messages)
    return outs[0]


# --------------------------- Parameter creation ---------------------------- #

def init_mlp_params(key, dins, dh, dout):
    """torch MLP.reset_parameters: weight ~ N(0, 1/sqrt(in_total)), bias = 0,
    LayerNorm affine = (ones, zeros).  `dins` is the list of input-split widths
    (concat order); every feature dim is zero-padded to a multiple of 128."""
    din_total = sum(dins)
    keys = jax.random.split(key, len(dins) + 2)
    dh_p, dout_p = _pad_to(dh, LANE), _pad_to(dout, LANE)

    w1 = []
    for k, d in zip(keys[:len(dins)], dins):
        w = jax.random.normal(k, (d, dh), jnp.float32) / math.sqrt(din_total)
        w = jnp.pad(w, ((0, _pad_to(d, LANE) - d), (0, dh_p - dh)))
        w1.append(w.astype(WEIGHT_DTYPE))
    w2 = jax.random.normal(keys[-2], (dh, dh), jnp.float32) / math.sqrt(dh)
    w2 = jnp.pad(w2, ((0, dh_p - dh), (0, dh_p - dh))).astype(WEIGHT_DTYPE)
    w3 = jax.random.normal(keys[-1], (dh, dout), jnp.float32) / math.sqrt(dh)
    w3 = jnp.pad(w3, ((0, dh_p - dh), (0, dout_p - dout))).astype(WEIGHT_DTYPE)

    return dict(
        w1=tuple(w1),
        b1=jnp.zeros((1, dh_p), jnp.float32),
        w2=w2,
        b2=jnp.zeros((1, dh_p), jnp.float32),
        w3=w3,
        b3=jnp.zeros((1, dout_p), jnp.float32),
        gamma=jnp.pad(jnp.ones((1, dout), jnp.float32), ((0, 0), (0, dout_p - dout))),
        beta=jnp.zeros((1, dout_p), jnp.float32),
        dout=dout,
    )


def init_simulator_params(key, hidden_size, n_mp_layers, num_particle_types,
                          particle_type_dim, dim, window_size):
    keys = jax.random.split(key, 4 + 2 * n_mp_layers)
    node_in_dim = particle_type_dim + dim * (window_size + 2)
    edge_in_dim = dim + 1

    # xavier_uniform_ on Embedding weight [num_types, type_dim]
    bound = math.sqrt(6.0 / (num_particle_types + particle_type_dim))
    embed = jax.random.uniform(keys[0], (num_particle_types, particle_type_dim),
                               jnp.float32, -bound, bound)

    params = {
        "embed": embed,
        "node_in": init_mlp_params(keys[1], [node_in_dim], hidden_size, hidden_size),
        "edge_in": init_mlp_params(keys[2], [edge_in_dim], hidden_size, hidden_size),
        "node_out": init_mlp_params(keys[3], [hidden_size], hidden_size, dim),
        "mp_layers": [],
    }
    for l in range(n_mp_layers):
        params["mp_layers"].append({
            "lin_edge": init_mlp_params(keys[4 + 2 * l], [hidden_size] * 3,
                                        hidden_size, hidden_size),
            "lin_node": init_mlp_params(keys[5 + 2 * l], [hidden_size] * 2,
                                        hidden_size, hidden_size),
        })
    return params


# ------------------------------ Forward pass ------------------------------- #

def learned_simulator_forward(params, particle_type, pos, edge_index, edge_attr):
    n_nodes = int(particle_type.shape[0])
    n_edges = int(edge_attr.shape[0])

    # Row tiles + one-time row padding (no per-call jnp.pad inside the MP loop).
    tm_n = choose_row_tile(n_nodes)
    tm_e = choose_row_tile(n_edges)
    n_pad = pl.cdiv(n_nodes, tm_n) * tm_n
    e_pad = pl.cdiv(n_edges, tm_e) * tm_e

    # Node encoder: embed lookup + concat with pos, lane/row padded once.
    emb = params["embed"][particle_type]                       # [N, type_dim]
    node_in_feat = jnp.concatenate([emb, pos], axis=-1)        # [N, 30]
    din = node_in_feat.shape[1]
    node_in_feat = jnp.pad(node_in_feat,
                           ((0, n_pad - n_nodes), (0, _pad_to(din, LANE) - din)))
    node_feat = fused_mlp([node_in_feat.astype(ACT_DTYPE)], params["node_in"],
                          layernorm=True, tm=tm_n)             # [N_pad, H_pad] bf16

    # Edge encoder.
    de = edge_attr.shape[1]
    edge_in_feat = jnp.pad(edge_attr,
                           ((0, e_pad - n_edges), (0, _pad_to(de, LANE) - de)))
    edge_feat = fused_mlp([edge_in_feat.astype(ACT_DTYPE)], params["edge_in"],
                          layernorm=True, tm=tm_e)             # [E_pad, H_pad] bf16

    src = jnp.pad(edge_index[0], (0, e_pad - n_edges))         # x_j (source)
    dst = jnp.pad(edge_index[1], (0, e_pad - n_edges))         # x_i (target / aggr idx)

    # Message-passing (InteractionNetwork) layers.
    for layer in params["mp_layers"]:
        # TODO(synk): the per-edge row gathers (node_feat[src/dst]) and the
        # scatter-add aggregation stay in plain JAX/XLA: they need data-dependent
        # row indexing that Mosaic cannot reliably lower in-kernel at this layout.
        x_i = node_feat[dst]
        x_j = node_feat[src]
        # lin_edge: concat fused via split-W1, residual (+edge_feat) fused in
        # f32, and a second pre-masked f32 output feeding the scatter directly.
        edge_feat, messages = fused_mlp(
            [x_i, x_j, edge_feat], layer["lin_edge"], layernorm=True, tm=tm_e,
            residual_index=2, message_rows=n_edges)
        aggr = jnp.zeros((n_pad, messages.shape[1]), jnp.float32).at[dst].add(messages)
        # lin_node: aggr read as f32 and cast per-tile in VMEM; residual
        # (+node_feat) fused in f32 in the epilogue.
        node_feat = fused_mlp([node_feat, aggr], layer["lin_node"],
                              layernorm=True, tm=tm_n, residual_index=0)

    # Decoder (no layernorm, no gamma/beta DMA), f32 output; valid 2 lanes
    # sliced outside (negligible at these sizes).
    out = fused_mlp([node_feat], params["node_out"], layernorm=False,
                    tm=tm_n, out_dtype=jnp.float32)
    return out[:n_nodes, :params["node_out"]["dout"]]


# ---------------------------------- Main ----------------------------------- #

if __name__ == "__main__":
    # Module-default feature sizes (hidden_size=128 keeps the lane dim dense),
    # small graph and a reduced number of MP layers for the smoke test.
    hidden_size = 128
    n_mp_layers = 2
    num_particle_types = 9
    particle_type_dim = 16
    dim = 2
    window_size = 5

    n_nodes = 64
    n_edges = 192

    key = jax.random.PRNGKey(0)
    kp, kt, kpos, kei, kea = jax.random.split(key, 5)

    params = init_simulator_params(kp, hidden_size, n_mp_layers,
                                   num_particle_types, particle_type_dim,
                                   dim, window_size)

    particle_type = jax.random.randint(kt, (n_nodes,), 0, num_particle_types)
    pos = jax.random.normal(kpos, (n_nodes, dim * (window_size + 2)), jnp.float32)
    edge_index = jax.random.randint(kei, (2, n_edges), 0, n_nodes)
    edge_attr = jax.random.normal(kea, (n_edges, dim + 1), jnp.float32)

    fwd = jax.jit(functools.partial(learned_simulator_forward, params))
    out = fwd(particle_type, pos, edge_index, edge_attr)
    out = jax.block_until_ready(out)
    assert out.shape == (n_nodes, dim), out.shape
    assert bool(jnp.all(jnp.isfinite(out)))
    print("KERNEL_OK")
</pallas_src>

<mosaic_0001>
module attributes {stable_mosaic.version = 11 : i64} {
  func.func @_mlp_kernel(%arg0: i32, %arg1: memref<16x128xbf16, #tpu.memory_space<vmem>>, %arg2: memref<128x128xbf16, #tpu.memory_space<vmem>>, %arg3: memref<1x128xf32, #tpu.memory_space<vmem>>, %arg4: memref<128x128xbf16, #tpu.memory_space<vmem>>, %arg5: memref<1x128xf32, #tpu.memory_space<vmem>>, %arg6: memref<128x128xbf16, #tpu.memory_space<vmem>>, %arg7: memref<1x128xf32, #tpu.memory_space<vmem>>, %arg8: memref<1x128xf32, #tpu.memory_space<vmem>>, %arg9: memref<1x128xf32, #tpu.memory_space<vmem>>, %arg10: memref<16x128xbf16, #tpu.memory_space<vmem>>) attributes {dimension_semantics = [#tpu.dimension_semantics<parallel>], iteration_bounds = array<i64: 4>, scalar_prefetch = 0 : i64, scratch_operands = 0 : i64, tpu.core_type = #tpu.core_type<tc>, window_params = [{transform_indices = @transform_0, window_bounds = array<i64: 16, 128>}, {pipeline_mode = #tpu.pipeline_mode<synchronous>, transform_indices = @transform_1, window_bounds = array<i64: 128, 128>}, {pipeline_mode = #tpu.pipeline_mode<synchronous>, transform_indices = @transform_2, window_bounds = array<i64: 1, 128>}, {pipeline_mode = #tpu.pipeline_mode<synchronous>, transform_indices = @transform_3, window_bounds = array<i64: 128, 128>}, {pipeline_mode = #tpu.pipeline_mode<synchronous>, transform_indices = @transform_4, window_bounds = array<i64: 1, 128>}, {pipeline_mode = #tpu.pipeline_mode<synchronous>, transform_indices = @transform_5, window_bounds = array<i64: 128, 128>}, {pipeline_mode = #tpu.pipeline_mode<synchronous>, transform_indices = @transform_6, window_bounds = array<i64: 1, 128>}, {pipeline_mode = #tpu.pipeline_mode<synchronous>, transform_indices = @transform_7, window_bounds = array<i64: 1, 128>}, {pipeline_mode = #tpu.pipeline_mode<synchronous>, transform_indices = @transform_8, window_bounds = array<i64: 1, 128>}, {transform_indices = @transform_9, window_bounds = array<i64: 16, 128>}]} {
    %c0 = arith.constant 0 : index
    %c0_0 = arith.constant 0 : index
    %0 = vector.load %arg1[%c0, %c0_0] : memref<16x128xbf16, #tpu.memory_space<vmem>>, vector<16x128xbf16>
    %c0_1 = arith.constant 0 : index
    %c0_2 = arith.constant 0 : index
    %1 = vector.load %arg2[%c0_1, %c0_2] : memref<128x128xbf16, #tpu.memory_space<vmem>>, vector<128x128xbf16>
    %cst = arith.constant dense<0.000000e+00> : vector<16x128xf32>
    %2 = tpu.matmul %0, %1, %cst {dimension_numbers = #tpu.dot_dimension_numbers<[1], [0], [0], [1], [0, 0, 1, 1], [], []>} : vector<16x128xbf16>, vector<128x128xbf16>, vector<16x128xf32> -> vector<16x128xf32>
    %c0_3 = arith.constant 0 : index
    %c0_4 = arith.constant 0 : index
    %3 = vector.load %arg3[%c0_3, %c0_4] : memref<1x128xf32, #tpu.memory_space<vmem>>, vector<1x128xf32>
    %4 = vector.broadcast %3 : vector<1x128xf32> to vector<16x128xf32>
    %5 = arith.addf %2, %4 : vector<16x128xf32>
    %cst_5 = arith.constant 0.000000e+00 : f32
    %6 = vector.broadcast %cst_5 : f32 to vector<16x128xf32>
    %7 = arith.maximumf %5, %6 : vector<16x128xf32>
    %8 = arith.truncf %7 : vector<16x128xf32> to vector<16x128xbf16>
    %c0_6 = arith.constant 0 : index
    %c0_7 = arith.constant 0 : index
    %9 = vector.load %arg4[%c0_6, %c0_7] : memref<128x128xbf16, #tpu.memory_space<vmem>>, vector<128x128xbf16>
    %cst_8 = arith.constant dense<0.000000e+00> : vector<16x128xf32>
    %10 = tpu.matmul %8, %9, %cst_8 {dimension_numbers = #tpu.dot_dimension_numbers<[1], [0], [0], [1], [0, 0, 1, 1], [], []>} : vector<16x128xbf16>, vector<128x128xbf16>, vector<16x128xf32> -> vector<16x128xf32>
    %c0_9 = arith.constant 0 : index
    %c0_10 = arith.constant 0 : index
    %11 = vector.load %arg5[%c0_9, %c0_10] : memref<1x128xf32, #tpu.memory_space<vmem>>, vector<1x128xf32>
    %12 = vector.broadcast %11 : vector<1x128xf32> to vector<16x128xf32>
    %13 = arith.addf %10, %12 : vector<16x128xf32>
    %cst_11 = arith.constant 0.000000e+00 : f32
    %14 = vector.broadcast %cst_11 : f32 to vector<16x128xf32>
    %15 = arith.maximumf %13, %14 : vector<16x128xf32>
    %16 = arith.truncf %15 : vector<16x128xf32> to vector<16x128xbf16>
    %c0_12 = arith.constant 0 : index
    %c0_13 = arith.constant 0 : index
    %17 = vector.load %arg6[%c0_12, %c0_13] : memref<128x128xbf16, #tpu.memory_space<vmem>>, vector<128x128xbf16>
    %cst_14 = arith.constant dense<0.000000e+00> : vector<16x128xf32>
    %18 = tpu.matmul %16, %17, %cst_14 {dimension_numbers = #tpu.dot_dimension_numbers<[1], [0], [0], [1], [0, 0, 1, 1], [], []>} : vector<16x128xbf16>, vector<128x128xbf16>, vector<16x128xf32> -> vector<16x128xf32>
    %c0_15 = arith.constant 0 : index
    %c0_16 = arith.constant 0 : index
    %19 = vector.load %arg7[%c0_15, %c0_16] : memref<1x128xf32, #tpu.memory_space<vmem>>, vector<1x128xf32>
    %20 = vector.broadcast %19 : vector<1x128xf32> to vector<16x128xf32>
    %21 = arith.addf %18, %20 : vector<16x128xf32>
    %cst_17 = arith.constant dense<0.000000e+00> : vector<16xf32>
    %22 = vector.multi_reduction <add>, %21, %cst_17 [1] : vector<16x128xf32> to vector<16xf32>
    %23 = vector.shape_cast %22 : vector<16xf32> to vector<16x1xf32>
    %cst_18 = arith.constant 1.280000e+02 : f32
    %24 = vector.broadcast %cst_18 : f32 to vector<16x1xf32>
    %25 = arith.divf %23, %24 : vector<16x1xf32>
    %26 = vector.broadcast %25 : vector<16x1xf32> to vector<16x128xf32>
    %27 = arith.subf %21, %26 : vector<16x128xf32>
    %28 = arith.mulf %27, %27 : vector<16x128xf32>
    %cst_19 = arith.constant dense<0.000000e+00> : vector<16xf32>
    %29 = vector.multi_reduction <add>, %28, %cst_19 [1] : vector<16x128xf32> to vector<16xf32>
    %30 = vector.shape_cast %29 : vector<16xf32> to vector<16x1xf32>
    %cst_20 = arith.constant 7.812500e-03 : f32
    %31 = vector.broadcast %cst_20 : f32 to vector<16x1xf32>
    %32 = arith.mulf %30, %31 : vector<16x1xf32>
    %cst_21 = arith.constant 9.99999974E-6 : f32
    %33 = vector.broadcast %cst_21 : f32 to vector<16x1xf32>
    %34 = arith.addf %32, %33 : vector<16x1xf32>
    %35 = math.rsqrt %34 : vector<16x1xf32>
    %36 = vector.broadcast %35 : vector<16x1xf32> to vector<16x128xf32>
    %37 = arith.mulf %27, %36 : vector<16x128xf32>
    %c0_22 = arith.constant 0 : index
    %c0_23 = arith.constant 0 : index
    %38 = vector.load %arg8[%c0_22, %c0_23] : memref<1x128xf32, #tpu.memory_space<vmem>>, vector<1x128xf32>
    %39 = vector.broadcast %38 : vector<1x128xf32> to vector<16x128xf32>
    %40 = arith.mulf %37, %39 : vector<16x128xf32>
    %c0_24 = arith.constant 0 : index
    %c0_25 = arith.constant 0 : index
    %41 = vector.load %arg9[%c0_24, %c0_25] : memref<1x128xf32, #tpu.memory_space<vmem>>, vector<1x128xf32>
    %42 = vector.broadcast %41 : vector<1x128xf32> to vector<16x128xf32>
    %43 = arith.addf %40, %42 : vector<16x128xf32>
    %44 = arith.truncf %43 : vector<16x128xf32> to vector<16x128xbf16>
    %c0_26 = arith.constant 0 : index
    %c0_27 = arith.constant 0 : index
    %45 = vector.load %arg10[%c0_26, %c0_27] : memref<16x128xbf16, #tpu.memory_space<vmem>>, vector<16x128xbf16>
    tpu.vector_store %arg10[%c0_26, %c0_27], %44 {strides = array<i32>} : memref<16x128xbf16, #tpu.memory_space<vmem>>, vector<16x128xbf16>,
    return
  }
  func.func @transform_0(%arg0: i32) -> (i32, i32) {
    %c0_i32 = arith.constant 0 : i32
    %c0_i32_0 = arith.constant 0 : i32
    return %arg0, %c0_i32 : i32, i32
  }
  func.func @transform_1(%arg0: i32) -> (i32, i32) {
    %c0_i32 = arith.constant 0 : i32
    %c0_i32_0 = arith.constant 0 : i32
    %c0_i32_1 = arith.constant 0 : i32
    return %c0_i32, %c0_i32_0 : i32, i32
  }
  func.func @transform_2(%arg0: i32) -> (i32, i32) {
    %c0_i32 = arith.constant 0 : i32
    %c0_i32_0 = arith.constant 0 : i32
    %c0_i32_1 = arith.constant 0 : i32
    return %c0_i32, %c0_i32_0 : i32, i32
  }
  func.func @transform_3(%arg0: i32) -> (i32, i32) {
    %c0_i32 = arith.constant 0 : i32
    %c0_i32_0 = arith.constant 0 : i32
    %c0_i32_1 = arith.constant 0 : i32
    return %c0_i32, %c0_i32_0 : i32, i32
  }
  func.func @transform_4(%arg0: i32) -> (i32, i32) {
    %c0_i32 = arith.constant 0 : i32
    %c0_i32_0 = arith.constant 0 : i32
    %c0_i32_1 = arith.constant 0 : i32
    return %c0_i32, %c0_i32_0 : i32, i32
  }
  func.func @transform_5(%arg0: i32) -> (i32, i32) {
    %c0_i32 = arith.constant 0 : i32
    %c0_i32_0 = arith.constant 0 : i32
    %c0_i32_1 = arith.constant 0 : i32
    return %c0_i32, %c0_i32_0 : i32, i32
  }
  func.func @transform_6(%arg0: i32) -> (i32, i32) {
    %c0_i32 = arith.constant 0 : i32
    %c0_i32_0 = arith.constant 0 : i32
    %c0_i32_1 = arith.constant 0 : i32
    return %c0_i32, %c0_i32_0 : i32, i32
  }
  func.func @transform_7(%arg0: i32) -> (i32, i32) {
    %c0_i32 = arith.constant 0 : i32
    %c0_i32_0 = arith.constant 0 : i32
    %c0_i32_1 = arith.constant 0 : i32
    return %c0_i32, %c0_i32_0 : i32, i32
  }
  func.func @transform_8(%arg0: i32) -> (i32, i32) {
    %c0_i32 = arith.constant 0 : i32
    %c0_i32_0 = arith.constant 0 : i32
    %c0_i32_1 = arith.constant 0 : i32
    return %c0_i32, %c0_i32_0 : i32, i32
  }
  func.func @transform_9(%arg0: i32) -> (i32, i32) {
    %c0_i32 = arith.constant 0 : i32
    %c0_i32_0 = arith.constant 0 : i32
    return %arg0, %c0_i32 : i32, i32
  }
}

module attributes {stable_mosaic.version = 11 : i64} {
  func.func @_mlp_kernel(%arg0: i32, %arg1: memref<48x128xbf16, #tpu.memory_space<vmem>>, %arg2: memref<128x128xbf16, #tpu.memory_space<vmem>>, %arg3: memref<1x128xf32, #tpu.memory_space<vmem>>, %arg4: memref<128x128xbf16, #tpu.memory_space<vmem>>, %arg5: memref<1x128xf32, #tpu.memory_space<vmem>>, %arg6: memref<128x128xbf16, #tpu.memory_space<vmem>>, %arg7: memref<1x128xf32, #tpu.memory_space<vmem>>, %arg8: memref<1x128xf32, #tpu.memory_space<vmem>>, %arg9: memref<1x128xf32, #tpu.memory_space<vmem>>, %arg10: memref<48x128xbf16, #tpu.memory_space<vmem>>) attributes {dimension_semantics = [#tpu.dimension_semantics<parallel>], iteration_bounds = array<i64: 4>, scalar_prefetch = 0 : i64, scratch_operands = 0 : i64, tpu.core_type = #tpu.core_type<tc>, window_params = [{transform_indices = @transform_0, window_bounds = array<i64: 48, 128>}, {pipeline_mode = #tpu.pipeline_mode<synchronous>, transform_indices = @transform_1, window_bounds = array<i64: 128, 128>}, {pipeline_mode = #tpu.pipeline_mode<synchronous>, transform_indices = @transform_2, window_bounds = array<i64: 1, 128>}, {pipeline_mode = #tpu.pipeline_mode<synchronous>, transform_indices = @transform_3, window_bounds = array<i64: 128, 128>}, {pipeline_mode = #tpu.pipeline_mode<synchronous>, transform_indices = @transform_4, window_bounds = array<i64: 1, 128>}, {pipeline_mode = #tpu.pipeline_mode<synchronous>, transform_indices = @transform_5, window_bounds = array<i64: 128, 128>}, {pipeline_mode = #tpu.pipeline_mode<synchronous>, transform_indices = @transform_6, window_bounds = array<i64: 1, 128>}, {pipeline_mode = #tpu.pipeline_mode<synchronous>, transform_indices = @transform_7, window_bounds = array<i64: 1, 128>}, {pipeline_mode = #tpu.pipeline_mode<synchronous>, transform_indices = @transform_8, window_bounds = array<i64: 1, 128>}, {transform_indices = @transform_9, window_bounds = array<i64: 48, 128>}]} {
    %c0 = arith.constant 0 : index
    %c0_0 = arith.constant 0 : index
    %0 = vector.load %arg1[%c0, %c0_0] : memref<48x128xbf16, #tpu.memory_space<vmem>>, vector<48x128xbf16>
    %c0_1 = arith.constant 0 : index
    %c0_2 = arith.constant 0 : index
    %1 = vector.load %arg2[%c0_1, %c0_2] : memref<128x128xbf16, #tpu.memory_space<vmem>>, vector<128x128xbf16>
    %cst = arith.constant dense<0.000000e+00> : vector<48x128xf32>
    %2 = tpu.matmul %0, %1, %cst {dimension_numbers = #tpu.dot_dimension_numbers<[1], [0], [0], [1], [0, 0, 1, 1], [], []>} : vector<48x128xbf16>, vector<128x128xbf16>, vector<48x128xf32> -> vector<48x128xf32>
    %c0_3 = arith.constant 0 : index
    %c0_4 = arith.constant 0 : index
    %3 = vector.load %arg3[%c0_3, %c0_4] : memref<1x128xf32, #tpu.memory_space<vmem>>, vector<1x128xf32>
    %4 = vector.broadcast %3 : vector<1x128xf32> to vector<48x128xf32>
    %5 = arith.addf %2, %4 : vector<48x128xf32>
    %cst_5 = arith.constant 0.000000e+00 : f32
    %6 = vector.broadcast %cst_5 : f32 to vector<48x128xf32>
    %7 = arith.maximumf %5, %6 : vector<48x128xf32>
    %8 = arith.truncf %7 : vector<48x128xf32> to vector<48x128xbf16>
    %c0_6 = arith.constant 0 : index
    %c0_7 = arith.constant 0 : index
    %9 = vector.load %arg4[%c0_6, %c0_7] : memref<128x128xbf16, #tpu.memory_space<vmem>>, vector<128x128xbf16>
    %cst_8 = arith.constant dense<0.000000e+00> : vector<48x128xf32>
    %10 = tpu.matmul %8, %9, %cst_8 {dimension_numbers = #tpu.dot_dimension_numbers<[1], [0], [0], [1], [0, 0, 1, 1], [], []>} : vector<48x128xbf16>, vector<128x128xbf16>, vector<48x128xf32> -> vector<48x128xf32>
    %c0_9 = arith.constant 0 : index
    %c0_10 = arith.constant 0 : index
    %11 = vector.load %arg5[%c0_9, %c0_10] : memref<1x128xf32, #tpu.memory_space<vmem>>, vector<1x128xf32>
    %12 = vector.broadcast %11 : vector<1x128xf32> to vector<48x128xf32>
    %13 = arith.addf %10, %12 : vector<48x128xf32>
    %cst_11 = arith.constant 0.000000e+00 : f32
    %14 = vector.broadcast %cst_11 : f32 to vector<48x128xf32>
    %15 = arith.maximumf %13, %14 : vector<48x128xf32>
    %16 = arith.truncf %15 : vector<48x128xf32> to vector<48x128xbf16>
    %c0_12 = arith.constant 0 : index
    %c0_13 = arith.constant 0 : index
    %17 = vector.load %arg6[%c0_12, %c0_13] : memref<128x128xbf16, #tpu.memory_space<vmem>>, vector<128x128xbf16>
    %cst_14 = arith.constant dense<0.000000e+00> : vector<48x128xf32>
    %18 = tpu.matmul %16, %17, %cst_14 {dimension_numbers = #tpu.dot_dimension_numbers<[1], [0], [0], [1], [0, 0, 1, 1], [], []>} : vector<48x128xbf16>, vector<128x128xbf16>, vector<48x128xf32> -> vector<48x128xf32>
    %c0_15 = arith.constant 0 : index
    %c0_16 = arith.constant 0 : index
    %19 = vector.load %arg7[%c0_15, %c0_16] : memref<1x128xf32, #tpu.memory_space<vmem>>, vector<1x128xf32>
    %20 = vector.broadcast %19 : vector<1x128xf32> to vector<48x128xf32>
    %21 = arith.addf %18, %20 : vector<48x128xf32>
    %cst_17 = arith.constant dense<0.000000e+00> : vector<48xf32>
    %22 = vector.multi_reduction <add>, %21, %cst_17 [1] : vector<48x128xf32> to vector<48xf32>
    %23 = vector.shape_cast %22 : vector<48xf32> to vector<48x1xf32>
    %cst_18 = arith.constant 1.280000e+02 : f32
    %24 = vector.broadcast %cst_18 : f32 to vector<48x1xf32>
    %25 = arith.divf %23, %24 : vector<48x1xf32>
    %26 = vector.broadcast %25 : vector<48x1xf32> to vector<48x128xf32>
    %27 = arith.subf %21, %26 : vector<48x128xf32>
    %28 = arith.mulf %27, %27 : vector<48x128xf32>
    %cst_19 = arith.constant dense<0.000000e+00> : vector<48xf32>
    %29 = vector.multi_reduction <add>, %28, %cst_19 [1] : vector<48x128xf32> to vector<48xf32>
    %30 = vector.shape_cast %29 : vector<48xf32> to vector<48x1xf32>
    %cst_20 = arith.constant 7.812500e-03 : f32
    %31 = vector.broadcast %cst_20 : f32 to vector<48x1xf32>
    %32 = arith.mulf %30, %31 : vector<48x1xf32>
    %cst_21 = arith.constant 9.99999974E-6 : f32
    %33 = vector.broadcast %cst_21 : f32 to vector<48x1xf32>
    %34 = arith.addf %32, %33 : vector<48x1xf32>
    %35 = math.rsqrt %34 : vector<48x1xf32>
    %36 = vector.broadcast %35 : vector<48x1xf32> to vector<48x128xf32>
    %37 = arith.mulf %27, %36 : vector<48x128xf32>
    %c0_22 = arith.constant 0 : index
    %c0_23 = arith.constant 0 : index
    %38 = vector.load %arg8[%c0_22, %c0_23] : memref<1x128xf32, #tpu.memory_space<vmem>>, vector<1x128xf32>
    %39 = vector.broadcast %38 : vector<1x128xf32> to vector<48x128xf32>
    %40 = arith.mulf %37, %39 : vector<48x128xf32>
    %c0_24 = arith.constant 0 : index
    %c0_25 = arith.constant 0 : index
    %41 = vector.load %arg9[%c0_24, %c0_25] : memref<1x128xf32, #tpu.memory_space<vmem>>, vector<1x128xf32>
    %42 = vector.broadcast %41 : vector<1x128xf32> to vector<48x128xf32>
    %43 = arith.addf %40, %42 : vector<48x128xf32>
    %44 = arith.truncf %43 : vector<48x128xf32> to vector<48x128xbf16>
    %c0_26 = arith.constant 0 : index
    %c0_27 = arith.constant 0 : index
    %45 = vector.load %arg10[%c0_26, %c0_27] : memref<48x128xbf16, #tpu.memory_space<vmem>>, vector<48x128xbf16>
    tpu.vector_store %arg10[%c0_26, %c0_27], %44 {strides = array<i32>} : memref<48x128xbf16, #tpu.memory_space<vmem>>, vector<48x128xbf16>,
    return
  }
  func.func @transform_0(%arg0: i32) -> (i32, i32) {
    %c0_i32 = arith.constant 0 : i32
    %c0_i32_0 = arith.constant 0 : i32
    return %arg0, %c0_i32 : i32, i32
  }
  func.func @transform_1(%arg0: i32) -> (i32, i32) {
    %c0_i32 = arith.constant 0 : i32
    %c0_i32_0 = arith.constant 0 : i32
    %c0_i32_1 = arith.constant 0 : i32
    return %c0_i32, %c0_i32_0 : i32, i32
  }
  func.func @transform_2(%arg0: i32) -> (i32, i32) {
    %c0_i32 = arith.constant 0 : i32
    %c0_i32_0 = arith.constant 0 : i32
    %c0_i32_1 = arith.constant 0 : i32
    return %c0_i32, %c0_i32_0 : i32, i32
  }
  func.func @transform_3(%arg0: i32) -> (i32, i32) {
    %c0_i32 = arith.constant 0 : i32
    %c0_i32_0 = arith.constant 0 : i32
    %c0_i32_1 = arith.constant 0 : i32
    return %c0_i32, %c0_i32_0 : i32, i32
  }
  func.func @transform_4(%arg0: i32) -> (i32, i32) {
    %c0_i32 = arith.constant 0 : i32
    %c0_i32_0 = arith.constant 0 : i32
    %c0_i32_1 = arith.constant 0 : i32
    return %c0_i32, %c0_i32_0 : i32, i32
  }
  func.func @transform_5(%arg0: i32) -> (i32, i32) {
    %c0_i32 = arith.constant 0 : i32
    %c0_i32_0 = arith.constant 0 : i32
    %c0_i32_1 = arith.constant 0 : i32
    return %c0_i32, %c0_i32_0 : i32, i32
  }
  func.func @transform_6(%arg0: i32) -> (i32, i32) {
    %c0_i32 = arith.constant 0 : i32
    %c0_i32_0 = arith.constant 0 : i32
    %c0_i32_1 = arith.constant 0 : i32
    return %c0_i32, %c0_i32_0 : i32, i32
  }
  func.func @transform_7(%arg0: i32) -> (i32, i32) {
    %c0_i32 = arith.constant 0 : i32
    %c0_i32_0 = arith.constant 0 : i32
    %c0_i32_1 = arith.constant 0 : i32
    return %c0_i32, %c0_i32_0 : i32, i32
  }
  func.func @transform_8(%arg0: i32) -> (i32, i32) {
    %c0_i32 = arith.constant 0 : i32
    %c0_i32_0 = arith.constant 0 : i32
    %c0_i32_1 = arith.constant 0 : i32
    return %c0_i32, %c0_i32_0 : i32, i32
  }
  func.func @transform_9(%arg0: i32) -> (i32, i32) {
    %c0_i32 = arith.constant 0 : i32
    %c0_i32_0 = arith.constant 0 : i32
    return %arg0, %c0_i32 : i32, i32
  }
}

module attributes {stable_mosaic.version = 11 : i64} {
  func.func @_mlp_kernel(%arg0: i32, %arg1: memref<48x128xbf16, #tpu.memory_space<vmem>>, %arg2: memref<48x128xbf16, #tpu.memory_space<vmem>>, %arg3: memref<48x128xbf16, #tpu.memory_space<vmem>>, %arg4: memref<128x128xbf16, #tpu.memory_space<vmem>>, %arg5: memref<128x128xbf16, #tpu.memory_space<vmem>>, %arg6: memref<128x128xbf16, #tpu.memory_space<vmem>>, %arg7: memref<1x128xf32, #tpu.memory_space<vmem>>, %arg8: memref<128x128xbf16, #tpu.memory_space<vmem>>, %arg9: memref<1x128xf32, #tpu.memory_space<vmem>>, %arg10: memref<128x128xbf16, #tpu.memory_space<vmem>>, %arg11: memref<1x128xf32, #tpu.memory_space<vmem>>, %arg12: memref<1x128xf32, #tpu.memory_space<vmem>>, %arg13: memref<1x128xf32, #tpu.memory_space<vmem>>, %arg14: memref<48x128xbf16, #tpu.memory_space<vmem>>, %arg15: memref<48x128xf32, #tpu.memory_space<vmem>>) attributes {dimension_semantics = [#tpu.dimension_semantics<parallel>], iteration_bounds = array<i64: 4>, scalar_prefetch = 0 : i64, scratch_operands = 0 : i64, tpu.core_type = #tpu.core_type<tc>, window_params = [{transform_indices = @transform_0, window_bounds = array<i64: 48, 128>}, {transform_indices = @transform_1, window_bounds = array<i64: 48, 128>}, {transform_indices = @transform_2, window_bounds = array<i64: 48, 128>}, {pipeline_mode = #tpu.pipeline_mode<synchronous>, transform_indices = @transform_3, window_bounds = array<i64: 128, 128>}, {pipeline_mode = #tpu.pipeline_mode<synchronous>, transform_indices = @transform_4, window_bounds = array<i64: 128, 128>}, {pipeline_mode = #tpu.pipeline_mode<synchronous>, transform_indices = @transform_5, window_bounds = array<i64: 128, 128>}, {pipeline_mode = #tpu.pipeline_mode<synchronous>, transform_indices = @transform_6, window_bounds = array<i64: 1, 128>}, {pipeline_mode = #tpu.pipeline_mode<synchronous>, transform_indices = @transform_7, window_bounds = array<i64: 128, 128>}, {pipeline_mode = #tpu.pipeline_mode<synchronous>, transform_indices = @transform_8, window_bounds = array<i64: 1, 128>}, {pipeline_mode = #tpu.pipeline_mode<synchronous>, transform_indices = @transform_9, window_bounds = array<i64: 128, 128>}, {pipeline_mode = #tpu.pipeline_mode<synchronous>, transform_indices = @transform_10, window_bounds = array<i64: 1, 128>}, {pipeline_mode = #tpu.pipeline_mode<synchronous>, transform_indices = @transform_11, window_bounds = array<i64: 1, 128>}, {pipeline_mode = #tpu.pipeline_mode<synchronous>, transform_indices = @transform_12, window_bounds = array<i64: 1, 128>}, {transform_indices = @transform_13, window_bounds = array<i64: 48, 128>}, {transform_indices = @transform_14, window_bounds = array<i64: 48, 128>}]} {
    %c0 = arith.constant 0 : index
    %c0_0 = arith.constant 0 : index
    %0 = vector.load %arg1[%c0, %c0_0] : memref<48x128xbf16, #tpu.memory_space<vmem>>, vector<48x128xbf16>
    %c0_1 = arith.constant 0 : index
    %c0_2 = arith.constant 0 : index
    %1 = vector.load %arg4[%c0_1, %c0_2] : memref<128x128xbf16, #tpu.memory_space<vmem>>, vector<128x128xbf16>
    %cst = arith.constant dense<0.000000e+00> : vector<48x128xf32>
    %2 = tpu.matmul %0, %1, %cst {dimension_numbers = #tpu.dot_dimension_numbers<[1], [0], [0], [1], [0, 0, 1, 1], [], []>} : vector<48x128xbf16>, vector<128x128xbf16>, vector<48x128xf32> -> vector<48x128xf32>
    %c0_3 = arith.constant 0 : index
    %c0_4 = arith.constant 0 : index
    %3 = vector.load %arg2[%c0_3, %c0_4] : memref<48x128xbf16, #tpu.memory_space<vmem>>, vector<48x128xbf16>
    %c0_5 = arith.constant 0 : index
    %c0_6 = arith.constant 0 : index
    %4 = vector.load %arg5[%c0_5, %c0_6] : memref<128x128xbf16, #tpu.memory_space<vmem>>, vector<128x128xbf16>
    %cst_7 = arith.constant dense<0.000000e+00> : vector<48x128xf32>
    %5 = tpu.matmul %3, %4, %cst_7 {dimension_numbers = #tpu.dot_dimension_numbers<[1], [0], [0], [1], [0, 0, 1, 1], [], []>} : vector<48x128xbf16>, vector<128x128xbf16>, vector<48x128xf32> -> vector<48x128xf32>
    %6 = arith.addf %2, %5 : vector<48x128xf32>
    %c0_8 = arith.constant 0 : index
    %c0_9 = arith.constant 0 : index
    %7 = vector.load %arg3[%c0_8, %c0_9] : memref<48x128xbf16, #tpu.memory_space<vmem>>, vector<48x128xbf16>
    %c0_10 = arith.constant 0 : index
    %c0_11 = arith.constant 0 : index
    %8 = vector.load %arg6[%c0_10, %c0_11] : memref<128x128xbf16, #tpu.memory_space<vmem>>, vector<128x128xbf16>
    %cst_12 = arith.constant dense<0.000000e+00> : vector<48x128xf32>
    %9 = tpu.matmul %7, %8, %cst_12 {dimension_numbers = #tpu.dot_dimension_numbers<[1], [0], [0], [1], [0, 0, 1, 1], [], []>} : vector<48x128xbf16>, vector<128x128xbf16>, vector<48x128xf32> -> vector<48x128xf32>
    %10 = arith.addf %6, %9 : vector<48x128xf32>
    %c0_13 = arith.constant 0 : index
    %c0_14 = arith.constant 0 : index
    %11 = vector.load %arg7[%c0_13, %c0_14] : memref<1x128xf32, #tpu.memory_space<vmem>>, vector<1x128xf32>
    %12 = vector.broadcast %11 : vector<1x128xf32> to vector<48x128xf32>
    %13 = arith.addf %10, %12 : vector<48x128xf32>
    %cst_15 = arith.constant 0.000000e+00 : f32
    %14 = vector.broadcast %cst_15 : f32 to vector<48x128xf32>
    %15 = arith.maximumf %13, %14 : vector<48x128xf32>
    %16 = arith.truncf %15 : vector<48x128xf32> to vector<48x128xbf16>
    %c0_16 = arith.constant 0 : index
    %c0_17 = arith.constant 0 : index
    %17 = vector.load %arg8[%c0_16, %c0_17] : memref<128x128xbf16, #tpu.memory_space<vmem>>, vector<128x128xbf16>
    %cst_18 = arith.constant dense<0.000000e+00> : vector<48x128xf32>
    %18 = tpu.matmul %16, %17, %cst_18 {dimension_numbers = #tpu.dot_dimension_numbers<[1], [0], [0], [1], [0, 0, 1, 1], [], []>} : vector<48x128xbf16>, vector<128x128xbf16>, vector<48x128xf32> -> vector<48x128xf32>
    %c0_19 = arith.constant 0 : index
    %c0_20 = arith.constant 0 : index
    %19 = vector.load %arg9[%c0_19, %c0_20] : memref<1x128xf32, #tpu.memory_space<vmem>>, vector<1x128xf32>
    %20 = vector.broadcast %19 : vector<1x128xf32> to vector<48x128xf32>
    %21 = arith.addf %18, %20 : vector<48x128xf32>
    %cst_21 = arith.constant 0.000000e+00 : f32
    %22 = vector.broadcast %cst_21 : f32 to vector<48x128xf32>
    %23 = arith.maximumf %21, %22 : vector<48x128xf32>
    %24 = arith.truncf %23 : vector<48x128xf32> to vector<48x128xbf16>
    %c0_22 = arith.constant 0 : index
    %c0_23 = arith.constant 0 : index
    %25 = vector.load %arg10[%c0_22, %c0_23] : memref<128x128xbf16, #tpu.memory_space<vmem>>, vector<128x128xbf16>
    %cst_24 = arith.constant dense<0.000000e+00> : vector<48x128xf32>
    %26 = tpu.matmul %24, %25, %cst_24 {dimension_numbers = #tpu.dot_dimension_numbers<[1], [0], [0], [1], [0, 0, 1, 1], [], []>} : vector<48x128xbf16>, vector<128x128xbf16>, vector<48x128xf32> -> vector<48x128xf32>
    %c0_25 = arith.constant 0 : index
    %c0_26 = arith.constant 0 : index
    %27 = vector.load %arg11[%c0_25, %c0_26] : memref<1x128xf32, #tpu.memory_space<vmem>>, vector<1x128xf32>
    %28 = vector.broadcast %27 : vector<1x128xf32> to vector<48x128xf32>
    %29 = arith.addf %26, %28 : vector<48x128xf32>
    %cst_27 = arith.constant dense<0.000000e+00> : vector<48xf32>
    %30 = vector.multi_reduction <add>, %29, %cst_27 [1] : vector<48x128xf32> to vector<48xf32>
    %31 = vector.shape_cast %30 : vector<48xf32> to vector<48x1xf32>
    %cst_28 = arith.constant 1.280000e+02 : f32
    %32 = vector.broadcast %cst_28 : f32 to vector<48x1xf32>
    %33 = arith.divf %31, %32 : vector<48x1xf32>
    %34 = vector.broadcast %33 : vector<48x1xf32> to vector<48x128xf32>
    %35 = arith.subf %29, %34 : vector<48x128xf32>
    %36 = arith.mulf %35, %35 : vector<48x128xf32>
    %cst_29 = arith.constant dense<0.000000e+00> : vector<48xf32>
    %37 = vector.multi_reduction <add>, %36, %cst_29 [1] : vector<48x128xf32> to vector<48xf32>
    %38 = vector.shape_cast %37 : vector<48xf32> to vector<48x1xf32>
    %cst_30 = arith.constant 7.812500e-03 : f32
    %39 = vector.broadcast %cst_30 : f32 to vector<48x1xf32>
    %40 = arith.mulf %38, %39 : vector<48x1xf32>
    %cst_31 = arith.constant 9.99999974E-6 : f32
    %41 = vector.broadcast %cst_31 : f32 to vector<48x1xf32>
    %42 = arith.addf %40, %41 : vector<48x1xf32>
    %43 = math.rsqrt %42 : vector<48x1xf32>
    %44 = vector.broadcast %43 : vector<48x1xf32> to vector<48x128xf32>
    %45 = arith.mulf %35, %44 : vector<48x128xf32>
    %c0_32 = arith.constant 0 : index
    %c0_33 = arith.constant 0 : index
    %46 = vector.load %arg12[%c0_32, %c0_33] : memref<1x128xf32, #tpu.memory_space<vmem>>, vector<1x128xf32>
    %47 = vector.broadcast %46 : vector<1x128xf32> to vector<48x128xf32>
    %48 = arith.mulf %45, %47 : vector<48x128xf32>
    %c0_34 = arith.constant 0 : index
    %c0_35 = arith.constant 0 : index
    %49 = vector.load %arg13[%c0_34, %c0_35] : memref<1x128xf32, #tpu.memory_space<vmem>>, vector<1x128xf32>
    %50 = vector.broadcast %49 : vector<1x128xf32> to vector<48x128xf32>
    %51 = arith.addf %48, %50 : vector<48x128xf32>
    %c48_i32 = arith.constant 48 : i32
    %52 = arith.muli %arg0, %c48_i32 : i32
    %53 = tpu.iota {dimensions = array<i32: 0>} : vector<48x128xi32>
    %54 = vector.broadcast %52 : i32 to vector<48x128xi32>
    %55 = arith.addi %54, %53 : vector<48x128xi32>
    %c192_i32 = arith.constant 192 : i32
    %56 = vector.broadcast %c192_i32 : i32 to vector<48x128xi32>
    %57 = arith.cmpi slt, %55, %56 : vector<48x128xi32>
    %cst_36 = arith.constant 0.000000e+00 : f32
    %58 = vector.broadcast %cst_36 : f32 to vector<48x128xf32>
    %59 = arith.select %57, %51, %58 : vector<48x128xi1>, vector<48x128xf32>
    %c0_37 = arith.constant 0 : index
    %c0_38 = arith.constant 0 : index
    %60 = vector.load %arg15[%c0_37, %c0_38] : memref<48x128xf32, #tpu.memory_space<vmem>>, vector<48x128xf32>
    tpu.vector_store %arg15[%c0_37, %c0_38], %59 {strides = array<i32>} : memref<48x128xf32, #tpu.memory_space<vmem>>, vector<48x128xf32>,
    %c0_39 = arith.constant 0 : index
    %c0_40 = arith.constant 0 : index
    %61 = vector.load %arg3[%c0_39, %c0_40] : memref<48x128xbf16, #tpu.memory_space<vmem>>, vector<48x128xbf16>
    %62 = arith.extf %61 : vector<48x128xbf16> to vector<48x128xf32>
    %63 = arith.addf %51, %62 : vector<48x128xf32>
    %64 = arith.truncf %63 : vector<48x128xf32> to vector<48x128xbf16>
    %c0_41 = arith.constant 0 : index
    %c0_42 = arith.constant 0 : index
    %65 = vector.load %arg14[%c0_41, %c0_42] : memref<48x128xbf16, #tpu.memory_space<vmem>>, vector<48x128xbf16>
    tpu.vector_store %arg14[%c0_41, %c0_42], %64 {strides = array<i32>} : memref<48x128xbf16, #tpu.memory_space<vmem>>, vector<48x128xbf16>,
    return
  }
  func.func @transform_0(%arg0: i32) -> (i32, i32) {
    %c0_i32 = arith.constant 0 : i32
    %c0_i32_0 = arith.constant 0 : i32
    return %arg0, %c0_i32 : i32, i32
  }
  func.func @transform_1(%arg0: i32) -> (i32, i32) {
    %c0_i32 = arith.constant 0 : i32
    %c0_i32_0 = arith.constant 0 : i32
    return %arg0, %c0_i32 : i32, i32
  }
  func.func @transform_2(%arg0: i32) -> (i32, i32) {
    %c0_i32 = arith.constant 0 : i32
    %c0_i32_0 = arith.constant 0 : i32
    return %arg0, %c0_i32 : i32, i32
  }
  func.func @transform_3(%arg0: i32) -> (i32, i32) {
    %c0_i32 = arith.constant 0 : i32
    %c0_i32_0 = arith.constant 0 : i32
    %c0_i32_1 = arith.constant 0 : i32
    return %c0_i32, %c0_i32_0 : i32, i32
  }
  func.func @transform_4(%arg0: i32) -> (i32, i32) {
    %c0_i32 = arith.constant 0 : i32
    %c0_i32_0 = arith.constant 0 : i32
    %c0_i32_1 = arith.constant 0 : i32
    return %c0_i32, %c0_i32_0 : i32, i32
  }
  func.func @transform_5(%arg0: i32) -> (i32, i32) {
    %c0_i32 = arith.constant 0 : i32
    %c0_i32_0 = arith.constant 0 : i32
    %c0_i32_1 = arith.constant 0 : i32
    return %c0_i32, %c0_i32_0 : i32, i32
  }
  func.func @transform_6(%arg0: i32) -> (i32, i32) {
    %c0_i32 = arith.constant 0 : i32
    %c0_i32_0 = arith.constant 0 : i32
    %c0_i32_1 = arith.constant 0 : i32
    return %c0_i32, %c0_i32_0 : i32, i32
  }
  func.func @transform_7(%arg0: i32) -> (i32, i32) {
    %c0_i32 = arith.constant 0 : i32
    %c0_i32_0 = arith.constant 0 : i32
    %c0_i32_1 = arith.constant 0 : i32
    return %c0_i32, %c0_i32_0 : i32, i32
  }
  func.func @transform_8(%arg0: i32) -> (i32, i32) {
    %c0_i32 = arith.constant 0 : i32
    %c0_i32_0 = arith.constant 0 : i32
    %c0_i32_1 = arith.constant 0 : i32
    return %c0_i32, %c0_i32_0 : i32, i32
  }
  func.func @transform_9(%arg0: i32) -> (i32, i32) {
    %c0_i32 = arith.constant 0 : i32
    %c0_i32_0 = arith.constant 0 : i32
    %c0_i32_1 = arith.constant 0 : i32
    return %c0_i32, %c0_i32_0 : i32, i32
  }
  func.func @transform_10(%arg0: i32) -> (i32, i32) {
    %c0_i32 = arith.constant 0 : i32
    %c0_i32_0 = arith.constant 0 : i32
    %c0_i32_1 = arith.constant 0 : i32
    return %c0_i32, %c0_i32_0 : i32, i32
  }
  func.func @transform_11(%arg0: i32) -> (i32, i32) {
    %c0_i32 = arith.constant 0 : i32
    %c0_i32_0 = arith.constant 0 : i32
    %c0_i32_1 = arith.constant 0 : i32
    return %c0_i32, %c0_i32_0 : i32, i32
  }
  func.func @transform_12(%arg0: i32) -> (i32, i32) {
    %c0_i32 = arith.constant 0 : i32
    %c0_i32_0 = arith.constant 0 : i32
    %c0_i32_1 = arith.constant 0 : i32
    return %c0_i32, %c0_i32_0 : i32, i32
  }
  func.func @transform_13(%arg0: i32) -> (i32, i32) {
    %c0_i32 = arith.constant 0 : i32
    %c0_i32_0 = arith.constant 0 : i32
    return %arg0, %c0_i32 : i32, i32
  }
  func.func @transform_14(%arg0: i32) -> (i32, i32) {
    %c0_i32 = arith.constant 0 : i32
    %c0_i32_0 = arith.constant 0 : i32
    return %arg0, %c0_i32 : i32, i32
  }
}

module attributes {stable_mosaic.version = 11 : i64} {
  func.func @_mlp_kernel(%arg0: i32, %arg1: memref<16x128xbf16, #tpu.memory_space<vmem>>, %arg2: memref<16x128xf32, #tpu.memory_space<vmem>>, %arg3: memref<128x128xbf16, #tpu.memory_space<vmem>>, %arg4: memref<128x128xbf16, #tpu.memory_space<vmem>>, %arg5: memref<1x128xf32, #tpu.memory_space<vmem>>, %arg6: memref<128x128xbf16, #tpu.memory_space<vmem>>, %arg7: memref<1x128xf32, #tpu.memory_space<vmem>>, %arg8: memref<128x128xbf16, #tpu.memory_space<vmem>>, %arg9: memref<1x128xf32, #tpu.memory_space<vmem>>, %arg10: memref<1x128xf32, #tpu.memory_space<vmem>>, %arg11: memref<1x128xf32, #tpu.memory_space<vmem>>, %arg12: memref<16x128xbf16, #tpu.memory_space<vmem>>) attributes {dimension_semantics = [#tpu.dimension_semantics<parallel>], iteration_bounds = array<i64: 4>, scalar_prefetch = 0 : i64, scratch_operands = 0 : i64, tpu.core_type = #tpu.core_type<tc>, window_params = [{transform_indices = @transform_0, window_bounds = array<i64: 16, 128>}, {transform_indices = @transform_1, window_bounds = array<i64: 16, 128>}, {pipeline_mode = #tpu.pipeline_mode<synchronous>, transform_indices = @transform_2, window_bounds = array<i64: 128, 128>}, {pipeline_mode = #tpu.pipeline_mode<synchronous>, transform_indices = @transform_3, window_bounds = array<i64: 128, 128>}, {pipeline_mode = #tpu.pipeline_mode<synchronous>, transform_indices = @transform_4, window_bounds = array<i64: 1, 128>}, {pipeline_mode = #tpu.pipeline_mode<synchronous>, transform_indices = @transform_5, window_bounds = array<i64: 128, 128>}, {pipeline_mode = #tpu.pipeline_mode<synchronous>, transform_indices = @transform_6, window_bounds = array<i64: 1, 128>}, {pipeline_mode = #tpu.pipeline_mode<synchronous>, transform_indices = @transform_7, window_bounds = array<i64: 128, 128>}, {pipeline_mode = #tpu.pipeline_mode<synchronous>, transform_indices = @transform_8, window_bounds = array<i64: 1, 128>}, {pipeline_mode = #tpu.pipeline_mode<synchronous>, transform_indices = @transform_9, window_bounds = array<i64: 1, 128>}, {pipeline_mode = #tpu.pipeline_mode<synchronous>, transform_indices = @transform_10, window_bounds = array<i64: 1, 128>}, {transform_indices = @transform_11, window_bounds = array<i64: 16, 128>}]} {
    %c0 = arith.constant 0 : index
    %c0_0 = arith.constant 0 : index
    %0 = vector.load %arg1[%c0, %c0_0] : memref<16x128xbf16, #tpu.memory_space<vmem>>, vector<16x128xbf16>
    %c0_1 = arith.constant 0 : index
    %c0_2 = arith.constant 0 : index
    %1 = vector.load %arg3[%c0_1, %c0_2] : memref<128x128xbf16, #tpu.memory_space<vmem>>, vector<128x128xbf16>
    %cst = arith.constant dense<0.000000e+00> : vector<16x128xf32>
    %2 = tpu.matmul %0, %1, %cst {dimension_numbers = #tpu.dot_dimension_numbers<[1], [0], [0], [1], [0, 0, 1, 1], [], []>} : vector<16x128xbf16>, vector<128x128xbf16>, vector<16x128xf32> -> vector<16x128xf32>
    %c0_3 = arith.constant 0 : index
    %c0_4 = arith.constant 0 : index
    %3 = vector.load %arg2[%c0_3, %c0_4] : memref<16x128xf32, #tpu.memory_space<vmem>>, vector<16x128xf32>
    %4 = arith.truncf %3 : vector<16x128xf32> to vector<16x128xbf16>
    %c0_5 = arith.constant 0 : index
    %c0_6 = arith.constant 0 : index
    %5 = vector.load %arg4[%c0_5, %c0_6] : memref<128x128xbf16, #tpu.memory_space<vmem>>, vector<128x128xbf16>
    %cst_7 = arith.constant dense<0.000000e+00> : vector<16x128xf32>
    %6 = tpu.matmul %4, %5, %cst_7 {dimension_numbers = #tpu.dot_dimension_numbers<[1], [0], [0], [1], [0, 0, 1, 1], [], []>} : vector<16x128xbf16>, vector<128x128xbf16>, vector<16x128xf32> -> vector<16x128xf32>
    %7 = arith.addf %2, %6 : vector<16x128xf32>
    %c0_8 = arith.constant 0 : index
    %c0_9 = arith.constant 0 : index
    %8 = vector.load %arg5[%c0_8, %c0_9] : memref<1x128xf32, #tpu.memory_space<vmem>>, vector<1x128xf32>
    %9 = vector.broadcast %8 : vector<1x128xf32> to vector<16x128xf32>
    %10 = arith.addf %7, %9 : vector<16x128xf32>
    %cst_10 = arith.constant 0.000000e+00 : f32
    %11 = vector.broadcast %cst_10 : f32 to vector<16x128xf32>
    %12 = arith.maximumf %10, %11 : vector<16x128xf32>
    %13 = arith.truncf %12 : vector<16x128xf32> to vector<16x128xbf16>
    %c0_11 = arith.constant 0 : index
    %c0_12 = arith.constant 0 : index
    %14 = vector.load %arg6[%c0_11, %c0_12] : memref<128x128xbf16, #tpu.memory_space<vmem>>, vector<128x128xbf16>
    %cst_13 = arith.constant dense<0.000000e+00> : vector<16x128xf32>
    %15 = tpu.matmul %13, %14, %cst_13 {dimension_numbers = #tpu.dot_dimension_numbers<[1], [0], [0], [1], [0, 0, 1, 1], [], []>} : vector<16x128xbf16>, vector<128x128xbf16>, vector<16x128xf32> -> vector<16x128xf32>
    %c0_14 = arith.constant 0 : index
    %c0_15 = arith.constant 0 : index
    %16 = vector.load %arg7[%c0_14, %c0_15] : memref<1x128xf32, #tpu.memory_space<vmem>>, vector<1x128xf32>
    %17 = vector.broadcast %16 : vector<1x128xf32> to vector<16x128xf32>
    %18 = arith.addf %15, %17 : vector<16x128xf32>
    %cst_16 = arith.constant 0.000000e+00 : f32
    %19 = vector.broadcast %cst_16 : f32 to vector<16x128xf32>
    %20 = arith.maximumf %18, %19 : vector<16x128xf32>
    %21 = arith.truncf %20 : vector<16x128xf32> to vector<16x128xbf16>
    %c0_17 = arith.constant 0 : index
    %c0_18 = arith.constant 0 : index
    %22 = vector.load %arg8[%c0_17, %c0_18] : memref<128x128xbf16, #tpu.memory_space<vmem>>, vector<128x128xbf16>
    %cst_19 = arith.constant dense<0.000000e+00> : vector<16x128xf32>
    %23 = tpu.matmul %21, %22, %cst_19 {dimension_numbers = #tpu.dot_dimension_numbers<[1], [0], [0], [1], [0, 0, 1, 1], [], []>} : vector<16x128xbf16>, vector<128x128xbf16>, vector<16x128xf32> -> vector<16x128xf32>
    %c0_20 = arith.constant 0 : index
    %c0_21 = arith.constant 0 : index
    %24 = vector.load %arg9[%c0_20, %c0_21] : memref<1x128xf32, #tpu.memory_space<vmem>>, vector<1x128xf32>
    %25 = vector.broadcast %24 : vector<1x128xf32> to vector<16x128xf32>
    %26 = arith.addf %23, %25 : vector<16x128xf32>
    %cst_22 = arith.constant dense<0.000000e+00> : vector<16xf32>
    %27 = vector.multi_reduction <add>, %26, %cst_22 [1] : vector<16x128xf32> to vector<16xf32>
    %28 = vector.shape_cast %27 : vector<16xf32> to vector<16x1xf32>
    %cst_23 = arith.constant 1.280000e+02 : f32
    %29 = vector.broadcast %cst_23 : f32 to vector<16x1xf32>
    %30 = arith.divf %28, %29 : vector<16x1xf32>
    %31 = vector.broadcast %30 : vector<16x1xf32> to vector<16x128xf32>
    %32 = arith.subf %26, %31 : vector<16x128xf32>
    %33 = arith.mulf %32, %32 : vector<16x128xf32>
    %cst_24 = arith.constant dense<0.000000e+00> : vector<16xf32>
    %34 = vector.multi_reduction <add>, %33, %cst_24 [1] : vector<16x128xf32> to vector<16xf32>
    %35 = vector.shape_cast %34 : vector<16xf32> to vector<16x1xf32>
    %cst_25 = arith.constant 7.812500e-03 : f32
    %36 = vector.broadcast %cst_25 : f32 to vector<16x1xf32>
    %37 = arith.mulf %35, %36 : vector<16x1xf32>
    %cst_26 = arith.constant 9.99999974E-6 : f32
    %38 = vector.broadcast %cst_26 : f32 to vector<16x1xf32>
    %39 = arith.addf %37, %38 : vector<16x1xf32>
    %40 = math.rsqrt %39 : vector<16x1xf32>
    %41 = vector.broadcast %40 : vector<16x1xf32> to vector<16x128xf32>
    %42 = arith.mulf %32, %41 : vector<16x128xf32>
    %c0_27 = arith.constant 0 : index
    %c0_28 = arith.constant 0 : index
    %43 = vector.load %arg10[%c0_27, %c0_28] : memref<1x128xf32, #tpu.memory_space<vmem>>, vector<1x128xf32>
    %44 = vector.broadcast %43 : vector<1x128xf32> to vector<16x128xf32>
    %45 = arith.mulf %42, %44 : vector<16x128xf32>
    %c0_29 = arith.constant 0 : index
    %c0_30 = arith.constant 0 : index
    %46 = vector.load %arg11[%c0_29, %c0_30] : memref<1x128xf32, #tpu.memory_space<vmem>>, vector<1x128xf32>
    %47 = vector.broadcast %46 : vector<1x128xf32> to vector<16x128xf32>
    %48 = arith.addf %45, %47 : vector<16x128xf32>
    %c0_31 = arith.constant 0 : index
    %c0_32 = arith.constant 0 : index
    %49 = vector.load %arg1[%c0_31, %c0_32] : memref<16x128xbf16, #tpu.memory_space<vmem>>, vector<16x128xbf16>
    %50 = arith.extf %49 : vector<16x128xbf16> to vector<16x128xf32>
    %51 = arith.addf %48, %50 : vector<16x128xf32>
    %52 = arith.truncf %51 : vector<16x128xf32> to vector<16x128xbf16>
    %c0_33 = arith.constant 0 : index
    %c0_34 = arith.constant 0 : index
    %53 = vector.load %arg12[%c0_33, %c0_34] : memref<16x128xbf16, #tpu.memory_space<vmem>>, vector<16x128xbf16>
    tpu.vector_store %arg12[%c0_33, %c0_34], %52 {strides = array<i32>} : memref<16x128xbf16, #tpu.memory_space<vmem>>, vector<16x128xbf16>,
    return
  }
  func.func @transform_0(%arg0: i32) -> (i32, i32) {
    %c0_i32 = arith.constant 0 : i32
    %c0_i32_0 = arith.constant 0 : i32
    return %arg0, %c0_i32 : i32, i32
  }
  func.func @transform_1(%arg0: i32) -> (i32, i32) {
    %c0_i32 = arith.constant 0 : i32
    %c0_i32_0 = arith.constant 0 : i32
    return %arg0, %c0_i32 : i32, i32
  }
  func.func @transform_2(%arg0: i32) -> (i32, i32) {
    %c0_i32 = arith.constant 0 : i32
    %c0_i32_0 = arith.constant 0 : i32
    %c0_i32_1 = arith.constant 0 : i32
    return %c0_i32, %c0_i32_0 : i32, i32
  }
  func.func @transform_3(%arg0: i32) -> (i32, i32) {
    %c0_i32 = arith.constant 0 : i32
    %c0_i32_0 = arith.constant 0 : i32
    %c0_i32_1 = arith.constant 0 : i32
    return %c0_i32, %c0_i32_0 : i32, i32
  }
  func.func @transform_4(%arg0: i32) -> (i32, i32) {
    %c0_i32 = arith.constant 0 : i32
    %c0_i32_0 = arith.constant 0 : i32
    %c0_i32_1 = arith.constant 0 : i32
    return %c0_i32, %c0_i32_0 : i32, i32
  }
  func.func @transform_5(%arg0: i32) -> (i32, i32) {
    %c0_i32 = arith.constant 0 : i32
    %c0_i32_0 = arith.constant 0 : i32
    %c0_i32_1 = arith.constant 0 : i32
    return %c0_i32, %c0_i32_0 : i32, i32
  }
  func.func @transform_6(%arg0: i32) -> (i32, i32) {
    %c0_i32 = arith.constant 0 : i32
    %c0_i32_0 = arith.constant 0 : i32
    %c0_i32_1 = arith.constant 0 : i32
    return %c0_i32, %c0_i32_0 : i32, i32
  }
  func.func @transform_7(%arg0: i32) -> (i32, i32) {
    %c0_i32 = arith.constant 0 : i32
    %c0_i32_0 = arith.constant 0 : i32
    %c0_i32_1 = arith.constant 0 : i32
    return %c0_i32, %c0_i32_0 : i32, i32
  }
  func.func @transform_8(%arg0: i32) -> (i32, i32) {
    %c0_i32 = arith.constant 0 : i32
    %c0_i32_0 = arith.constant 0 : i32
    %c0_i32_1 = arith.constant 0 : i32
    return %c0_i32, %c0_i32_0 : i32, i32
  }
  func.func @transform_9(%arg0: i32) -> (i32, i32) {
    %c0_i32 = arith.constant 0 : i32
    %c0_i32_0 = arith.constant 0 : i32
    %c0_i32_1 = arith.constant 0 : i32
    return %c0_i32, %c0_i32_0 : i32, i32
  }
  func.func @transform_10(%arg0: i32) -> (i32, i32) {
    %c0_i32 = arith.constant 0 : i32
    %c0_i32_0 = arith.constant 0 : i32
    %c0_i32_1 = arith.constant 0 : i32
    return %c0_i32, %c0_i32_0 : i32, i32
  }
  func.func @transform_11(%arg0: i32) -> (i32, i32) {
    %c0_i32 = arith.constant 0 : i32
    %c0_i32_0 = arith.constant 0 : i32
    return %arg0, %c0_i32 : i32, i32
  }
}

module attributes {stable_mosaic.version = 11 : i64} {
  func.func @_mlp_kernel(%arg0: i32, %arg1: memref<48x128xbf16, #tpu.memory_space<vmem>>, %arg2: memref<48x128xbf16, #tpu.memory_space<vmem>>, %arg3: memref<48x128xbf16, #tpu.memory_space<vmem>>, %arg4: memref<128x128xbf16, #tpu.memory_space<vmem>>, %arg5: memref<128x128xbf16, #tpu.memory_space<vmem>>, %arg6: memref<128x128xbf16, #tpu.memory_space<vmem>>, %arg7: memref<1x128xf32, #tpu.memory_space<vmem>>, %arg8: memref<128x128xbf16, #tpu.memory_space<vmem>>, %arg9: memref<1x128xf32, #tpu.memory_space<vmem>>, %arg10: memref<128x128xbf16, #tpu.memory_space<vmem>>, %arg11: memref<1x128xf32, #tpu.memory_space<vmem>>, %arg12: memref<1x128xf32, #tpu.memory_space<vmem>>, %arg13: memref<1x128xf32, #tpu.memory_space<vmem>>, %arg14: memref<48x128xbf16, #tpu.memory_space<vmem>>, %arg15: memref<48x128xf32, #tpu.memory_space<vmem>>) attributes {dimension_semantics = [#tpu.dimension_semantics<parallel>], iteration_bounds = array<i64: 4>, scalar_prefetch = 0 : i64, scratch_operands = 0 : i64, tpu.core_type = #tpu.core_type<tc>, window_params = [{transform_indices = @transform_0, window_bounds = array<i64: 48, 128>}, {transform_indices = @transform_1, window_bounds = array<i64: 48, 128>}, {transform_indices = @transform_2, window_bounds = array<i64: 48, 128>}, {pipeline_mode = #tpu.pipeline_mode<synchronous>, transform_indices = @transform_3, window_bounds = array<i64: 128, 128>}, {pipeline_mode = #tpu.pipeline_mode<synchronous>, transform_indices = @transform_4, window_bounds = array<i64: 128, 128>}, {pipeline_mode = #tpu.pipeline_mode<synchronous>, transform_indices = @transform_5, window_bounds = array<i64: 128, 128>}, {pipeline_mode = #tpu.pipeline_mode<synchronous>, transform_indices = @transform_6, window_bounds = array<i64: 1, 128>}, {pipeline_mode = #tpu.pipeline_mode<synchronous>, transform_indices = @transform_7, window_bounds = array<i64: 128, 128>}, {pipeline_mode = #tpu.pipeline_mode<synchronous>, transform_indices = @transform_8, window_bounds = array<i64: 1, 128>}, {pipeline_mode = #tpu.pipeline_mode<synchronous>, transform_indices = @transform_9, window_bounds = array<i64: 128, 128>}, {pipeline_mode = #tpu.pipeline_mode<synchronous>, transform_indices = @transform_10, window_bounds = array<i64: 1, 128>}, {pipeline_mode = #tpu.pipeline_mode<synchronous>, transform_indices = @transform_11, window_bounds = array<i64: 1, 128>}, {pipeline_mode = #tpu.pipeline_mode<synchronous>, transform_indices = @transform_12, window_bounds = array<i64: 1, 128>}, {transform_indices = @transform_13, window_bounds = array<i64: 48, 128>}, {transform_indices = @transform_14, window_bounds = array<i64: 48, 128>}]} {
    %c0 = arith.constant 0 : index
    %c0_0 = arith.constant 0 : index
    %0 = vector.load %arg1[%c0, %c0_0] : memref<48x128xbf16, #tpu.memory_space<vmem>>, vector<48x128xbf16>
    %c0_1 = arith.constant 0 : index
    %c0_2 = arith.constant 0 : index
    %1 = vector.load %arg4[%c0_1, %c0_2] : memref<128x128xbf16, #tpu.memory_space<vmem>>, vector<128x128xbf16>
    %cst = arith.constant dense<0.000000e+00> : vector<48x128xf32>
    %2 = tpu.matmul %0, %1, %cst {dimension_numbers = #tpu.dot_dimension_numbers<[1], [0], [0], [1], [0, 0, 1, 1], [], []>} : vector<48x128xbf16>, vector<128x128xbf16>, vector<48x128xf32> -> vector<48x128xf32>
    %c0_3 = arith.constant 0 : index
    %c0_4 = arith.constant 0 : index
    %3 = vector.load %arg2[%c0_3, %c0_4] : memref<48x128xbf16, #tpu.memory_space<vmem>>, vector<48x128xbf16>
    %c0_5 = arith.constant 0 : index
    %c0_6 = arith.constant 0 : index
    %4 = vector.load %arg5[%c0_5, %c0_6] : memref<128x128xbf16, #tpu.memory_space<vmem>>, vector<128x128xbf16>
    %cst_7 = arith.constant dense<0.000000e+00> : vector<48x128xf32>
    %5 = tpu.matmul %3, %4, %cst_7 {dimension_numbers = #tpu.dot_dimension_numbers<[1], [0], [0], [1], [0, 0, 1, 1], [], []>} : vector<48x128xbf16>, vector<128x128xbf16>, vector<48x128xf32> -> vector<48x128xf32>
    %6 = arith.addf %2, %5 : vector<48x128xf32>
    %c0_8 = arith.constant 0 : index
    %c0_9 = arith.constant 0 : index
    %7 = vector.load %arg3[%c0_8, %c0_9] : memref<48x128xbf16, #tpu.memory_space<vmem>>, vector<48x128xbf16>
    %c0_10 = arith.constant 0 : index
    %c0_11 = arith.constant 0 : index
    %8 = vector.load %arg6[%c0_10, %c0_11] : memref<128x128xbf16, #tpu.memory_space<vmem>>, vector<128x128xbf16>
    %cst_12 = arith.constant dense<0.000000e+00> : vector<48x128xf32>
    %9 = tpu.matmul %7, %8, %cst_12 {dimension_numbers = #tpu.dot_dimension_numbers<[1], [0], [0], [1], [0, 0, 1, 1], [], []>} : vector<48x128xbf16>, vector<128x128xbf16>, vector<48x128xf32> -> vector<48x128xf32>
    %10 = arith.addf %6, %9 : vector<48x128xf32>
    %c0_13 = arith.constant 0 : index
    %c0_14 = arith.constant 0 : index
    %11 = vector.load %arg7[%c0_13, %c0_14] : memref<1x128xf32, #tpu.memory_space<vmem>>, vector<1x128xf32>
    %12 = vector.broadcast %11 : vector<1x128xf32> to vector<48x128xf32>
    %13 = arith.addf %10, %12 : vector<48x128xf32>
    %cst_15 = arith.constant 0.000000e+00 : f32
    %14 = vector.broadcast %cst_15 : f32 to vector<48x128xf32>
    %15 = arith.maximumf %13, %14 : vector<48x128xf32>
    %16 = arith.truncf %15 : vector<48x128xf32> to vector<48x128xbf16>
    %c0_16 = arith.constant 0 : index
    %c0_17 = arith.constant 0 : index
    %17 = vector.load %arg8[%c0_16, %c0_17] : memref<128x128xbf16, #tpu.memory_space<vmem>>, vector<128x128xbf16>
    %cst_18 = arith.constant dense<0.000000e+00> : vector<48x128xf32>
    %18 = tpu.matmul %16, %17, %cst_18 {dimension_numbers = #tpu.dot_dimension_numbers<[1], [0], [0], [1], [0, 0, 1, 1], [], []>} : vector<48x128xbf16>, vector<128x128xbf16>, vector<48x128xf32> -> vector<48x128xf32>
    %c0_19 = arith.constant 0 : index
    %c0_20 = arith.constant 0 : index
    %19 = vector.load %arg9[%c0_19, %c0_20] : memref<1x128xf32, #tpu.memory_space<vmem>>, vector<1x128xf32>
    %20 = vector.broadcast %19 : vector<1x128xf32> to vector<48x128xf32>
    %21 = arith.addf %18, %20 : vector<48x128xf32>
    %cst_21 = arith.constant 0.000000e+00 : f32
    %22 = vector.broadcast %cst_21 : f32 to vector<48x128xf32>
    %23 = arith.maximumf %21, %22 : vector<48x128xf32>
    %24 = arith.truncf %23 : vector<48x128xf32> to vector<48x128xbf16>
    %c0_22 = arith.constant 0 : index
    %c0_23 = arith.constant 0 : index
    %25 = vector.load %arg10[%c0_22, %c0_23] : memref<128x128xbf16, #tpu.memory_space<vmem>>, vector<128x128xbf16>
    %cst_24 = arith.constant dense<0.000000e+00> : vector<48x128xf32>
    %26 = tpu.matmul %24, %25, %cst_24 {dimension_numbers = #tpu.dot_dimension_numbers<[1], [0], [0], [1], [0, 0, 1, 1], [], []>} : vector<48x128xbf16>, vector<128x128xbf16>, vector<48x128xf32> -> vector<48x128xf32>
    %c0_25 = arith.constant 0 : index
    %c0_26 = arith.constant 0 : index
    %27 = vector.load %arg11[%c0_25, %c0_26] : memref<1x128xf32, #tpu.memory_space<vmem>>, vector<1x128xf32>
    %28 = vector.broadcast %27 : vector<1x128xf32> to vector<48x128xf32>
    %29 = arith.addf %26, %28 : vector<48x128xf32>
    %cst_27 = arith.constant dense<0.000000e+00> : vector<48xf32>
    %30 = vector.multi_reduction <add>, %29, %cst_27 [1] : vector<48x128xf32> to vector<48xf32>
    %31 = vector.shape_cast %30 : vector<48xf32> to vector<48x1xf32>
    %cst_28 = arith.constant 1.280000e+02 : f32
    %32 = vector.broadcast %cst_28 : f32 to vector<48x1xf32>
    %33 = arith.divf %31, %32 : vector<48x1xf32>
    %34 = vector.broadcast %33 : vector<48x1xf32> to vector<48x128xf32>
    %35 = arith.subf %29, %34 : vector<48x128xf32>
    %36 = arith.mulf %35, %35 : vector<48x128xf32>
    %cst_29 = arith.constant dense<0.000000e+00> : vector<48xf32>
    %37 = vector.multi_reduction <add>, %36, %cst_29 [1] : vector<48x128xf32> to vector<48xf32>
    %38 = vector.shape_cast %37 : vector<48xf32> to vector<48x1xf32>
    %cst_30 = arith.constant 7.812500e-03 : f32
    %39 = vector.broadcast %cst_30 : f32 to vector<48x1xf32>
    %40 = arith.mulf %38, %39 : vector<48x1xf32>
    %cst_31 = arith.constant 9.99999974E-6 : f32
    %41 = vector.broadcast %cst_31 : f32 to vector<48x1xf32>
    %42 = arith.addf %40, %41 : vector<48x1xf32>
    %43 = math.rsqrt %42 : vector<48x1xf32>
    %44 = vector.broadcast %43 : vector<48x1xf32> to vector<48x128xf32>
    %45 = arith.mulf %35, %44 : vector<48x128xf32>
    %c0_32 = arith.constant 0 : index
    %c0_33 = arith.constant 0 : index
    %46 = vector.load %arg12[%c0_32, %c0_33] : memref<1x128xf32, #tpu.memory_space<vmem>>, vector<1x128xf32>
    %47 = vector.broadcast %46 : vector<1x128xf32> to vector<48x128xf32>
    %48 = arith.mulf %45, %47 : vector<48x128xf32>
    %c0_34 = arith.constant 0 : index
    %c0_35 = arith.constant 0 : index
    %49 = vector.load %arg13[%c0_34, %c0_35] : memref<1x128xf32, #tpu.memory_space<vmem>>, vector<1x128xf32>
    %50 = vector.broadcast %49 : vector<1x128xf32> to vector<48x128xf32>
    %51 = arith.addf %48, %50 : vector<48x128xf32>
    %c48_i32 = arith.constant 48 : i32
    %52 = arith.muli %arg0, %c48_i32 : i32
    %53 = tpu.iota {dimensions = array<i32: 0>} : vector<48x128xi32>
    %54 = vector.broadcast %52 : i32 to vector<48x128xi32>
    %55 = arith.addi %54, %53 : vector<48x128xi32>
    %c192_i32 = arith.constant 192 : i32
    %56 = vector.broadcast %c192_i32 : i32 to vector<48x128xi32>
    %57 = arith.cmpi slt, %55, %56 : vector<48x128xi32>
    %cst_36 = arith.constant 0.000000e+00 : f32
    %58 = vector.broadcast %cst_36 : f32 to vector<48x128xf32>
    %59 = arith.select %57, %51, %58 : vector<48x128xi1>, vector<48x128xf32>
    %c0_37 = arith.constant 0 : index
    %c0_38 = arith.constant 0 : index
    %60 = vector.load %arg15[%c0_37, %c0_38] : memref<48x128xf32, #tpu.memory_space<vmem>>, vector<48x128xf32>
    tpu.vector_store %arg15[%c0_37, %c0_38], %59 {strides = array<i32>} : memref<48x128xf32, #tpu.memory_space<vmem>>, vector<48x128xf32>,
    %c0_39 = arith.constant 0 : index
    %c0_40 = arith.constant 0 : index
    %61 = vector.load %arg3[%c0_39, %c0_40] : memref<48x128xbf16, #tpu.memory_space<vmem>>, vector<48x128xbf16>
    %62 = arith.extf %61 : vector<48x128xbf16> to vector<48x128xf32>
    %63 = arith.addf %51, %62 : vector<48x128xf32>
    %64 = arith.truncf %63 : vector<48x128xf32> to vector<48x128xbf16>
    %c0_41 = arith.constant 0 : index
    %c0_42 = arith.constant 0 : index
    %65 = vector.load %arg14[%c0_41, %c0_42] : memref<48x128xbf16, #tpu.memory_space<vmem>>, vector<48x128xbf16>
    tpu.vector_store %arg14[%c0_41, %c0_42], %64 {strides = array<i32>} : memref<48x128xbf16, #tpu.memory_space<vmem>>, vector<48x128xbf16>,
    return
  }
  func.func @transform_0(%arg0: i32) -> (i32, i32) {
    %c0_i32 = arith.constant 0 : i32
    %c0_i32_0 = arith.constant 0 : i32
    return %arg0, %c0_i32 : i32, i32
  }
  func.func @transform_1(%arg0: i32) -> (i32, i32) {
    %c0_i32 = arith.constant 0 : i32
    %c0_i32_0 = arith.constant 0 : i32
    return %arg0, %c0_i32 : i32, i32
  }
  func.func @transform_2(%arg0: i32) -> (i32, i32) {
    %c0_i32 = arith.constant 0 : i32
    %c0_i32_0 = arith.constant 0 : i32
    return %arg0, %c0_i32 : i32, i32
  }
  func.func @transform_3(%arg0: i32) -> (i32, i32) {
    %c0_i32 = arith.constant 0 : i32
    %c0_i32_0 = arith.constant 0 : i32
    %c0_i32_1 = arith.constant 0 : i32
    return %c0_i32, %c0_i32_0 : i32, i32
  }
  func.func @transform_4(%arg0: i32) -> (i32, i32) {
    %c0_i32 = arith.constant 0 : i32
    %c0_i32_0 = arith.constant 0 : i32
    %c0_i32_1 = arith.constant 0 : i32
    return %c0_i32, %c0_i32_0 : i32, i32
  }
  func.func @transform_5(%arg0: i32) -> (i32, i32) {
    %c0_i32 = arith.constant 0 : i32
    %c0_i32_0 = arith.constant 0 : i32
    %c0_i32_1 = arith.constant 0 : i32
    return %c0_i32, %c0_i32_0 : i32, i32
  }
  func.func @transform_6(%arg0: i32) -> (i32, i32) {
    %c0_i32 = arith.constant 0 : i32
    %c0_i32_0 = arith.constant 0 : i32
    %c0_i32_1 = arith.constant 0 : i32
    return %c0_i32, %c0_i32_0 : i32, i32
  }
  func.func @transform_7(%arg0: i32) -> (i32, i32) {
    %c0_i32 = arith.constant 0 : i32
    %c0_i32_0 = arith.constant 0 : i32
    %c0_i32_1 = arith.constant 0 : i32
    return %c0_i32, %c0_i32_0 : i32, i32
  }
  func.func @transform_8(%arg0: i32) -> (i32, i32) {
    %c0_i32 = arith.constant 0 : i32
    %c0_i32_0 = arith.constant 0 : i32
    %c0_i32_1 = arith.constant 0 : i32
    return %c0_i32, %c0_i32_0 : i32, i32
  }
  func.func @transform_9(%arg0: i32) -> (i32, i32) {
    %c0_i32 = arith.constant 0 : i32
    %c0_i32_0 = arith.constant 0 : i32
    %c0_i32_1 = arith.constant 0 : i32
    return %c0_i32, %c0_i32_0 : i32, i32
  }
  func.func @transform_10(%arg0: i32) -> (i32, i32) {
    %c0_i32 = arith.constant 0 : i32
    %c0_i32_0 = arith.constant 0 : i32
    %c0_i32_1 = arith.constant 0 : i32
    return %c0_i32, %c0_i32_0 : i32, i32
  }
  func.func @transform_11(%arg0: i32) -> (i32, i32) {
    %c0_i32 = arith.constant 0 : i32
    %c0_i32_0 = arith.constant 0 : i32
    %c0_i32_1 = arith.constant 0 : i32
    return %c0_i32, %c0_i32_0 : i32, i32
  }
  func.func @transform_12(%arg0: i32) -> (i32, i32) {
    %c0_i32 = arith.constant 0 : i32
    %c0_i32_0 = arith.constant 0 : i32
    %c0_i32_1 = arith.constant 0 : i32
    return %c0_i32, %c0_i32_0 : i32, i32
  }
  func.func @transform_13(%arg0: i32) -> (i32, i32) {
    %c0_i32 = arith.constant 0 : i32
    %c0_i32_0 = arith.constant 0 : i32
    return %arg0, %c0_i32 : i32, i32
  }
  func.func @transform_14(%arg0: i32) -> (i32, i32) {
    %c0_i32 = arith.constant 0 : i32
    %c0_i32_0 = arith.constant 0 : i32
    return %arg0, %c0_i32 : i32, i32
  }
}

module attributes {stable_mosaic.version = 11 : i64} {
  func.func @_mlp_kernel(%arg0: i32, %arg1: memref<16x128xbf16, #tpu.memory_space<vmem>>, %arg2: memref<128x128xbf16, #tpu.memory_space<vmem>>, %arg3: memref<1x128xf32, #tpu.memory_space<vmem>>, %arg4: memref<128x128xbf16, #tpu.memory_space<vmem>>, %arg5: memref<1x128xf32, #tpu.memory_space<vmem>>, %arg6: memref<128x128xbf16, #tpu.memory_space<vmem>>, %arg7: memref<1x128xf32, #tpu.memory_space<vmem>>, %arg8: memref<16x128xf32, #tpu.memory_space<vmem>>) attributes {dimension_semantics = [#tpu.dimension_semantics<parallel>], iteration_bounds = array<i64: 4>, scalar_prefetch = 0 : i64, scratch_operands = 0 : i64, tpu.core_type = #tpu.core_type<tc>, window_params = [{transform_indices = @transform_0, window_bounds = array<i64: 16, 128>}, {pipeline_mode = #tpu.pipeline_mode<synchronous>, transform_indices = @transform_1, window_bounds = array<i64: 128, 128>}, {pipeline_mode = #tpu.pipeline_mode<synchronous>, transform_indices = @transform_2, window_bounds = array<i64: 1, 128>}, {pipeline_mode = #tpu.pipeline_mode<synchronous>, transform_indices = @transform_3, window_bounds = array<i64: 128, 128>}, {pipeline_mode = #tpu.pipeline_mode<synchronous>, transform_indices = @transform_4, window_bounds = array<i64: 1, 128>}, {pipeline_mode = #tpu.pipeline_mode<synchronous>, transform_indices = @transform_5, window_bounds = array<i64: 128, 128>}, {pipeline_mode = #tpu.pipeline_mode<synchronous>, transform_indices = @transform_6, window_bounds = array<i64: 1, 128>}, {transform_indices = @transform_7, window_bounds = array<i64: 16, 128>}]} {
    %c0 = arith.constant 0 : index
    %c0_0 = arith.constant 0 : index
    %0 = vector.load %arg1[%c0, %c0_0] : memref<16x128xbf16, #tpu.memory_space<vmem>>, vector<16x128xbf16>
    %c0_1 = arith.constant 0 : index
    %c0_2 = arith.constant 0 : index
    %1 = vector.load %arg2[%c0_1, %c0_2] : memref<128x128xbf16, #tpu.memory_space<vmem>>, vector<128x128xbf16>
    %cst = arith.constant dense<0.000000e+00> : vector<16x128xf32>
    %2 = tpu.matmul %0, %1, %cst {dimension_numbers = #tpu.dot_dimension_numbers<[1], [0], [0], [1], [0, 0, 1, 1], [], []>} : vector<16x128xbf16>, vector<128x128xbf16>, vector<16x128xf32> -> vector<16x128xf32>
    %c0_3 = arith.constant 0 : index
    %c0_4 = arith.constant 0 : index
    %3 = vector.load %arg3[%c0_3, %c0_4] : memref<1x128xf32, #tpu.memory_space<vmem>>, vector<1x128xf32>
    %4 = vector.broadcast %3 : vector<1x128xf32> to vector<16x128xf32>
    %5 = arith.addf %2, %4 : vector<16x128xf32>
    %cst_5 = arith.constant 0.000000e+00 : f32
    %6 = vector.broadcast %cst_5 : f32 to vector<16x128xf32>
    %7 = arith.maximumf %5, %6 : vector<16x128xf32>
    %8 = arith.truncf %7 : vector<16x128xf32> to vector<16x128xbf16>
    %c0_6 = arith.constant 0 : index
    %c0_7 = arith.constant 0 : index
    %9 = vector.load %arg4[%c0_6, %c0_7] : memref<128x128xbf16, #tpu.memory_space<vmem>>, vector<128x128xbf16>
    %cst_8 = arith.constant dense<0.000000e+00> : vector<16x128xf32>
    %10 = tpu.matmul %8, %9, %cst_8 {dimension_numbers = #tpu.dot_dimension_numbers<[1], [0], [0], [1], [0, 0, 1, 1], [], []>} : vector<16x128xbf16>, vector<128x128xbf16>, vector<16x128xf32> -> vector<16x128xf32>
    %c0_9 = arith.constant 0 : index
    %c0_10 = arith.constant 0 : index
    %11 = vector.load %arg5[%c0_9, %c0_10] : memref<1x128xf32, #tpu.memory_space<vmem>>, vector<1x128xf32>
    %12 = vector.broadcast %11 : vector<1x128xf32> to vector<16x128xf32>
    %13 = arith.addf %10, %12 : vector<16x128xf32>
    %cst_11 = arith.constant 0.000000e+00 : f32
    %14 = vector.broadcast %cst_11 : f32 to vector<16x128xf32>
    %15 = arith.maximumf %13, %14 : vector<16x128xf32>
    %16 = arith.truncf %15 : vector<16x128xf32> to vector<16x128xbf16>
    %c0_12 = arith.constant 0 : index
    %c0_13 = arith.constant 0 : index
    %17 = vector.load %arg6[%c0_12, %c0_13] : memref<128x128xbf16, #tpu.memory_space<vmem>>, vector<128x128xbf16>
    %cst_14 = arith.constant dense<0.000000e+00> : vector<16x128xf32>
    %18 = tpu.matmul %16, %17, %cst_14 {dimension_numbers = #tpu.dot_dimension_numbers<[1], [0], [0], [1], [0, 0, 1, 1], [], []>} : vector<16x128xbf16>, vector<128x128xbf16>, vector<16x128xf32> -> vector<16x128xf32>
    %c0_15 = arith.constant 0 : index
    %c0_16 = arith.constant 0 : index
    %19 = vector.load %arg7[%c0_15, %c0_16] : memref<1x128xf32, #tpu.memory_space<vmem>>, vector<1x128xf32>
    %20 = vector.broadcast %19 : vector<1x128xf32> to vector<16x128xf32>
    %21 = arith.addf %18, %20 : vector<16x128xf32>
    %c0_17 = arith.constant 0 : index
    %c0_18 = arith.constant 0 : index
    %22 = vector.load %arg8[%c0_17, %c0_18] : memref<16x128xf32, #tpu.memory_space<vmem>>, vector<16x128xf32>
    tpu.vector_store %arg8[%c0_17, %c0_18], %21 {strides = array<i32>} : memref<16x128xf32, #tpu.memory_space<vmem>>, vector<16x128xf32>,
    return
  }
  func.func @transform_0(%arg0: i32) -> (i32, i32) {
    %c0_i32 = arith.constant 0 : i32
    %c0_i32_0 = arith.constant 0 : i32
    return %arg0, %c0_i32 : i32, i32
  }
  func.func @transform_1(%arg0: i32) -> (i32, i32) {
    %c0_i32 = arith.constant 0 : i32
    %c0_i32_0 = arith.constant 0 : i32
    %c0_i32_1 = arith.constant 0 : i32
    return %c0_i32, %c0_i32_0 : i32, i32
  }
  func.func @transform_2(%arg0: i32) -> (i32, i32) {
    %c0_i32 = arith.constant 0 : i32
    %c0_i32_0 = arith.constant 0 : i32
    %c0_i32_1 = arith.constant 0 : i32
    return %c0_i32, %c0_i32_0 : i32, i32
  }
  func.func @transform_3(%arg0: i32) -> (i32, i32) {
    %c0_i32 = arith.constant 0 : i32
    %c0_i32_0 = arith.constant 0 : i32
    %c0_i32_1 = arith.constant 0 : i32
    return %c0_i32, %c0_i32_0 : i32, i32
  }
  func.func @transform_4(%arg0: i32) -> (i32, i32) {
    %c0_i32 = arith.constant 0 : i32
    %c0_i32_0 = arith.constant 0 : i32
    %c0_i32_1 = arith.constant 0 : i32
    return %c0_i32, %c0_i32_0 : i32, i32
  }
  func.func @transform_5(%arg0: i32) -> (i32, i32) {
    %c0_i32 = arith.constant 0 : i32
    %c0_i32_0 = arith.constant 0 : i32
    %c0_i32_1 = arith.constant 0 : i32
    return %c0_i32, %c0_i32_0 : i32, i32
  }
  func.func @transform_6(%arg0: i32) -> (i32, i32) {
    %c0_i32 = arith.constant 0 : i32
    %c0_i32_0 = arith.constant 0 : i32
    %c0_i32_1 = arith.constant 0 : i32
    return %c0_i32, %c0_i32_0 : i32, i32
  }
  func.func @transform_7(%arg0: i32) -> (i32, i32) {
    %c0_i32 = arith.constant 0 : i32
    %c0_i32_0 = arith.constant 0 : i32
    return %arg0, %c0_i32 : i32, i32
  }
}

</mosaic_0001>

<llo_original>
// kernel: learned_simulator_forward.8
$region0: #{learned_simulator_forward.8}
  #allocation0 [shape = 'u32[]', space=smem, size = 0x4, offset = 0x4, fixed_abs, tag = 'smem constant byte address 0x4 - core index']
  #allocation1 [shape = 'u32[144,128]{1,0:T(1,128)}', space=vmem, size = 0x12000, scoped, tag = 'internal scratch']
  %s0 = inlined_call_operand.vmem [shape: bf16[192,128], index: 0, kind: input, shape index: {}]
  %s1 = inlined_call_operand.vmem [shape: bf16[128,128], index: 1, kind: input, shape index: {}]
  %s2 = inlined_call_operand.vmem [shape: f32[1,128], index: 2, kind: input, shape index: {}, may-alias: {2,4,6,8}]
  %s3 = inlined_call_operand.vmem [shape: bf16[128,128], index: 3, kind: input, shape index: {}]
  %s4 = inlined_call_operand.vmem [shape: f32[1,128], index: 4, kind: input, shape index: {}, may-alias: {2,4,6,8}]
  %s5 = inlined_call_operand.vmem [shape: bf16[128,128], index: 5, kind: input, shape index: {}]
  %s6 = inlined_call_operand.vmem [shape: f32[1,128], index: 6, kind: input, shape index: {}, may-alias: {2,4,6,8}]
  %s7 = inlined_call_operand.vmem [shape: f32[1,128], index: 7, kind: input, shape index: {}]
  %s8 = inlined_call_operand.vmem [shape: f32[1,128], index: 8, kind: input, shape index: {}, may-alias: {2,4,6,8}]
  %s9 = inlined_call_operand.vmem [shape: bf16[192,128], index: 9, kind: output, shape index: {}]
  %s10 = sld [smem:[#allocation0]]
  $region69: #{learned_simulator_forward.8} parent=0
    _
  %s12 = ssub.s32 1, %s10
  %s13 = scalar_select 0, %s12, %s10
  loop: start=0, step=1, limit=6
  $region2: #{learned_simulator_forward.8} parent=0 // loop_pre_header
    _
  $region3: #{learned_simulator_forward.8} parent=0 // loop_header
    %s15 = sphi 0, %s19
    %p16 = scmp.ge.s32.totalorder %s15, 6
    %s25 = sphi 0, %s27
    %s28 = sphi 0, %s25
    %s29 = sphi 0, %s28
    %s45 = sphi 0, %s29
    %s49 = sphi 0, %s49
    %s51 = sphi 0, %s49
    %s52 = sphi 0, %s51
    %s66 = sphi 0, %s52
    %s70 = sphi 0, %s70
    %s72 = sphi 0, %s70
    %s73 = sphi 0, %s72
    %s87 = sphi 0, %s73
    %s91 = sphi 0, %s91
    %s93 = sphi 0, %s91
    %s94 = sphi 0, %s93
    %s108 = sphi 0, %s94
    %s112 = sphi 0, %s112
    %s114 = sphi 0, %s112
    %s115 = sphi 0, %s114
    %s129 = sphi 0, %s115
    %s133 = sphi 0, %s133
    %s135 = sphi 0, %s133
    %s136 = sphi 0, %s135
    %s150 = sphi 0, %s136
    %s154 = sphi 0, %s154
    %s156 = sphi 0, %s154
    %s157 = sphi 0, %s156
    %s171 = sphi 0, %s157
    %s175 = sphi 0, %s175
    %s177 = sphi 0, %s175
    %s178 = sphi 0, %s177
    %s192 = sphi 0, %s178
    %s196 = sphi 0, %s196
    %s198 = sphi 0, %s196
    %s199 = sphi 0, %s198
    %s213 = sphi 0, %s199
    %s219 = sphi 0, %s221
    %s222 = sphi 0, %s219
    %s223 = sphi 0, %s222
    %s239 = sphi 0, %s223
  $region4: #{learned_simulator_forward.8} parent=0 // loop_header_branch
    %18 = sbr.rel (%p16) target = $region8
  $region5: #{learned_simulator_forward.8} parent=0 // loop_body
    %s20 = ssub.s32 %s15, 1
    %s21 = ssub.s32 %s15, 2
    %s22 = sadd.s32 %s15, 1
    %s23 = ssub.s32 %s15, %s22
    %p24 = scmp.eq.s32.totalorder %s23, 0
    %s26 = sadd.s32 %s25, 1
    %s27 = scalar_select %p24, %s25, %s26
    %p30 = pneg %p24
    %p31 = scmp.eq.s32.totalorder %s15, 3
    %p32 = por %p30, %p31
    %p33 = scmp.ne.s32.totalorder %s25, %s28
    %p34 = scmp.eq.s32.totalorder %s15, 0
    %p35 = por %p33, %p34
    %p36 = scmp.ne.s32.totalorder %s25, %s28
    %p37 = scmp.eq.s32.totalorder %s20, 3
    %p38 = por %p36, %p37
    %p39 = scmp.ne.s32.totalorder %s28, %s29
    %p40 = scmp.eq.s32.totalorder %s20, 0
    %p41 = por %p39, %p40
    %p42 = scmp.ne.s32.totalorder %s28, %s29
    %p43 = scmp.eq.s32.totalorder %s21, 3
    %p44 = por %p42, %p43
    %p46 = scmp.ne.s32.totalorder %s29, %s45
    %p47 = scmp.eq.s32.totalorder %s21, 0
    %p48 = por %p46, %p47
    %s50 = sadd.s32 %s49, 1
    %p53 = scmp.eq.s32.totalorder %s15, 3
    %p54 = scmp.ne.s32.totalorder %s49, %s51
    %p55 = scmp.eq.s32.totalorder %s15, 0
    %p56 = por %p54, %p55
    %p57 = scmp.ne.s32.totalorder %s49, %s51
    %p58 = scmp.eq.s32.totalorder %s20, 3
    %p59 = por %p57, %p58
    %p60 = scmp.ne.s32.totalorder %s51, %s52
    %p61 = scmp.eq.s32.totalorder %s20, 0
    %p62 = por %p60, %p61
    %p63 = scmp.ne.s32.totalorder %s51, %s52
    %p64 = scmp.eq.s32.totalorder %s21, 3
    %p65 = por %p63, %p64
    %p67 = scmp.ne.s32.totalorder %s52, %s66
    %p68 = scmp.eq.s32.totalorder %s21, 0
    %p69 = por %p67, %p68
    %s71 = sadd.s32 %s70, 1
    %p74 = scmp.eq.s32.totalorder %s15, 3
    %p75 = scmp.ne.s32.totalorder %s70, %s72
    %p76 = scmp.eq.s32.totalorder %s15, 0
    %p77 = por %p75, %p76
    %p78 = scmp.ne.s32.totalorder %s70, %s72
    %p79 = scmp.eq.s32.totalorder %s20, 3
    %p80 = por %p78, %p79
    %p81 = scmp.ne.s32.totalorder %s72, %s73
    %p82 = scmp.eq.s32.totalorder %s20, 0
    %p83 = por %p81, %p82
    %p84 = scmp.ne.s32.totalorder %s72, %s73
    %p85 = scmp.eq.s32.totalorder %s21, 3
    %p86 = por %p84, %p85
    %p88 = scmp.ne.s32.totalorder %s73, %s87
    %p89 = scmp.eq.s32.totalorder %s21, 0
    %p90 = por %p88, %p89
    %s92 = sadd.s32 %s91, 1
    %p95 = scmp.eq.s32.totalorder %s15, 3
    %p96 = scmp.ne.s32.totalorder %s91, %s93
    %p97 = scmp.eq.s32.totalorder %s15, 0
    %p98 = por %p96, %p97
    %p99 = scmp.ne.s32.totalorder %s91, %s93
    %p100 = scmp.eq.s32.totalorder %s20, 3
    %p101 = por %p99, %p100
    %p102 = scmp.ne.s32.totalorder %s93, %s94
    %p103 = scmp.eq.s32.totalorder %s20, 0
    %p104 = por %p102, %p103
    %p105 = scmp.ne.s32.totalorder %s93, %s94
    %p106 = scmp.eq.s32.totalorder %s21, 3
    %p107 = por %p105, %p106
    %p109 = scmp.ne.s32.totalorder %s94, %s108
    %p110 = scmp.eq.s32.totalorder %s21, 0
    %p111 = por %p109, %p110
    %s113 = sadd.s32 %s112, 1
    %p116 = scmp.eq.s32.totalorder %s15, 3
    %p117 = scmp.ne.s32.totalorder %s112, %s114
    %p118 = scmp.eq.s32.totalorder %s15, 0
    %p119 = por %p117, %p118
    %p120 = scmp.ne.s32.totalorder %s112, %s114
    %p121 = scmp.eq.s32.totalorder %s20, 3
    %p122 = por %p120, %p121
    %p123 = scmp.ne.s32.totalorder %s114, %s115
    %p124 = scmp.eq.s32.totalorder %s20, 0
    %p125 = por %p123, %p124
    %p126 = scmp.ne.s32.totalorder %s114, %s115
    %p127 = scmp.eq.s32.totalorder %s21, 3
    %p128 = por %p126, %p127
    %p130 = scmp.ne.s32.totalorder %s115, %s129
    %p131 = scmp.eq.s32.totalorder %s21, 0
    %p132 = por %p130, %p131
    %s134 = sadd.s32 %s133, 1
    %p137 = scmp.eq.s32.totalorder %s15, 3
    %p138 = scmp.ne.s32.totalorder %s133, %s135
    %p139 = scmp.eq.s32.totalorder %s15, 0
    %p140 = por %p138, %p139
    %p141 = scmp.ne.s32.totalorder %s133, %s135
    %p142 = scmp.eq.s32.totalorder %s20, 3
    %p143 = por %p141, %p142
    %p144 = scmp.ne.s32.totalorder %s135, %s136
    %p145 = scmp.eq.s32.totalorder %s20, 0
    %p146 = por %p144, %p145
    %p147 = scmp.ne.s32.totalorder %s135, %s136
    %p148 = scmp.eq.s32.totalorder %s21, 3
    %p149 = por %p147, %p148
    %p151 = scmp.ne.s32.totalorder %s136, %s150
    %p152 = scmp.eq.s32.totalorder %s21, 0
    %p153 = por %p151, %p152
    %s155 = sadd.s32 %s154, 1
    %p158 = scmp.eq.s32.totalorder %s15, 3
    %p159 = scmp.ne.s32.totalorder %s154, %s156
    %p160 = scmp.eq.s32.totalorder %s15, 0
    %p161 = por %p159, %p160
    %p162 = scmp.ne.s32.totalorder %s154, %s156
    %p163 = scmp.eq.s32.totalorder %s20, 3
    %p164 = por %p162, %p163
    %p165 = scmp.ne.s32.totalorder %s156, %s157
    %p166 = scmp.eq.s32.totalorder %s20, 0
    %p167 = por %p165, %p166
    %p168 = scmp.ne.s32.totalorder %s156, %s157
    %p169 = scmp.eq.s32.totalorder %s21, 3
    %p170 = por %p168, %p169
    %p172 = scmp.ne.s32.totalorder %s157, %s171
    %p173 = scmp.eq.s32.totalorder %s21, 0
    %p174 = por %p172, %p173
    %s176 = sadd.s32 %s175, 1
    %p179 = scmp.eq.s32.totalorder %s15, 3
    %p180 = scmp.ne.s32.totalorder %s175, %s177
    %p181 = scmp.eq.s32.totalorder %s15, 0
    %p182 = por %p180, %p181
    %p183 = scmp.ne.s32.totalorder %s175, %s177
    %p184 = scmp.eq.s32.totalorder %s20, 3
    %p185 = por %p183, %p184
    %p186 = scmp.ne.s32.totalorder %s177, %s178
    %p187 = scmp.eq.s32.totalorder %s20, 0
    %p188 = por %p186, %p187
    %p189 = scmp.ne.s32.totalorder %s177, %s178
    %p190 = scmp.eq.s32.totalorder %s21, 3
    %p191 = por %p189, %p190
    %p193 = scmp.ne.s32.totalorder %s178, %s192
    %p194 = scmp.eq.s32.totalorder %s21, 0
    %p195 = por %p193, %p194
    %s197 = sadd.s32 %s196, 1
    %p200 = scmp.eq.s32.totalorder %s15, 3
    %p201 = scmp.ne.s32.totalorder %s196, %s198
    %p202 = scmp.eq.s32.totalorder %s15, 0
    %p203 = por %p201, %p202
    %p204 = scmp.ne.s32.totalorder %s196, %s198
    %p205 = scmp.eq.s32.totalorder %s20, 3
    %p206 = por %p204, %p205
    %p207 = scmp.ne.s32.totalorder %s198, %s199
    %p208 = scmp.eq.s32.totalorder %s20, 0
    %p209 = por %p207, %p208
    %p210 = scmp.ne.s32.totalorder %s198, %s199
    %p211 = scmp.eq.s32.totalorder %s21, 3
    %p212 = por %p210, %p211
    %p214 = scmp.ne.s32.totalorder %s199, %s213
    %p215 = scmp.eq.s32.totalorder %s21, 0
    %p216 = por %p214, %p215
    %s217 = ssub.s32 %s15, %s22
    %p218 = scmp.eq.s32.totalorder %s217, 0
    %s220 = sadd.s32 %s219, 1
    %s221 = scalar_select %p218, %s219, %s220
    %p224 = pneg %p218
    %p225 = scmp.eq.s32.totalorder %s15, 3
    %p226 = por %p224, %p225
    %p227 = scmp.ne.s32.totalorder %s219, %s222
    %p228 = scmp.eq.s32.totalorder %s15, 0
    %p229 = por %p227, %p228
    %p230 = scmp.ne.s32.totalorder %s219, %s222
    %p231 = scmp.eq.s32.totalorder %s20, 3
    %p232 = por %p230, %p231
    %p233 = scmp.ne.s32.totalorder %s222, %s223
    %p234 = scmp.eq.s32.totalorder %s20, 0
    %p235 = por %p233, %p234
    %p236 = scmp.ne.s32.totalorder %s222, %s223
    %p237 = scmp.eq.s32.totalorder %s21, 3
    %p238 = por %p236, %p237
    %p240 = scmp.ne.s32.totalorder %s223, %s239
    %p241 = scmp.eq.s32.totalorder %s21, 0
    %p242 = por %p240, %p241
    %p243 = scmp.le.s32.totalorder 1, %s15
    %p244 = scmp.lt.s32.totalorder %s15, 5
    %p245 = pnand %p243, %p244
    %p246 = pneg %p245
    // Predicated region
    $region9: #{learned_simulator_forward.8} parent=5 // pred_check
      _
    $region10: #{learned_simulator_forward.8} parent=5 // pred_check_branch
      %248 = sbr.rel (%p245) target = $region12
    $region11: #{learned_simulator_forward.8} parent=5 // pred_region
      %s249 = ssub.s32 %s15, 1
      // Predicated region
      $region13: #{learned_simulator_forward.8} parent=11 // pred_check
        %p250 = pneg %p62
      $region14: #{learned_simulator_forward.8} parent=11 // pred_check_branch
        %252 = sbr.rel (%p250) target = $region16
      $region15: #{learned_simulator_forward.8} parent=11 // pred_region
        _
      $region16: #{learned_simulator_forward.8} parent=11 // pred_fallthru
        _
      // Predicated region
      $region17: #{learned_simulator_forward.8} parent=11 // pred_check
        %p253 = pneg %p83
      $region18: #{learned_simulator_forward.8} parent=11 // pred_check_branch
        %255 = sbr.rel (%p253) target = $region20
      $region19: #{learned_simulator_forward.8} parent=11 // pred_region
        _
      $region20: #{learned_simulator_forward.8} parent=11 // pred_fallthru
        _
      // Predicated region
      $region21: #{learned_simulator_forward.8} parent=11 // pred_check
        %p256 = pneg %p104
      $region22: #{learned_simulator_forward.8} parent=11 // pred_check_branch
        %258 = sbr.rel (%p256) target = $region24
      $region23: #{learned_simulator_forward.8} parent=11 // pred_region
        _
      $region24: #{learned_simulator_forward.8} parent=11 // pred_fallthru
        _
      // Predicated region
      $region25: #{learned_simulator_forward.8} parent=11 // pred_check
        %p259 = pneg %p125
      $region26: #{learned_simulator_forward.8} parent=11 // pred_check_branch
        %261 = sbr.rel (%p259) target = $region28
      $region27: #{learned_simulator_forward.8} parent=11 // pred_region
        _
      $region28: #{learned_simulator_forward.8} parent=11 // pred_fallthru
        _
      // Predicated region
      $region29: #{learned_simulator_forward.8} parent=11 // pred_check
        %p262 = pneg %p146
      $region30: #{learned_simulator_forward.8} parent=11 // pred_check_branch
        %264 = sbr.rel (%p262) target = $region32
      $region31: #{learned_simulator_forward.8} parent=11 // pred_region
        _
      $region32: #{learned_simulator_forward.8} parent=11 // pred_fallthru
        _
      // Predicated region
      $region33: #{learned_simulator_forward.8} parent=11 // pred_check
        %p265 = pneg %p167
      $region34: #{learned_simulator_forward.8} parent=11 // pred_check_branch
        %267 = sbr.rel (%p265) target = $region36
      $region35: #{learned_simulator_forward.8} parent=11 // pred_region
        _
      $region36: #{learned_simulator_forward.8} parent=11 // pred_fallthru
        _
      // Predicated region
      $region37: #{learned_simulator_forward.8} parent=11 // pred_check
        %p268 = pneg %p188
      $region38: #{learned_simulator_forward.8} parent=11 // pred_check_branch
        %270 = sbr.rel (%p268) target = $region40
      $region39: #{learned_simulator_forward.8} parent=11 // pred_region
        _
      $region40: #{learned_simulator_forward.8} parent=11 // pred_fallthru
        _
      // Predicated region
      $region41: #{learned_simulator_forward.8} parent=11 // pred_check
        %p271 = pneg %p209
      $region42: #{learned_simulator_forward.8} parent=11 // pred_check_branch
        %273 = sbr.rel (%p271) target = $region44
      $region43: #{learned_simulator_forward.8} parent=11 // pred_region
        _
      $region44: #{learned_simulator_forward.8} parent=11 // pred_fallthru
        _
    $region12: #{learned_simulator_forward.8} parent=5 // pred_fallthru
      _
    %p274 = scmp.lt.s32.totalorder %s15, 4
    // Predicated region
    $region45: #{learned_simulator_forward.8} parent=5 // pred_check
      %p275 = pneg %p274
    $region46: #{learned_simulator_forward.8} parent=5 // pred_check_branch
      %277 = sbr.rel (%p275) target = $region48
    $region47: #{learned_simulator_forward.8} parent=5 // pred_region
      // Predicated region
      $region49: #{learned_simulator_forward.8} parent=47 // pred_check
        %p278 = pneg %p35
      $region50: #{learned_simulator_forward.8} parent=47 // pred_check_branch
        %280 = sbr.rel (%p278) target = $region52
      $region51: #{learned_simulator_forward.8} parent=47 // pred_region
        %s281 = smul.u32 6, %s15
        %p282 = scmp.lt.s32.totalorder %s281, 23
        %s283 = scalar_select %p282, %s281, 23
        %s284 = smul.addr %s283, 4
        %s285 = scalar_lea.vmem %s0, %s284
        %s286 = smul.u32 6, %s15
      $region52: #{learned_simulator_forward.8} parent=47 // pred_fallthru
        _
    $region48: #{learned_simulator_forward.8} parent=5 // pred_fallthru
      _
    %p287 = scmp.le.s32.totalorder 1, %s15
    %p288 = scmp.lt.s32.totalorder %s15, 5
    %p289 = pnand %p287, %p288
    %p290 = pneg %p289
    // Predicated region
    $region53: #{learned_simulator_forward.8} parent=5 // pred_check
      _
    $region54: #{learned_simulator_forward.8} parent=5 // pred_check_branch
      %292 = sbr.rel (%p289) target = $region56
    $region55: #{learned_simulator_forward.8} parent=5 // pred_region
      %s293 = ssub.s32 %s15, 1
      %s294 = smul.u32 6, %s20
      %p295 = scmp.lt.s32.totalorder %s294, 23
      %s296 = scalar_select %p295, %s294, 23
      %s297 = smul.addr %s296, 4
      %s298 = scalar_lea.vmem %s0, %s297
      %p299 = pneg %p41
      %p300 = pneg %p38
      %p301 = pneg %p62
      %p302 = pneg %p59
      %p303 = pneg %p83
      %p304 = pneg %p80
      %p305 = pneg %p104
      %p306 = pneg %p101
      %p307 = pneg %p125
      %p308 = pneg %p122
      %p309 = pneg %p146
      %p310 = pneg %p143
      %p311 = pneg %p167
      %p312 = pneg %p164
      %p313 = pneg %p188
      %p314 = pneg %p185
      %p315 = pneg %p209
      %p316 = pneg %p206
      %p317 = pneg %p235
      %p318 = pneg %p232
      %s319 = smul.u32 6, %s20
      %p320 = scmp.lt.s32.totalorder %s319, 23
      %s321 = scalar_select %p320, %s319, 23
      %s322 = smul.addr %s321, 4
      %s323 = scalar_lea.vmem %s9, %s322
      %s324 = smul.u32 6, %s20
      %p325 = scmp.lt.s32.totalorder %s324, 23
      %s326 = scalar_select %p325, %s324, 23
      %s327 = smul.addr %s326, 4
      %s328 = scalar_lea.vmem %s0, %s327
      %s329 = smul.u32 6, %s20
      %s330 = smul.u32 6, %s20
      %p331 = scmp.lt.s32.totalorder %s330, 23
      %s332 = scalar_select %p331, %s330, 23
      %s333 = smul.addr %s332, 4
      %s334 = scalar_lea.vmem %s9, %s333
      %s335 = smul.u32 6, %s20
      %v337 = vld [vmem:[%s328] sm:$0xf]
      %v338 = vld [vmem:[%s328 + $0x4] sm:$0xf]
      %v339 = vld [vmem:[%s328 + $0x8] sm:$0xf]
      %v340 = vld [vmem:[%s328 + $0xc] sm:$0xf]
      %v341 = vld [vmem:[%s328 + $0x10] sm:$0xf]
      %v342 = vld [vmem:[%s328 + $0x14] sm:$0xf]
      %v343 = vld [vmem:[%s1] sm:$0xf]
      %v344 = vld [vmem:[%s1 + $0x4] sm:$0xf]
      %v345 = vld [vmem:[%s1 + $0x8] sm:$0xf]
      %v346 = vld [vmem:[%s1 + $0xc] sm:$0xf]
      %v347 = vld [vmem:[%s1 + $0x10] sm:$0xf]
      %v348 = vld [vmem:[%s1 + $0x14] sm:$0xf]
      %v349 = vld [vmem:[%s1 + $0x18] sm:$0xf]
      %v350 = vld [vmem:[%s1 + $0x1c] sm:$0xf]
      %v351 = vld [vmem:[%s1 + $0x20] sm:$0xf]
      %v352 = vld [vmem:[%s1 + $0x24] sm:$0xf]
      %v353 = vld [vmem:[%s1 + $0x28] sm:$0xf]
      %v354 = vld [vmem:[%s1 + $0x2c] sm:$0xf]
      %v355 = vld [vmem:[%s1 + $0x30] sm:$0xf]
      %v356 = vld [vmem:[%s1 + $0x34] sm:$0xf]
      %v357 = vld [vmem:[%s1 + $0x38] sm:$0xf]
      %v358 = vld [vmem:[%s1 + $0x3c] sm:$0xf]
      %v359 = vld [vmem:[%s2] sm:$0x1]
      %v361 = vlaneseq
      %v362 = vshrl.u32 %v361, 7
      %v363 = vsub.s32 0, %v362
      %v364 = vrot.slane %v359, %v363
      %v372 = vunpack.c.l.b16 %v337
      %v373 = vunpack.c.l.b16 %v338
      %v374 = vunpack.c.l.b16 %v339
      %v375 = vunpack.c.l.b16 %v340
      %v376 = vunpack.c.l.b16 %v341
      %v377 = vunpack.c.l.b16 %v342
      %v378 = vpack.c.b16 %v373, %v372
      %v379 = vpack.c.b16 %v375, %v374
      %v380 = vpack.c.b16 %v377, %v376
      %v400 = vunpack.c.l.b16 %v343
      %v401 = vunpack.c.l.b16 %v344
      %v402 = vunpack.c.l.b16 %v345
      %v403 = vunpack.c.l.b16 %v346
      %v404 = vunpack.c.l.b16 %v347
      %v405 = vunpack.c.l.b16 %v348
      %v406 = vunpack.c.l.b16 %v349
      %v407 = vunpack.c.l.b16 %v350
      %v408 = vunpack.c.l.b16 %v351
      %v409 = vunpack.c.l.b16 %v352
      %v410 = vunpack.c.l.b16 %v353
      %v411 = vunpack.c.l.b16 %v354
      %v412 = vunpack.c.l.b16 %v355
      %v413 = vunpack.c.l.b16 %v356
      %v414 = vunpack.c.l.b16 %v357
      %v415 = vunpack.c.l.b16 %v358
      %v416 = vpack.c.b16 %v401, %v400
      %v417 = vpack.c.b16 %v403, %v402
      %v418 = vpack.c.b16 %v405, %v404
      %v419 = vpack.c.b16 %v407, %v406
      %v420 = vpack.c.b16 %v409, %v408
      %v421 = vpack.c.b16 %v411, %v410
      %v422 = vpack.c.b16 %v413, %v412
      %v423 = vpack.c.b16 %v415, %v414
      %432 = vmatprep.subr.bf16.mxu0 0
      %433 = vmatpush1.bf16.msra.mxu0 %v423
      %434 = vmatprep.subr.bf16.mxu0 0
      %435 = vmatpush1.bf16.msra.mxu0 %v422
      %436 = vmatprep.subr.bf16.mxu0 0
      %437 = vmatpush1.bf16.msra.mxu0 %v421
      %438 = vmatprep.subr.bf16.mxu0 0
      %439 = vmatpush1.bf16.msra.mxu0 %v420
      %440 = vmatprep.subr.bf16.mxu0 0
      %441 = vmatpush1.bf16.msra.mxu0 %v419
      %442 = vmatprep.subr.bf16.mxu0 0
      %443 = vmatpush1.bf16.msra.mxu0 %v418
      %444 = vmatprep.subr.bf16.mxu0 0
      %445 = vmatpush1.bf16.msra.mxu0 %v417
      %446 = vmatprep.subr.bf16.mxu0 0
      %447 = vmatpush1.bf16.msra.mxu0 %v416
      %448 = vmatprep.subr.bf16.mxu0 0
      %449 = vmatpush2.bf16.msra.mxu0 0
      %450 = vmatprep.subr.bf16.mxu0 0
      %451 = vmatpush2.bf16.msra.mxu0 0
      %452 = vmatprep.subr.bf16.mxu0 0
      %453 = vmatpush2.bf16.msra.mxu0 0
      %454 = vmatprep.subr.bf16.mxu0 0
      %455 = vmatpush2.bf16.msra.mxu0 0
      %456 = vmatprep.subr.bf16.mxu0 0
      %457 = vmatpush2.bf16.msra.mxu0 0
      %458 = vmatprep.subr.bf16.mxu0 0
      %459 = vmatpush2.bf16.msra.mxu0 0
      %460 = vmatprep.subr.bf16.mxu0 0
      %461 = vmatpush2.bf16.msra.mxu0 0
      %462 = vmatprep.subr.bf16.mxu0 0
      %463 = vmatpush2.bf16.msra.mxu0 0
      %464 = vmatprep.mubr.bf16.mxu0 0
      %465 = vmatmul.mubr.bf16.gmra.mxu0 %v378
      %v466 = vpop.f32.mrf.mxu0
      %v467 = vadd.f32 %v364, %v466
      %v468 = vpop.f32.mrf.mxu0
      %v469 = vpop.f32.mrf.mxu0
      %v470 = vadd.f32 %v364, %v469
      %v471 = vpop.f32.mrf.mxu0
      %472 = vmatprep.mubr.bf16.mxu0 0
      %473 = vmatmul.mubr.bf16.gmra.mxu0 %v379
      %v474 = vpop.f32.mrf.mxu0
      %v475 = vadd.f32 %v364, %v474
      %v476 = vpop.f32.mrf.mxu0
      %v477 = vpop.f32.mrf.mxu0
      %v478 = vadd.f32 %v364, %v477
      %v479 = vpop.f32.mrf.mxu0
      %480 = vmatprep.mubr.bf16.mxu0 0
      %481 = vmatmul.mubr.bf16.gmra.mxu0 %v380
      %v482 = vpop.f32.mrf.mxu0
      %v483 = vadd.f32 %v364, %v482
      %v484 = vpop.f32.mrf.mxu0
      %v485 = vpop.f32.mrf.mxu0
      %v486 = vadd.f32 %v364, %v485
      %v487 = vpop.f32.mrf.mxu0
      %488 = vdwg.mxu0
      %v489 = vmax.f32 %v467, 0.0
      %v490 = vmax.f32 %v470, 0.0
      %v491 = vmax.f32 %v475, 0.0
      %v492 = vmax.f32 %v478, 0.0
      %v493 = vmax.f32 %v483, 0.0
      %v494 = vmax.f32 %v486, 0.0
      %v495 = vpack.c.bf16 %v490, %v489
      %v496 = vpack.c.bf16 %v492, %v491
      %v497 = vpack.c.bf16 %v494, %v493
      %v498 = vld [vmem:[%s3] sm:$0xf]
      %v499 = vld [vmem:[%s3 + $0x4] sm:$0xf]
      %v500 = vld [vmem:[%s3 + $0x8] sm:$0xf]
      %v501 = vld [vmem:[%s3 + $0xc] sm:$0xf]
      %v502 = vld [vmem:[%s3 + $0x10] sm:$0xf]
      %v503 = vld [vmem:[%s3 + $0x14] sm:$0xf]
      %v504 = vld [vmem:[%s3 + $0x18] sm:$0xf]
      %v505 = vld [vmem:[%s3 + $0x1c] sm:$0xf]
      %v506 = vld [vmem:[%s3 + $0x20] sm:$0xf]
      %v507 = vld [vmem:[%s3 + $0x24] sm:$0xf]
      %v508 = vld [vmem:[%s3 + $0x28] sm:$0xf]
      %v509 = vld [vmem:[%s3 + $0x2c] sm:$0xf]
      %v510 = vld [vmem:[%s3 + $0x30] sm:$0xf]
      %v511 = vld [vmem:[%s3 + $0x34] sm:$0xf]
      %v512 = vld [vmem:[%s3 + $0x38] sm:$0xf]
      %v513 = vld [vmem:[%s3 + $0x3c] sm:$0xf]
      %v514 = vld [vmem:[%s4] sm:$0x1]
      %v516 = vlaneseq
      %v517 = vshrl.u32 %v516, 7
      %v518 = vsub.s32 0, %v517
      %v519 = vrot.slane %v514, %v518
      %v537 = vunpack.c.l.b16 %v498
      %v538 = vunpack.c.l.b16 %v499
      %v539 = vunpack.c.l.b16 %v500
      %v540 = vunpack.c.l.b16 %v501
      %v541 = vunpack.c.l.b16 %v502
      %v542 = vunpack.c.l.b16 %v503
      %v543 = vunpack.c.l.b16 %v504
      %v544 = vunpack.c.l.b16 %v505
      %v545 = vunpack.c.l.b16 %v506
      %v546 = vunpack.c.l.b16 %v507
      %v547 = vunpack.c.l.b16 %v508
      %v548 = vunpack.c.l.b16 %v509
      %v549 = vunpack.c.l.b16 %v510
      %v550 = vunpack.c.l.b16 %v511
      %v551 = vunpack.c.l.b16 %v512
      %v552 = vunpack.c.l.b16 %v513
      %v553 = vpack.c.b16 %v538, %v537
      %v554 = vpack.c.b16 %v540, %v539
      %v555 = vpack.c.b16 %v542, %v541
      %v556 = vpack.c.b16 %v544, %v543
      %v557 = vpack.c.b16 %v546, %v545
      %v558 = vpack.c.b16 %v548, %v547
      %v559 = vpack.c.b16 %v550, %v549
      %v560 = vpack.c.b16 %v552, %v551
      %569 = vmatprep.subr.bf16.mxu0 0
      %570 = vmatpush1.bf16.msra.mxu0 %v560
      %571 = vmatprep.subr.bf16.mxu0 0
      %572 = vmatpush1.bf16.msra.mxu0 %v559
      %573 = vmatprep.subr.bf16.mxu0 0
      %574 = vmatpush1.bf16.msra.mxu0 %v558
      %575 = vmatprep.subr.bf16.mxu0 0
      %576 = vmatpush1.bf16.msra.mxu0 %v557
      %577 = vmatprep.subr.bf16.mxu0 0
      %578 = vmatpush1.bf16.msra.mxu0 %v556
      %579 = vmatprep.subr.bf16.mxu0 0
      %580 = vmatpush1.bf16.msra.mxu0 %v555
      %581 = vmatprep.subr.bf16.mxu0 0
      %582 = vmatpush1.bf16.msra.mxu0 %v554
      %583 = vmatprep.subr.bf16.mxu0 0
      %584 = vmatpush1.bf16.msra.mxu0 %v553
      %585 = vmatprep.subr.bf16.mxu0 0
      %586 = vmatpush2.bf16.msra.mxu0 0
      %587 = vmatprep.subr.bf16.mxu0 0
      %588 = vmatpush2.bf16.msra.mxu0 0
      %589 = vmatprep.subr.bf16.mxu0 0
      %590 = vmatpush2.bf16.msra.mxu0 0
      %591 = vmatprep.subr.bf16.mxu0 0
      %592 = vmatpush2.bf16.msra.mxu0 0
      %593 = vmatprep.subr.bf16.mxu0 0
      %594 = vmatpush2.bf16.msra.mxu0 0
      %595 = vmatprep.subr.bf16.mxu0 0
      %596 = vmatpush2.bf16.msra.mxu0 0
      %597 = vmatprep.subr.bf16.mxu0 0
      %598 = vmatpush2.bf16.msra.mxu0 0
      %599 = vmatprep.subr.bf16.mxu0 0
      %600 = vmatpush2.bf16.msra.mxu0 0
      %601 = vmatprep.mubr.bf16.mxu0 0
      %602 = vmatmul.mubr.bf16.gmra.mxu0 %v495
      %v603 = vpop.f32.mrf.mxu0
      %v604 = vadd.f32 %v519, %v603
      %v605 = vpop.f32.mrf.mxu0
      %v606 = vpop.f32.mrf.mxu0
      %v607 = vadd.f32 %v519, %v606
      %v608 = vpop.f32.mrf.mxu0
      %609 = vmatprep.mubr.bf16.mxu0 0
      %610 = vmatmul.mubr.bf16.gmra.mxu0 %v496
      %v611 = vpop.f32.mrf.mxu0
      %v612 = vadd.f32 %v519, %v611
      %v613 = vpop.f32.mrf.mxu0
      %v614 = vpop.f32.mrf.mxu0
      %v615 = vadd.f32 %v519, %v614
      %v616 = vpop.f32.mrf.mxu0
      %617 = vmatprep.mubr.bf16.mxu0 0
      %618 = vmatmul.mubr.bf16.gmra.mxu0 %v497
      %v619 = vpop.f32.mrf.mxu0
      %v620 = vadd.f32 %v519, %v619
      %v621 = vpop.f32.mrf.mxu0
      %v622 = vpop.f32.mrf.mxu0
      %v623 = vadd.f32 %v519, %v622
      %v624 = vpop.f32.mrf.mxu0
      %625 = vdwg.mxu0
      %v626 = vmax.f32 %v604, 0.0
      %v627 = vmax.f32 %v607, 0.0
      %v628 = vmax.f32 %v612, 0.0
      %v629 = vmax.f32 %v615, 0.0
      %v630 = vmax.f32 %v620, 0.0
      %v631 = vmax.f32 %v623, 0.0
      %v632 = vpack.c.bf16 %v627, %v626
      %v633 = vpack.c.bf16 %v629, %v628
      %v634 = vpack.c.bf16 %v631, %v630
      %v635 = vld [vmem:[%s5] sm:$0xf]
      %v636 = vld [vmem:[%s5 + $0x4] sm:$0xf]
      %v637 = vld [vmem:[%s5 + $0x8] sm:$0xf]
      %v638 = vld [vmem:[%s5 + $0xc] sm:$0xf]
      %v639 = vld [vmem:[%s5 + $0x10] sm:$0xf]
      %v640 = vld [vmem:[%s5 + $0x14] sm:$0xf]
      %v641 = vld [vmem:[%s5 + $0x18] sm:$0xf]
      %v642 = vld [vmem:[%s5 + $0x1c] sm:$0xf]
      %v643 = vld [vmem:[%s5 + $0x20] sm:$0xf]
      %v644 = vld [vmem:[%s5 + $0x24] sm:$0xf]
      %v645 = vld [vmem:[%s5 + $0x28] sm:$0xf]
      %v646 = vld [vmem:[%s5 + $0x2c] sm:$0xf]
      %v647 = vld [vmem:[%s5 + $0x30] sm:$0xf]
      %v648 = vld [vmem:[%s5 + $0x34] sm:$0xf]
      %v649 = vld [vmem:[%s5 + $0x38] sm:$0xf]
      %v650 = vld [vmem:[%s5 + $0x3c] sm:$0xf]
      %v651 = vld [vmem:[%s6] sm:$0x1]
      %v653 = vlaneseq
      %v654 = vshrl.u32 %v653, 7
      %v655 = vsub.s32 0, %v654
      %v656 = vrot.slane %v651, %v655
      %v674 = vunpack.c.l.b16 %v635
      %v675 = vunpack.c.l.b16 %v636
      %v676 = vunpack.c.l.b16 %v637
      %v677 = vunpack.c.l.b16 %v638
      %v678 = vunpack.c.l.b16 %v639
      %v679 = vunpack.c.l.b16 %v640
      %v680 = vunpack.c.l.b16 %v641
      %v681 = vunpack.c.l.b16 %v642
      %v682 = vunpack.c.l.b16 %v643
      %v683 = vunpack.c.l.b16 %v644
      %v684 = vunpack.c.l.b16 %v645
      %v685 = vunpack.c.l.b16 %v646
      %v686 = vunpack.c.l.b16 %v647
      %v687 = vunpack.c.l.b16 %v648
      %v688 = vunpack.c.l.b16 %v649
      %v689 = vunpack.c.l.b16 %v650
      %v690 = vpack.c.b16 %v675, %v674
      %v691 = vpack.c.b16 %v677, %v676
      %v692 = vpack.c.b16 %v679, %v678
      %v693 = vpack.c.b16 %v681, %v680
      %v694 = vpack.c.b16 %v683, %v682
      %v695 = vpack.c.b16 %v685, %v684
      %v696 = vpack.c.b16 %v687, %v686
      %v697 = vpack.c.b16 %v689, %v688
      %706 = vmatprep.subr.bf16.mxu0 0
      %707 = vmatpush1.bf16.msra.mxu0 %v697
      %708 = vmatprep.subr.bf16.mxu0 0
      %709 = vmatpush1.bf16.msra.mxu0 %v696
      %710 = vmatprep.subr.bf16.mxu0 0
      %711 = vmatpush1.bf16.msra.mxu0 %v695
      %712 = vmatprep.subr.bf16.mxu0 0
      %713 = vmatpush1.bf16.msra.mxu0 %v694
      %714 = vmatprep.subr.bf16.mxu0 0
      %715 = vmatpush1.bf16.msra.mxu0 %v693
      %716 = vmatprep.subr.bf16.mxu0 0
      %717 = vmatpush1.bf16.msra.mxu0 %v692
      %718 = vmatprep.subr.bf16.mxu0 0
      %719 = vmatpush1.bf16.msra.mxu0 %v691
      %720 = vmatprep.subr.bf16.mxu0 0
      %721 = vmatpush1.bf16.msra.mxu0 %v690
      %722 = vmatprep.subr.bf16.mxu0 0
      %723 = vmatpush2.bf16.msra.mxu0 0
      %724 = vmatprep.subr.bf16.mxu0 0
      %725 = vmatpush2.bf16.msra.mxu0 0
      %726 = vmatprep.subr.bf16.mxu0 0
      %727 = vmatpush2.bf16.msra.mxu0 0
      %728 = vmatprep.subr.bf16.mxu0 0
      %729 = vmatpush2.bf16.msra.mxu0 0
      %730 = vmatprep.subr.bf16.mxu0 0
      %731 = vmatpush2.bf16.msra.mxu0 0
      %732 = vmatprep.subr.bf16.mxu0 0
      %733 = vmatpush2.bf16.msra.mxu0 0
      %734 = vmatprep.subr.bf16.mxu0 0
      %735 = vmatpush2.bf16.msra.mxu0 0
      %736 = vmatprep.subr.bf16.mxu0 0
      %737 = vmatpush2.bf16.msra.mxu0 0
      %738 = vmatprep.mubr.bf16.mxu0 0
      %739 = vmatmul.mubr.bf16.gmra.mxu0 %v632
      %v740 = vpop.f32.mrf.mxu0
      %v741 = vadd.f32 %v656, %v740
      %v742 = vpop.f32.mrf.mxu0
      %v743 = vpop.f32.mrf.mxu0
      %v744 = vadd.f32 %v656, %v743
      %v745 = vpop.f32.mrf.mxu0
      %746 = vmatprep.mubr.bf16.mxu0 0
      %747 = vmatmul.mubr.bf16.gmra.mxu0 %v633
      %v748 = vpop.f32.mrf.mxu0
      %v749 = vadd.f32 %v656, %v748
      %v750 = vpop.f32.mrf.mxu0
      %v751 = vpop.f32.mrf.mxu0
      %v752 = vadd.f32 %v656, %v751
      %v753 = vpop.f32.mrf.mxu0
      %754 = vmatprep.mubr.bf16.mxu0 0
      %755 = vmatmul.mubr.bf16.gmra.mxu0 %v634
      %v756 = vpop.f32.mrf.mxu0
      %v757 = vadd.f32 %v656, %v756
      %v758 = vpop.f32.mrf.mxu0
      %v759 = vpop.f32.mrf.mxu0
      %v760 = vadd.f32 %v656, %v759
      %v761 = vpop.f32.mrf.mxu0
      %762 = vdwg.mxu0
      %763 = vadd.xlane.f32.xlu0 %v741
      %v764 = vpop.xlane.xlu0 %763
      %765 = vadd.xlane.f32.xlu0 %v744
      %v766 = vpop.xlane.xlu0 %765
      %767 = vadd.xlane.f32.xlu0 %v749
      %v768 = vpop.xlane.xlu0 %767
      %769 = vadd.xlane.f32.xlu0 %v752
      %v770 = vpop.xlane.xlu0 %769
      %771 = vadd.xlane.f32.xlu0 %v757
      %v772 = vpop.xlane.xlu0 %771
      %773 = vadd.xlane.f32.xlu0 %v760
      %v774 = vpop.xlane.xlu0 %773
      %v775 = vrcp.pop 128.0
      %v776 = vmul.f32 %v764, %v775
      %v777 = vmul.f32 %v766, %v775
      %v778 = vmul.f32 %v768, %v775
      %v779 = vmul.f32 %v770, %v775
      %v780 = vmul.f32 %v772, %v775
      %v781 = vmul.f32 %v774, %v775
      %v782 = vsub.f32 %v741, %v776
      %v783 = vsub.f32 %v744, %v777
      %v784 = vsub.f32 %v749, %v778
      %v785 = vsub.f32 %v752, %v779
      %v786 = vsub.f32 %v757, %v780
      %v787 = vsub.f32 %v760, %v781
      %v788 = vmul.f32 %v782, %v782
      %v789 = vmul.f32 %v783, %v783
      %v790 = vmul.f32 %v784, %v784
      %v791 = vmul.f32 %v785, %v785
      %v792 = vmul.f32 %v786, %v786
      %v793 = vmul.f32 %v787, %v787
      %794 = vadd.xlane.f32.xlu0 %v788
      %v795 = vpop.xlane.xlu0 %794
      %796 = vadd.xlane.f32.xlu0 %v789
      %v797 = vpop.xlane.xlu0 %796
      %798 = vadd.xlane.f32.xlu0 %v790
      %v799 = vpop.xlane.xlu0 %798
      %800 = vadd.xlane.f32.xlu0 %v791
      %v801 = vpop.xlane.xlu0 %800
      %802 = vadd.xlane.f32.xlu0 %v792
      %v803 = vpop.xlane.xlu0 %802
      %804 = vadd.xlane.f32.xlu0 %v793
      %v805 = vpop.xlane.xlu0 %804
      %v806 = vmul.f32 %v795, 0.0078125
      %v807 = vmul.f32 %v797, 0.0078125
      %v808 = vmul.f32 %v799, 0.0078125
      %v809 = vmul.f32 %v801, 0.0078125
      %v810 = vmul.f32 %v803, 0.0078125
      %v811 = vmul.f32 %v805, 0.0078125
      %v812 = vadd.f32 %v806, 1e-05
      %v813 = vadd.f32 %v807, 1e-05
      %v814 = vadd.f32 %v808, 1e-05
      %v815 = vadd.f32 %v809, 1e-05
      %v816 = vadd.f32 %v810, 1e-05
      %v817 = vadd.f32 %v811, 1e-05
      %v818 = vrsqrt.pop %v812
      %v819 = vrsqrt.pop %v813
      %v820 = vrsqrt.pop %v814
      %v821 = vrsqrt.pop %v815
      %v822 = vrsqrt.pop %v816
      %v823 = vrsqrt.pop %v817
      %v824 = vmul.f32 %v782, %v818
      %v825 = vmul.f32 %v783, %v819
      %v826 = vmul.f32 %v784, %v820
      %v827 = vmul.f32 %v785, %v821
      %v828 = vmul.f32 %v786, %v822
      %v829 = vmul.f32 %v787, %v823
      %v830 = vld [vmem:[%s7] sm:$0x1]
      %v832 = vlaneseq
      %v833 = vshrl.u32 %v832, 7
      %v834 = vsub.s32 0, %v833
      %v835 = vrot.slane %v830, %v834
      %v837 = vmul.f32 %v824, %v835
      %v838 = vmul.f32 %v825, %v835
      %v839 = vmul.f32 %v826, %v835
      %v840 = vmul.f32 %v827, %v835
      %v841 = vmul.f32 %v828, %v835
      %v842 = vmul.f32 %v829, %v835
      %v843 = vld [vmem:[%s8] sm:$0x1]
      %v845 = vlaneseq
      %v846 = vshrl.u32 %v845, 7
      %v847 = vsub.s32 0, %v846
      %v848 = vrot.slane %v843, %v847
      %v850 = vadd.f32 %v837, %v848
      %v851 = vadd.f32 %v838, %v848
      %v852 = vadd.f32 %v839, %v848
      %v853 = vadd.f32 %v840, %v848
      %v854 = vadd.f32 %v841, %v848
      %v855 = vadd.f32 %v842, %v848
      %v856 = vpack.c.bf16 %v851, %v850
      %v857 = vpack.c.bf16 %v853, %v852
      %v858 = vpack.c.bf16 %v855, %v854
      %v862 = vunpack.c.l.b16 %v856
      %v863 = vunpack.c.h.b16 %v856
      %v864 = vunpack.c.l.b16 %v857
      %v865 = vunpack.c.h.b16 %v857
      %v866 = vunpack.c.l.b16 %v858
      %v867 = vunpack.c.h.b16 %v858
      %v868 = vpack.c.b16 %v862, %v862
      %v869 = vpack.c.b16 %v863, %v863
      %v870 = vpack.c.b16 %v864, %v864
      %v871 = vpack.c.b16 %v865, %v865
      %v872 = vpack.c.b16 %v866, %v866
      %v873 = vpack.c.b16 %v867, %v867
      %880 = vst [vmem:[%s334] sm:$0xf] %v868
      %881 = vst [vmem:[%s334 + $0x4] sm:$0xf] %v869
      %882 = vst [vmem:[%s334 + $0x8] sm:$0xf] %v870
      %883 = vst [vmem:[%s334 + $0xc] sm:$0xf] %v871
      %884 = vst [vmem:[%s334 + $0x10] sm:$0xf] %v872
      %885 = vst [vmem:[%s334 + $0x14] sm:$0xf] %v873
      %s886 = smul.u32 6, %s20
      %p887 = scmp.lt.s32.totalorder %s886, 23
      %s888 = scalar_select %p887, %s886, 23
      %s889 = smul.addr %s888, 4
      %s890 = scalar_lea.vmem %s9, %s889
      // Predicated region
      $region57: #{learned_simulator_forward.8} parent=55 // pred_check
        %p891 = pneg %p232
      $region58: #{learned_simulator_forward.8} parent=55 // pred_check_branch
        %893 = sbr.rel (%p891) target = $region60
      $region59: #{learned_simulator_forward.8} parent=55 // pred_region
        %s894 = smul.u32 6, %s20
      $region60: #{learned_simulator_forward.8} parent=55 // pred_fallthru
        _
    $region56: #{learned_simulator_forward.8} parent=5 // pred_fallthru
      _
    %p895 = scmp.le.s32.totalorder 2, %s15
    // Predicated region
    $region61: #{learned_simulator_forward.8} parent=5 // pred_check
      %p896 = pneg %p895
    $region62: #{learned_simulator_forward.8} parent=5 // pred_check_branch
      %898 = sbr.rel (%p896) target = $region64
    $region63: #{learned_simulator_forward.8} parent=5 // pred_region
      %s899 = ssub.s32 %s15, 2
      // Predicated region
      $region65: #{learned_simulator_forward.8} parent=63 // pred_check
        %p900 = pneg %p238
      $region66: #{learned_simulator_forward.8} parent=63 // pred_check_branch
        %902 = sbr.rel (%p900) target = $region68
      $region67: #{learned_simulator_forward.8} parent=63 // pred_region
        %s903 = smul.u32 6, %s21
        %p904 = scmp.lt.s32.totalorder %s903, 23
        %s905 = scalar_select %p904, %s903, 23
        %s906 = smul.addr %s905, 4
        %s907 = scalar_lea.vmem %s9, %s906
      $region68: #{learned_simulator_forward.8} parent=63 // pred_fallthru
        _
    $region64: #{learned_simulator_forward.8} parent=5 // pred_fallthru
      _
  $region6: #{learned_simulator_forward.8} parent=0 // loop_footer
    %s19 = sadd.s32 1, %s15
  $region7: #{learned_simulator_forward.8} parent=0 // loop_footer_branch
    %14 = sbr.rel target = $region3
  $region8: #{learned_simulator_forward.8} parent=0 // loop_exit
    _

// kernel: learned_simulator_forward.7
$region0: #{learned_simulator_forward.7}
  #allocation0 [shape = 'u32[]', space=smem, size = 0x4, offset = 0x4, fixed_abs, tag = 'smem constant byte address 0x4 - core index']
  #allocation1 [shape = 'u32[144,128]{1,0:T(1,128)}', space=vmem, size = 0x12000, scoped, tag = 'internal scratch']
  %s0 = inlined_call_operand.vmem [shape: bf16[64,128], index: 0, kind: input, shape index: {}]
  %s1 = inlined_call_operand.vmem [shape: bf16[128,128], index: 1, kind: input, shape index: {}]
  %s2 = inlined_call_operand.vmem [shape: f32[1,128], index: 2, kind: input, shape index: {}, may-alias: {2,4,6,8}]
  %s3 = inlined_call_operand.vmem [shape: bf16[128,128], index: 3, kind: input, shape index: {}]
  %s4 = inlined_call_operand.vmem [shape: f32[1,128], index: 4, kind: input, shape index: {}, may-alias: {2,4,6,8}]
  %s5 = inlined_call_operand.vmem [shape: bf16[128,128], index: 5, kind: input, shape index: {}]
  %s6 = inlined_call_operand.vmem [shape: f32[1,128], index: 6, kind: input, shape index: {}, may-alias: {2,4,6,8}]
  %s7 = inlined_call_operand.vmem [shape: f32[1,128], index: 7, kind: input, shape index: {}]
  %s8 = inlined_call_operand.vmem [shape: f32[1,128], index: 8, kind: input, shape index: {}, may-alias: {2,4,6,8}]
  %s9 = inlined_call_operand.vmem [shape: bf16[64,128], index: 9, kind: output, shape index: {}]
  %s10 = sld [smem:[#allocation0]]
  $region69: #{learned_simulator_forward.7} parent=0
    _
  %s12 = ssub.s32 1, %s10
  %s13 = scalar_select 0, %s12, %s10
  loop: start=0, step=1, limit=6
  $region2: #{learned_simulator_forward.7} parent=0 // loop_pre_header
    _
  $region3: #{learned_simulator_forward.7} parent=0 // loop_header
    %s15 = sphi 0, %s19
    %p16 = scmp.ge.s32.totalorder %s15, 6
    %s25 = sphi 0, %s27
    %s28 = sphi 0, %s25
    %s29 = sphi 0, %s28
    %s45 = sphi 0, %s29
    %s49 = sphi 0, %s49
    %s51 = sphi 0, %s49
    %s52 = sphi 0, %s51
    %s66 = sphi 0, %s52
    %s70 = sphi 0, %s70
    %s72 = sphi 0, %s70
    %s73 = sphi 0, %s72
    %s87 = sphi 0, %s73
    %s91 = sphi 0, %s91
    %s93 = sphi 0, %s91
    %s94 = sphi 0, %s93
    %s108 = sphi 0, %s94
    %s112 = sphi 0, %s112
    %s114 = sphi 0, %s112
    %s115 = sphi 0, %s114
    %s129 = sphi 0, %s115
    %s133 = sphi 0, %s133
    %s135 = sphi 0, %s133
    %s136 = sphi 0, %s135
    %s150 = sphi 0, %s136
    %s154 = sphi 0, %s154
    %s156 = sphi 0, %s154
    %s157 = sphi 0, %s156
    %s171 = sphi 0, %s157
    %s175 = sphi 0, %s175
    %s177 = sphi 0, %s175
    %s178 = sphi 0, %s177
    %s192 = sphi 0, %s178
    %s196 = sphi 0, %s196
    %s198 = sphi 0, %s196
    %s199 = sphi 0, %s198
    %s213 = sphi 0, %s199
    %s219 = sphi 0, %s221
    %s222 = sphi 0, %s219
    %s223 = sphi 0, %s222
    %s239 = sphi 0, %s223
  $region4: #{learned_simulator_forward.7} parent=0 // loop_header_branch
    %18 = sbr.rel (%p16) target = $region8
  $region5: #{learned_simulator_forward.7} parent=0 // loop_body
    %s20 = ssub.s32 %s15, 1
    %s21 = ssub.s32 %s15, 2
    %s22 = sadd.s32 %s15, 1
    %s23 = ssub.s32 %s15, %s22
    %p24 = scmp.eq.s32.totalorder %s23, 0
    %s26 = sadd.s32 %s25, 1
    %s27 = scalar_select %p24, %s25, %s26
    %p30 = pneg %p24
    %p31 = scmp.eq.s32.totalorder %s15, 3
    %p32 = por %p30, %p31
    %p33 = scmp.ne.s32.totalorder %s25, %s28
    %p34 = scmp.eq.s32.totalorder %s15, 0
    %p35 = por %p33, %p34
    %p36 = scmp.ne.s32.totalorder %s25, %s28
    %p37 = scmp.eq.s32.totalorder %s20, 3
    %p38 = por %p36, %p37
    %p39 = scmp.ne.s32.totalorder %s28, %s29
    %p40 = scmp.eq.s32.totalorder %s20, 0
    %p41 = por %p39, %p40
    %p42 = scmp.ne.s32.totalorder %s28, %s29
    %p43 = scmp.eq.s32.totalorder %s21, 3
    %p44 = por %p42, %p43
    %p46 = scmp.ne.s32.totalorder %s29, %s45
    %p47 = scmp.eq.s32.totalorder %s21, 0
    %p48 = por %p46, %p47
    %s50 = sadd.s32 %s49, 1
    %p53 = scmp.eq.s32.totalorder %s15, 3
    %p54 = scmp.ne.s32.totalorder %s49, %s51
    %p55 = scmp.eq.s32.totalorder %s15, 0
    %p56 = por %p54, %p55
    %p57 = scmp.ne.s32.totalorder %s49, %s51
    %p58 = scmp.eq.s32.totalorder %s20, 3
    %p59 = por %p57, %p58
    %p60 = scmp.ne.s32.totalorder %s51, %s52
    %p61 = scmp.eq.s32.totalorder %s20, 0
    %p62 = por %p60, %p61
    %p63 = scmp.ne.s32.totalorder %s51, %s52
    %p64 = scmp.eq.s32.totalorder %s21, 3
    %p65 = por %p63, %p64
    %p67 = scmp.ne.s32.totalorder %s52, %s66
    %p68 = scmp.eq.s32.totalorder %s21, 0
    %p69 = por %p67, %p68
    %s71 = sadd.s32 %s70, 1
    %p74 = scmp.eq.s32.totalorder %s15, 3
    %p75 = scmp.ne.s32.totalorder %s70, %s72
    %p76 = scmp.eq.s32.totalorder %s15, 0
    %p77 = por %p75, %p76
    %p78 = scmp.ne.s32.totalorder %s70, %s72
    %p79 = scmp.eq.s32.totalorder %s20, 3
    %p80 = por %p78, %p79
    %p81 = scmp.ne.s32.totalorder %s72, %s73
    %p82 = scmp.eq.s32.totalorder %s20, 0
    %p83 = por %p81, %p82
    %p84 = scmp.ne.s32.totalorder %s72, %s73
    %p85 = scmp.eq.s32.totalorder %s21, 3
    %p86 = por %p84, %p85
    %p88 = scmp.ne.s32.totalorder %s73, %s87
    %p89 = scmp.eq.s32.totalorder %s21, 0
    %p90 = por %p88, %p89
    %s92 = sadd.s32 %s91, 1
    %p95 = scmp.eq.s32.totalorder %s15, 3
    %p96 = scmp.ne.s32.totalorder %s91, %s93
    %p97 = scmp.eq.s32.totalorder %s15, 0
    %p98 = por %p96, %p97
    %p99 = scmp.ne.s32.totalorder %s91, %s93
    %p100 = scmp.eq.s32.totalorder %s20, 3
    %p101 = por %p99, %p100
    %p102 = scmp.ne.s32.totalorder %s93, %s94
    %p103 = scmp.eq.s32.totalorder %s20, 0
    %p104 = por %p102, %p103
    %p105 = scmp.ne.s32.totalorder %s93, %s94
    %p106 = scmp.eq.s32.totalorder %s21, 3
    %p107 = por %p105, %p106
    %p109 = scmp.ne.s32.totalorder %s94, %s108
    %p110 = scmp.eq.s32.totalorder %s21, 0
    %p111 = por %p109, %p110
    %s113 = sadd.s32 %s112, 1
    %p116 = scmp.eq.s32.totalorder %s15, 3
    %p117 = scmp.ne.s32.totalorder %s112, %s114
    %p118 = scmp.eq.s32.totalorder %s15, 0
    %p119 = por %p117, %p118
    %p120 = scmp.ne.s32.totalorder %s112, %s114
    %p121 = scmp.eq.s32.totalorder %s20, 3
    %p122 = por %p120, %p121
    %p123 = scmp.ne.s32.totalorder %s114, %s115
    %p124 = scmp.eq.s32.totalorder %s20, 0
    %p125 = por %p123, %p124
    %p126 = scmp.ne.s32.totalorder %s114, %s115
    %p127 = scmp.eq.s32.totalorder %s21, 3
    %p128 = por %p126, %p127
    %p130 = scmp.ne.s32.totalorder %s115, %s129
    %p131 = scmp.eq.s32.totalorder %s21, 0
    %p132 = por %p130, %p131
    %s134 = sadd.s32 %s133, 1
    %p137 = scmp.eq.s32.totalorder %s15, 3
    %p138 = scmp.ne.s32.totalorder %s133, %s135
    %p139 = scmp.eq.s32.totalorder %s15, 0
    %p140 = por %p138, %p139
    %p141 = scmp.ne.s32.totalorder %s133, %s135
    %p142 = scmp.eq.s32.totalorder %s20, 3
    %p143 = por %p141, %p142
    %p144 = scmp.ne.s32.totalorder %s135, %s136
    %p145 = scmp.eq.s32.totalorder %s20, 0
    %p146 = por %p144, %p145
    %p147 = scmp.ne.s32.totalorder %s135, %s136
    %p148 = scmp.eq.s32.totalorder %s21, 3
    %p149 = por %p147, %p148
    %p151 = scmp.ne.s32.totalorder %s136, %s150
    %p152 = scmp.eq.s32.totalorder %s21, 0
    %p153 = por %p151, %p152
    %s155 = sadd.s32 %s154, 1
    %p158 = scmp.eq.s32.totalorder %s15, 3
    %p159 = scmp.ne.s32.totalorder %s154, %s156
    %p160 = scmp.eq.s32.totalorder %s15, 0
    %p161 = por %p159, %p160
    %p162 = scmp.ne.s32.totalorder %s154, %s156
    %p163 = scmp.eq.s32.totalorder %s20, 3
    %p164 = por %p162, %p163
    %p165 = scmp.ne.s32.totalorder %s156, %s157
    %p166 = scmp.eq.s32.totalorder %s20, 0
    %p167 = por %p165, %p166
    %p168 = scmp.ne.s32.totalorder %s156, %s157
    %p169 = scmp.eq.s32.totalorder %s21, 3
    %p170 = por %p168, %p169
    %p172 = scmp.ne.s32.totalorder %s157, %s171
    %p173 = scmp.eq.s32.totalorder %s21, 0
    %p174 = por %p172, %p173
    %s176 = sadd.s32 %s175, 1
    %p179 = scmp.eq.s32.totalorder %s15, 3
    %p180 = scmp.ne.s32.totalorder %s175, %s177
    %p181 = scmp.eq.s32.totalorder %s15, 0
    %p182 = por %p180, %p181
    %p183 = scmp.ne.s32.totalorder %s175, %s177
    %p184 = scmp.eq.s32.totalorder %s20, 3
    %p185 = por %p183, %p184
    %p186 = scmp.ne.s32.totalorder %s177, %s178
    %p187 = scmp.eq.s32.totalorder %s20, 0
    %p188 = por %p186, %p187
    %p189 = scmp.ne.s32.totalorder %s177, %s178
    %p190 = scmp.eq.s32.totalorder %s21, 3
    %p191 = por %p189, %p190
    %p193 = scmp.ne.s32.totalorder %s178, %s192
    %p194 = scmp.eq.s32.totalorder %s21, 0
    %p195 = por %p193, %p194
    %s197 = sadd.s32 %s196, 1
    %p200 = scmp.eq.s32.totalorder %s15, 3
    %p201 = scmp.ne.s32.totalorder %s196, %s198
    %p202 = scmp.eq.s32.totalorder %s15, 0
    %p203 = por %p201, %p202
    %p204 = scmp.ne.s32.totalorder %s196, %s198
    %p205 = scmp.eq.s32.totalorder %s20, 3
    %p206 = por %p204, %p205
    %p207 = scmp.ne.s32.totalorder %s198, %s199
    %p208 = scmp.eq.s32.totalorder %s20, 0
    %p209 = por %p207, %p208
    %p210 = scmp.ne.s32.totalorder %s198, %s199
    %p211 = scmp.eq.s32.totalorder %s21, 3
    %p212 = por %p210, %p211
    %p214 = scmp.ne.s32.totalorder %s199, %s213
    %p215 = scmp.eq.s32.totalorder %s21, 0
    %p216 = por %p214, %p215
    %s217 = ssub.s32 %s15, %s22
    %p218 = scmp.eq.s32.totalorder %s217, 0
    %s220 = sadd.s32 %s219, 1
    %s221 = scalar_select %p218, %s219, %s220
    %p224 = pneg %p218
    %p225 = scmp.eq.s32.totalorder %s15, 3
    %p226 = por %p224, %p225
    %p227 = scmp.ne.s32.totalorder %s219, %s222
    %p228 = scmp.eq.s32.totalorder %s15, 0
    %p229 = por %p227, %p228
    %p230 = scmp.ne.s32.totalorder %s219, %s222
    %p231 = scmp.eq.s32.totalorder %s20, 3
    %p232 = por %p230, %p231
    %p233 = scmp.ne.s32.totalorder %s222, %s223
    %p234 = scmp.eq.s32.totalorder %s20, 0
    %p235 = por %p233, %p234
    %p236 = scmp.ne.s32.totalorder %s222, %s223
    %p237 = scmp.eq.s32.totalorder %s21, 3
    %p238 = por %p236, %p237
    %p240 = scmp.ne.s32.totalorder %s223, %s239
    %p241 = scmp.eq.s32.totalorder %s21, 0
    %p242 = por %p240, %p241
    %p243 = scmp.le.s32.totalorder 1, %s15
    %p244 = scmp.lt.s32.totalorder %s15, 5
    %p245 = pnand %p243, %p244
    %p246 = pneg %p245
    // Predicated region
    $region9: #{learned_simulator_forward.7} parent=5 // pred_check
      _
    $region10: #{learned_simulator_forward.7} parent=5 // pred_check_branch
      %248 = sbr.rel (%p245) target = $region12
    $region11: #{learned_simulator_forward.7} parent=5 // pred_region
      %s249 = ssub.s32 %s15, 1
      // Predicated region
      $region13: #{learned_simulator_forward.7} parent=11 // pred_check
        %p250 = pneg %p62
      $region14: #{learned_simulator_forward.7} parent=11 // pred_check_branch
        %252 = sbr.rel (%p250) target = $region16
      $region15: #{learned_simulator_forward.7} parent=11 // pred_region
        _
      $region16: #{learned_simulator_forward.7} parent=11 // pred_fallthru
        _
      // Predicated region
      $region17: #{learned_simulator_forward.7} parent=11 // pred_check
        %p253 = pneg %p83
      $region18: #{learned_simulator_forward.7} parent=11 // pred_check_branch
        %255 = sbr.rel (%p253) target = $region20
      $region19: #{learned_simulator_forward.7} parent=11 // pred_region
        _
      $region20: #{learned_simulator_forward.7} parent=11 // pred_fallthru
        _
      // Predicated region
      $region21: #{learned_simulator_forward.7} parent=11 // pred_check
        %p256 = pneg %p104
      $region22: #{learned_simulator_forward.7} parent=11 // pred_check_branch
        %258 = sbr.rel (%p256) target = $region24
      $region23: #{learned_simulator_forward.7} parent=11 // pred_region
        _
      $region24: #{learned_simulator_forward.7} parent=11 // pred_fallthru
        _
      // Predicated region
      $region25: #{learned_simulator_forward.7} parent=11 // pred_check
        %p259 = pneg %p125
      $region26: #{learned_simulator_forward.7} parent=11 // pred_check_branch
        %261 = sbr.rel (%p259) target = $region28
      $region27: #{learned_simulator_forward.7} parent=11 // pred_region
        _
      $region28: #{learned_simulator_forward.7} parent=11 // pred_fallthru
        _
      // Predicated region
      $region29: #{learned_simulator_forward.7} parent=11 // pred_check
        %p262 = pneg %p146
      $region30: #{learned_simulator_forward.7} parent=11 // pred_check_branch
        %264 = sbr.rel (%p262) target = $region32
      $region31: #{learned_simulator_forward.7} parent=11 // pred_region
        _
      $region32: #{learned_simulator_forward.7} parent=11 // pred_fallthru
        _
      // Predicated region
      $region33: #{learned_simulator_forward.7} parent=11 // pred_check
        %p265 = pneg %p167
      $region34: #{learned_simulator_forward.7} parent=11 // pred_check_branch
        %267 = sbr.rel (%p265) target = $region36
      $region35: #{learned_simulator_forward.7} parent=11 // pred_region
        _
      $region36: #{learned_simulator_forward.7} parent=11 // pred_fallthru
        _
      // Predicated region
      $region37: #{learned_simulator_forward.7} parent=11 // pred_check
        %p268 = pneg %p188
      $region38: #{learned_simulator_forward.7} parent=11 // pred_check_branch
        %270 = sbr.rel (%p268) target = $region40
      $region39: #{learned_simulator_forward.7} parent=11 // pred_region
        _
      $region40: #{learned_simulator_forward.7} parent=11 // pred_fallthru
        _
      // Predicated region
      $region41: #{learned_simulator_forward.7} parent=11 // pred_check
        %p271 = pneg %p209
      $region42: #{learned_simulator_forward.7} parent=11 // pred_check_branch
        %273 = sbr.rel (%p271) target = $region44
      $region43: #{learned_simulator_forward.7} parent=11 // pred_region
        _
      $region44: #{learned_simulator_forward.7} parent=11 // pred_fallthru
        _
    $region12: #{learned_simulator_forward.7} parent=5 // pred_fallthru
      _
    %p274 = scmp.lt.s32.totalorder %s15, 4
    // Predicated region
    $region45: #{learned_simulator_forward.7} parent=5 // pred_check
      %p275 = pneg %p274
    $region46: #{learned_simulator_forward.7} parent=5 // pred_check_branch
      %277 = sbr.rel (%p275) target = $region48
    $region47: #{learned_simulator_forward.7} parent=5 // pred_region
      // Predicated region
      $region49: #{learned_simulator_forward.7} parent=47 // pred_check
        %p278 = pneg %p35
      $region50: #{learned_simulator_forward.7} parent=47 // pred_check_branch
        %280 = sbr.rel (%p278) target = $region52
      $region51: #{learned_simulator_forward.7} parent=47 // pred_region
        %s281 = smul.u32 2, %s15
        %p282 = scmp.lt.s32.totalorder %s281, 7
        %s283 = scalar_select %p282, %s281, 7
        %s284 = smul.addr %s283, 4
        %s285 = scalar_lea.vmem %s0, %s284
        %s286 = smul.u32 2, %s15
      $region52: #{learned_simulator_forward.7} parent=47 // pred_fallthru
        _
    $region48: #{learned_simulator_forward.7} parent=5 // pred_fallthru
      _
    %p287 = scmp.le.s32.totalorder 1, %s15
    %p288 = scmp.lt.s32.totalorder %s15, 5
    %p289 = pnand %p287, %p288
    %p290 = pneg %p289
    // Predicated region
    $region53: #{learned_simulator_forward.7} parent=5 // pred_check
      _
    $region54: #{learned_simulator_forward.7} parent=5 // pred_check_branch
      %292 = sbr.rel (%p289) target = $region56
    $region55: #{learned_simulator_forward.7} parent=5 // pred_region
      %s293 = ssub.s32 %s15, 1
      %s294 = smul.u32 2, %s20
      %p295 = scmp.lt.s32.totalorder %s294, 7
      %s296 = scalar_select %p295, %s294, 7
      %s297 = smul.addr %s296, 4
      %s298 = scalar_lea.vmem %s0, %s297
      %p299 = pneg %p41
      %p300 = pneg %p38
      %p301 = pneg %p62
      %p302 = pneg %p59
      %p303 = pneg %p83
      %p304 = pneg %p80
      %p305 = pneg %p104
      %p306 = pneg %p101
      %p307 = pneg %p125
      %p308 = pneg %p122
      %p309 = pneg %p146
      %p310 = pneg %p143
      %p311 = pneg %p167
      %p312 = pneg %p164
      %p313 = pneg %p188
      %p314 = pneg %p185
      %p315 = pneg %p209
      %p316 = pneg %p206
      %p317 = pneg %p235
      %p318 = pneg %p232
      %s319 = smul.u32 2, %s20
      %p320 = scmp.lt.s32.totalorder %s319, 7
      %s321 = scalar_select %p320, %s319, 7
      %s322 = smul.addr %s321, 4
      %s323 = scalar_lea.vmem %s9, %s322
      %s324 = smul.u32 2, %s20
      %p325 = scmp.lt.s32.totalorder %s324, 7
      %s326 = scalar_select %p325, %s324, 7
      %s327 = smul.addr %s326, 4
      %s328 = scalar_lea.vmem %s0, %s327
      %s329 = smul.u32 2, %s20
      %s330 = smul.u32 2, %s20
      %p331 = scmp.lt.s32.totalorder %s330, 7
      %s332 = scalar_select %p331, %s330, 7
      %s333 = smul.addr %s332, 4
      %s334 = scalar_lea.vmem %s9, %s333
      %s335 = smul.u32 2, %s20
      %v337 = vld [vmem:[%s328] sm:$0xf]
      %v338 = vld [vmem:[%s328 + $0x4] sm:$0xf]
      %v339 = vld [vmem:[%s1] sm:$0xf]
      %v340 = vld [vmem:[%s1 + $0x4] sm:$0xf]
      %v341 = vld [vmem:[%s1 + $0x8] sm:$0xf]
      %v342 = vld [vmem:[%s1 + $0xc] sm:$0xf]
      %v343 = vld [vmem:[%s1 + $0x10] sm:$0xf]
      %v344 = vld [vmem:[%s1 + $0x14] sm:$0xf]
      %v345 = vld [vmem:[%s1 + $0x18] sm:$0xf]
      %v346 = vld [vmem:[%s1 + $0x1c] sm:$0xf]
      %v347 = vld [vmem:[%s1 + $0x20] sm:$0xf]
      %v348 = vld [vmem:[%s1 + $0x24] sm:$0xf]
      %v349 = vld [vmem:[%s1 + $0x28] sm:$0xf]
      %v350 = vld [vmem:[%s1 + $0x2c] sm:$0xf]
      %v351 = vld [vmem:[%s1 + $0x30] sm:$0xf]
      %v352 = vld [vmem:[%s1 + $0x34] sm:$0xf]
      %v353 = vld [vmem:[%s1 + $0x38] sm:$0xf]
      %v354 = vld [vmem:[%s1 + $0x3c] sm:$0xf]
      %v355 = vld [vmem:[%s2] sm:$0x1]
      %v357 = vlaneseq
      %v358 = vshrl.u32 %v357, 7
      %v359 = vsub.s32 0, %v358
      %v360 = vrot.slane %v355, %v359
      %v364 = vunpack.c.l.b16 %v337
      %v365 = vunpack.c.l.b16 %v338
      %v366 = vpack.c.b16 %v365, %v364
      %v384 = vunpack.c.l.b16 %v339
      %v385 = vunpack.c.l.b16 %v340
      %v386 = vunpack.c.l.b16 %v341
      %v387 = vunpack.c.l.b16 %v342
      %v388 = vunpack.c.l.b16 %v343
      %v389 = vunpack.c.l.b16 %v344
      %v390 = vunpack.c.l.b16 %v345
      %v391 = vunpack.c.l.b16 %v346
      %v392 = vunpack.c.l.b16 %v347
      %v393 = vunpack.c.l.b16 %v348
      %v394 = vunpack.c.l.b16 %v349
      %v395 = vunpack.c.l.b16 %v350
      %v396 = vunpack.c.l.b16 %v351
      %v397 = vunpack.c.l.b16 %v352
      %v398 = vunpack.c.l.b16 %v353
      %v399 = vunpack.c.l.b16 %v354
      %v400 = vpack.c.b16 %v385, %v384
      %v401 = vpack.c.b16 %v387, %v386
      %v402 = vpack.c.b16 %v389, %v388
      %v403 = vpack.c.b16 %v391, %v390
      %v404 = vpack.c.b16 %v393, %v392
      %v405 = vpack.c.b16 %v395, %v394
      %v406 = vpack.c.b16 %v397, %v396
      %v407 = vpack.c.b16 %v399, %v398
      %416 = vmatprep.subr.bf16.mxu0 0
      %417 = vmatpush1.bf16.msra.mxu0 %v407
      %418 = vmatprep.subr.bf16.mxu0 0
      %419 = vmatpush1.bf16.msra.mxu0 %v406
      %420 = vmatprep.subr.bf16.mxu0 0
      %421 = vmatpush1.bf16.msra.mxu0 %v405
      %422 = vmatprep.subr.bf16.mxu0 0
      %423 = vmatpush1.bf16.msra.mxu0 %v404
      %424 = vmatprep.subr.bf16.mxu0 0
      %425 = vmatpush1.bf16.msra.mxu0 %v403
      %426 = vmatprep.subr.bf16.mxu0 0
      %427 = vmatpush1.bf16.msra.mxu0 %v402
      %428 = vmatprep.subr.bf16.mxu0 0
      %429 = vmatpush1.bf16.msra.mxu0 %v401
      %430 = vmatprep.subr.bf16.mxu0 0
      %431 = vmatpush1.bf16.msra.mxu0 %v400
      %432 = vmatprep.subr.bf16.mxu0 0
      %433 = vmatpush2.bf16.msra.mxu0 0
      %434 = vmatprep.subr.bf16.mxu0 0
      %435 = vmatpush2.bf16.msra.mxu0 0
      %436 = vmatprep.subr.bf16.mxu0 0
      %437 = vmatpush2.bf16.msra.mxu0 0
      %438 = vmatprep.subr.bf16.mxu0 0
      %439 = vmatpush2.bf16.msra.mxu0 0
      %440 = vmatprep.subr.bf16.mxu0 0
      %441 = vmatpush2.bf16.msra.mxu0 0
      %442 = vmatprep.subr.bf16.mxu0 0
      %443 = vmatpush2.bf16.msra.mxu0 0
      %444 = vmatprep.subr.bf16.mxu0 0
      %445 = vmatpush2.bf16.msra.mxu0 0
      %446 = vmatprep.subr.bf16.mxu0 0
      %447 = vmatpush2.bf16.msra.mxu0 0
      %448 = vmatprep.mubr.bf16.mxu0 0
      %449 = vmatmul.mubr.bf16.gmra.mxu0 %v366
      %v450 = vpop.f32.mrf.mxu0
      %v451 = vadd.f32 %v360, %v450
      %v452 = vpop.f32.mrf.mxu0
      %v453 = vpop.f32.mrf.mxu0
      %v454 = vadd.f32 %v360, %v453
      %v455 = vpop.f32.mrf.mxu0
      %456 = vdwg.mxu0
      %v457 = vmax.f32 %v451, 0.0
      %v458 = vmax.f32 %v454, 0.0
      %v459 = vpack.c.bf16 %v458, %v457
      %v460 = vld [vmem:[%s3] sm:$0xf]
      %v461 = vld [vmem:[%s3 + $0x4] sm:$0xf]
      %v462 = vld [vmem:[%s3 + $0x8] sm:$0xf]
      %v463 = vld [vmem:[%s3 + $0xc] sm:$0xf]
      %v464 = vld [vmem:[%s3 + $0x10] sm:$0xf]
      %v465 = vld [vmem:[%s3 + $0x14] sm:$0xf]
      %v466 = vld [vmem:[%s3 + $0x18] sm:$0xf]
      %v467 = vld [vmem:[%s3 + $0x1c] sm:$0xf]
      %v468 = vld [vmem:[%s3 + $0x20] sm:$0xf]
      %v469 = vld [vmem:[%s3 + $0x24] sm:$0xf]
      %v470 = vld [vmem:[%s3 + $0x28] sm:$0xf]
      %v471 = vld [vmem:[%s3 + $0x2c] sm:$0xf]
      %v472 = vld [vmem:[%s3 + $0x30] sm:$0xf]
      %v473 = vld [vmem:[%s3 + $0x34] sm:$0xf]
      %v474 = vld [vmem:[%s3 + $0x38] sm:$0xf]
      %v475 = vld [vmem:[%s3 + $0x3c] sm:$0xf]
      %v476 = vld [vmem:[%s4] sm:$0x1]
      %v478 = vlaneseq
      %v479 = vshrl.u32 %v478, 7
      %v480 = vsub.s32 0, %v479
      %v481 = vrot.slane %v476, %v480
      %v499 = vunpack.c.l.b16 %v460
      %v500 = vunpack.c.l.b16 %v461
      %v501 = vunpack.c.l.b16 %v462
      %v502 = vunpack.c.l.b16 %v463
      %v503 = vunpack.c.l.b16 %v464
      %v504 = vunpack.c.l.b16 %v465
      %v505 = vunpack.c.l.b16 %v466
      %v506 = vunpack.c.l.b16 %v467
      %v507 = vunpack.c.l.b16 %v468
      %v508 = vunpack.c.l.b16 %v469
      %v509 = vunpack.c.l.b16 %v470
      %v510 = vunpack.c.l.b16 %v471
      %v511 = vunpack.c.l.b16 %v472
      %v512 = vunpack.c.l.b16 %v473
      %v513 = vunpack.c.l.b16 %v474
      %v514 = vunpack.c.l.b16 %v475
      %v515 = vpack.c.b16 %v500, %v499
      %v516 = vpack.c.b16 %v502, %v501
      %v517 = vpack.c.b16 %v504, %v503
      %v518 = vpack.c.b16 %v506, %v505
      %v519 = vpack.c.b16 %v508, %v507
      %v520 = vpack.c.b16 %v510, %v509
      %v521 = vpack.c.b16 %v512, %v511
      %v522 = vpack.c.b16 %v514, %v513
      %531 = vmatprep.subr.bf16.mxu0 0
      %532 = vmatpush1.bf16.msra.mxu0 %v522
      %533 = vmatprep.subr.bf16.mxu0 0
      %534 = vmatpush1.bf16.msra.mxu0 %v521
      %535 = vmatprep.subr.bf16.mxu0 0
      %536 = vmatpush1.bf16.msra.mxu0 %v520
      %537 = vmatprep.subr.bf16.mxu0 0
      %538 = vmatpush1.bf16.msra.mxu0 %v519
      %539 = vmatprep.subr.bf16.mxu0 0
      %540 = vmatpush1.bf16.msra.mxu0 %v518
      %541 = vmatprep.subr.bf16.mxu0 0
      %542 = vmatpush1.bf16.msra.mxu0 %v517
      %543 = vmatprep.subr.bf16.mxu0 0
      %544 = vmatpush1.bf16.msra.mxu0 %v516
      %545 = vmatprep.subr.bf16.mxu0 0
      %546 = vmatpush1.bf16.msra.mxu0 %v515
      %547 = vmatprep.subr.bf16.mxu0 0
      %548 = vmatpush2.bf16.msra.mxu0 0
      %549 = vmatprep.subr.bf16.mxu0 0
      %550 = vmatpush2.bf16.msra.mxu0 0
      %551 = vmatprep.subr.bf16.mxu0 0
      %552 = vmatpush2.bf16.msra.mxu0 0
      %553 = vmatprep.subr.bf16.mxu0 0
      %554 = vmatpush2.bf16.msra.mxu0 0
      %555 = vmatprep.subr.bf16.mxu0 0
      %556 = vmatpush2.bf16.msra.mxu0 0
      %557 = vmatprep.subr.bf16.mxu0 0
      %558 = vmatpush2.bf16.msra.mxu0 0
      %559 = vmatprep.subr.bf16.mxu0 0
      %560 = vmatpush2.bf16.msra.mxu0 0
      %561 = vmatprep.subr.bf16.mxu0 0
      %562 = vmatpush2.bf16.msra.mxu0 0
      %563 = vmatprep.mubr.bf16.mxu0 0
      %564 = vmatmul.mubr.bf16.gmra.mxu0 %v459
      %v565 = vpop.f32.mrf.mxu0
      %v566 = vadd.f32 %v481, %v565
      %v567 = vpop.f32.mrf.mxu0
      %v568 = vpop.f32.mrf.mxu0
      %v569 = vadd.f32 %v481, %v568
      %v570 = vpop.f32.mrf.mxu0
      %571 = vdwg.mxu0
      %v572 = vmax.f32 %v566, 0.0
      %v573 = vmax.f32 %v569, 0.0
      %v574 = vpack.c.bf16 %v573, %v572
      %v575 = vld [vmem:[%s5] sm:$0xf]
      %v576 = vld [vmem:[%s5 + $0x4] sm:$0xf]
      %v577 = vld [vmem:[%s5 + $0x8] sm:$0xf]
      %v578 = vld [vmem:[%s5 + $0xc] sm:$0xf]
      %v579 = vld [vmem:[%s5 + $0x10] sm:$0xf]
      %v580 = vld [vmem:[%s5 + $0x14] sm:$0xf]
      %v581 = vld [vmem:[%s5 + $0x18] sm:$0xf]
      %v582 = vld [vmem:[%s5 + $0x1c] sm:$0xf]
      %v583 = vld [vmem:[%s5 + $0x20] sm:$0xf]
      %v584 = vld [vmem:[%s5 + $0x24] sm:$0xf]
      %v585 = vld [vmem:[%s5 + $0x28] sm:$0xf]
      %v586 = vld [vmem:[%s5 + $0x2c] sm:$0xf]
      %v587 = vld [vmem:[%s5 + $0x30] sm:$0xf]
      %v588 = vld [vmem:[%s5 + $0x34] sm:$0xf]
      %v589 = vld [vmem:[%s5 + $0x38] sm:$0xf]
      %v590 = vld [vmem:[%s5 + $0x3c] sm:$0xf]
      %v591 = vld [vmem:[%s6] sm:$0x1]
      %v593 = vlaneseq
      %v594 = vshrl.u32 %v593, 7
      %v595 = vsub.s32 0, %v594
      %v596 = vrot.slane %v591, %v595
      %v614 = vunpack.c.l.b16 %v575
      %v615 = vunpack.c.l.b16 %v576
      %v616 = vunpack.c.l.b16 %v577
      %v617 = vunpack.c.l.b16 %v578
      %v618 = vunpack.c.l.b16 %v579
      %v619 = vunpack.c.l.b16 %v580
      %v620 = vunpack.c.l.b16 %v581
      %v621 = vunpack.c.l.b16 %v582
      %v622 = vunpack.c.l.b16 %v583
      %v623 = vunpack.c.l.b16 %v584
      %v624 = vunpack.c.l.b16 %v585
      %v625 = vunpack.c.l.b16 %v586
      %v626 = vunpack.c.l.b16 %v587
      %v627 = vunpack.c.l.b16 %v588
      %v628 = vunpack.c.l.b16 %v589
      %v629 = vunpack.c.l.b16 %v590
      %v630 = vpack.c.b16 %v615, %v614
      %v631 = vpack.c.b16 %v617, %v616
      %v632 = vpack.c.b16 %v619, %v618
      %v633 = vpack.c.b16 %v621, %v620
      %v634 = vpack.c.b16 %v623, %v622
      %v635 = vpack.c.b16 %v625, %v624
      %v636 = vpack.c.b16 %v627, %v626
      %v637 = vpack.c.b16 %v629, %v628
      %646 = vmatprep.subr.bf16.mxu0 0
      %647 = vmatpush1.bf16.msra.mxu0 %v637
      %648 = vmatprep.subr.bf16.mxu0 0
      %649 = vmatpush1.bf16.msra.mxu0 %v636
      %650 = vmatprep.subr.bf16.mxu0 0
      %651 = vmatpush1.bf16.msra.mxu0 %v635
      %652 = vmatprep.subr.bf16.mxu0 0
      %653 = vmatpush1.bf16.msra.mxu0 %v634
      %654 = vmatprep.subr.bf16.mxu0 0
      %655 = vmatpush1.bf16.msra.mxu0 %v633
      %656 = vmatprep.subr.bf16.mxu0 0
      %657 = vmatpush1.bf16.msra.mxu0 %v632
      %658 = vmatprep.subr.bf16.mxu0 0
      %659 = vmatpush1.bf16.msra.mxu0 %v631
      %660 = vmatprep.subr.bf16.mxu0 0
      %661 = vmatpush1.bf16.msra.mxu0 %v630
      %662 = vmatprep.subr.bf16.mxu0 0
      %663 = vmatpush2.bf16.msra.mxu0 0
      %664 = vmatprep.subr.bf16.mxu0 0
      %665 = vmatpush2.bf16.msra.mxu0 0
      %666 = vmatprep.subr.bf16.mxu0 0
      %667 = vmatpush2.bf16.msra.mxu0 0
      %668 = vmatprep.subr.bf16.mxu0 0
      %669 = vmatpush2.bf16.msra.mxu0 0
      %670 = vmatprep.subr.bf16.mxu0 0
      %671 = vmatpush2.bf16.msra.mxu0 0
      %672 = vmatprep.subr.bf16.mxu0 0
      %673 = vmatpush2.bf16.msra.mxu0 0
      %674 = vmatprep.subr.bf16.mxu0 0
      %675 = vmatpush2.bf16.msra.mxu0 0
      %676 = vmatprep.subr.bf16.mxu0 0
      %677 = vmatpush2.bf16.msra.mxu0 0
      %678 = vmatprep.mubr.bf16.mxu0 0
      %679 = vmatmul.mubr.bf16.gmra.mxu0 %v574
      %v680 = vpop.f32.mrf.mxu0
      %v681 = vadd.f32 %v596, %v680
      %v682 = vpop.f32.mrf.mxu0
      %v683 = vpop.f32.mrf.mxu0
      %v684 = vadd.f32 %v596, %v683
      %v685 = vpop.f32.mrf.mxu0
      %686 = vdwg.mxu0
      %687 = vadd.xlane.f32.xlu0 %v681
      %v688 = vpop.xlane.xlu0 %687
      %689 = vadd.xlane.f32.xlu0 %v684
      %v690 = vpop.xlane.xlu0 %689
      %v691 = vrcp.pop 128.0
      %v692 = vmul.f32 %v688, %v691
      %v693 = vmul.f32 %v690, %v691
      %v694 = vsub.f32 %v681, %v692
      %v695 = vsub.f32 %v684, %v693
      %v696 = vmul.f32 %v694, %v694
      %v697 = vmul.f32 %v695, %v695
      %698 = vadd.xlane.f32.xlu0 %v696
      %v699 = vpop.xlane.xlu0 %698
      %700 = vadd.xlane.f32.xlu0 %v697
      %v701 = vpop.xlane.xlu0 %700
      %v702 = vmul.f32 %v699, 0.0078125
      %v703 = vmul.f32 %v701, 0.0078125
      %v704 = vadd.f32 %v702, 1e-05
      %v705 = vadd.f32 %v703, 1e-05
      %v706 = vrsqrt.pop %v704
      %v707 = vrsqrt.pop %v705
      %v708 = vmul.f32 %v694, %v706
      %v709 = vmul.f32 %v695, %v707
      %v710 = vld [vmem:[%s7] sm:$0x1]
      %v712 = vlaneseq
      %v713 = vshrl.u32 %v712, 7
      %v714 = vsub.s32 0, %v713
      %v715 = vrot.slane %v710, %v714
      %v717 = vmul.f32 %v708, %v715
      %v718 = vmul.f32 %v709, %v715
      %v719 = vld [vmem:[%s8] sm:$0x1]
      %v721 = vlaneseq
      %v722 = vshrl.u32 %v721, 7
      %v723 = vsub.s32 0, %v722
      %v724 = vrot.slane %v719, %v723
      %v726 = vadd.f32 %v717, %v724
      %v727 = vadd.f32 %v718, %v724
      %v728 = vpack.c.bf16 %v727, %v726
      %v730 = vunpack.c.l.b16 %v728
      %v731 = vunpack.c.h.b16 %v728
      %v732 = vpack.c.b16 %v730, %v730
      %v733 = vpack.c.b16 %v731, %v731
      %736 = vst [vmem:[%s334] sm:$0xf] %v732
      %737 = vst [vmem:[%s334 + $0x4] sm:$0xf] %v733
      %s738 = smul.u32 2, %s20
      %p739 = scmp.lt.s32.totalorder %s738, 7
      %s740 = scalar_select %p739, %s738, 7
      %s741 = smul.addr %s740, 4
      %s742 = scalar_lea.vmem %s9, %s741
      // Predicated region
      $region57: #{learned_simulator_forward.7} parent=55 // pred_check
        %p743 = pneg %p232
      $region58: #{learned_simulator_forward.7} parent=55 // pred_check_branch
        %745 = sbr.rel (%p743) target = $region60
      $region59: #{learned_simulator_forward.7} parent=55 // pred_region
        %s746 = smul.u32 2, %s20
      $region60: #{learned_simulator_forward.7} parent=55 // pred_fallthru
        _
    $region56: #{learned_simulator_forward.7} parent=5 // pred_fallthru
      _
    %p747 = scmp.le.s32.totalorder 2, %s15
    // Predicated region
    $region61: #{learned_simulator_forward.7} parent=5 // pred_check
      %p748 = pneg %p747
    $region62: #{learned_simulator_forward.7} parent=5 // pred_check_branch
      %750 = sbr.rel (%p748) target = $region64
    $region63: #{learned_simulator_forward.7} parent=5 // pred_region
      %s751 = ssub.s32 %s15, 2
      // Predicated region
      $region65: #{learned_simulator_forward.7} parent=63 // pred_check
        %p752 = pneg %p238
      $region66: #{learned_simulator_forward.7} parent=63 // pred_check_branch
        %754 = sbr.rel (%p752) target = $region68
      $region67: #{learned_simulator_forward.7} parent=63 // pred_region
        %s755 = smul.u32 2, %s21
        %p756 = scmp.lt.s32.totalorder %s755, 7
        %s757 = scalar_select %p756, %s755, 7
        %s758 = smul.addr %s757, 4
        %s759 = scalar_lea.vmem %s9, %s758
      $region68: #{learned_simulator_forward.7} parent=63 // pred_fallthru
        _
    $region64: #{learned_simulator_forward.7} parent=5 // pred_fallthru
      _
  $region6: #{learned_simulator_forward.7} parent=0 // loop_footer
    %s19 = sadd.s32 1, %s15
  $region7: #{learned_simulator_forward.7} parent=0 // loop_footer_branch
    %14 = sbr.rel target = $region3
  $region8: #{learned_simulator_forward.7} parent=0 // loop_exit
    _

// kernel: learned_simulator_forward.9
$region0: #{learned_simulator_forward.9}
  #allocation0 [shape = 'u32[]', space=smem, size = 0x4, offset = 0x4, fixed_abs, tag = 'smem constant byte address 0x4 - core index']
  #allocation1 [shape = 'u32[144,128]{1,0:T(1,128)}', space=vmem, size = 0x12000, scoped, tag = 'internal scratch']
  %s0 = inlined_call_operand.vmem [shape: bf16[192,128], index: 0, kind: input, shape index: {}]
  %s1 = inlined_call_operand.vmem [shape: bf16[192,128], index: 1, kind: input, shape index: {}]
  %s2 = inlined_call_operand.vmem [shape: bf16[192,128], index: 2, kind: input, shape index: {}]
  %s3 = inlined_call_operand.vmem [shape: bf16[128,128], index: 3, kind: input, shape index: {}]
  %s4 = inlined_call_operand.vmem [shape: bf16[128,128], index: 4, kind: input, shape index: {}]
  %s5 = inlined_call_operand.vmem [shape: bf16[128,128], index: 5, kind: input, shape index: {}]
  %s6 = inlined_call_operand.vmem [shape: f32[1,128], index: 6, kind: input, shape index: {}, may-alias: {6,8,10,12}]
  %s7 = inlined_call_operand.vmem [shape: bf16[128,128], index: 7, kind: input, shape index: {}]
  %s8 = inlined_call_operand.vmem [shape: f32[1,128], index: 8, kind: input, shape index: {}, may-alias: {6,8,10,12}]
  %s9 = inlined_call_operand.vmem [shape: bf16[128,128], index: 9, kind: input, shape index: {}]
  %s10 = inlined_call_operand.vmem [shape: f32[1,128], index: 10, kind: input, shape index: {}, may-alias: {6,8,10,12}]
  %s11 = inlined_call_operand.vmem [shape: f32[1,128], index: 11, kind: input, shape index: {}]
  %s12 = inlined_call_operand.vmem [shape: f32[1,128], index: 12, kind: input, shape index: {}, may-alias: {6,8,10,12}]
  %s13 = inlined_call_operand.vmem [shape: bf16[192,128], index: 13, kind: output, shape index: {0}]
  %s14 = inlined_call_operand.vmem [shape: f32[192,128], index: 14, kind: output, shape index: {1}]
  %15 = xla_tuple %s13, %s14
  %s16 = sld [smem:[#allocation0]]
  $region93: #{learned_simulator_forward.9} parent=0
    _
  %s18 = ssub.s32 1, %s16
  %s19 = scalar_select 0, %s18, %s16
  loop: start=0, step=1, limit=6
  $region2: #{learned_simulator_forward.9} parent=0 // loop_pre_header
    _
  $region3: #{learned_simulator_forward.9} parent=0 // loop_header
    %s21 = sphi 0, %s25
    %p22 = scmp.ge.s32.totalorder %s21, 6
    %s31 = sphi 0, %s33
    %s34 = sphi 0, %s31
    %s35 = sphi 0, %s34
    %s51 = sphi 0, %s35
    %s57 = sphi 0, %s59
    %s60 = sphi 0, %s57
    %s61 = sphi 0, %s60
    %s77 = sphi 0, %s61
    %s83 = sphi 0, %s85
    %s86 = sphi 0, %s83
    %s87 = sphi 0, %s86
    %s103 = sphi 0, %s87
    %s107 = sphi 0, %s107
    %s109 = sphi 0, %s107
    %s110 = sphi 0, %s109
    %s124 = sphi 0, %s110
    %s128 = sphi 0, %s128
    %s130 = sphi 0, %s128
    %s131 = sphi 0, %s130
    %s145 = sphi 0, %s131
    %s149 = sphi 0, %s149
    %s151 = sphi 0, %s149
    %s152 = sphi 0, %s151
    %s166 = sphi 0, %s152
    %s170 = sphi 0, %s170
    %s172 = sphi 0, %s170
    %s173 = sphi 0, %s172
    %s187 = sphi 0, %s173
    %s191 = sphi 0, %s191
    %s193 = sphi 0, %s191
    %s194 = sphi 0, %s193
    %s208 = sphi 0, %s194
    %s212 = sphi 0, %s212
    %s214 = sphi 0, %s212
    %s215 = sphi 0, %s214
    %s229 = sphi 0, %s215
    %s233 = sphi 0, %s233
    %s235 = sphi 0, %s233
    %s236 = sphi 0, %s235
    %s250 = sphi 0, %s236
    %s254 = sphi 0, %s254
    %s256 = sphi 0, %s254
    %s257 = sphi 0, %s256
    %s271 = sphi 0, %s257
    %s275 = sphi 0, %s275
    %s277 = sphi 0, %s275
    %s278 = sphi 0, %s277
    %s292 = sphi 0, %s278
    %s296 = sphi 0, %s296
    %s298 = sphi 0, %s296
    %s299 = sphi 0, %s298
    %s313 = sphi 0, %s299
    %s319 = sphi 0, %s321
    %s322 = sphi 0, %s319
    %s323 = sphi 0, %s322
    %s339 = sphi 0, %s323
    %s345 = sphi 0, %s347
    %s348 = sphi 0, %s345
    %s349 = sphi 0, %s348
    %s365 = sphi 0, %s349
  $region4: #{learned_simulator_forward.9} parent=0 // loop_header_branch
    %24 = sbr.rel (%p22) target = $region8
  $region5: #{learned_simulator_forward.9} parent=0 // loop_body
    %s26 = ssub.s32 %s21, 1
    %s27 = ssub.s32 %s21, 2
    %s28 = sadd.s32 %s21, 1
    %s29 = ssub.s32 %s21, %s28
    %p30 = scmp.eq.s32.totalorder %s29, 0
    %s32 = sadd.s32 %s31, 1
    %s33 = scalar_select %p30, %s31, %s32
    %p36 = pneg %p30
    %p37 = scmp.eq.s32.totalorder %s21, 3
    %p38 = por %p36, %p37
    %p39 = scmp.ne.s32.totalorder %s31, %s34
    %p40 = scmp.eq.s32.totalorder %s21, 0
    %p41 = por %p39, %p40
    %p42 = scmp.ne.s32.totalorder %s31, %s34
    %p43 = scmp.eq.s32.totalorder %s26, 3
    %p44 = por %p42, %p43
    %p45 = scmp.ne.s32.totalorder %s34, %s35
    %p46 = scmp.eq.s32.totalorder %s26, 0
    %p47 = por %p45, %p46
    %p48 = scmp.ne.s32.totalorder %s34, %s35
    %p49 = scmp.eq.s32.totalorder %s27, 3
    %p50 = por %p48, %p49
    %p52 = scmp.ne.s32.totalorder %s35, %s51
    %p53 = scmp.eq.s32.totalorder %s27, 0
    %p54 = por %p52, %p53
    %s55 = ssub.s32 %s21, %s28
    %p56 = scmp.eq.s32.totalorder %s55, 0
    %s58 = sadd.s32 %s57, 1
    %s59 = scalar_select %p56, %s57, %s58
    %p62 = pneg %p56
    %p63 = scmp.eq.s32.totalorder %s21, 3
    %p64 = por %p62, %p63
    %p65 = scmp.ne.s32.totalorder %s57, %s60
    %p66 = scmp.eq.s32.totalorder %s21, 0
    %p67 = por %p65, %p66
    %p68 = scmp.ne.s32.totalorder %s57, %s60
    %p69 = scmp.eq.s32.totalorder %s26, 3
    %p70 = por %p68, %p69
    %p71 = scmp.ne.s32.totalorder %s60, %s61
    %p72 = scmp.eq.s32.totalorder %s26, 0
    %p73 = por %p71, %p72
    %p74 = scmp.ne.s32.totalorder %s60, %s61
    %p75 = scmp.eq.s32.totalorder %s27, 3
    %p76 = por %p74, %p75
    %p78 = scmp.ne.s32.totalorder %s61, %s77
    %p79 = scmp.eq.s32.totalorder %s27, 0
    %p80 = por %p78, %p79
    %s81 = ssub.s32 %s21, %s28
    %p82 = scmp.eq.s32.totalorder %s81, 0
    %s84 = sadd.s32 %s83, 1
    %s85 = scalar_select %p82, %s83, %s84
    %p88 = pneg %p82
    %p89 = scmp.eq.s32.totalorder %s21, 3
    %p90 = por %p88, %p89
    %p91 = scmp.ne.s32.totalorder %s83, %s86
    %p92 = scmp.eq.s32.totalorder %s21, 0
    %p93 = por %p91, %p92
    %p94 = scmp.ne.s32.totalorder %s83, %s86
    %p95 = scmp.eq.s32.totalorder %s26, 3
    %p96 = por %p94, %p95
    %p97 = scmp.ne.s32.totalorder %s86, %s87
    %p98 = scmp.eq.s32.totalorder %s26, 0
    %p99 = por %p97, %p98
    %p100 = scmp.ne.s32.totalorder %s86, %s87
    %p101 = scmp.eq.s32.totalorder %s27, 3
    %p102 = por %p100, %p101
    %p104 = scmp.ne.s32.totalorder %s87, %s103
    %p105 = scmp.eq.s32.totalorder %s27, 0
    %p106 = por %p104, %p105
    %s108 = sadd.s32 %s107, 1
    %p111 = scmp.eq.s32.totalorder %s21, 3
    %p112 = scmp.ne.s32.totalorder %s107, %s109
    %p113 = scmp.eq.s32.totalorder %s21, 0
    %p114 = por %p112, %p113
    %p115 = scmp.ne.s32.totalorder %s107, %s109
    %p116 = scmp.eq.s32.totalorder %s26, 3
    %p117 = por %p115, %p116
    %p118 = scmp.ne.s32.totalorder %s109, %s110
    %p119 = scmp.eq.s32.totalorder %s26, 0
    %p120 = por %p118, %p119
    %p121 = scmp.ne.s32.totalorder %s109, %s110
    %p122 = scmp.eq.s32.totalorder %s27, 3
    %p123 = por %p121, %p122
    %p125 = scmp.ne.s32.totalorder %s110, %s124
    %p126 = scmp.eq.s32.totalorder %s27, 0
    %p127 = por %p125, %p126
    %s129 = sadd.s32 %s128, 1
    %p132 = scmp.eq.s32.totalorder %s21, 3
    %p133 = scmp.ne.s32.totalorder %s128, %s130
    %p134 = scmp.eq.s32.totalorder %s21, 0
    %p135 = por %p133, %p134
    %p136 = scmp.ne.s32.totalorder %s128, %s130
    %p137 = scmp.eq.s32.totalorder %s26, 3
    %p138 = por %p136, %p137
    %p139 = scmp.ne.s32.totalorder %s130, %s131
    %p140 = scmp.eq.s32.totalorder %s26, 0
    %p141 = por %p139, %p140
    %p142 = scmp.ne.s32.totalorder %s130, %s131
    %p143 = scmp.eq.s32.totalorder %s27, 3
    %p144 = por %p142, %p143
    %p146 = scmp.ne.s32.totalorder %s131, %s145
    %p147 = scmp.eq.s32.totalorder %s27, 0
    %p148 = por %p146, %p147
    %s150 = sadd.s32 %s149, 1
    %p153 = scmp.eq.s32.totalorder %s21, 3
    %p154 = scmp.ne.s32.totalorder %s149, %s151
    %p155 = scmp.eq.s32.totalorder %s21, 0
    %p156 = por %p154, %p155
    %p157 = scmp.ne.s32.totalorder %s149, %s151
    %p158 = scmp.eq.s32.totalorder %s26, 3
    %p159 = por %p157, %p158
    %p160 = scmp.ne.s32.totalorder %s151, %s152
    %p161 = scmp.eq.s32.totalorder %s26, 0
    %p162 = por %p160, %p161
    %p163 = scmp.ne.s32.totalorder %s151, %s152
    %p164 = scmp.eq.s32.totalorder %s27, 3
    %p165 = por %p163, %p164
    %p167 = scmp.ne.s32.totalorder %s152, %s166
    %p168 = scmp.eq.s32.totalorder %s27, 0
    %p169 = por %p167, %p168
    %s171 = sadd.s32 %s170, 1
    %p174 = scmp.eq.s32.totalorder %s21, 3
    %p175 = scmp.ne.s32.totalorder %s170, %s172
    %p176 = scmp.eq.s32.totalorder %s21, 0
    %p177 = por %p175, %p176
    %p178 = scmp.ne.s32.totalorder %s170, %s172
    %p179 = scmp.eq.s32.totalorder %s26, 3
    %p180 = por %p178, %p179
    %p181 = scmp.ne.s32.totalorder %s172, %s173
    %p182 = scmp.eq.s32.totalorder %s26, 0
    %p183 = por %p181, %p182
    %p184 = scmp.ne.s32.totalorder %s172, %s173
    %p185 = scmp.eq.s32.totalorder %s27, 3
    %p186 = por %p184, %p185
    %p188 = scmp.ne.s32.totalorder %s173, %s187
    %p189 = scmp.eq.s32.totalorder %s27, 0
    %p190 = por %p188, %p189
    %s192 = sadd.s32 %s191, 1
    %p195 = scmp.eq.s32.totalorder %s21, 3
    %p196 = scmp.ne.s32.totalorder %s191, %s193
    %p197 = scmp.eq.s32.totalorder %s21, 0
    %p198 = por %p196, %p197
    %p199 = scmp.ne.s32.totalorder %s191, %s193
    %p200 = scmp.eq.s32.totalorder %s26, 3
    %p201 = por %p199, %p200
    %p202 = scmp.ne.s32.totalorder %s193, %s194
    %p203 = scmp.eq.s32.totalorder %s26, 0
    %p204 = por %p202, %p203
    %p205 = scmp.ne.s32.totalorder %s193, %s194
    %p206 = scmp.eq.s32.totalorder %s27, 3
    %p207 = por %p205, %p206
    %p209 = scmp.ne.s32.totalorder %s194, %s208
    %p210 = scmp.eq.s32.totalorder %s27, 0
    %p211 = por %p209, %p210
    %s213 = sadd.s32 %s212, 1
    %p216 = scmp.eq.s32.totalorder %s21, 3
    %p217 = scmp.ne.s32.totalorder %s212, %s214
    %p218 = scmp.eq.s32.totalorder %s21, 0
    %p219 = por %p217, %p218
    %p220 = scmp.ne.s32.totalorder %s212, %s214
    %p221 = scmp.eq.s32.totalorder %s26, 3
    %p222 = por %p220, %p221
    %p223 = scmp.ne.s32.totalorder %s214, %s215
    %p224 = scmp.eq.s32.totalorder %s26, 0
    %p225 = por %p223, %p224
    %p226 = scmp.ne.s32.totalorder %s214, %s215
    %p227 = scmp.eq.s32.totalorder %s27, 3
    %p228 = por %p226, %p227
    %p230 = scmp.ne.s32.totalorder %s215, %s229
    %p231 = scmp.eq.s32.totalorder %s27, 0
    %p232 = por %p230, %p231
    %s234 = sadd.s32 %s233, 1
    %p237 = scmp.eq.s32.totalorder %s21, 3
    %p238 = scmp.ne.s32.totalorder %s233, %s235
    %p239 = scmp.eq.s32.totalorder %s21, 0
    %p240 = por %p238, %p239
    %p241 = scmp.ne.s32.totalorder %s233, %s235
    %p242 = scmp.eq.s32.totalorder %s26, 3
    %p243 = por %p241, %p242
    %p244 = scmp.ne.s32.totalorder %s235, %s236
    %p245 = scmp.eq.s32.totalorder %s26, 0
    %p246 = por %p244, %p245
    %p247 = scmp.ne.s32.totalorder %s235, %s236
    %p248 = scmp.eq.s32.totalorder %s27, 3
    %p249 = por %p247, %p248
    %p251 = scmp.ne.s32.totalorder %s236, %s250
    %p252 = scmp.eq.s32.totalorder %s27, 0
    %p253 = por %p251, %p252
    %s255 = sadd.s32 %s254, 1
    %p258 = scmp.eq.s32.totalorder %s21, 3
    %p259 = scmp.ne.s32.totalorder %s254, %s256
    %p260 = scmp.eq.s32.totalorder %s21, 0
    %p261 = por %p259, %p260
    %p262 = scmp.ne.s32.totalorder %s254, %s256
    %p263 = scmp.eq.s32.totalorder %s26, 3
    %p264 = por %p262, %p263
    %p265 = scmp.ne.s32.totalorder %s256, %s257
    %p266 = scmp.eq.s32.totalorder %s26, 0
    %p267 = por %p265, %p266
    %p268 = scmp.ne.s32.totalorder %s256, %s257
    %p269 = scmp.eq.s32.totalorder %s27, 3
    %p270 = por %p268, %p269
    %p272 = scmp.ne.s32.totalorder %s257, %s271
    %p273 = scmp.eq.s32.totalorder %s27, 0
    %p274 = por %p272, %p273
    %s276 = sadd.s32 %s275, 1
    %p279 = scmp.eq.s32.totalorder %s21, 3
    %p280 = scmp.ne.s32.totalorder %s275, %s277
    %p281 = scmp.eq.s32.totalorder %s21, 0
    %p282 = por %p280, %p281
    %p283 = scmp.ne.s32.totalorder %s275, %s277
    %p284 = scmp.eq.s32.totalorder %s26, 3
    %p285 = por %p283, %p284
    %p286 = scmp.ne.s32.totalorder %s277, %s278
    %p287 = scmp.eq.s32.totalorder %s26, 0
    %p288 = por %p286, %p287
    %p289 = scmp.ne.s32.totalorder %s277, %s278
    %p290 = scmp.eq.s32.totalorder %s27, 3
    %p291 = por %p289, %p290
    %p293 = scmp.ne.s32.totalorder %s278, %s292
    %p294 = scmp.eq.s32.totalorder %s27, 0
    %p295 = por %p293, %p294
    %s297 = sadd.s32 %s296, 1
    %p300 = scmp.eq.s32.totalorder %s21, 3
    %p301 = scmp.ne.s32.totalorder %s296, %s298
    %p302 = scmp.eq.s32.totalorder %s21, 0
    %p303 = por %p301, %p302
    %p304 = scmp.ne.s32.totalorder %s296, %s298
    %p305 = scmp.eq.s32.totalorder %s26, 3
    %p306 = por %p304, %p305
    %p307 = scmp.ne.s32.totalorder %s298, %s299
    %p308 = scmp.eq.s32.totalorder %s26, 0
    %p309 = por %p307, %p308
    %p310 = scmp.ne.s32.totalorder %s298, %s299
    %p311 = scmp.eq.s32.totalorder %s27, 3
    %p312 = por %p310, %p311
    %p314 = scmp.ne.s32.totalorder %s299, %s313
    %p315 = scmp.eq.s32.totalorder %s27, 0
    %p316 = por %p314, %p315
    %s317 = ssub.s32 %s21, %s28
    %p318 = scmp.eq.s32.totalorder %s317, 0
    %s320 = sadd.s32 %s319, 1
    %s321 = scalar_select %p318, %s319, %s320
    %p324 = pneg %p318
    %p325 = scmp.eq.s32.totalorder %s21, 3
    %p326 = por %p324, %p325
    %p327 = scmp.ne.s32.totalorder %s319, %s322
    %p328 = scmp.eq.s32.totalorder %s21, 0
    %p329 = por %p327, %p328
    %p330 = scmp.ne.s32.totalorder %s319, %s322
    %p331 = scmp.eq.s32.totalorder %s26, 3
    %p332 = por %p330, %p331
    %p333 = scmp.ne.s32.totalorder %s322, %s323
    %p334 = scmp.eq.s32.totalorder %s26, 0
    %p335 = por %p333, %p334
    %p336 = scmp.ne.s32.totalorder %s322, %s323
    %p337 = scmp.eq.s32.totalorder %s27, 3
    %p338 = por %p336, %p337
    %p340 = scmp.ne.s32.totalorder %s323, %s339
    %p341 = scmp.eq.s32.totalorder %s27, 0
    %p342 = por %p340, %p341
    %s343 = ssub.s32 %s21, %s28
    %p344 = scmp.eq.s32.totalorder %s343, 0
    %s346 = sadd.s32 %s345, 1
    %s347 = scalar_select %p344, %s345, %s346
    %p350 = pneg %p344
    %p351 = scmp.eq.s32.totalorder %s21, 3
    %p352 = por %p350, %p351
    %p353 = scmp.ne.s32.totalorder %s345, %s348
    %p354 = scmp.eq.s32.totalorder %s21, 0
    %p355 = por %p353, %p354
    %p356 = scmp.ne.s32.totalorder %s345, %s348
    %p357 = scmp.eq.s32.totalorder %s26, 3
    %p358 = por %p356, %p357
    %p359 = scmp.ne.s32.totalorder %s348, %s349
    %p360 = scmp.eq.s32.totalorder %s26, 0
    %p361 = por %p359, %p360
    %p362 = scmp.ne.s32.totalorder %s348, %s349
    %p363 = scmp.eq.s32.totalorder %s27, 3
    %p364 = por %p362, %p363
    %p366 = scmp.ne.s32.totalorder %s349, %s365
    %p367 = scmp.eq.s32.totalorder %s27, 0
    %p368 = por %p366, %p367
    %p369 = scmp.le.s32.totalorder 1, %s21
    %p370 = scmp.lt.s32.totalorder %s21, 5
    %p371 = pnand %p369, %p370
    %p372 = pneg %p371
    // Predicated region
    $region9: #{learned_simulator_forward.9} parent=5 // pred_check
      _
    $region10: #{learned_simulator_forward.9} parent=5 // pred_check_branch
      %374 = sbr.rel (%p371) target = $region12
    $region11: #{learned_simulator_forward.9} parent=5 // pred_region
      %s375 = ssub.s32 %s21, 1
      // Predicated region
      $region13: #{learned_simulator_forward.9} parent=11 // pred_check
        %p376 = pneg %p120
      $region14: #{learned_simulator_forward.9} parent=11 // pred_check_branch
        %378 = sbr.rel (%p376) target = $region16
      $region15: #{learned_simulator_forward.9} parent=11 // pred_region
        _
      $region16: #{learned_simulator_forward.9} parent=11 // pred_fallthru
        _
      // Predicated region
      $region17: #{learned_simulator_forward.9} parent=11 // pred_check
        %p379 = pneg %p141
      $region18: #{learned_simulator_forward.9} parent=11 // pred_check_branch
        %381 = sbr.rel (%p379) target = $region20
      $region19: #{learned_simulator_forward.9} parent=11 // pred_region
        _
      $region20: #{learned_simulator_forward.9} parent=11 // pred_fallthru
        _
      // Predicated region
      $region21: #{learned_simulator_forward.9} parent=11 // pred_check
        %p382 = pneg %p162
      $region22: #{learned_simulator_forward.9} parent=11 // pred_check_branch
        %384 = sbr.rel (%p382) target = $region24
      $region23: #{learned_simulator_forward.9} parent=11 // pred_region
        _
      $region24: #{learned_simulator_forward.9} parent=11 // pred_fallthru
        _
      // Predicated region
      $region25: #{learned_simulator_forward.9} parent=11 // pred_check
        %p385 = pneg %p183
      $region26: #{learned_simulator_forward.9} parent=11 // pred_check_branch
        %387 = sbr.rel (%p385) target = $region28
      $region27: #{learned_simulator_forward.9} parent=11 // pred_region
        _
      $region28: #{learned_simulator_forward.9} parent=11 // pred_fallthru
        _
      // Predicated region
      $region29: #{learned_simulator_forward.9} parent=11 // pred_check
        %p388 = pneg %p204
      $region30: #{learned_simulator_forward.9} parent=11 // pred_check_branch
        %390 = sbr.rel (%p388) target = $region32
      $region31: #{learned_simulator_forward.9} parent=11 // pred_region
        _
      $region32: #{learned_simulator_forward.9} parent=11 // pred_fallthru
        _
      // Predicated region
      $region33: #{learned_simulator_forward.9} parent=11 // pred_check
        %p391 = pneg %p225
      $region34: #{learned_simulator_forward.9} parent=11 // pred_check_branch
        %393 = sbr.rel (%p391) target = $region36
      $region35: #{learned_simulator_forward.9} parent=11 // pred_region
        _
      $region36: #{learned_simulator_forward.9} parent=11 // pred_fallthru
        _
      // Predicated region
      $region37: #{learned_simulator_forward.9} parent=11 // pred_check
        %p394 = pneg %p246
      $region38: #{learned_simulator_forward.9} parent=11 // pred_check_branch
        %396 = sbr.rel (%p394) target = $region40
      $region39: #{learned_simulator_forward.9} parent=11 // pred_region
        _
      $region40: #{learned_simulator_forward.9} parent=11 // pred_fallthru
        _
      // Predicated region
      $region41: #{learned_simulator_forward.9} parent=11 // pred_check
        %p397 = pneg %p267
      $region42: #{learned_simulator_forward.9} parent=11 // pred_check_branch
        %399 = sbr.rel (%p397) target = $region44
      $region43: #{learned_simulator_forward.9} parent=11 // pred_region
        _
      $region44: #{learned_simulator_forward.9} parent=11 // pred_fallthru
        _
      // Predicated region
      $region45: #{learned_simulator_forward.9} parent=11 // pred_check
        %p400 = pneg %p288
      $region46: #{learned_simulator_forward.9} parent=11 // pred_check_branch
        %402 = sbr.rel (%p400) target = $region48
      $region47: #{learned_simulator_forward.9} parent=11 // pred_region
        _
      $region48: #{learned_simulator_forward.9} parent=11 // pred_fallthru
        _
      // Predicated region
      $region49: #{learned_simulator_forward.9} parent=11 // pred_check
        %p403 = pneg %p309
      $region50: #{learned_simulator_forward.9} parent=11 // pred_check_branch
        %405 = sbr.rel (%p403) target = $region52
      $region51: #{learned_simulator_forward.9} parent=11 // pred_region
        _
      $region52: #{learned_simulator_forward.9} parent=11 // pred_fallthru
        _
    $region12: #{learned_simulator_forward.9} parent=5 // pred_fallthru
      _
    %p406 = scmp.lt.s32.totalorder %s21, 4
    // Predicated region
    $region53: #{learned_simulator_forward.9} parent=5 // pred_check
      %p407 = pneg %p406
    $region54: #{learned_simulator_forward.9} parent=5 // pred_check_branch
      %409 = sbr.rel (%p407) target = $region56
    $region55: #{learned_simulator_forward.9} parent=5 // pred_region
      // Predicated region
      $region57: #{learned_simulator_forward.9} parent=55 // pred_check
        %p410 = pneg %p41
      $region58: #{learned_simulator_forward.9} parent=55 // pred_check_branch
        %412 = sbr.rel (%p410) target = $region60
      $region59: #{learned_simulator_forward.9} parent=55 // pred_region
        %s413 = smul.u32 6, %s21
        %p414 = scmp.lt.s32.totalorder %s413, 23
        %s415 = scalar_select %p414, %s413, 23
        %s416 = smul.addr %s415, 4
        %s417 = scalar_lea.vmem %s0, %s416
        %s418 = smul.u32 6, %s21
      $region60: #{learned_simulator_forward.9} parent=55 // pred_fallthru
        _
      // Predicated region
      $region61: #{learned_simulator_forward.9} parent=55 // pred_check
        %p419 = pneg %p67
      $region62: #{learned_simulator_forward.9} parent=55 // pred_check_branch
        %421 = sbr.rel (%p419) target = $region64
      $region63: #{learned_simulator_forward.9} parent=55 // pred_region
        %s422 = smul.u32 6, %s21
        %p423 = scmp.lt.s32.totalorder %s422, 23
        %s424 = scalar_select %p423, %s422, 23
        %s425 = smul.addr %s424, 4
        %s426 = scalar_lea.vmem %s1, %s425
        %s427 = smul.u32 6, %s21
      $region64: #{learned_simulator_forward.9} parent=55 // pred_fallthru
        _
      // Predicated region
      $region65: #{learned_simulator_forward.9} parent=55 // pred_check
        %p428 = pneg %p93
      $region66: #{learned_simulator_forward.9} parent=55 // pred_check_branch
        %430 = sbr.rel (%p428) target = $region68
      $region67: #{learned_simulator_forward.9} parent=55 // pred_region
        %s431 = smul.u32 6, %s21
        %p432 = scmp.lt.s32.totalorder %s431, 23
        %s433 = scalar_select %p432, %s431, 23
        %s434 = smul.addr %s433, 4
        %s435 = scalar_lea.vmem %s2, %s434
        %s436 = smul.u32 6, %s21
      $region68: #{learned_simulator_forward.9} parent=55 // pred_fallthru
        _
    $region56: #{learned_simulator_forward.9} parent=5 // pred_fallthru
      _
    %p437 = scmp.le.s32.totalorder 1, %s21
    %p438 = scmp.lt.s32.totalorder %s21, 5
    %p439 = pnand %p437, %p438
    %p440 = pneg %p439
    // Predicated region
    $region69: #{learned_simulator_forward.9} parent=5 // pred_check
      _
    $region70: #{learned_simulator_forward.9} parent=5 // pred_check_branch
      %442 = sbr.rel (%p439) target = $region72
    $region71: #{learned_simulator_forward.9} parent=5 // pred_region
      %s443 = ssub.s32 %s21, 1
      %s444 = smul.u32 6, %s26
      %p445 = scmp.lt.s32.totalorder %s444, 23
      %s446 = scalar_select %p445, %s444, 23
      %s447 = smul.addr %s446, 4
      %s448 = scalar_lea.vmem %s0, %s447
      %p449 = pneg %p47
      %p450 = pneg %p44
      %s451 = smul.u32 6, %s26
      %p452 = scmp.lt.s32.totalorder %s451, 23
      %s453 = scalar_select %p452, %s451, 23
      %s454 = smul.addr %s453, 4
      %s455 = scalar_lea.vmem %s1, %s454
      %p456 = pneg %p73
      %p457 = pneg %p70
      %s458 = smul.u32 6, %s26
      %p459 = scmp.lt.s32.totalorder %s458, 23
      %s460 = scalar_select %p459, %s458, 23
      %s461 = smul.addr %s460, 4
      %s462 = scalar_lea.vmem %s2, %s461
      %p463 = pneg %p99
      %p464 = pneg %p96
      %p465 = pneg %p120
      %p466 = pneg %p117
      %p467 = pneg %p141
      %p468 = pneg %p138
      %p469 = pneg %p162
      %p470 = pneg %p159
      %p471 = pneg %p183
      %p472 = pneg %p180
      %p473 = pneg %p204
      %p474 = pneg %p201
      %p475 = pneg %p225
      %p476 = pneg %p222
      %p477 = pneg %p246
      %p478 = pneg %p243
      %p479 = pneg %p267
      %p480 = pneg %p264
      %p481 = pneg %p288
      %p482 = pneg %p285
      %p483 = pneg %p309
      %p484 = pneg %p306
      %p485 = pneg %p335
      %p486 = pneg %p332
      %s487 = smul.u32 6, %s26
      %p488 = scmp.lt.s32.totalorder %s487, 23
      %s489 = scalar_select %p488, %s487, 23
      %s490 = smul.addr %s489, 4
      %s491 = scalar_lea.vmem %s13, %s490
      %p492 = pneg %p361
      %p493 = pneg %p358
      %s494 = smul.u32 6, %s26
      %p495 = scmp.lt.s32.totalorder %s494, 23
      %s496 = scalar_select %p495, %s494, 23
      %s497 = smul.addr %s496, 8
      %s498 = scalar_lea.vmem %s14, %s497
      %s499 = smul.u32 6, %s26
      %p500 = scmp.lt.s32.totalorder %s499, 23
      %s501 = scalar_select %p500, %s499, 23
      %s502 = smul.addr %s501, 4
      %s503 = scalar_lea.vmem %s0, %s502
      %s504 = smul.u32 6, %s26
      %s505 = smul.u32 6, %s26
      %p506 = scmp.lt.s32.totalorder %s505, 23
      %s507 = scalar_select %p506, %s505, 23
      %s508 = smul.addr %s507, 4
      %s509 = scalar_lea.vmem %s1, %s508
      %s510 = smul.u32 6, %s26
      %s511 = smul.u32 6, %s26
      %p512 = scmp.lt.s32.totalorder %s511, 23
      %s513 = scalar_select %p512, %s511, 23
      %s514 = smul.addr %s513, 4
      %s515 = scalar_lea.vmem %s2, %s514
      %s516 = smul.u32 6, %s26
      %s517 = smul.u32 6, %s26
      %p518 = scmp.lt.s32.totalorder %s517, 23
      %s519 = scalar_select %p518, %s517, 23
      %s520 = smul.addr %s519, 4
      %s521 = scalar_lea.vmem %s13, %s520
      %s522 = smul.u32 6, %s26
      %s523 = smul.u32 6, %s26
      %p524 = scmp.lt.s32.totalorder %s523, 23
      %s525 = scalar_select %p524, %s523, 23
      %s526 = smul.addr %s525, 8
      %s527 = scalar_lea.vmem %s14, %s526
      %s528 = smul.u32 6, %s26
      %v530 = vld [vmem:[%s503] sm:$0xf]
      %v531 = vld [vmem:[%s503 + $0x4] sm:$0xf]
      %v532 = vld [vmem:[%s503 + $0x8] sm:$0xf]
      %v533 = vld [vmem:[%s503 + $0xc] sm:$0xf]
      %v534 = vld [vmem:[%s503 + $0x10] sm:$0xf]
      %v535 = vld [vmem:[%s503 + $0x14] sm:$0xf]
      %v536 = vld [vmem:[%s3] sm:$0xf]
      %v537 = vld [vmem:[%s3 + $0x4] sm:$0xf]
      %v538 = vld [vmem:[%s3 + $0x8] sm:$0xf]
      %v539 = vld [vmem:[%s3 + $0xc] sm:$0xf]
      %v540 = vld [vmem:[%s3 + $0x10] sm:$0xf]
      %v541 = vld [vmem:[%s3 + $0x14] sm:$0xf]
      %v542 = vld [vmem:[%s3 + $0x18] sm:$0xf]
      %v543 = vld [vmem:[%s3 + $0x1c] sm:$0xf]
      %v544 = vld [vmem:[%s3 + $0x20] sm:$0xf]
      %v545 = vld [vmem:[%s3 + $0x24] sm:$0xf]
      %v546 = vld [vmem:[%s3 + $0x28] sm:$0xf]
      %v547 = vld [vmem:[%s3 + $0x2c] sm:$0xf]
      %v548 = vld [vmem:[%s3 + $0x30] sm:$0xf]
      %v549 = vld [vmem:[%s3 + $0x34] sm:$0xf]
      %v550 = vld [vmem:[%s3 + $0x38] sm:$0xf]
      %v551 = vld [vmem:[%s3 + $0x3c] sm:$0xf]
      %v552 = vld [vmem:[%s509] sm:$0xf]
      %v553 = vld [vmem:[%s509 + $0x4] sm:$0xf]
      %v554 = vld [vmem:[%s509 + $0x8] sm:$0xf]
      %v555 = vld [vmem:[%s509 + $0xc] sm:$0xf]
      %v556 = vld [vmem:[%s509 + $0x10] sm:$0xf]
      %v557 = vld [vmem:[%s509 + $0x14] sm:$0xf]
      %v558 = vld [vmem:[%s4] sm:$0xf]
      %v559 = vld [vmem:[%s4 + $0x4] sm:$0xf]
      %v560 = vld [vmem:[%s4 + $0x8] sm:$0xf]
      %v561 = vld [vmem:[%s4 + $0xc] sm:$0xf]
      %v562 = vld [vmem:[%s4 + $0x10] sm:$0xf]
      %v563 = vld [vmem:[%s4 + $0x14] sm:$0xf]
      %v564 = vld [vmem:[%s4 + $0x18] sm:$0xf]
      %v565 = vld [vmem:[%s4 + $0x1c] sm:$0xf]
      %v566 = vld [vmem:[%s4 + $0x20] sm:$0xf]
      %v567 = vld [vmem:[%s4 + $0x24] sm:$0xf]
      %v568 = vld [vmem:[%s4 + $0x28] sm:$0xf]
      %v569 = vld [vmem:[%s4 + $0x2c] sm:$0xf]
      %v570 = vld [vmem:[%s4 + $0x30] sm:$0xf]
      %v571 = vld [vmem:[%s4 + $0x34] sm:$0xf]
      %v572 = vld [vmem:[%s4 + $0x38] sm:$0xf]
      %v573 = vld [vmem:[%s4 + $0x3c] sm:$0xf]
      %v580 = vunpack.c.l.b16 %v552
      %v581 = vunpack.c.l.b16 %v553
      %v582 = vunpack.c.l.b16 %v554
      %v583 = vunpack.c.l.b16 %v555
      %v584 = vunpack.c.l.b16 %v556
      %v585 = vunpack.c.l.b16 %v557
      %v586 = vpack.c.b16 %v581, %v580
      %v587 = vpack.c.b16 %v583, %v582
      %v588 = vpack.c.b16 %v585, %v584
      %v608 = vunpack.c.l.b16 %v558
      %v609 = vunpack.c.l.b16 %v559
      %v610 = vunpack.c.l.b16 %v560
      %v611 = vunpack.c.l.b16 %v561
      %v612 = vunpack.c.l.b16 %v562
      %v613 = vunpack.c.l.b16 %v563
      %v614 = vunpack.c.l.b16 %v564
      %v615 = vunpack.c.l.b16 %v565
      %v616 = vunpack.c.l.b16 %v566
      %v617 = vunpack.c.l.b16 %v567
      %v618 = vunpack.c.l.b16 %v568
      %v619 = vunpack.c.l.b16 %v569
      %v620 = vunpack.c.l.b16 %v570
      %v621 = vunpack.c.l.b16 %v571
      %v622 = vunpack.c.l.b16 %v572
      %v623 = vunpack.c.l.b16 %v573
      %v624 = vpack.c.b16 %v609, %v608
      %v625 = vpack.c.b16 %v611, %v610
      %v626 = vpack.c.b16 %v613, %v612
      %v627 = vpack.c.b16 %v615, %v614
      %v628 = vpack.c.b16 %v617, %v616
      %v629 = vpack.c.b16 %v619, %v618
      %v630 = vpack.c.b16 %v621, %v620
      %v631 = vpack.c.b16 %v623, %v622
      %640 = vmatprep.subr.bf16.mxu0 0
      %641 = vmatpush1.bf16.msra.mxu0 %v631
      %642 = vmatprep.subr.bf16.mxu0 0
      %643 = vmatpush1.bf16.msra.mxu0 %v630
      %644 = vmatprep.subr.bf16.mxu0 0
      %645 = vmatpush1.bf16.msra.mxu0 %v629
      %646 = vmatprep.subr.bf16.mxu0 0
      %647 = vmatpush1.bf16.msra.mxu0 %v628
      %648 = vmatprep.subr.bf16.mxu0 0
      %649 = vmatpush1.bf16.msra.mxu0 %v627
      %650 = vmatprep.subr.bf16.mxu0 0
      %651 = vmatpush1.bf16.msra.mxu0 %v626
      %652 = vmatprep.subr.bf16.mxu0 0
      %653 = vmatpush1.bf16.msra.mxu0 %v625
      %654 = vmatprep.subr.bf16.mxu0 0
      %655 = vmatpush1.bf16.msra.mxu0 %v624
      %656 = vmatprep.subr.bf16.mxu0 0
      %657 = vmatpush2.bf16.msra.mxu0 0
      %658 = vmatprep.subr.bf16.mxu0 0
      %659 = vmatpush2.bf16.msra.mxu0 0
      %660 = vmatprep.subr.bf16.mxu0 0
      %661 = vmatpush2.bf16.msra.mxu0 0
      %662 = vmatprep.subr.bf16.mxu0 0
      %663 = vmatpush2.bf16.msra.mxu0 0
      %664 = vmatprep.subr.bf16.mxu0 0
      %665 = vmatpush2.bf16.msra.mxu0 0
      %666 = vmatprep.subr.bf16.mxu0 0
      %667 = vmatpush2.bf16.msra.mxu0 0
      %668 = vmatprep.subr.bf16.mxu0 0
      %669 = vmatpush2.bf16.msra.mxu0 0
      %670 = vmatprep.subr.bf16.mxu0 0
      %671 = vmatpush2.bf16.msra.mxu0 0
      %672 = vmatprep.mubr.bf16.mxu0 0
      %673 = vmatmul.mubr.bf16.gmra.mxu0 %v586
      %v674 = vpop.f32.mrf.mxu0
      %v675 = vadd.f32 0.0, %v674
      %v676 = vpop.f32.mrf.mxu0
      %v677 = vpop.f32.mrf.mxu0
      %v678 = vadd.f32 0.0, %v677
      %v679 = vpop.f32.mrf.mxu0
      %680 = vmatprep.mubr.bf16.mxu0 0
      %681 = vmatmul.mubr.bf16.gmra.mxu0 %v587
      %v682 = vpop.f32.mrf.mxu0
      %v683 = vadd.f32 0.0, %v682
      %v684 = vpop.f32.mrf.mxu0
      %v685 = vpop.f32.mrf.mxu0
      %v686 = vadd.f32 0.0, %v685
      %v687 = vpop.f32.mrf.mxu0
      %688 = vmatprep.mubr.bf16.mxu0 0
      %689 = vmatmul.mubr.bf16.gmra.mxu0 %v588
      %v690 = vpop.f32.mrf.mxu0
      %v691 = vadd.f32 0.0, %v690
      %v692 = vpop.f32.mrf.mxu0
      %v693 = vpop.f32.mrf.mxu0
      %v694 = vadd.f32 0.0, %v693
      %v695 = vpop.f32.mrf.mxu0
      %696 = vdwg.mxu0
      %v703 = vunpack.c.l.b16 %v530
      %v704 = vunpack.c.l.b16 %v531
      %v705 = vunpack.c.l.b16 %v532
      %v706 = vunpack.c.l.b16 %v533
      %v707 = vunpack.c.l.b16 %v534
      %v708 = vunpack.c.l.b16 %v535
      %v709 = vpack.c.b16 %v704, %v703
      %v710 = vpack.c.b16 %v706, %v705
      %v711 = vpack.c.b16 %v708, %v707
      %v731 = vunpack.c.l.b16 %v536
      %v732 = vunpack.c.l.b16 %v537
      %v733 = vunpack.c.l.b16 %v538
      %v734 = vunpack.c.l.b16 %v539
      %v735 = vunpack.c.l.b16 %v540
      %v736 = vunpack.c.l.b16 %v541
      %v737 = vunpack.c.l.b16 %v542
      %v738 = vunpack.c.l.b16 %v543
      %v739 = vunpack.c.l.b16 %v544
      %v740 = vunpack.c.l.b16 %v545
      %v741 = vunpack.c.l.b16 %v546
      %v742 = vunpack.c.l.b16 %v547
      %v743 = vunpack.c.l.b16 %v548
      %v744 = vunpack.c.l.b16 %v549
      %v745 = vunpack.c.l.b16 %v550
      %v746 = vunpack.c.l.b16 %v551
      %v747 = vpack.c.b16 %v732, %v731
      %v748 = vpack.c.b16 %v734, %v733
      %v749 = vpack.c.b16 %v736, %v735
      %v750 = vpack.c.b16 %v738, %v737
      %v751 = vpack.c.b16 %v740, %v739
      %v752 = vpack.c.b16 %v742, %v741
      %v753 = vpack.c.b16 %v744, %v743
      %v754 = vpack.c.b16 %v746, %v745
      %763 = vmatprep.subr.bf16.mxu0 0
      %764 = vmatpush1.bf16.msra.mxu0 %v754
      %765 = vmatprep.subr.bf16.mxu0 0
      %766 = vmatpush1.bf16.msra.mxu0 %v753
      %767 = vmatprep.subr.bf16.mxu0 0
      %768 = vmatpush1.bf16.msra.mxu0 %v752
      %769 = vmatprep.subr.bf16.mxu0 0
      %770 = vmatpush1.bf16.msra.mxu0 %v751
      %771 = vmatprep.subr.bf16.mxu0 0
      %772 = vmatpush1.bf16.msra.mxu0 %v750
      %773 = vmatprep.subr.bf16.mxu0 0
      %774 = vmatpush1.bf16.msra.mxu0 %v749
      %775 = vmatprep.subr.bf16.mxu0 0
      %776 = vmatpush1.bf16.msra.mxu0 %v748
      %777 = vmatprep.subr.bf16.mxu0 0
      %778 = vmatpush1.bf16.msra.mxu0 %v747
      %779 = vmatprep.subr.bf16.mxu0 0
      %780 = vmatpush2.bf16.msra.mxu0 0
      %781 = vmatprep.subr.bf16.mxu0 0
      %782 = vmatpush2.bf16.msra.mxu0 0
      %783 = vmatprep.subr.bf16.mxu0 0
      %784 = vmatpush2.bf16.msra.mxu0 0
      %785 = vmatprep.subr.bf16.mxu0 0
      %786 = vmatpush2.bf16.msra.mxu0 0
      %787 = vmatprep.subr.bf16.mxu0 0
      %788 = vmatpush2.bf16.msra.mxu0 0
      %789 = vmatprep.subr.bf16.mxu0 0
      %790 = vmatpush2.bf16.msra.mxu0 0
      %791 = vmatprep.subr.bf16.mxu0 0
      %792 = vmatpush2.bf16.msra.mxu0 0
      %793 = vmatprep.subr.bf16.mxu0 0
      %794 = vmatpush2.bf16.msra.mxu0 0
      %795 = vmatprep.mubr.bf16.mxu0 0
      %796 = vmatmul.mubr.bf16.gmra.mxu0 %v709
      %v797 = vpop.f32.mrf.mxu0
      %v798 = vadd.f32 %v675, %v797
      %v799 = vpop.f32.mrf.mxu0
      %v800 = vpop.f32.mrf.mxu0
      %v801 = vadd.f32 %v678, %v800
      %v802 = vpop.f32.mrf.mxu0
      %803 = vmatprep.mubr.bf16.mxu0 0
      %804 = vmatmul.mubr.bf16.gmra.mxu0 %v710
      %v805 = vpop.f32.mrf.mxu0
      %v806 = vadd.f32 %v683, %v805
      %v807 = vpop.f32.mrf.mxu0
      %v808 = vpop.f32.mrf.mxu0
      %v809 = vadd.f32 %v686, %v808
      %v810 = vpop.f32.mrf.mxu0
      %811 = vmatprep.mubr.bf16.mxu0 0
      %812 = vmatmul.mubr.bf16.gmra.mxu0 %v711
      %v813 = vpop.f32.mrf.mxu0
      %v814 = vadd.f32 %v691, %v813
      %v815 = vpop.f32.mrf.mxu0
      %v816 = vpop.f32.mrf.mxu0
      %v817 = vadd.f32 %v694, %v816
      %v818 = vpop.f32.mrf.mxu0
      %819 = vdwg.mxu0
      %v820 = vld [vmem:[%s515] sm:$0xf]
      %v821 = vld [vmem:[%s515 + $0x4] sm:$0xf]
      %v822 = vld [vmem:[%s515 + $0x8] sm:$0xf]
      %v823 = vld [vmem:[%s515 + $0xc] sm:$0xf]
      %v824 = vld [vmem:[%s515 + $0x10] sm:$0xf]
      %v825 = vld [vmem:[%s515 + $0x14] sm:$0xf]
      %v826 = vld [vmem:[%s5] sm:$0xf]
      %v827 = vld [vmem:[%s5 + $0x4] sm:$0xf]
      %v828 = vld [vmem:[%s5 + $0x8] sm:$0xf]
      %v829 = vld [vmem:[%s5 + $0xc] sm:$0xf]
      %v830 = vld [vmem:[%s5 + $0x10] sm:$0xf]
      %v831 = vld [vmem:[%s5 + $0x14] sm:$0xf]
      %v832 = vld [vmem:[%s5 + $0x18] sm:$0xf]
      %v833 = vld [vmem:[%s5 + $0x1c] sm:$0xf]
      %v834 = vld [vmem:[%s5 + $0x20] sm:$0xf]
      %v835 = vld [vmem:[%s5 + $0x24] sm:$0xf]
      %v836 = vld [vmem:[%s5 + $0x28] sm:$0xf]
      %v837 = vld [vmem:[%s5 + $0x2c] sm:$0xf]
      %v838 = vld [vmem:[%s5 + $0x30] sm:$0xf]
      %v839 = vld [vmem:[%s5 + $0x34] sm:$0xf]
      %v840 = vld [vmem:[%s5 + $0x38] sm:$0xf]
      %v841 = vld [vmem:[%s5 + $0x3c] sm:$0xf]
      %v848 = vunpack.c.l.b16 %v820
      %v849 = vunpack.c.l.b16 %v821
      %v850 = vunpack.c.l.b16 %v822
      %v851 = vunpack.c.l.b16 %v823
      %v852 = vunpack.c.l.b16 %v824
      %v853 = vunpack.c.l.b16 %v825
      %v854 = vpack.c.b16 %v849, %v848
      %v855 = vpack.c.b16 %v851, %v850
      %v856 = vpack.c.b16 %v853, %v852
      %v876 = vunpack.c.l.b16 %v826
      %v877 = vunpack.c.l.b16 %v827
      %v878 = vunpack.c.l.b16 %v828
      %v879 = vunpack.c.l.b16 %v829
      %v880 = vunpack.c.l.b16 %v830
      %v881 = vunpack.c.l.b16 %v831
      %v882 = vunpack.c.l.b16 %v832
      %v883 = vunpack.c.l.b16 %v833
      %v884 = vunpack.c.l.b16 %v834
      %v885 = vunpack.c.l.b16 %v835
      %v886 = vunpack.c.l.b16 %v836
      %v887 = vunpack.c.l.b16 %v837
      %v888 = vunpack.c.l.b16 %v838
      %v889 = vunpack.c.l.b16 %v839
      %v890 = vunpack.c.l.b16 %v840
      %v891 = vunpack.c.l.b16 %v841
      %v892 = vpack.c.b16 %v877, %v876
      %v893 = vpack.c.b16 %v879, %v878
      %v894 = vpack.c.b16 %v881, %v880
      %v895 = vpack.c.b16 %v883, %v882
      %v896 = vpack.c.b16 %v885, %v884
      %v897 = vpack.c.b16 %v887, %v886
      %v898 = vpack.c.b16 %v889, %v888
      %v899 = vpack.c.b16 %v891, %v890
      %908 = vmatprep.subr.bf16.mxu0 0
      %909 = vmatpush1.bf16.msra.mxu0 %v899
      %910 = vmatprep.subr.bf16.mxu0 0
      %911 = vmatpush1.bf16.msra.mxu0 %v898
      %912 = vmatprep.subr.bf16.mxu0 0
      %913 = vmatpush1.bf16.msra.mxu0 %v897
      %914 = vmatprep.subr.bf16.mxu0 0
      %915 = vmatpush1.bf16.msra.mxu0 %v896
      %916 = vmatprep.subr.bf16.mxu0 0
      %917 = vmatpush1.bf16.msra.mxu0 %v895
      %918 = vmatprep.subr.bf16.mxu0 0
      %919 = vmatpush1.bf16.msra.mxu0 %v894
      %920 = vmatprep.subr.bf16.mxu0 0
      %921 = vmatpush1.bf16.msra.mxu0 %v893
      %922 = vmatprep.subr.bf16.mxu0 0
      %923 = vmatpush1.bf16.msra.mxu0 %v892
      %924 = vmatprep.subr.bf16.mxu0 0
      %925 = vmatpush2.bf16.msra.mxu0 0
      %926 = vmatprep.subr.bf16.mxu0 0
      %927 = vmatpush2.bf16.msra.mxu0 0
      %928 = vmatprep.subr.bf16.mxu0 0
      %929 = vmatpush2.bf16.msra.mxu0 0
      %930 = vmatprep.subr.bf16.mxu0 0
      %931 = vmatpush2.bf16.msra.mxu0 0
      %932 = vmatprep.subr.bf16.mxu0 0
      %933 = vmatpush2.bf16.msra.mxu0 0
      %934 = vmatprep.subr.bf16.mxu0 0
      %935 = vmatpush2.bf16.msra.mxu0 0
      %936 = vmatprep.subr.bf16.mxu0 0
      %937 = vmatpush2.bf16.msra.mxu0 0
      %938 = vmatprep.subr.bf16.mxu0 0
      %939 = vmatpush2.bf16.msra.mxu0 0
      %940 = vmatprep.mubr.bf16.mxu0 0
      %941 = vmatmul.mubr.bf16.gmra.mxu0 %v854
      %v942 = vpop.f32.mrf.mxu0
      %v943 = vadd.f32 0.0, %v942
      %v944 = vpop.f32.mrf.mxu0
      %v945 = vpop.f32.mrf.mxu0
      %v946 = vadd.f32 0.0, %v945
      %v947 = vpop.f32.mrf.mxu0
      %948 = vmatprep.mubr.bf16.mxu0 0
      %949 = vmatmul.mubr.bf16.gmra.mxu0 %v855
      %v950 = vpop.f32.mrf.mxu0
      %v951 = vadd.f32 0.0, %v950
      %v952 = vpop.f32.mrf.mxu0
      %v953 = vpop.f32.mrf.mxu0
      %v954 = vadd.f32 0.0, %v953
      %v955 = vpop.f32.mrf.mxu0
      %956 = vmatprep.mubr.bf16.mxu0 0
      %957 = vmatmul.mubr.bf16.gmra.mxu0 %v856
      %v958 = vpop.f32.mrf.mxu0
      %v959 = vadd.f32 0.0, %v958
      %v960 = vpop.f32.mrf.mxu0
      %v961 = vpop.f32.mrf.mxu0
      %v962 = vadd.f32 0.0, %v961
      %v963 = vpop.f32.mrf.mxu0
      %964 = vdwg.mxu0
      %v965 = vadd.f32 %v798, %v943
      %v966 = vadd.f32 %v801, %v946
      %v967 = vadd.f32 %v806, %v951
      %v968 = vadd.f32 %v809, %v954
      %v969 = vadd.f32 %v814, %v959
      %v970 = vadd.f32 %v817, %v962
      %v971 = vld [vmem:[%s6] sm:$0x1]
      %v973 = vlaneseq
      %v974 = vshrl.u32 %v973, 7
      %v975 = vsub.s32 0, %v974
      %v976 = vrot.slane %v971, %v975
      %v978 = vadd.f32 %v965, %v976
      %v979 = vadd.f32 %v966, %v976
      %v980 = vadd.f32 %v967, %v976
      %v981 = vadd.f32 %v968, %v976
      %v982 = vadd.f32 %v969, %v976
      %v983 = vadd.f32 %v970, %v976
      %v984 = vmax.f32 %v978, 0.0
      %v985 = vmax.f32 %v979, 0.0
      %v986 = vmax.f32 %v980, 0.0
      %v987 = vmax.f32 %v981, 0.0
      %v988 = vmax.f32 %v982, 0.0
      %v989 = vmax.f32 %v983, 0.0
      %v990 = vpack.c.bf16 %v985, %v984
      %v991 = vpack.c.bf16 %v987, %v986
      %v992 = vpack.c.bf16 %v989, %v988
      %v993 = vld [vmem:[%s7] sm:$0xf]
      %v994 = vld [vmem:[%s7 + $0x4] sm:$0xf]
      %v995 = vld [vmem:[%s7 + $0x8] sm:$0xf]
      %v996 = vld [vmem:[%s7 + $0xc] sm:$0xf]
      %v997 = vld [vmem:[%s7 + $0x10] sm:$0xf]
      %v998 = vld [vmem:[%s7 + $0x14] sm:$0xf]
      %v999 = vld [vmem:[%s7 + $0x18] sm:$0xf]
      %v1000 = vld [vmem:[%s7 + $0x1c] sm:$0xf]
      %v1001 = vld [vmem:[%s7 + $0x20] sm:$0xf]
      %v1002 = vld [vmem:[%s7 + $0x24] sm:$0xf]
      %v1003 = vld [vmem:[%s7 + $0x28] sm:$0xf]
      %v1004 = vld [vmem:[%s7 + $0x2c] sm:$0xf]
      %v1005 = vld [vmem:[%s7 + $0x30] sm:$0xf]
      %v1006 = vld [vmem:[%s7 + $0x34] sm:$0xf]
      %v1007 = vld [vmem:[%s7 + $0x38] sm:$0xf]
      %v1008 = vld [vmem:[%s7 + $0x3c] sm:$0xf]
      %v1009 = vld [vmem:[%s8] sm:$0x1]
      %v1011 = vlaneseq
      %v1012 = vshrl.u32 %v1011, 7
      %v1013 = vsub.s32 0, %v1012
      %v1014 = vrot.slane %v1009, %v1013
      %v1032 = vunpack.c.l.b16 %v993
      %v1033 = vunpack.c.l.b16 %v994
      %v1034 = vunpack.c.l.b16 %v995
      %v1035 = vunpack.c.l.b16 %v996
      %v1036 = vunpack.c.l.b16 %v997
      %v1037 = vunpack.c.l.b16 %v998
      %v1038 = vunpack.c.l.b16 %v999
      %v1039 = vunpack.c.l.b16 %v1000
      %v1040 = vunpack.c.l.b16 %v1001
      %v1041 = vunpack.c.l.b16 %v1002
      %v1042 = vunpack.c.l.b16 %v1003
      %v1043 = vunpack.c.l.b16 %v1004
      %v1044 = vunpack.c.l.b16 %v1005
      %v1045 = vunpack.c.l.b16 %v1006
      %v1046 = vunpack.c.l.b16 %v1007
      %v1047 = vunpack.c.l.b16 %v1008
      %v1048 = vpack.c.b16 %v1033, %v1032
      %v1049 = vpack.c.b16 %v1035, %v1034
      %v1050 = vpack.c.b16 %v1037, %v1036
      %v1051 = vpack.c.b16 %v1039, %v1038
      %v1052 = vpack.c.b16 %v1041, %v1040
      %v1053 = vpack.c.b16 %v1043, %v1042
      %v1054 = vpack.c.b16 %v1045, %v1044
      %v1055 = vpack.c.b16 %v1047, %v1046
      %1064 = vmatprep.subr.bf16.mxu0 0
      %1065 = vmatpush1.bf16.msra.mxu0 %v1055
      %1066 = vmatprep.subr.bf16.mxu0 0
      %1067 = vmatpush1.bf16.msra.mxu0 %v1054
      %1068 = vmatprep.subr.bf16.mxu0 0
      %1069 = vmatpush1.bf16.msra.mxu0 %v1053
      %1070 = vmatprep.subr.bf16.mxu0 0
      %1071 = vmatpush1.bf16.msra.mxu0 %v1052
      %1072 = vmatprep.subr.bf16.mxu0 0
      %1073 = vmatpush1.bf16.msra.mxu0 %v1051
      %1074 = vmatprep.subr.bf16.mxu0 0
      %1075 = vmatpush1.bf16.msra.mxu0 %v1050
      %1076 = vmatprep.subr.bf16.mxu0 0
      %1077 = vmatpush1.bf16.msra.mxu0 %v1049
      %1078 = vmatprep.subr.bf16.mxu0 0
      %1079 = vmatpush1.bf16.msra.mxu0 %v1048
      %1080 = vmatprep.subr.bf16.mxu0 0
      %1081 = vmatpush2.bf16.msra.mxu0 0
      %1082 = vmatprep.subr.bf16.mxu0 0
      %1083 = vmatpush2.bf16.msra.mxu0 0
      %1084 = vmatprep.subr.bf16.mxu0 0
      %1085 = vmatpush2.bf16.msra.mxu0 0
      %1086 = vmatprep.subr.bf16.mxu0 0
      %1087 = vmatpush2.bf16.msra.mxu0 0
      %1088 = vmatprep.subr.bf16.mxu0 0
      %1089 = vmatpush2.bf16.msra.mxu0 0
      %1090 = vmatprep.subr.bf16.mxu0 0
      %1091 = vmatpush2.bf16.msra.mxu0 0
      %1092 = vmatprep.subr.bf16.mxu0 0
      %1093 = vmatpush2.bf16.msra.mxu0 0
      %1094 = vmatprep.subr.bf16.mxu0 0
      %1095 = vmatpush2.bf16.msra.mxu0 0
      %1096 = vmatprep.mubr.bf16.mxu0 0
      %1097 = vmatmul.mubr.bf16.gmra.mxu0 %v990
      %v1098 = vpop.f32.mrf.mxu0
      %v1099 = vadd.f32 %v1014, %v1098
      %v1100 = vpop.f32.mrf.mxu0
      %v1101 = vpop.f32.mrf.mxu0
      %v1102 = vadd.f32 %v1014, %v1101
      %v1103 = vpop.f32.mrf.mxu0
      %1104 = vmatprep.mubr.bf16.mxu0 0
      %1105 = vmatmul.mubr.bf16.gmra.mxu0 %v991
      %v1106 = vpop.f32.mrf.mxu0
      %v1107 = vadd.f32 %v1014, %v1106
      %v1108 = vpop.f32.mrf.mxu0
      %v1109 = vpop.f32.mrf.mxu0
      %v1110 = vadd.f32 %v1014, %v1109
      %v1111 = vpop.f32.mrf.mxu0
      %1112 = vmatprep.mubr.bf16.mxu0 0
      %1113 = vmatmul.mubr.bf16.gmra.mxu0 %v992
      %v1114 = vpop.f32.mrf.mxu0
      %v1115 = vadd.f32 %v1014, %v1114
      %v1116 = vpop.f32.mrf.mxu0
      %v1117 = vpop.f32.mrf.mxu0
      %v1118 = vadd.f32 %v1014, %v1117
      %v1119 = vpop.f32.mrf.mxu0
      %1120 = vdwg.mxu0
      %v1121 = vmax.f32 %v1099, 0.0
      %v1122 = vmax.f32 %v1102, 0.0
      %v1123 = vmax.f32 %v1107, 0.0
      %v1124 = vmax.f32 %v1110, 0.0
      %v1125 = vmax.f32 %v1115, 0.0
      %v1126 = vmax.f32 %v1118, 0.0
      %v1127 = vpack.c.bf16 %v1122, %v1121
      %v1128 = vpack.c.bf16 %v1124, %v1123
      %v1129 = vpack.c.bf16 %v1126, %v1125
      %v1130 = vld [vmem:[%s9] sm:$0xf]
      %v1131 = vld [vmem:[%s9 + $0x4] sm:$0xf]
      %v1132 = vld [vmem:[%s9 + $0x8] sm:$0xf]
      %v1133 = vld [vmem:[%s9 + $0xc] sm:$0xf]
      %v1134 = vld [vmem:[%s9 + $0x10] sm:$0xf]
      %v1135 = vld [vmem:[%s9 + $0x14] sm:$0xf]
      %v1136 = vld [vmem:[%s9 + $0x18] sm:$0xf]
      %v1137 = vld [vmem:[%s9 + $0x1c] sm:$0xf]
      %v1138 = vld [vmem:[%s9 + $0x20] sm:$0xf]
      %v1139 = vld [vmem:[%s9 + $0x24] sm:$0xf]
      %v1140 = vld [vmem:[%s9 + $0x28] sm:$0xf]
      %v1141 = vld [vmem:[%s9 + $0x2c] sm:$0xf]
      %v1142 = vld [vmem:[%s9 + $0x30] sm:$0xf]
      %v1143 = vld [vmem:[%s9 + $0x34] sm:$0xf]
      %v1144 = vld [vmem:[%s9 + $0x38] sm:$0xf]
      %v1145 = vld [vmem:[%s9 + $0x3c] sm:$0xf]
      %v1146 = vld [vmem:[%s10] sm:$0x1]
      %v1148 = vlaneseq
      %v1149 = vshrl.u32 %v1148, 7
      %v1150 = vsub.s32 0, %v1149
      %v1151 = vrot.slane %v1146, %v1150
      %v1169 = vunpack.c.l.b16 %v1130
      %v1170 = vunpack.c.l.b16 %v1131
      %v1171 = vunpack.c.l.b16 %v1132
      %v1172 = vunpack.c.l.b16 %v1133
      %v1173 = vunpack.c.l.b16 %v1134
      %v1174 = vunpack.c.l.b16 %v1135
      %v1175 = vunpack.c.l.b16 %v1136
      %v1176 = vunpack.c.l.b16 %v1137
      %v1177 = vunpack.c.l.b16 %v1138
      %v1178 = vunpack.c.l.b16 %v1139
      %v1179 = vunpack.c.l.b16 %v1140
      %v1180 = vunpack.c.l.b16 %v1141
      %v1181 = vunpack.c.l.b16 %v1142
      %v1182 = vunpack.c.l.b16 %v1143
      %v1183 = vunpack.c.l.b16 %v1144
      %v1184 = vunpack.c.l.b16 %v1145
      %v1185 = vpack.c.b16 %v1170, %v1169
      %v1186 = vpack.c.b16 %v1172, %v1171
      %v1187 = vpack.c.b16 %v1174, %v1173
      %v1188 = vpack.c.b16 %v1176, %v1175
      %v1189 = vpack.c.b16 %v1178, %v1177
      %v1190 = vpack.c.b16 %v1180, %v1179
      %v1191 = vpack.c.b16 %v1182, %v1181
      %v1192 = vpack.c.b16 %v1184, %v1183
      %1201 = vmatprep.subr.bf16.mxu0 0
      %1202 = vmatpush1.bf16.msra.mxu0 %v1192
      %1203 = vmatprep.subr.bf16.mxu0 0
      %1204 = vmatpush1.bf16.msra.mxu0 %v1191
      %1205 = vmatprep.subr.bf16.mxu0 0
      %1206 = vmatpush1.bf16.msra.mxu0 %v1190
      %1207 = vmatprep.subr.bf16.mxu0 0
      %1208 = vmatpush1.bf16.msra.mxu0 %v1189
      %1209 = vmatprep.subr.bf16.mxu0 0
      %1210 = vmatpush1.bf16.msra.mxu0 %v1188
      %1211 = vmatprep.subr.bf16.mxu0 0
      %1212 = vmatpush1.bf16.msra.mxu0 %v1187
      %1213 = vmatprep.subr.bf16.mxu0 0
      %1214 = vmatpush1.bf16.msra.mxu0 %v1186
      %1215 = vmatprep.subr.bf16.mxu0 0
      %1216 = vmatpush1.bf16.msra.mxu0 %v1185
      %1217 = vmatprep.subr.bf16.mxu0 0
      %1218 = vmatpush2.bf16.msra.mxu0 0
      %1219 = vmatprep.subr.bf16.mxu0 0
      %1220 = vmatpush2.bf16.msra.mxu0 0
      %1221 = vmatprep.subr.bf16.mxu0 0
      %1222 = vmatpush2.bf16.msra.mxu0 0
      %1223 = vmatprep.subr.bf16.mxu0 0
      %1224 = vmatpush2.bf16.msra.mxu0 0
      %1225 = vmatprep.subr.bf16.mxu0 0
      %1226 = vmatpush2.bf16.msra.mxu0 0
      %1227 = vmatprep.subr.bf16.mxu0 0
      %1228 = vmatpush2.bf16.msra.mxu0 0
      %1229 = vmatprep.subr.bf16.mxu0 0
      %1230 = vmatpush2.bf16.msra.mxu0 0
      %1231 = vmatprep.subr.bf16.mxu0 0
      %1232 = vmatpush2.bf16.msra.mxu0 0
      %1233 = vmatprep.mubr.bf16.mxu0 0
      %1234 = vmatmul.mubr.bf16.gmra.mxu0 %v1127
      %v1235 = vpop.f32.mrf.mxu0
      %v1236 = vadd.f32 %v1151, %v1235
      %v1237 = vpop.f32.mrf.mxu0
      %v1238 = vpop.f32.mrf.mxu0
      %v1239 = vadd.f32 %v1151, %v1238
      %v1240 = vpop.f32.mrf.mxu0
      %1241 = vmatprep.mubr.bf16.mxu0 0
      %1242 = vmatmul.mubr.bf16.gmra.mxu0 %v1128
      %v1243 = vpop.f32.mrf.mxu0
      %v1244 = vadd.f32 %v1151, %v1243
      %v1245 = vpop.f32.mrf.mxu0
      %v1246 = vpop.f32.mrf.mxu0
      %v1247 = vadd.f32 %v1151, %v1246
      %v1248 = vpop.f32.mrf.mxu0
      %1249 = vmatprep.mubr.bf16.mxu0 0
      %1250 = vmatmul.mubr.bf16.gmra.mxu0 %v1129
      %v1251 = vpop.f32.mrf.mxu0
      %v1252 = vadd.f32 %v1151, %v1251
      %v1253 = vpop.f32.mrf.mxu0
      %v1254 = vpop.f32.mrf.mxu0
      %v1255 = vadd.f32 %v1151, %v1254
      %v1256 = vpop.f32.mrf.mxu0
      %1257 = vdwg.mxu0
      %1258 = vadd.xlane.f32.xlu0 %v1236
      %v1259 = vpop.xlane.xlu0 %1258
      %1260 = vadd.xlane.f32.xlu0 %v1239
      %v1261 = vpop.xlane.xlu0 %1260
      %1262 = vadd.xlane.f32.xlu0 %v1244
      %v1263 = vpop.xlane.xlu0 %1262
      %1264 = vadd.xlane.f32.xlu0 %v1247
      %v1265 = vpop.xlane.xlu0 %1264
      %1266 = vadd.xlane.f32.xlu0 %v1252
      %v1267 = vpop.xlane.xlu0 %1266
      %1268 = vadd.xlane.f32.xlu0 %v1255
      %v1269 = vpop.xlane.xlu0 %1268
      %v1270 = vrcp.pop 128.0
      %v1271 = vmul.f32 %v1259, %v1270
      %v1272 = vmul.f32 %v1261, %v1270
      %v1273 = vmul.f32 %v1263, %v1270
      %v1274 = vmul.f32 %v1265, %v1270
      %v1275 = vmul.f32 %v1267, %v1270
      %v1276 = vmul.f32 %v1269, %v1270
      %v1277 = vsub.f32 %v1236, %v1271
      %v1278 = vsub.f32 %v1239, %v1272
      %v1279 = vsub.f32 %v1244, %v1273
      %v1280 = vsub.f32 %v1247, %v1274
      %v1281 = vsub.f32 %v1252, %v1275
      %v1282 = vsub.f32 %v1255, %v1276
      %v1283 = vmul.f32 %v1277, %v1277
      %v1284 = vmul.f32 %v1278, %v1278
      %v1285 = vmul.f32 %v1279, %v1279
      %v1286 = vmul.f32 %v1280, %v1280
      %v1287 = vmul.f32 %v1281, %v1281
      %v1288 = vmul.f32 %v1282, %v1282
      %1289 = vadd.xlane.f32.xlu0 %v1283
      %v1290 = vpop.xlane.xlu0 %1289
      %1291 = vadd.xlane.f32.xlu0 %v1284
      %v1292 = vpop.xlane.xlu0 %1291
      %1293 = vadd.xlane.f32.xlu0 %v1285
      %v1294 = vpop.xlane.xlu0 %1293
      %1295 = vadd.xlane.f32.xlu0 %v1286
      %v1296 = vpop.xlane.xlu0 %1295
      %1297 = vadd.xlane.f32.xlu0 %v1287
      %v1298 = vpop.xlane.xlu0 %1297
      %1299 = vadd.xlane.f32.xlu0 %v1288
      %v1300 = vpop.xlane.xlu0 %1299
      %v1301 = vmul.f32 %v1290, 0.0078125
      %v1302 = vmul.f32 %v1292, 0.0078125
      %v1303 = vmul.f32 %v1294, 0.0078125
      %v1304 = vmul.f32 %v1296, 0.0078125
      %v1305 = vmul.f32 %v1298, 0.0078125
      %v1306 = vmul.f32 %v1300, 0.0078125
      %v1307 = vadd.f32 %v1301, 1e-05
      %v1308 = vadd.f32 %v1302, 1e-05
      %v1309 = vadd.f32 %v1303, 1e-05
      %v1310 = vadd.f32 %v1304, 1e-05
      %v1311 = vadd.f32 %v1305, 1e-05
      %v1312 = vadd.f32 %v1306, 1e-05
      %v1313 = vrsqrt.pop %v1307
      %v1314 = vrsqrt.pop %v1308
      %v1315 = vrsqrt.pop %v1309
      %v1316 = vrsqrt.pop %v1310
      %v1317 = vrsqrt.pop %v1311
      %v1318 = vrsqrt.pop %v1312
      %v1319 = vmul.f32 %v1277, %v1313
      %v1320 = vmul.f32 %v1278, %v1314
      %v1321 = vmul.f32 %v1279, %v1315
      %v1322 = vmul.f32 %v1280, %v1316
      %v1323 = vmul.f32 %v1281, %v1317
      %v1324 = vmul.f32 %v1282, %v1318
      %v1325 = vld [vmem:[%s11] sm:$0x1]
      %v1327 = vlaneseq
      %v1328 = vshrl.u32 %v1327, 7
      %v1329 = vsub.s32 0, %v1328
      %v1330 = vrot.slane %v1325, %v1329
      %v1332 = vmul.f32 %v1319, %v1330
      %v1333 = vmul.f32 %v1320, %v1330
      %v1334 = vmul.f32 %v1321, %v1330
      %v1335 = vmul.f32 %v1322, %v1330
      %v1336 = vmul.f32 %v1323, %v1330
      %v1337 = vmul.f32 %v1324, %v1330
      %v1338 = vld [vmem:[%s12] sm:$0x1]
      %v1340 = vlaneseq
      %v1341 = vshrl.u32 %v1340, 7
      %v1342 = vsub.s32 0, %v1341
      %v1343 = vrot.slane %v1338, %v1342
      %v1345 = vadd.f32 %v1332, %v1343
      %v1346 = vadd.f32 %v1333, %v1343
      %v1347 = vadd.f32 %v1334, %v1343
      %v1348 = vadd.f32 %v1335, %v1343
      %v1349 = vadd.f32 %v1336, %v1343
      %v1350 = vadd.f32 %v1337, %v1343
      %s1351 = smul.u32 %s26, 48
      %v1352 = vlaneseq
      %v1353 = vshrl.u32 %v1352, 7
      %v1354 = vadd.s32 %v1353, 8
      %v1355 = vadd.s32 %v1353, 16
      %v1356 = vadd.s32 %v1353, 24
      %v1357 = vadd.s32 %v1353, 32
      %v1358 = vadd.s32 %v1353, 40
      %v1359 = vstv %s1351
      %v1360 = vadd.s32 %v1359, %v1353
      %v1361 = vadd.s32 %v1359, %v1354
      %v1362 = vadd.s32 %v1359, %v1355
      %v1363 = vadd.s32 %v1359, %v1356
      %v1364 = vadd.s32 %v1359, %v1357
      %v1365 = vadd.s32 %v1359, %v1358
      %vm1366 = vcmp.lt.s32.totalorder %v1360, 192
      %vm1367 = vcmp.lt.s32.totalorder %v1361, 192
      %vm1368 = vcmp.lt.s32.totalorder %v1362, 192
      %vm1369 = vcmp.lt.s32.totalorder %v1363, 192
      %vm1370 = vcmp.lt.s32.totalorder %v1364, 192
      %vm1371 = vcmp.lt.s32.totalorder %v1365, 192
      %v1372 = vsel %vm1366, %v1345, 0.0
      %v1373 = vsel %vm1367, %v1346, 0.0
      %v1374 = vsel %vm1368, %v1347, 0.0
      %v1375 = vsel %vm1369, %v1348, 0.0
      %v1376 = vsel %vm1370, %v1349, 0.0
      %v1377 = vsel %vm1371, %v1350, 0.0
      %1378 = vst [vmem:[%s527] sm:$0xff] %v1372
      %1379 = vst [vmem:[%s527 + $0x8] sm:$0xff] %v1373
      %1380 = vst [vmem:[%s527 + $0x10] sm:$0xff] %v1374
      %1381 = vst [vmem:[%s527 + $0x18] sm:$0xff] %v1375
      %1382 = vst [vmem:[%s527 + $0x20] sm:$0xff] %v1376
      %1383 = vst [vmem:[%s527 + $0x28] sm:$0xff] %v1377
      %v1384 = vld [vmem:[%s515] sm:$0xf]
      %v1385 = vld [vmem:[%s515 + $0x4] sm:$0xf]
      %v1386 = vld [vmem:[%s515 + $0x8] sm:$0xf]
      %v1387 = vld [vmem:[%s515 + $0xc] sm:$0xf]
      %v1388 = vld [vmem:[%s515 + $0x10] sm:$0xf]
      %v1389 = vld [vmem:[%s515 + $0x14] sm:$0xf]
      %v1390 = vunpack.c.l.bf16 %v1384
      %v1391 = vunpack.c.l.bf16 %v1385
      %v1392 = vunpack.c.l.bf16 %v1386
      %v1393 = vunpack.c.l.bf16 %v1387
      %v1394 = vunpack.c.l.bf16 %v1388
      %v1395 = vunpack.c.l.bf16 %v1389
      %v1396 = vadd.f32 %v1345, %v1390
      %v1397 = vadd.f32 %v1346, %v1391
      %v1398 = vadd.f32 %v1347, %v1392
      %v1399 = vadd.f32 %v1348, %v1393
      %v1400 = vadd.f32 %v1349, %v1394
      %v1401 = vadd.f32 %v1350, %v1395
      %v1402 = vpack.c.bf16 %v1397, %v1396
      %v1403 = vpack.c.bf16 %v1399, %v1398
      %v1404 = vpack.c.bf16 %v1401, %v1400
      %v1408 = vunpack.c.l.b16 %v1402
      %v1409 = vunpack.c.h.b16 %v1402
      %v1410 = vunpack.c.l.b16 %v1403
      %v1411 = vunpack.c.h.b16 %v1403
      %v1412 = vunpack.c.l.b16 %v1404
      %v1413 = vunpack.c.h.b16 %v1404
      %v1414 = vpack.c.b16 %v1408, %v1408
      %v1415 = vpack.c.b16 %v1409, %v1409
      %v1416 = vpack.c.b16 %v1410, %v1410
      %v1417 = vpack.c.b16 %v1411, %v1411
      %v1418 = vpack.c.b16 %v1412, %v1412
      %v1419 = vpack.c.b16 %v1413, %v1413
      %1426 = vst [vmem:[%s521] sm:$0xf] %v1414
      %1427 = vst [vmem:[%s521 + $0x4] sm:$0xf] %v1415
      %1428 = vst [vmem:[%s521 + $0x8] sm:$0xf] %v1416
      %1429 = vst [vmem:[%s521 + $0xc] sm:$0xf] %v1417
      %1430 = vst [vmem:[%s521 + $0x10] sm:$0xf] %v1418
      %1431 = vst [vmem:[%s521 + $0x14] sm:$0xf] %v1419
      %s1432 = smul.u32 6, %s26
      %p1433 = scmp.lt.s32.totalorder %s1432, 23
      %s1434 = scalar_select %p1433, %s1432, 23
      %s1435 = smul.addr %s1434, 4
      %s1436 = scalar_lea.vmem %s13, %s1435
      %s1437 = smul.u32 6, %s26
      %p1438 = scmp.lt.s32.totalorder %s1437, 23
      %s1439 = scalar_select %p1438, %s1437, 23
      %s1440 = smul.addr %s1439, 8
      %s1441 = scalar_lea.vmem %s14, %s1440
      // Predicated region
      $region73: #{learned_simulator_forward.9} parent=71 // pred_check
        %p1442 = pneg %p332
      $region74: #{learned_simulator_forward.9} parent=71 // pred_check_branch
        %1444 = sbr.rel (%p1442) target = $region76
      $region75: #{learned_simulator_forward.9} parent=71 // pred_region
        %s1445 = smul.u32 6, %s26
      $region76: #{learned_simulator_forward.9} parent=71 // pred_fallthru
        _
      // Predicated region
      $region77: #{learned_simulator_forward.9} parent=71 // pred_check
        %p1446 = pneg %p358
      $region78: #{learned_simulator_forward.9} parent=71 // pred_check_branch
        %1448 = sbr.rel (%p1446) target = $region80
      $region79: #{learned_simulator_forward.9} parent=71 // pred_region
        %s1449 = smul.u32 6, %s26
      $region80: #{learned_simulator_forward.9} parent=71 // pred_fallthru
        _
    $region72: #{learned_simulator_forward.9} parent=5 // pred_fallthru
      _
    %p1450 = scmp.le.s32.totalorder 2, %s21
    // Predicated region
    $region81: #{learned_simulator_forward.9} parent=5 // pred_check
      %p1451 = pneg %p1450
    $region82: #{learned_simulator_forward.9} parent=5 // pred_check_branch
      %1453 = sbr.rel (%p1451) target = $region84
    $region83: #{learned_simulator_forward.9} parent=5 // pred_region
      %s1454 = ssub.s32 %s21, 2
      // Predicated region
      $region85: #{learned_simulator_forward.9} parent=83 // pred_check
        %p1455 = pneg %p338
      $region86: #{learned_simulator_forward.9} parent=83 // pred_check_branch
        %1457 = sbr.rel (%p1455) target = $region88
      $region87: #{learned_simulator_forward.9} parent=83 // pred_region
        %s1458 = smul.u32 6, %s27
        %p1459 = scmp.lt.s32.totalorder %s1458, 23
        %s1460 = scalar_select %p1459, %s1458, 23
        %s1461 = smul.addr %s1460, 4
        %s1462 = scalar_lea.vmem %s13, %s1461
      $region88: #{learned_simulator_forward.9} parent=83 // pred_fallthru
        _
      // Predicated region
      $region89: #{learned_simulator_forward.9} parent=83 // pred_check
        %p1463 = pneg %p364
      $region90: #{learned_simulator_forward.9} parent=83 // pred_check_branch
        %1465 = sbr.rel (%p1463) target = $region92
      $region91: #{learned_simulator_forward.9} parent=83 // pred_region
        %s1466 = smul.u32 6, %s27
        %p1467 = scmp.lt.s32.totalorder %s1466, 23
        %s1468 = scalar_select %p1467, %s1466, 23
        %s1469 = smul.addr %s1468, 8
        %s1470 = scalar_lea.vmem %s14, %s1469
      $region92: #{learned_simulator_forward.9} parent=83 // pred_fallthru
        _
    $region84: #{learned_simulator_forward.9} parent=5 // pred_fallthru
      _
  $region6: #{learned_simulator_forward.9} parent=0 // loop_footer
    %s25 = sadd.s32 1, %s21
  $region7: #{learned_simulator_forward.9} parent=0 // loop_footer_branch
    %20 = sbr.rel target = $region3
  $region8: #{learned_simulator_forward.9} parent=0 // loop_exit
    _

// kernel: learned_simulator_forward.10
$region0: #{learned_simulator_forward.10}
  #allocation0 [shape = 'u32[]', space=smem, size = 0x4, offset = 0x4, fixed_abs, tag = 'smem constant byte address 0x4 - core index']
  #allocation1 [shape = 'u32[144,128]{1,0:T(1,128)}', space=vmem, size = 0x12000, scoped, tag = 'internal scratch']
  %s0 = inlined_call_operand.vmem [shape: bf16[64,128], index: 0, kind: input, shape index: {}]
  %s1 = inlined_call_operand.vmem [shape: f32[64,128], index: 1, kind: input, shape index: {}]
  %s2 = inlined_call_operand.vmem [shape: bf16[128,128], index: 2, kind: input, shape index: {}]
  %s3 = inlined_call_operand.vmem [shape: bf16[128,128], index: 3, kind: input, shape index: {}]
  %s4 = inlined_call_operand.vmem [shape: f32[1,128], index: 4, kind: input, shape index: {}, may-alias: {4,6,8,10}]
  %s5 = inlined_call_operand.vmem [shape: bf16[128,128], index: 5, kind: input, shape index: {}]
  %s6 = inlined_call_operand.vmem [shape: f32[1,128], index: 6, kind: input, shape index: {}, may-alias: {4,6,8,10}]
  %s7 = inlined_call_operand.vmem [shape: bf16[128,128], index: 7, kind: input, shape index: {}]
  %s8 = inlined_call_operand.vmem [shape: f32[1,128], index: 8, kind: input, shape index: {}, may-alias: {4,6,8,10}]
  %s9 = inlined_call_operand.vmem [shape: f32[1,128], index: 9, kind: input, shape index: {}]
  %s10 = inlined_call_operand.vmem [shape: f32[1,128], index: 10, kind: input, shape index: {}, may-alias: {4,6,8,10}]
  %s11 = inlined_call_operand.vmem [shape: bf16[64,128], index: 11, kind: output, shape index: {}]
  %s12 = sld [smem:[#allocation0]]
  $region77: #{learned_simulator_forward.10} parent=0
    _
  %s14 = ssub.s32 1, %s12
  %s15 = scalar_select 0, %s14, %s12
  loop: start=0, step=1, limit=6
  $region2: #{learned_simulator_forward.10} parent=0 // loop_pre_header
    _
  $region3: #{learned_simulator_forward.10} parent=0 // loop_header
    %s17 = sphi 0, %s21
    %p18 = scmp.ge.s32.totalorder %s17, 6
    %s27 = sphi 0, %s29
    %s30 = sphi 0, %s27
    %s31 = sphi 0, %s30
    %s47 = sphi 0, %s31
    %s53 = sphi 0, %s55
    %s56 = sphi 0, %s53
    %s57 = sphi 0, %s56
    %s73 = sphi 0, %s57
    %s77 = sphi 0, %s77
    %s79 = sphi 0, %s77
    %s80 = sphi 0, %s79
    %s94 = sphi 0, %s80
    %s98 = sphi 0, %s98
    %s100 = sphi 0, %s98
    %s101 = sphi 0, %s100
    %s115 = sphi 0, %s101
    %s119 = sphi 0, %s119
    %s121 = sphi 0, %s119
    %s122 = sphi 0, %s121
    %s136 = sphi 0, %s122
    %s140 = sphi 0, %s140
    %s142 = sphi 0, %s140
    %s143 = sphi 0, %s142
    %s157 = sphi 0, %s143
    %s161 = sphi 0, %s161
    %s163 = sphi 0, %s161
    %s164 = sphi 0, %s163
    %s178 = sphi 0, %s164
    %s182 = sphi 0, %s182
    %s184 = sphi 0, %s182
    %s185 = sphi 0, %s184
    %s199 = sphi 0, %s185
    %s203 = sphi 0, %s203
    %s205 = sphi 0, %s203
    %s206 = sphi 0, %s205
    %s220 = sphi 0, %s206
    %s224 = sphi 0, %s224
    %s226 = sphi 0, %s224
    %s227 = sphi 0, %s226
    %s241 = sphi 0, %s227
    %s245 = sphi 0, %s245
    %s247 = sphi 0, %s245
    %s248 = sphi 0, %s247
    %s262 = sphi 0, %s248
    %s268 = sphi 0, %s270
    %s271 = sphi 0, %s268
    %s272 = sphi 0, %s271
    %s288 = sphi 0, %s272
  $region4: #{learned_simulator_forward.10} parent=0 // loop_header_branch
    %20 = sbr.rel (%p18) target = $region8
  $region5: #{learned_simulator_forward.10} parent=0 // loop_body
    %s22 = ssub.s32 %s17, 1
    %s23 = ssub.s32 %s17, 2
    %s24 = sadd.s32 %s17, 1
    %s25 = ssub.s32 %s17, %s24
    %p26 = scmp.eq.s32.totalorder %s25, 0
    %s28 = sadd.s32 %s27, 1
    %s29 = scalar_select %p26, %s27, %s28
    %p32 = pneg %p26
    %p33 = scmp.eq.s32.totalorder %s17, 3
    %p34 = por %p32, %p33
    %p35 = scmp.ne.s32.totalorder %s27, %s30
    %p36 = scmp.eq.s32.totalorder %s17, 0
    %p37 = por %p35, %p36
    %p38 = scmp.ne.s32.totalorder %s27, %s30
    %p39 = scmp.eq.s32.totalorder %s22, 3
    %p40 = por %p38, %p39
    %p41 = scmp.ne.s32.totalorder %s30, %s31
    %p42 = scmp.eq.s32.totalorder %s22, 0
    %p43 = por %p41, %p42
    %p44 = scmp.ne.s32.totalorder %s30, %s31
    %p45 = scmp.eq.s32.totalorder %s23, 3
    %p46 = por %p44, %p45
    %p48 = scmp.ne.s32.totalorder %s31, %s47
    %p49 = scmp.eq.s32.totalorder %s23, 0
    %p50 = por %p48, %p49
    %s51 = ssub.s32 %s17, %s24
    %p52 = scmp.eq.s32.totalorder %s51, 0
    %s54 = sadd.s32 %s53, 1
    %s55 = scalar_select %p52, %s53, %s54
    %p58 = pneg %p52
    %p59 = scmp.eq.s32.totalorder %s17, 3
    %p60 = por %p58, %p59
    %p61 = scmp.ne.s32.totalorder %s53, %s56
    %p62 = scmp.eq.s32.totalorder %s17, 0
    %p63 = por %p61, %p62
    %p64 = scmp.ne.s32.totalorder %s53, %s56
    %p65 = scmp.eq.s32.totalorder %s22, 3
    %p66 = por %p64, %p65
    %p67 = scmp.ne.s32.totalorder %s56, %s57
    %p68 = scmp.eq.s32.totalorder %s22, 0
    %p69 = por %p67, %p68
    %p70 = scmp.ne.s32.totalorder %s56, %s57
    %p71 = scmp.eq.s32.totalorder %s23, 3
    %p72 = por %p70, %p71
    %p74 = scmp.ne.s32.totalorder %s57, %s73
    %p75 = scmp.eq.s32.totalorder %s23, 0
    %p76 = por %p74, %p75
    %s78 = sadd.s32 %s77, 1
    %p81 = scmp.eq.s32.totalorder %s17, 3
    %p82 = scmp.ne.s32.totalorder %s77, %s79
    %p83 = scmp.eq.s32.totalorder %s17, 0
    %p84 = por %p82, %p83
    %p85 = scmp.ne.s32.totalorder %s77, %s79
    %p86 = scmp.eq.s32.totalorder %s22, 3
    %p87 = por %p85, %p86
    %p88 = scmp.ne.s32.totalorder %s79, %s80
    %p89 = scmp.eq.s32.totalorder %s22, 0
    %p90 = por %p88, %p89
    %p91 = scmp.ne.s32.totalorder %s79, %s80
    %p92 = scmp.eq.s32.totalorder %s23, 3
    %p93 = por %p91, %p92
    %p95 = scmp.ne.s32.totalorder %s80, %s94
    %p96 = scmp.eq.s32.totalorder %s23, 0
    %p97 = por %p95, %p96
    %s99 = sadd.s32 %s98, 1
    %p102 = scmp.eq.s32.totalorder %s17, 3
    %p103 = scmp.ne.s32.totalorder %s98, %s100
    %p104 = scmp.eq.s32.totalorder %s17, 0
    %p105 = por %p103, %p104
    %p106 = scmp.ne.s32.totalorder %s98, %s100
    %p107 = scmp.eq.s32.totalorder %s22, 3
    %p108 = por %p106, %p107
    %p109 = scmp.ne.s32.totalorder %s100, %s101
    %p110 = scmp.eq.s32.totalorder %s22, 0
    %p111 = por %p109, %p110
    %p112 = scmp.ne.s32.totalorder %s100, %s101
    %p113 = scmp.eq.s32.totalorder %s23, 3
    %p114 = por %p112, %p113
    %p116 = scmp.ne.s32.totalorder %s101, %s115
    %p117 = scmp.eq.s32.totalorder %s23, 0
    %p118 = por %p116, %p117
    %s120 = sadd.s32 %s119, 1
    %p123 = scmp.eq.s32.totalorder %s17, 3
    %p124 = scmp.ne.s32.totalorder %s119, %s121
    %p125 = scmp.eq.s32.totalorder %s17, 0
    %p126 = por %p124, %p125
    %p127 = scmp.ne.s32.totalorder %s119, %s121
    %p128 = scmp.eq.s32.totalorder %s22, 3
    %p129 = por %p127, %p128
    %p130 = scmp.ne.s32.totalorder %s121, %s122
    %p131 = scmp.eq.s32.totalorder %s22, 0
    %p132 = por %p130, %p131
    %p133 = scmp.ne.s32.totalorder %s121, %s122
    %p134 = scmp.eq.s32.totalorder %s23, 3
    %p135 = por %p133, %p134
    %p137 = scmp.ne.s32.totalorder %s122, %s136
    %p138 = scmp.eq.s32.totalorder %s23, 0
    %p139 = por %p137, %p138
    %s141 = sadd.s32 %s140, 1
    %p144 = scmp.eq.s32.totalorder %s17, 3
    %p145 = scmp.ne.s32.totalorder %s140, %s142
    %p146 = scmp.eq.s32.totalorder %s17, 0
    %p147 = por %p145, %p146
    %p148 = scmp.ne.s32.totalorder %s140, %s142
    %p149 = scmp.eq.s32.totalorder %s22, 3
    %p150 = por %p148, %p149
    %p151 = scmp.ne.s32.totalorder %s142, %s143
    %p152 = scmp.eq.s32.totalorder %s22, 0
    %p153 = por %p151, %p152
    %p154 = scmp.ne.s32.totalorder %s142, %s143
    %p155 = scmp.eq.s32.totalorder %s23, 3
    %p156 = por %p154, %p155
    %p158 = scmp.ne.s32.totalorder %s143, %s157
    %p159 = scmp.eq.s32.totalorder %s23, 0
    %p160 = por %p158, %p159
    %s162 = sadd.s32 %s161, 1
    %p165 = scmp.eq.s32.totalorder %s17, 3
    %p166 = scmp.ne.s32.totalorder %s161, %s163
    %p167 = scmp.eq.s32.totalorder %s17, 0
    %p168 = por %p166, %p167
    %p169 = scmp.ne.s32.totalorder %s161, %s163
    %p170 = scmp.eq.s32.totalorder %s22, 3
    %p171 = por %p169, %p170
    %p172 = scmp.ne.s32.totalorder %s163, %s164
    %p173 = scmp.eq.s32.totalorder %s22, 0
    %p174 = por %p172, %p173
    %p175 = scmp.ne.s32.totalorder %s163, %s164
    %p176 = scmp.eq.s32.totalorder %s23, 3
    %p177 = por %p175, %p176
    %p179 = scmp.ne.s32.totalorder %s164, %s178
    %p180 = scmp.eq.s32.totalorder %s23, 0
    %p181 = por %p179, %p180
    %s183 = sadd.s32 %s182, 1
    %p186 = scmp.eq.s32.totalorder %s17, 3
    %p187 = scmp.ne.s32.totalorder %s182, %s184
    %p188 = scmp.eq.s32.totalorder %s17, 0
    %p189 = por %p187, %p188
    %p190 = scmp.ne.s32.totalorder %s182, %s184
    %p191 = scmp.eq.s32.totalorder %s22, 3
    %p192 = por %p190, %p191
    %p193 = scmp.ne.s32.totalorder %s184, %s185
    %p194 = scmp.eq.s32.totalorder %s22, 0
    %p195 = por %p193, %p194
    %p196 = scmp.ne.s32.totalorder %s184, %s185
    %p197 = scmp.eq.s32.totalorder %s23, 3
    %p198 = por %p196, %p197
    %p200 = scmp.ne.s32.totalorder %s185, %s199
    %p201 = scmp.eq.s32.totalorder %s23, 0
    %p202 = por %p200, %p201
    %s204 = sadd.s32 %s203, 1
    %p207 = scmp.eq.s32.totalorder %s17, 3
    %p208 = scmp.ne.s32.totalorder %s203, %s205
    %p209 = scmp.eq.s32.totalorder %s17, 0
    %p210 = por %p208, %p209
    %p211 = scmp.ne.s32.totalorder %s203, %s205
    %p212 = scmp.eq.s32.totalorder %s22, 3
    %p213 = por %p211, %p212
    %p214 = scmp.ne.s32.totalorder %s205, %s206
    %p215 = scmp.eq.s32.totalorder %s22, 0
    %p216 = por %p214, %p215
    %p217 = scmp.ne.s32.totalorder %s205, %s206
    %p218 = scmp.eq.s32.totalorder %s23, 3
    %p219 = por %p217, %p218
    %p221 = scmp.ne.s32.totalorder %s206, %s220
    %p222 = scmp.eq.s32.totalorder %s23, 0
    %p223 = por %p221, %p222
    %s225 = sadd.s32 %s224, 1
    %p228 = scmp.eq.s32.totalorder %s17, 3
    %p229 = scmp.ne.s32.totalorder %s224, %s226
    %p230 = scmp.eq.s32.totalorder %s17, 0
    %p231 = por %p229, %p230
    %p232 = scmp.ne.s32.totalorder %s224, %s226
    %p233 = scmp.eq.s32.totalorder %s22, 3
    %p234 = por %p232, %p233
    %p235 = scmp.ne.s32.totalorder %s226, %s227
    %p236 = scmp.eq.s32.totalorder %s22, 0
    %p237 = por %p235, %p236
    %p238 = scmp.ne.s32.totalorder %s226, %s227
    %p239 = scmp.eq.s32.totalorder %s23, 3
    %p240 = por %p238, %p239
    %p242 = scmp.ne.s32.totalorder %s227, %s241
    %p243 = scmp.eq.s32.totalorder %s23, 0
    %p244 = por %p242, %p243
    %s246 = sadd.s32 %s245, 1
    %p249 = scmp.eq.s32.totalorder %s17, 3
    %p250 = scmp.ne.s32.totalorder %s245, %s247
    %p251 = scmp.eq.s32.totalorder %s17, 0
    %p252 = por %p250, %p251
    %p253 = scmp.ne.s32.totalorder %s245, %s247
    %p254 = scmp.eq.s32.totalorder %s22, 3
    %p255 = por %p253, %p254
    %p256 = scmp.ne.s32.totalorder %s247, %s248
    %p257 = scmp.eq.s32.totalorder %s22, 0
    %p258 = por %p256, %p257
    %p259 = scmp.ne.s32.totalorder %s247, %s248
    %p260 = scmp.eq.s32.totalorder %s23, 3
    %p261 = por %p259, %p260
    %p263 = scmp.ne.s32.totalorder %s248, %s262
    %p264 = scmp.eq.s32.totalorder %s23, 0
    %p265 = por %p263, %p264
    %s266 = ssub.s32 %s17, %s24
    %p267 = scmp.eq.s32.totalorder %s266, 0
    %s269 = sadd.s32 %s268, 1
    %s270 = scalar_select %p267, %s268, %s269
    %p273 = pneg %p267
    %p274 = scmp.eq.s32.totalorder %s17, 3
    %p275 = por %p273, %p274
    %p276 = scmp.ne.s32.totalorder %s268, %s271
    %p277 = scmp.eq.s32.totalorder %s17, 0
    %p278 = por %p276, %p277
    %p279 = scmp.ne.s32.totalorder %s268, %s271
    %p280 = scmp.eq.s32.totalorder %s22, 3
    %p281 = por %p279, %p280
    %p282 = scmp.ne.s32.totalorder %s271, %s272
    %p283 = scmp.eq.s32.totalorder %s22, 0
    %p284 = por %p282, %p283
    %p285 = scmp.ne.s32.totalorder %s271, %s272
    %p286 = scmp.eq.s32.totalorder %s23, 3
    %p287 = por %p285, %p286
    %p289 = scmp.ne.s32.totalorder %s272, %s288
    %p290 = scmp.eq.s32.totalorder %s23, 0
    %p291 = por %p289, %p290
    %p292 = scmp.le.s32.totalorder 1, %s17
    %p293 = scmp.lt.s32.totalorder %s17, 5
    %p294 = pnand %p292, %p293
    %p295 = pneg %p294
    // Predicated region
    $region9: #{learned_simulator_forward.10} parent=5 // pred_check
      _
    $region10: #{learned_simulator_forward.10} parent=5 // pred_check_branch
      %297 = sbr.rel (%p294) target = $region12
    $region11: #{learned_simulator_forward.10} parent=5 // pred_region
      %s298 = ssub.s32 %s17, 1
      // Predicated region
      $region13: #{learned_simulator_forward.10} parent=11 // pred_check
        %p299 = pneg %p90
      $region14: #{learned_simulator_forward.10} parent=11 // pred_check_branch
        %301 = sbr.rel (%p299) target = $region16
      $region15: #{learned_simulator_forward.10} parent=11 // pred_region
        _
      $region16: #{learned_simulator_forward.10} parent=11 // pred_fallthru
        _
      // Predicated region
      $region17: #{learned_simulator_forward.10} parent=11 // pred_check
        %p302 = pneg %p111
      $region18: #{learned_simulator_forward.10} parent=11 // pred_check_branch
        %304 = sbr.rel (%p302) target = $region20
      $region19: #{learned_simulator_forward.10} parent=11 // pred_region
        _
      $region20: #{learned_simulator_forward.10} parent=11 // pred_fallthru
        _
      // Predicated region
      $region21: #{learned_simulator_forward.10} parent=11 // pred_check
        %p305 = pneg %p132
      $region22: #{learned_simulator_forward.10} parent=11 // pred_check_branch
        %307 = sbr.rel (%p305) target = $region24
      $region23: #{learned_simulator_forward.10} parent=11 // pred_region
        _
      $region24: #{learned_simulator_forward.10} parent=11 // pred_fallthru
        _
      // Predicated region
      $region25: #{learned_simulator_forward.10} parent=11 // pred_check
        %p308 = pneg %p153
      $region26: #{learned_simulator_forward.10} parent=11 // pred_check_branch
        %310 = sbr.rel (%p308) target = $region28
      $region27: #{learned_simulator_forward.10} parent=11 // pred_region
        _
      $region28: #{learned_simulator_forward.10} parent=11 // pred_fallthru
        _
      // Predicated region
      $region29: #{learned_simulator_forward.10} parent=11 // pred_check
        %p311 = pneg %p174
      $region30: #{learned_simulator_forward.10} parent=11 // pred_check_branch
        %313 = sbr.rel (%p311) target = $region32
      $region31: #{learned_simulator_forward.10} parent=11 // pred_region
        _
      $region32: #{learned_simulator_forward.10} parent=11 // pred_fallthru
        _
      // Predicated region
      $region33: #{learned_simulator_forward.10} parent=11 // pred_check
        %p314 = pneg %p195
      $region34: #{learned_simulator_forward.10} parent=11 // pred_check_branch
        %316 = sbr.rel (%p314) target = $region36
      $region35: #{learned_simulator_forward.10} parent=11 // pred_region
        _
      $region36: #{learned_simulator_forward.10} parent=11 // pred_fallthru
        _
      // Predicated region
      $region37: #{learned_simulator_forward.10} parent=11 // pred_check
        %p317 = pneg %p216
      $region38: #{learned_simulator_forward.10} parent=11 // pred_check_branch
        %319 = sbr.rel (%p317) target = $region40
      $region39: #{learned_simulator_forward.10} parent=11 // pred_region
        _
      $region40: #{learned_simulator_forward.10} parent=11 // pred_fallthru
        _
      // Predicated region
      $region41: #{learned_simulator_forward.10} parent=11 // pred_check
        %p320 = pneg %p237
      $region42: #{learned_simulator_forward.10} parent=11 // pred_check_branch
        %322 = sbr.rel (%p320) target = $region44
      $region43: #{learned_simulator_forward.10} parent=11 // pred_region
        _
      $region44: #{learned_simulator_forward.10} parent=11 // pred_fallthru
        _
      // Predicated region
      $region45: #{learned_simulator_forward.10} parent=11 // pred_check
        %p323 = pneg %p258
      $region46: #{learned_simulator_forward.10} parent=11 // pred_check_branch
        %325 = sbr.rel (%p323) target = $region48
      $region47: #{learned_simulator_forward.10} parent=11 // pred_region
        _
      $region48: #{learned_simulator_forward.10} parent=11 // pred_fallthru
        _
    $region12: #{learned_simulator_forward.10} parent=5 // pred_fallthru
      _
    %p326 = scmp.lt.s32.totalorder %s17, 4
    // Predicated region
    $region49: #{learned_simulator_forward.10} parent=5 // pred_check
      %p327 = pneg %p326
    $region50: #{learned_simulator_forward.10} parent=5 // pred_check_branch
      %329 = sbr.rel (%p327) target = $region52
    $region51: #{learned_simulator_forward.10} parent=5 // pred_region
      // Predicated region
      $region53: #{learned_simulator_forward.10} parent=51 // pred_check
        %p330 = pneg %p37
      $region54: #{learned_simulator_forward.10} parent=51 // pred_check_branch
        %332 = sbr.rel (%p330) target = $region56
      $region55: #{learned_simulator_forward.10} parent=51 // pred_region
        %s333 = smul.u32 2, %s17
        %p334 = scmp.lt.s32.totalorder %s333, 7
        %s335 = scalar_select %p334, %s333, 7
        %s336 = smul.addr %s335, 4
        %s337 = scalar_lea.vmem %s0, %s336
        %s338 = smul.u32 2, %s17
      $region56: #{learned_simulator_forward.10} parent=51 // pred_fallthru
        _
      // Predicated region
      $region57: #{learned_simulator_forward.10} parent=51 // pred_check
        %p339 = pneg %p63
      $region58: #{learned_simulator_forward.10} parent=51 // pred_check_branch
        %341 = sbr.rel (%p339) target = $region60
      $region59: #{learned_simulator_forward.10} parent=51 // pred_region
        %s342 = smul.u32 2, %s17
        %p343 = scmp.lt.s32.totalorder %s342, 7
        %s344 = scalar_select %p343, %s342, 7
        %s345 = smul.addr %s344, 8
        %s346 = scalar_lea.vmem %s1, %s345
        %s347 = smul.u32 2, %s17
      $region60: #{learned_simulator_forward.10} parent=51 // pred_fallthru
        _
    $region52: #{learned_simulator_forward.10} parent=5 // pred_fallthru
      _
    %p348 = scmp.le.s32.totalorder 1, %s17
    %p349 = scmp.lt.s32.totalorder %s17, 5
    %p350 = pnand %p348, %p349
    %p351 = pneg %p350
    // Predicated region
    $region61: #{learned_simulator_forward.10} parent=5 // pred_check
      _
    $region62: #{learned_simulator_forward.10} parent=5 // pred_check_branch
      %353 = sbr.rel (%p350) target = $region64
    $region63: #{learned_simulator_forward.10} parent=5 // pred_region
      %s354 = ssub.s32 %s17, 1
      %s355 = smul.u32 2, %s22
      %p356 = scmp.lt.s32.totalorder %s355, 7
      %s357 = scalar_select %p356, %s355, 7
      %s358 = smul.addr %s357, 4
      %s359 = scalar_lea.vmem %s0, %s358
      %p360 = pneg %p43
      %p361 = pneg %p40
      %s362 = smul.u32 2, %s22
      %p363 = scmp.lt.s32.totalorder %s362, 7
      %s364 = scalar_select %p363, %s362, 7
      %s365 = smul.addr %s364, 8
      %s366 = scalar_lea.vmem %s1, %s365
      %p367 = pneg %p69
      %p368 = pneg %p66
      %p369 = pneg %p90
      %p370 = pneg %p87
      %p371 = pneg %p111
      %p372 = pneg %p108
      %p373 = pneg %p132
      %p374 = pneg %p129
      %p375 = pneg %p153
      %p376 = pneg %p150
      %p377 = pneg %p174
      %p378 = pneg %p171
      %p379 = pneg %p195
      %p380 = pneg %p192
      %p381 = pneg %p216
      %p382 = pneg %p213
      %p383 = pneg %p237
      %p384 = pneg %p234
      %p385 = pneg %p258
      %p386 = pneg %p255
      %p387 = pneg %p284
      %p388 = pneg %p281
      %s389 = smul.u32 2, %s22
      %p390 = scmp.lt.s32.totalorder %s389, 7
      %s391 = scalar_select %p390, %s389, 7
      %s392 = smul.addr %s391, 4
      %s393 = scalar_lea.vmem %s11, %s392
      %s394 = smul.u32 2, %s22
      %p395 = scmp.lt.s32.totalorder %s394, 7
      %s396 = scalar_select %p395, %s394, 7
      %s397 = smul.addr %s396, 4
      %s398 = scalar_lea.vmem %s0, %s397
      %s399 = smul.u32 2, %s22
      %s400 = smul.u32 2, %s22
      %p401 = scmp.lt.s32.totalorder %s400, 7
      %s402 = scalar_select %p401, %s400, 7
      %s403 = smul.addr %s402, 8
      %s404 = scalar_lea.vmem %s1, %s403
      %s405 = smul.u32 2, %s22
      %s406 = smul.u32 2, %s22
      %p407 = scmp.lt.s32.totalorder %s406, 7
      %s408 = scalar_select %p407, %s406, 7
      %s409 = smul.addr %s408, 4
      %s410 = scalar_lea.vmem %s11, %s409
      %s411 = smul.u32 2, %s22
      %v413 = vld [vmem:[%s398] sm:$0xf]
      %v414 = vld [vmem:[%s398 + $0x4] sm:$0xf]
      %v415 = vld [vmem:[%s2] sm:$0xf]
      %v416 = vld [vmem:[%s2 + $0x4] sm:$0xf]
      %v417 = vld [vmem:[%s2 + $0x8] sm:$0xf]
      %v418 = vld [vmem:[%s2 + $0xc] sm:$0xf]
      %v419 = vld [vmem:[%s2 + $0x10] sm:$0xf]
      %v420 = vld [vmem:[%s2 + $0x14] sm:$0xf]
      %v421 = vld [vmem:[%s2 + $0x18] sm:$0xf]
      %v422 = vld [vmem:[%s2 + $0x1c] sm:$0xf]
      %v423 = vld [vmem:[%s2 + $0x20] sm:$0xf]
      %v424 = vld [vmem:[%s2 + $0x24] sm:$0xf]
      %v425 = vld [vmem:[%s2 + $0x28] sm:$0xf]
      %v426 = vld [vmem:[%s2 + $0x2c] sm:$0xf]
      %v427 = vld [vmem:[%s2 + $0x30] sm:$0xf]
      %v428 = vld [vmem:[%s2 + $0x34] sm:$0xf]
      %v429 = vld [vmem:[%s2 + $0x38] sm:$0xf]
      %v430 = vld [vmem:[%s2 + $0x3c] sm:$0xf]
      %v431 = vld [vmem:[%s404] sm:$0xff]
      %v432 = vld [vmem:[%s404 + $0x8] sm:$0xff]
      %v433 = vpack.c.bf16 %v432, %v431
      %v434 = vld [vmem:[%s3] sm:$0xf]
      %v435 = vld [vmem:[%s3 + $0x4] sm:$0xf]
      %v436 = vld [vmem:[%s3 + $0x8] sm:$0xf]
      %v437 = vld [vmem:[%s3 + $0xc] sm:$0xf]
      %v438 = vld [vmem:[%s3 + $0x10] sm:$0xf]
      %v439 = vld [vmem:[%s3 + $0x14] sm:$0xf]
      %v440 = vld [vmem:[%s3 + $0x18] sm:$0xf]
      %v441 = vld [vmem:[%s3 + $0x1c] sm:$0xf]
      %v442 = vld [vmem:[%s3 + $0x20] sm:$0xf]
      %v443 = vld [vmem:[%s3 + $0x24] sm:$0xf]
      %v444 = vld [vmem:[%s3 + $0x28] sm:$0xf]
      %v445 = vld [vmem:[%s3 + $0x2c] sm:$0xf]
      %v446 = vld [vmem:[%s3 + $0x30] sm:$0xf]
      %v447 = vld [vmem:[%s3 + $0x34] sm:$0xf]
      %v448 = vld [vmem:[%s3 + $0x38] sm:$0xf]
      %v449 = vld [vmem:[%s3 + $0x3c] sm:$0xf]
      %v466 = vunpack.c.l.b16 %v434
      %v467 = vunpack.c.l.b16 %v435
      %v468 = vunpack.c.l.b16 %v436
      %v469 = vunpack.c.l.b16 %v437
      %v470 = vunpack.c.l.b16 %v438
      %v471 = vunpack.c.l.b16 %v439
      %v472 = vunpack.c.l.b16 %v440
      %v473 = vunpack.c.l.b16 %v441
      %v474 = vunpack.c.l.b16 %v442
      %v475 = vunpack.c.l.b16 %v443
      %v476 = vunpack.c.l.b16 %v444
      %v477 = vunpack.c.l.b16 %v445
      %v478 = vunpack.c.l.b16 %v446
      %v479 = vunpack.c.l.b16 %v447
      %v480 = vunpack.c.l.b16 %v448
      %v481 = vunpack.c.l.b16 %v449
      %v482 = vpack.c.b16 %v467, %v466
      %v483 = vpack.c.b16 %v469, %v468
      %v484 = vpack.c.b16 %v471, %v470
      %v485 = vpack.c.b16 %v473, %v472
      %v486 = vpack.c.b16 %v475, %v474
      %v487 = vpack.c.b16 %v477, %v476
      %v488 = vpack.c.b16 %v479, %v478
      %v489 = vpack.c.b16 %v481, %v480
      %498 = vmatprep.subr.bf16.mxu0 0
      %499 = vmatpush1.bf16.msra.mxu0 %v489
      %500 = vmatprep.subr.bf16.mxu0 0
      %501 = vmatpush1.bf16.msra.mxu0 %v488
      %502 = vmatprep.subr.bf16.mxu0 0
      %503 = vmatpush1.bf16.msra.mxu0 %v487
      %504 = vmatprep.subr.bf16.mxu0 0
      %505 = vmatpush1.bf16.msra.mxu0 %v486
      %506 = vmatprep.subr.bf16.mxu0 0
      %507 = vmatpush1.bf16.msra.mxu0 %v485
      %508 = vmatprep.subr.bf16.mxu0 0
      %509 = vmatpush1.bf16.msra.mxu0 %v484
      %510 = vmatprep.subr.bf16.mxu0 0
      %511 = vmatpush1.bf16.msra.mxu0 %v483
      %512 = vmatprep.subr.bf16.mxu0 0
      %513 = vmatpush1.bf16.msra.mxu0 %v482
      %514 = vmatprep.subr.bf16.mxu0 0
      %515 = vmatpush2.bf16.msra.mxu0 0
      %516 = vmatprep.subr.bf16.mxu0 0
      %517 = vmatpush2.bf16.msra.mxu0 0
      %518 = vmatprep.subr.bf16.mxu0 0
      %519 = vmatpush2.bf16.msra.mxu0 0
      %520 = vmatprep.subr.bf16.mxu0 0
      %521 = vmatpush2.bf16.msra.mxu0 0
      %522 = vmatprep.subr.bf16.mxu0 0
      %523 = vmatpush2.bf16.msra.mxu0 0
      %524 = vmatprep.subr.bf16.mxu0 0
      %525 = vmatpush2.bf16.msra.mxu0 0
      %526 = vmatprep.subr.bf16.mxu0 0
      %527 = vmatpush2.bf16.msra.mxu0 0
      %528 = vmatprep.subr.bf16.mxu0 0
      %529 = vmatpush2.bf16.msra.mxu0 0
      %530 = vmatprep.mubr.bf16.mxu0 0
      %531 = vmatmul.mubr.bf16.gmra.mxu0 %v433
      %v532 = vpop.f32.mrf.mxu0
      %v533 = vadd.f32 0.0, %v532
      %v534 = vpop.f32.mrf.mxu0
      %v535 = vpop.f32.mrf.mxu0
      %v536 = vadd.f32 0.0, %v535
      %v537 = vpop.f32.mrf.mxu0
      %538 = vdwg.mxu0
      %v541 = vunpack.c.l.b16 %v413
      %v542 = vunpack.c.l.b16 %v414
      %v543 = vpack.c.b16 %v542, %v541
      %v561 = vunpack.c.l.b16 %v415
      %v562 = vunpack.c.l.b16 %v416
      %v563 = vunpack.c.l.b16 %v417
      %v564 = vunpack.c.l.b16 %v418
      %v565 = vunpack.c.l.b16 %v419
      %v566 = vunpack.c.l.b16 %v420
      %v567 = vunpack.c.l.b16 %v421
      %v568 = vunpack.c.l.b16 %v422
      %v569 = vunpack.c.l.b16 %v423
      %v570 = vunpack.c.l.b16 %v424
      %v571 = vunpack.c.l.b16 %v425
      %v572 = vunpack.c.l.b16 %v426
      %v573 = vunpack.c.l.b16 %v427
      %v574 = vunpack.c.l.b16 %v428
      %v575 = vunpack.c.l.b16 %v429
      %v576 = vunpack.c.l.b16 %v430
      %v577 = vpack.c.b16 %v562, %v561
      %v578 = vpack.c.b16 %v564, %v563
      %v579 = vpack.c.b16 %v566, %v565
      %v580 = vpack.c.b16 %v568, %v567
      %v581 = vpack.c.b16 %v570, %v569
      %v582 = vpack.c.b16 %v572, %v571
      %v583 = vpack.c.b16 %v574, %v573
      %v584 = vpack.c.b16 %v576, %v575
      %593 = vmatprep.subr.bf16.mxu0 0
      %594 = vmatpush1.bf16.msra.mxu0 %v584
      %595 = vmatprep.subr.bf16.mxu0 0
      %596 = vmatpush1.bf16.msra.mxu0 %v583
      %597 = vmatprep.subr.bf16.mxu0 0
      %598 = vmatpush1.bf16.msra.mxu0 %v582
      %599 = vmatprep.subr.bf16.mxu0 0
      %600 = vmatpush1.bf16.msra.mxu0 %v581
      %601 = vmatprep.subr.bf16.mxu0 0
      %602 = vmatpush1.bf16.msra.mxu0 %v580
      %603 = vmatprep.subr.bf16.mxu0 0
      %604 = vmatpush1.bf16.msra.mxu0 %v579
      %605 = vmatprep.subr.bf16.mxu0 0
      %606 = vmatpush1.bf16.msra.mxu0 %v578
      %607 = vmatprep.subr.bf16.mxu0 0
      %608 = vmatpush1.bf16.msra.mxu0 %v577
      %609 = vmatprep.subr.bf16.mxu0 0
      %610 = vmatpush2.bf16.msra.mxu0 0
      %611 = vmatprep.subr.bf16.mxu0 0
      %612 = vmatpush2.bf16.msra.mxu0 0
      %613 = vmatprep.subr.bf16.mxu0 0
      %614 = vmatpush2.bf16.msra.mxu0 0
      %615 = vmatprep.subr.bf16.mxu0 0
      %616 = vmatpush2.bf16.msra.mxu0 0
      %617 = vmatprep.subr.bf16.mxu0 0
      %618 = vmatpush2.bf16.msra.mxu0 0
      %619 = vmatprep.subr.bf16.mxu0 0
      %620 = vmatpush2.bf16.msra.mxu0 0
      %621 = vmatprep.subr.bf16.mxu0 0
      %622 = vmatpush2.bf16.msra.mxu0 0
      %623 = vmatprep.subr.bf16.mxu0 0
      %624 = vmatpush2.bf16.msra.mxu0 0
      %625 = vmatprep.mubr.bf16.mxu0 0
      %626 = vmatmul.mubr.bf16.gmra.mxu0 %v543
      %v627 = vpop.f32.mrf.mxu0
      %v628 = vadd.f32 %v533, %v627
      %v629 = vpop.f32.mrf.mxu0
      %v630 = vpop.f32.mrf.mxu0
      %v631 = vadd.f32 %v536, %v630
      %v632 = vpop.f32.mrf.mxu0
      %633 = vdwg.mxu0
      %v634 = vld [vmem:[%s4] sm:$0x1]
      %v636 = vlaneseq
      %v637 = vshrl.u32 %v636, 7
      %v638 = vsub.s32 0, %v637
      %v639 = vrot.slane %v634, %v638
      %v641 = vadd.f32 %v628, %v639
      %v642 = vadd.f32 %v631, %v639
      %v643 = vmax.f32 %v641, 0.0
      %v644 = vmax.f32 %v642, 0.0
      %v645 = vpack.c.bf16 %v644, %v643
      %v646 = vld [vmem:[%s5] sm:$0xf]
      %v647 = vld [vmem:[%s5 + $0x4] sm:$0xf]
      %v648 = vld [vmem:[%s5 + $0x8] sm:$0xf]
      %v649 = vld [vmem:[%s5 + $0xc] sm:$0xf]
      %v650 = vld [vmem:[%s5 + $0x10] sm:$0xf]
      %v651 = vld [vmem:[%s5 + $0x14] sm:$0xf]
      %v652 = vld [vmem:[%s5 + $0x18] sm:$0xf]
      %v653 = vld [vmem:[%s5 + $0x1c] sm:$0xf]
      %v654 = vld [vmem:[%s5 + $0x20] sm:$0xf]
      %v655 = vld [vmem:[%s5 + $0x24] sm:$0xf]
      %v656 = vld [vmem:[%s5 + $0x28] sm:$0xf]
      %v657 = vld [vmem:[%s5 + $0x2c] sm:$0xf]
      %v658 = vld [vmem:[%s5 + $0x30] sm:$0xf]
      %v659 = vld [vmem:[%s5 + $0x34] sm:$0xf]
      %v660 = vld [vmem:[%s5 + $0x38] sm:$0xf]
      %v661 = vld [vmem:[%s5 + $0x3c] sm:$0xf]
      %v662 = vld [vmem:[%s6] sm:$0x1]
      %v664 = vlaneseq
      %v665 = vshrl.u32 %v664, 7
      %v666 = vsub.s32 0, %v665
      %v667 = vrot.slane %v662, %v666
      %v685 = vunpack.c.l.b16 %v646
      %v686 = vunpack.c.l.b16 %v647
      %v687 = vunpack.c.l.b16 %v648
      %v688 = vunpack.c.l.b16 %v649
      %v689 = vunpack.c.l.b16 %v650
      %v690 = vunpack.c.l.b16 %v651
      %v691 = vunpack.c.l.b16 %v652
      %v692 = vunpack.c.l.b16 %v653
      %v693 = vunpack.c.l.b16 %v654
      %v694 = vunpack.c.l.b16 %v655
      %v695 = vunpack.c.l.b16 %v656
      %v696 = vunpack.c.l.b16 %v657
      %v697 = vunpack.c.l.b16 %v658
      %v698 = vunpack.c.l.b16 %v659
      %v699 = vunpack.c.l.b16 %v660
      %v700 = vunpack.c.l.b16 %v661
      %v701 = vpack.c.b16 %v686, %v685
      %v702 = vpack.c.b16 %v688, %v687
      %v703 = vpack.c.b16 %v690, %v689
      %v704 = vpack.c.b16 %v692, %v691
      %v705 = vpack.c.b16 %v694, %v693
      %v706 = vpack.c.b16 %v696, %v695
      %v707 = vpack.c.b16 %v698, %v697
      %v708 = vpack.c.b16 %v700, %v699
      %717 = vmatprep.subr.bf16.mxu0 0
      %718 = vmatpush1.bf16.msra.mxu0 %v708
      %719 = vmatprep.subr.bf16.mxu0 0
      %720 = vmatpush1.bf16.msra.mxu0 %v707
      %721 = vmatprep.subr.bf16.mxu0 0
      %722 = vmatpush1.bf16.msra.mxu0 %v706
      %723 = vmatprep.subr.bf16.mxu0 0
      %724 = vmatpush1.bf16.msra.mxu0 %v705
      %725 = vmatprep.subr.bf16.mxu0 0
      %726 = vmatpush1.bf16.msra.mxu0 %v704
      %727 = vmatprep.subr.bf16.mxu0 0
      %728 = vmatpush1.bf16.msra.mxu0 %v703
      %729 = vmatprep.subr.bf16.mxu0 0
      %730 = vmatpush1.bf16.msra.mxu0 %v702
      %731 = vmatprep.subr.bf16.mxu0 0
      %732 = vmatpush1.bf16.msra.mxu0 %v701
      %733 = vmatprep.subr.bf16.mxu0 0
      %734 = vmatpush2.bf16.msra.mxu0 0
      %735 = vmatprep.subr.bf16.mxu0 0
      %736 = vmatpush2.bf16.msra.mxu0 0
      %737 = vmatprep.subr.bf16.mxu0 0
      %738 = vmatpush2.bf16.msra.mxu0 0
      %739 = vmatprep.subr.bf16.mxu0 0
      %740 = vmatpush2.bf16.msra.mxu0 0
      %741 = vmatprep.subr.bf16.mxu0 0
      %742 = vmatpush2.bf16.msra.mxu0 0
      %743 = vmatprep.subr.bf16.mxu0 0
      %744 = vmatpush2.bf16.msra.mxu0 0
      %745 = vmatprep.subr.bf16.mxu0 0
      %746 = vmatpush2.bf16.msra.mxu0 0
      %747 = vmatprep.subr.bf16.mxu0 0
      %748 = vmatpush2.bf16.msra.mxu0 0
      %749 = vmatprep.mubr.bf16.mxu0 0
      %750 = vmatmul.mubr.bf16.gmra.mxu0 %v645
      %v751 = vpop.f32.mrf.mxu0
      %v752 = vadd.f32 %v667, %v751
      %v753 = vpop.f32.mrf.mxu0
      %v754 = vpop.f32.mrf.mxu0
      %v755 = vadd.f32 %v667, %v754
      %v756 = vpop.f32.mrf.mxu0
      %757 = vdwg.mxu0
      %v758 = vmax.f32 %v752, 0.0
      %v759 = vmax.f32 %v755, 0.0
      %v760 = vpack.c.bf16 %v759, %v758
      %v761 = vld [vmem:[%s7] sm:$0xf]
      %v762 = vld [vmem:[%s7 + $0x4] sm:$0xf]
      %v763 = vld [vmem:[%s7 + $0x8] sm:$0xf]
      %v764 = vld [vmem:[%s7 + $0xc] sm:$0xf]
      %v765 = vld [vmem:[%s7 + $0x10] sm:$0xf]
      %v766 = vld [vmem:[%s7 + $0x14] sm:$0xf]
      %v767 = vld [vmem:[%s7 + $0x18] sm:$0xf]
      %v768 = vld [vmem:[%s7 + $0x1c] sm:$0xf]
      %v769 = vld [vmem:[%s7 + $0x20] sm:$0xf]
      %v770 = vld [vmem:[%s7 + $0x24] sm:$0xf]
      %v771 = vld [vmem:[%s7 + $0x28] sm:$0xf]
      %v772 = vld [vmem:[%s7 + $0x2c] sm:$0xf]
      %v773 = vld [vmem:[%s7 + $0x30] sm:$0xf]
      %v774 = vld [vmem:[%s7 + $0x34] sm:$0xf]
      %v775 = vld [vmem:[%s7 + $0x38] sm:$0xf]
      %v776 = vld [vmem:[%s7 + $0x3c] sm:$0xf]
      %v777 = vld [vmem:[%s8] sm:$0x1]
      %v779 = vlaneseq
      %v780 = vshrl.u32 %v779, 7
      %v781 = vsub.s32 0, %v780
      %v782 = vrot.slane %v777, %v781
      %v800 = vunpack.c.l.b16 %v761
      %v801 = vunpack.c.l.b16 %v762
      %v802 = vunpack.c.l.b16 %v763
      %v803 = vunpack.c.l.b16 %v764
      %v804 = vunpack.c.l.b16 %v765
      %v805 = vunpack.c.l.b16 %v766
      %v806 = vunpack.c.l.b16 %v767
      %v807 = vunpack.c.l.b16 %v768
      %v808 = vunpack.c.l.b16 %v769
      %v809 = vunpack.c.l.b16 %v770
      %v810 = vunpack.c.l.b16 %v771
      %v811 = vunpack.c.l.b16 %v772
      %v812 = vunpack.c.l.b16 %v773
      %v813 = vunpack.c.l.b16 %v774
      %v814 = vunpack.c.l.b16 %v775
      %v815 = vunpack.c.l.b16 %v776
      %v816 = vpack.c.b16 %v801, %v800
      %v817 = vpack.c.b16 %v803, %v802
      %v818 = vpack.c.b16 %v805, %v804
      %v819 = vpack.c.b16 %v807, %v806
      %v820 = vpack.c.b16 %v809, %v808
      %v821 = vpack.c.b16 %v811, %v810
      %v822 = vpack.c.b16 %v813, %v812
      %v823 = vpack.c.b16 %v815, %v814
      %832 = vmatprep.subr.bf16.mxu0 0
      %833 = vmatpush1.bf16.msra.mxu0 %v823
      %834 = vmatprep.subr.bf16.mxu0 0
      %835 = vmatpush1.bf16.msra.mxu0 %v822
      %836 = vmatprep.subr.bf16.mxu0 0
      %837 = vmatpush1.bf16.msra.mxu0 %v821
      %838 = vmatprep.subr.bf16.mxu0 0
      %839 = vmatpush1.bf16.msra.mxu0 %v820
      %840 = vmatprep.subr.bf16.mxu0 0
      %841 = vmatpush1.bf16.msra.mxu0 %v819
      %842 = vmatprep.subr.bf16.mxu0 0
      %843 = vmatpush1.bf16.msra.mxu0 %v818
      %844 = vmatprep.subr.bf16.mxu0 0
      %845 = vmatpush1.bf16.msra.mxu0 %v817
      %846 = vmatprep.subr.bf16.mxu0 0
      %847 = vmatpush1.bf16.msra.mxu0 %v816
      %848 = vmatprep.subr.bf16.mxu0 0
      %849 = vmatpush2.bf16.msra.mxu0 0
      %850 = vmatprep.subr.bf16.mxu0 0
      %851 = vmatpush2.bf16.msra.mxu0 0
      %852 = vmatprep.subr.bf16.mxu0 0
      %853 = vmatpush2.bf16.msra.mxu0 0
      %854 = vmatprep.subr.bf16.mxu0 0
      %855 = vmatpush2.bf16.msra.mxu0 0
      %856 = vmatprep.subr.bf16.mxu0 0
      %857 = vmatpush2.bf16.msra.mxu0 0
      %858 = vmatprep.subr.bf16.mxu0 0
      %859 = vmatpush2.bf16.msra.mxu0 0
      %860 = vmatprep.subr.bf16.mxu0 0
      %861 = vmatpush2.bf16.msra.mxu0 0
      %862 = vmatprep.subr.bf16.mxu0 0
      %863 = vmatpush2.bf16.msra.mxu0 0
      %864 = vmatprep.mubr.bf16.mxu0 0
      %865 = vmatmul.mubr.bf16.gmra.mxu0 %v760
      %v866 = vpop.f32.mrf.mxu0
      %v867 = vadd.f32 %v782, %v866
      %v868 = vpop.f32.mrf.mxu0
      %v869 = vpop.f32.mrf.mxu0
      %v870 = vadd.f32 %v782, %v869
      %v871 = vpop.f32.mrf.mxu0
      %872 = vdwg.mxu0
      %873 = vadd.xlane.f32.xlu0 %v867
      %v874 = vpop.xlane.xlu0 %873
      %875 = vadd.xlane.f32.xlu0 %v870
      %v876 = vpop.xlane.xlu0 %875
      %v877 = vrcp.pop 128.0
      %v878 = vmul.f32 %v874, %v877
      %v879 = vmul.f32 %v876, %v877
      %v880 = vsub.f32 %v867, %v878
      %v881 = vsub.f32 %v870, %v879
      %v882 = vmul.f32 %v880, %v880
      %v883 = vmul.f32 %v881, %v881
      %884 = vadd.xlane.f32.xlu0 %v882
      %v885 = vpop.xlane.xlu0 %884
      %886 = vadd.xlane.f32.xlu0 %v883
      %v887 = vpop.xlane.xlu0 %886
      %v888 = vmul.f32 %v885, 0.0078125
      %v889 = vmul.f32 %v887, 0.0078125
      %v890 = vadd.f32 %v888, 1e-05
      %v891 = vadd.f32 %v889, 1e-05
      %v892 = vrsqrt.pop %v890
      %v893 = vrsqrt.pop %v891
      %v894 = vmul.f32 %v880, %v892
      %v895 = vmul.f32 %v881, %v893
      %v896 = vld [vmem:[%s9] sm:$0x1]
      %v898 = vlaneseq
      %v899 = vshrl.u32 %v898, 7
      %v900 = vsub.s32 0, %v899
      %v901 = vrot.slane %v896, %v900
      %v903 = vmul.f32 %v894, %v901
      %v904 = vmul.f32 %v895, %v901
      %v905 = vld [vmem:[%s10] sm:$0x1]
      %v907 = vlaneseq
      %v908 = vshrl.u32 %v907, 7
      %v909 = vsub.s32 0, %v908
      %v910 = vrot.slane %v905, %v909
      %v912 = vadd.f32 %v903, %v910
      %v913 = vadd.f32 %v904, %v910
      %v914 = vunpack.c.l.bf16 %v413
      %v915 = vunpack.c.l.bf16 %v414
      %v916 = vadd.f32 %v912, %v914
      %v917 = vadd.f32 %v913, %v915
      %v918 = vpack.c.bf16 %v917, %v916
      %v920 = vunpack.c.l.b16 %v918
      %v921 = vunpack.c.h.b16 %v918
      %v922 = vpack.c.b16 %v920, %v920
      %v923 = vpack.c.b16 %v921, %v921
      %926 = vst [vmem:[%s410] sm:$0xf] %v922
      %927 = vst [vmem:[%s410 + $0x4] sm:$0xf] %v923
      %s928 = smul.u32 2, %s22
      %p929 = scmp.lt.s32.totalorder %s928, 7
      %s930 = scalar_select %p929, %s928, 7
      %s931 = smul.addr %s930, 4
      %s932 = scalar_lea.vmem %s11, %s931
      // Predicated region
      $region65: #{learned_simulator_forward.10} parent=63 // pred_check
        %p933 = pneg %p281
      $region66: #{learned_simulator_forward.10} parent=63 // pred_check_branch
        %935 = sbr.rel (%p933) target = $region68
      $region67: #{learned_simulator_forward.10} parent=63 // pred_region
        %s936 = smul.u32 2, %s22
      $region68: #{learned_simulator_forward.10} parent=63 // pred_fallthru
        _
    $region64: #{learned_simulator_forward.10} parent=5 // pred_fallthru
      _
    %p937 = scmp.le.s32.totalorder 2, %s17
    // Predicated region
    $region69: #{learned_simulator_forward.10} parent=5 // pred_check
      %p938 = pneg %p937
    $region70: #{learned_simulator_forward.10} parent=5 // pred_check_branch
      %940 = sbr.rel (%p938) target = $region72
    $region71: #{learned_simulator_forward.10} parent=5 // pred_region
      %s941 = ssub.s32 %s17, 2
      // Predicated region
      $region73: #{learned_simulator_forward.10} parent=71 // pred_check
        %p942 = pneg %p287
      $region74: #{learned_simulator_forward.10} parent=71 // pred_check_branch
        %944 = sbr.rel (%p942) target = $region76
      $region75: #{learned_simulator_forward.10} parent=71 // pred_region
        %s945 = smul.u32 2, %s23
        %p946 = scmp.lt.s32.totalorder %s945, 7
        %s947 = scalar_select %p946, %s945, 7
        %s948 = smul.addr %s947, 4
        %s949 = scalar_lea.vmem %s11, %s948
      $region76: #{learned_simulator_forward.10} parent=71 // pred_fallthru
        _
    $region72: #{learned_simulator_forward.10} parent=5 // pred_fallthru
      _
  $region6: #{learned_simulator_forward.10} parent=0 // loop_footer
    %s21 = sadd.s32 1, %s17
  $region7: #{learned_simulator_forward.10} parent=0 // loop_footer_branch
    %16 = sbr.rel target = $region3
  $region8: #{learned_simulator_forward.10} parent=0 // loop_exit
    _

// kernel: learned_simulator_forward.11
$region0: #{learned_simulator_forward.11}
  #allocation0 [shape = 'u32[]', space=smem, size = 0x4, offset = 0x4, fixed_abs, tag = 'smem constant byte address 0x4 - core index']
  #allocation1 [shape = 'u32[144,128]{1,0:T(1,128)}', space=vmem, size = 0x12000, scoped, tag = 'internal scratch']
  %s0 = inlined_call_operand.vmem [shape: bf16[192,128], index: 0, kind: input, shape index: {}]
  %s1 = inlined_call_operand.vmem [shape: bf16[192,128], index: 1, kind: input, shape index: {}]
  %s2 = inlined_call_operand.vmem [shape: bf16[192,128], index: 2, kind: input, shape index: {}]
  %s3 = inlined_call_operand.vmem [shape: bf16[128,128], index: 3, kind: input, shape index: {}]
  %s4 = inlined_call_operand.vmem [shape: bf16[128,128], index: 4, kind: input, shape index: {}]
  %s5 = inlined_call_operand.vmem [shape: bf16[128,128], index: 5, kind: input, shape index: {}]
  %s6 = inlined_call_operand.vmem [shape: f32[1,128], index: 6, kind: input, shape index: {}, may-alias: {6,8,10,12}]
  %s7 = inlined_call_operand.vmem [shape: bf16[128,128], index: 7, kind: input, shape index: {}]
  %s8 = inlined_call_operand.vmem [shape: f32[1,128], index: 8, kind: input, shape index: {}, may-alias: {6,8,10,12}]
  %s9 = inlined_call_operand.vmem [shape: bf16[128,128], index: 9, kind: input, shape index: {}]
  %s10 = inlined_call_operand.vmem [shape: f32[1,128], index: 10, kind: input, shape index: {}, may-alias: {6,8,10,12}]
  %s11 = inlined_call_operand.vmem [shape: f32[1,128], index: 11, kind: input, shape index: {}]
  %s12 = inlined_call_operand.vmem [shape: f32[1,128], index: 12, kind: input, shape index: {}, may-alias: {6,8,10,12}]
  %s13 = inlined_call_operand.hbm [shape: bf16[192,128], index: 13, kind: output, shape index: {0}]
  %s14 = inlined_call_operand.vmem [shape: f32[192,128], index: 14, kind: output, shape index: {1}]
  %15 = xla_tuple %s13, %s14
  %s16 = sld [smem:[#allocation0]]
  $region93: #{learned_simulator_forward.11} parent=0
    _
  %s18 = ssub.s32 1, %s16
  %s19 = scalar_select 0, %s18, %s16
  $region1: #{learned_simulator_forward.11} parent=0
    #allocation2 [shape = 'u8[24576]{0}', space=vmem, size = 0x6000, scoped, tag = 'output window, operand 0']
    #allocation3 [shape = 's32[2]{0}', space=sflag, size = 0x8, scoped, tag = 'scoped memory for learned_simulator_forward.11']
    %20 = vsyncpa [#allocation3], 0
    %s21 = scalar_lea.sflag [#allocation3], 1
    %22 = vsyncpa %s21, 0
    loop: start=0, step=1, limit=6
    $region2: #{learned_simulator_forward.11} parent=1 // loop_pre_header
      _
    $region3: #{learned_simulator_forward.11} parent=1 // loop_header
      %s24 = sphi 0, %s28
      %p25 = scmp.ge.s32.totalorder %s24, 6
      %s34 = sphi 0, %s36
      %s37 = sphi 0, %s34
      %s38 = sphi 0, %s37
      %s54 = sphi 0, %s38
      %s60 = sphi 0, %s62
      %s63 = sphi 0, %s60
      %s64 = sphi 0, %s63
      %s80 = sphi 0, %s64
      %s86 = sphi 0, %s88
      %s89 = sphi 0, %s86
      %s90 = sphi 0, %s89
      %s106 = sphi 0, %s90
      %s110 = sphi 0, %s110
      %s112 = sphi 0, %s110
      %s113 = sphi 0, %s112
      %s127 = sphi 0, %s113
      %s131 = sphi 0, %s131
      %s133 = sphi 0, %s131
      %s134 = sphi 0, %s133
      %s148 = sphi 0, %s134
      %s152 = sphi 0, %s152
      %s154 = sphi 0, %s152
      %s155 = sphi 0, %s154
      %s169 = sphi 0, %s155
      %s173 = sphi 0, %s173
      %s175 = sphi 0, %s173
      %s176 = sphi 0, %s175
      %s190 = sphi 0, %s176
      %s194 = sphi 0, %s194
      %s196 = sphi 0, %s194
      %s197 = sphi 0, %s196
      %s211 = sphi 0, %s197
      %s215 = sphi 0, %s215
      %s217 = sphi 0, %s215
      %s218 = sphi 0, %s217
      %s232 = sphi 0, %s218
      %s236 = sphi 0, %s236
      %s238 = sphi 0, %s236
      %s239 = sphi 0, %s238
      %s253 = sphi 0, %s239
      %s257 = sphi 0, %s257
      %s259 = sphi 0, %s257
      %s260 = sphi 0, %s259
      %s274 = sphi 0, %s260
      %s278 = sphi 0, %s278
      %s280 = sphi 0, %s278
      %s281 = sphi 0, %s280
      %s295 = sphi 0, %s281
      %s299 = sphi 0, %s299
      %s301 = sphi 0, %s299
      %s302 = sphi 0, %s301
      %s316 = sphi 0, %s302
      %s322 = sphi 0, %s324
      %s325 = sphi 0, %s322
      %s326 = sphi 0, %s325
      %s342 = sphi 0, %s326
      %s348 = sphi 0, %s350
      %s351 = sphi 0, %s348
      %s352 = sphi 0, %s351
      %s368 = sphi 0, %s352
    $region4: #{learned_simulator_forward.11} parent=1 // loop_header_branch
      %27 = sbr.rel (%p25) target = $region8
    $region5: #{learned_simulator_forward.11} parent=1 // loop_body
      %s29 = ssub.s32 %s24, 1
      %s30 = ssub.s32 %s24, 2
      %s31 = sadd.s32 %s24, 1
      %s32 = ssub.s32 %s24, %s31
      %p33 = scmp.eq.s32.totalorder %s32, 0
      %s35 = sadd.s32 %s34, 1
      %s36 = scalar_select %p33, %s34, %s35
      %p39 = pneg %p33
      %p40 = scmp.eq.s32.totalorder %s24, 3
      %p41 = por %p39, %p40
      %p42 = scmp.ne.s32.totalorder %s34, %s37
      %p43 = scmp.eq.s32.totalorder %s24, 0
      %p44 = por %p42, %p43
      %p45 = scmp.ne.s32.totalorder %s34, %s37
      %p46 = scmp.eq.s32.totalorder %s29, 3
      %p47 = por %p45, %p46
      %p48 = scmp.ne.s32.totalorder %s37, %s38
      %p49 = scmp.eq.s32.totalorder %s29, 0
      %p50 = por %p48, %p49
      %p51 = scmp.ne.s32.totalorder %s37, %s38
      %p52 = scmp.eq.s32.totalorder %s30, 3
      %p53 = por %p51, %p52
      %p55 = scmp.ne.s32.totalorder %s38, %s54
      %p56 = scmp.eq.s32.totalorder %s30, 0
      %p57 = por %p55, %p56
      %s58 = ssub.s32 %s24, %s31
      %p59 = scmp.eq.s32.totalorder %s58, 0
      %s61 = sadd.s32 %s60, 1
      %s62 = scalar_select %p59, %s60, %s61
      %p65 = pneg %p59
      %p66 = scmp.eq.s32.totalorder %s24, 3
      %p67 = por %p65, %p66
      %p68 = scmp.ne.s32.totalorder %s60, %s63
      %p69 = scmp.eq.s32.totalorder %s24, 0
      %p70 = por %p68, %p69
      %p71 = scmp.ne.s32.totalorder %s60, %s63
      %p72 = scmp.eq.s32.totalorder %s29, 3
      %p73 = por %p71, %p72
      %p74 = scmp.ne.s32.totalorder %s63, %s64
      %p75 = scmp.eq.s32.totalorder %s29, 0
      %p76 = por %p74, %p75
      %p77 = scmp.ne.s32.totalorder %s63, %s64
      %p78 = scmp.eq.s32.totalorder %s30, 3
      %p79 = por %p77, %p78
      %p81 = scmp.ne.s32.totalorder %s64, %s80
      %p82 = scmp.eq.s32.totalorder %s30, 0
      %p83 = por %p81, %p82
      %s84 = ssub.s32 %s24, %s31
      %p85 = scmp.eq.s32.totalorder %s84, 0
      %s87 = sadd.s32 %s86, 1
      %s88 = scalar_select %p85, %s86, %s87
      %p91 = pneg %p85
      %p92 = scmp.eq.s32.totalorder %s24, 3
      %p93 = por %p91, %p92
      %p94 = scmp.ne.s32.totalorder %s86, %s89
      %p95 = scmp.eq.s32.totalorder %s24, 0
      %p96 = por %p94, %p95
      %p97 = scmp.ne.s32.totalorder %s86, %s89
      %p98 = scmp.eq.s32.totalorder %s29, 3
      %p99 = por %p97, %p98
      %p100 = scmp.ne.s32.totalorder %s89, %s90
      %p101 = scmp.eq.s32.totalorder %s29, 0
      %p102 = por %p100, %p101
      %p103 = scmp.ne.s32.totalorder %s89, %s90
      %p104 = scmp.eq.s32.totalorder %s30, 3
      %p105 = por %p103, %p104
      %p107 = scmp.ne.s32.totalorder %s90, %s106
      %p108 = scmp.eq.s32.totalorder %s30, 0
      %p109 = por %p107, %p108
      %s111 = sadd.s32 %s110, 1
      %p114 = scmp.eq.s32.totalorder %s24, 3
      %p115 = scmp.ne.s32.totalorder %s110, %s112
      %p116 = scmp.eq.s32.totalorder %s24, 0
      %p117 = por %p115, %p116
      %p118 = scmp.ne.s32.totalorder %s110, %s112
      %p119 = scmp.eq.s32.totalorder %s29, 3
      %p120 = por %p118, %p119
      %p121 = scmp.ne.s32.totalorder %s112, %s113
      %p122 = scmp.eq.s32.totalorder %s29, 0
      %p123 = por %p121, %p122
      %p124 = scmp.ne.s32.totalorder %s112, %s113
      %p125 = scmp.eq.s32.totalorder %s30, 3
      %p126 = por %p124, %p125
      %p128 = scmp.ne.s32.totalorder %s113, %s127
      %p129 = scmp.eq.s32.totalorder %s30, 0
      %p130 = por %p128, %p129
      %s132 = sadd.s32 %s131, 1
      %p135 = scmp.eq.s32.totalorder %s24, 3
      %p136 = scmp.ne.s32.totalorder %s131, %s133
      %p137 = scmp.eq.s32.totalorder %s24, 0
      %p138 = por %p136, %p137
      %p139 = scmp.ne.s32.totalorder %s131, %s133
      %p140 = scmp.eq.s32.totalorder %s29, 3
      %p141 = por %p139, %p140
      %p142 = scmp.ne.s32.totalorder %s133, %s134
      %p143 = scmp.eq.s32.totalorder %s29, 0
      %p144 = por %p142, %p143
      %p145 = scmp.ne.s32.totalorder %s133, %s134
      %p146 = scmp.eq.s32.totalorder %s30, 3
      %p147 = por %p145, %p146
      %p149 = scmp.ne.s32.totalorder %s134, %s148
      %p150 = scmp.eq.s32.totalorder %s30, 0
      %p151 = por %p149, %p150
      %s153 = sadd.s32 %s152, 1
      %p156 = scmp.eq.s32.totalorder %s24, 3
      %p157 = scmp.ne.s32.totalorder %s152, %s154
      %p158 = scmp.eq.s32.totalorder %s24, 0
      %p159 = por %p157, %p158
      %p160 = scmp.ne.s32.totalorder %s152, %s154
      %p161 = scmp.eq.s32.totalorder %s29, 3
      %p162 = por %p160, %p161
      %p163 = scmp.ne.s32.totalorder %s154, %s155
      %p164 = scmp.eq.s32.totalorder %s29, 0
      %p165 = por %p163, %p164
      %p166 = scmp.ne.s32.totalorder %s154, %s155
      %p167 = scmp.eq.s32.totalorder %s30, 3
      %p168 = por %p166, %p167
      %p170 = scmp.ne.s32.totalorder %s155, %s169
      %p171 = scmp.eq.s32.totalorder %s30, 0
      %p172 = por %p170, %p171
      %s174 = sadd.s32 %s173, 1
      %p177 = scmp.eq.s32.totalorder %s24, 3
      %p178 = scmp.ne.s32.totalorder %s173, %s175
      %p179 = scmp.eq.s32.totalorder %s24, 0
      %p180 = por %p178, %p179
      %p181 = scmp.ne.s32.totalorder %s173, %s175
      %p182 = scmp.eq.s32.totalorder %s29, 3
      %p183 = por %p181, %p182
      %p184 = scmp.ne.s32.totalorder %s175, %s176
      %p185 = scmp.eq.s32.totalorder %s29, 0
      %p186 = por %p184, %p185
      %p187 = scmp.ne.s32.totalorder %s175, %s176
      %p188 = scmp.eq.s32.totalorder %s30, 3
      %p189 = por %p187, %p188
      %p191 = scmp.ne.s32.totalorder %s176, %s190
      %p192 = scmp.eq.s32.totalorder %s30, 0
      %p193 = por %p191, %p192
      %s195 = sadd.s32 %s194, 1
      %p198 = scmp.eq.s32.totalorder %s24, 3
      %p199 = scmp.ne.s32.totalorder %s194, %s196
      %p200 = scmp.eq.s32.totalorder %s24, 0
      %p201 = por %p199, %p200
      %p202 = scmp.ne.s32.totalorder %s194, %s196
      %p203 = scmp.eq.s32.totalorder %s29, 3
      %p204 = por %p202, %p203
      %p205 = scmp.ne.s32.totalorder %s196, %s197
      %p206 = scmp.eq.s32.totalorder %s29, 0
      %p207 = por %p205, %p206
      %p208 = scmp.ne.s32.totalorder %s196, %s197
      %p209 = scmp.eq.s32.totalorder %s30, 3
      %p210 = por %p208, %p209
      %p212 = scmp.ne.s32.totalorder %s197, %s211
      %p213 = scmp.eq.s32.totalorder %s30, 0
      %p214 = por %p212, %p213
      %s216 = sadd.s32 %s215, 1
      %p219 = scmp.eq.s32.totalorder %s24, 3
      %p220 = scmp.ne.s32.totalorder %s215, %s217
      %p221 = scmp.eq.s32.totalorder %s24, 0
      %p222 = por %p220, %p221
      %p223 = scmp.ne.s32.totalorder %s215, %s217
      %p224 = scmp.eq.s32.totalorder %s29, 3
      %p225 = por %p223, %p224
      %p226 = scmp.ne.s32.totalorder %s217, %s218
      %p227 = scmp.eq.s32.totalorder %s29, 0
      %p228 = por %p226, %p227
      %p229 = scmp.ne.s32.totalorder %s217, %s218
      %p230 = scmp.eq.s32.totalorder %s30, 3
      %p231 = por %p229, %p230
      %p233 = scmp.ne.s32.totalorder %s218, %s232
      %p234 = scmp.eq.s32.totalorder %s30, 0
      %p235 = por %p233, %p234
      %s237 = sadd.s32 %s236, 1
      %p240 = scmp.eq.s32.totalorder %s24, 3
      %p241 = scmp.ne.s32.totalorder %s236, %s238
      %p242 = scmp.eq.s32.totalorder %s24, 0
      %p243 = por %p241, %p242
      %p244 = scmp.ne.s32.totalorder %s236, %s238
      %p245 = scmp.eq.s32.totalorder %s29, 3
      %p246 = por %p244, %p245
      %p247 = scmp.ne.s32.totalorder %s238, %s239
      %p248 = scmp.eq.s32.totalorder %s29, 0
      %p249 = por %p247, %p248
      %p250 = scmp.ne.s32.totalorder %s238, %s239
      %p251 = scmp.eq.s32.totalorder %s30, 3
      %p252 = por %p250, %p251
      %p254 = scmp.ne.s32.totalorder %s239, %s253
      %p255 = scmp.eq.s32.totalorder %s30, 0
      %p256 = por %p254, %p255
      %s258 = sadd.s32 %s257, 1
      %p261 = scmp.eq.s32.totalorder %s24, 3
      %p262 = scmp.ne.s32.totalorder %s257, %s259
      %p263 = scmp.eq.s32.totalorder %s24, 0
      %p264 = por %p262, %p263
      %p265 = scmp.ne.s32.totalorder %s257, %s259
      %p266 = scmp.eq.s32.totalorder %s29, 3
      %p267 = por %p265, %p266
      %p268 = scmp.ne.s32.totalorder %s259, %s260
      %p269 = scmp.eq.s32.totalorder %s29, 0
      %p270 = por %p268, %p269
      %p271 = scmp.ne.s32.totalorder %s259, %s260
      %p272 = scmp.eq.s32.totalorder %s30, 3
      %p273 = por %p271, %p272
      %p275 = scmp.ne.s32.totalorder %s260, %s274
      %p276 = scmp.eq.s32.totalorder %s30, 0
      %p277 = por %p275, %p276
      %s279 = sadd.s32 %s278, 1
      %p282 = scmp.eq.s32.totalorder %s24, 3
      %p283 = scmp.ne.s32.totalorder %s278, %s280
      %p284 = scmp.eq.s32.totalorder %s24, 0
      %p285 = por %p283, %p284
      %p286 = scmp.ne.s32.totalorder %s278, %s280
      %p287 = scmp.eq.s32.totalorder %s29, 3
      %p288 = por %p286, %p287
      %p289 = scmp.ne.s32.totalorder %s280, %s281
      %p290 = scmp.eq.s32.totalorder %s29, 0
      %p291 = por %p289, %p290
      %p292 = scmp.ne.s32.totalorder %s280, %s281
      %p293 = scmp.eq.s32.totalorder %s30, 3
      %p294 = por %p292, %p293
      %p296 = scmp.ne.s32.totalorder %s281, %s295
      %p297 = scmp.eq.s32.totalorder %s30, 0
      %p298 = por %p296, %p297
      %s300 = sadd.s32 %s299, 1
      %p303 = scmp.eq.s32.totalorder %s24, 3
      %p304 = scmp.ne.s32.totalorder %s299, %s301
      %p305 = scmp.eq.s32.totalorder %s24, 0
      %p306 = por %p304, %p305
      %p307 = scmp.ne.s32.totalorder %s299, %s301
      %p308 = scmp.eq.s32.totalorder %s29, 3
      %p309 = por %p307, %p308
      %p310 = scmp.ne.s32.totalorder %s301, %s302
      %p311 = scmp.eq.s32.totalorder %s29, 0
      %p312 = por %p310, %p311
      %p313 = scmp.ne.s32.totalorder %s301, %s302
      %p314 = scmp.eq.s32.totalorder %s30, 3
      %p315 = por %p313, %p314
      %p317 = scmp.ne.s32.totalorder %s302, %s316
      %p318 = scmp.eq.s32.totalorder %s30, 0
      %p319 = por %p317, %p318
      %s320 = ssub.s32 %s24, %s31
      %p321 = scmp.eq.s32.totalorder %s320, 0
      %s323 = sadd.s32 %s322, 1
      %s324 = scalar_select %p321, %s322, %s323
      %p327 = pneg %p321
      %p328 = scmp.eq.s32.totalorder %s24, 3
      %p329 = por %p327, %p328
      %p330 = scmp.ne.s32.totalorder %s322, %s325
      %p331 = scmp.eq.s32.totalorder %s24, 0
      %p332 = por %p330, %p331
      %p333 = scmp.ne.s32.totalorder %s322, %s325
      %p334 = scmp.eq.s32.totalorder %s29, 3
      %p335 = por %p333, %p334
      %p336 = scmp.ne.s32.totalorder %s325, %s326
      %p337 = scmp.eq.s32.totalorder %s29, 0
      %p338 = por %p336, %p337
      %p339 = scmp.ne.s32.totalorder %s325, %s326
      %p340 = scmp.eq.s32.totalorder %s30, 3
      %p341 = por %p339, %p340
      %p343 = scmp.ne.s32.totalorder %s326, %s342
      %p344 = scmp.eq.s32.totalorder %s30, 0
      %p345 = por %p343, %p344
      %s346 = ssub.s32 %s24, %s31
      %p347 = scmp.eq.s32.totalorder %s346, 0
      %s349 = sadd.s32 %s348, 1
      %s350 = scalar_select %p347, %s348, %s349
      %p353 = pneg %p347
      %p354 = scmp.eq.s32.totalorder %s24, 3
      %p355 = por %p353, %p354
      %p356 = scmp.ne.s32.totalorder %s348, %s351
      %p357 = scmp.eq.s32.totalorder %s24, 0
      %p358 = por %p356, %p357
      %p359 = scmp.ne.s32.totalorder %s348, %s351
      %p360 = scmp.eq.s32.totalorder %s29, 3
      %p361 = por %p359, %p360
      %p362 = scmp.ne.s32.totalorder %s351, %s352
      %p363 = scmp.eq.s32.totalorder %s29, 0
      %p364 = por %p362, %p363
      %p365 = scmp.ne.s32.totalorder %s351, %s352
      %p366 = scmp.eq.s32.totalorder %s30, 3
      %p367 = por %p365, %p366
      %p369 = scmp.ne.s32.totalorder %s352, %s368
      %p370 = scmp.eq.s32.totalorder %s30, 0
      %p371 = por %p369, %p370
      %p372 = scmp.le.s32.totalorder 1, %s24
      %p373 = scmp.lt.s32.totalorder %s24, 5
      %p374 = pnand %p372, %p373
      %p375 = pneg %p374
      // Predicated region
      $region9: #{learned_simulator_forward.11} parent=5 // pred_check
        _
      $region10: #{learned_simulator_forward.11} parent=5 // pred_check_branch
        %377 = sbr.rel (%p374) target = $region12
      $region11: #{learned_simulator_forward.11} parent=5 // pred_region
        %s378 = ssub.s32 %s24, 1
        // Predicated region
        $region13: #{learned_simulator_forward.11} parent=11 // pred_check
          %p379 = pneg %p123
        $region14: #{learned_simulator_forward.11} parent=11 // pred_check_branch
          %381 = sbr.rel (%p379) target = $region16
        $region15: #{learned_simulator_forward.11} parent=11 // pred_region
          _
        $region16: #{learned_simulator_forward.11} parent=11 // pred_fallthru
          _
        // Predicated region
        $region17: #{learned_simulator_forward.11} parent=11 // pred_check
          %p382 = pneg %p144
        $region18: #{learned_simulator_forward.11} parent=11 // pred_check_branch
          %384 = sbr.rel (%p382) target = $region20
        $region19: #{learned_simulator_forward.11} parent=11 // pred_region
          _
        $region20: #{learned_simulator_forward.11} parent=11 // pred_fallthru
          _
        // Predicated region
        $region21: #{learned_simulator_forward.11} parent=11 // pred_check
          %p385 = pneg %p165
        $region22: #{learned_simulator_forward.11} parent=11 // pred_check_branch
          %387 = sbr.rel (%p385) target = $region24
        $region23: #{learned_simulator_forward.11} parent=11 // pred_region
          _
        $region24: #{learned_simulator_forward.11} parent=11 // pred_fallthru
          _
        // Predicated region
        $region25: #{learned_simulator_forward.11} parent=11 // pred_check
          %p388 = pneg %p186
        $region26: #{learned_simulator_forward.11} parent=11 // pred_check_branch
          %390 = sbr.rel (%p388) target = $region28
        $region27: #{learned_simulator_forward.11} parent=11 // pred_region
          _
        $region28: #{learned_simulator_forward.11} parent=11 // pred_fallthru
          _
        // Predicated region
        $region29: #{learned_simulator_forward.11} parent=11 // pred_check
          %p391 = pneg %p207
        $region30: #{learned_simulator_forward.11} parent=11 // pred_check_branch
          %393 = sbr.rel (%p391) target = $region32
        $region31: #{learned_simulator_forward.11} parent=11 // pred_region
          _
        $region32: #{learned_simulator_forward.11} parent=11 // pred_fallthru
          _
        // Predicated region
        $region33: #{learned_simulator_forward.11} parent=11 // pred_check
          %p394 = pneg %p228
        $region34: #{learned_simulator_forward.11} parent=11 // pred_check_branch
          %396 = sbr.rel (%p394) target = $region36
        $region35: #{learned_simulator_forward.11} parent=11 // pred_region
          _
        $region36: #{learned_simulator_forward.11} parent=11 // pred_fallthru
          _
        // Predicated region
        $region37: #{learned_simulator_forward.11} parent=11 // pred_check
          %p397 = pneg %p249
        $region38: #{learned_simulator_forward.11} parent=11 // pred_check_branch
          %399 = sbr.rel (%p397) target = $region40
        $region39: #{learned_simulator_forward.11} parent=11 // pred_region
          _
        $region40: #{learned_simulator_forward.11} parent=11 // pred_fallthru
          _
        // Predicated region
        $region41: #{learned_simulator_forward.11} parent=11 // pred_check
          %p400 = pneg %p270
        $region42: #{learned_simulator_forward.11} parent=11 // pred_check_branch
          %402 = sbr.rel (%p400) target = $region44
        $region43: #{learned_simulator_forward.11} parent=11 // pred_region
          _
        $region44: #{learned_simulator_forward.11} parent=11 // pred_fallthru
          _
        // Predicated region
        $region45: #{learned_simulator_forward.11} parent=11 // pred_check
          %p403 = pneg %p291
        $region46: #{learned_simulator_forward.11} parent=11 // pred_check_branch
          %405 = sbr.rel (%p403) target = $region48
        $region47: #{learned_simulator_forward.11} parent=11 // pred_region
          _
        $region48: #{learned_simulator_forward.11} parent=11 // pred_fallthru
          _
        // Predicated region
        $region49: #{learned_simulator_forward.11} parent=11 // pred_check
          %p406 = pneg %p312
        $region50: #{learned_simulator_forward.11} parent=11 // pred_check_branch
          %408 = sbr.rel (%p406) target = $region52
        $region51: #{learned_simulator_forward.11} parent=11 // pred_region
          _
        $region52: #{learned_simulator_forward.11} parent=11 // pred_fallthru
          _
      $region12: #{learned_simulator_forward.11} parent=5 // pred_fallthru
        _
      %p409 = scmp.lt.s32.totalorder %s24, 4
      // Predicated region
      $region53: #{learned_simulator_forward.11} parent=5 // pred_check
        %p410 = pneg %p409
      $region54: #{learned_simulator_forward.11} parent=5 // pred_check_branch
        %412 = sbr.rel (%p410) target = $region56
      $region55: #{learned_simulator_forward.11} parent=5 // pred_region
        // Predicated region
        $region57: #{learned_simulator_forward.11} parent=55 // pred_check
          %p413 = pneg %p44
        $region58: #{learned_simulator_forward.11} parent=55 // pred_check_branch
          %415 = sbr.rel (%p413) target = $region60
        $region59: #{learned_simulator_forward.11} parent=55 // pred_region
          %s416 = smul.u32 6, %s24
          %p417 = scmp.lt.s32.totalorder %s416, 23
          %s418 = scalar_select %p417, %s416, 23
          %s419 = smul.addr %s418, 4
          %s420 = scalar_lea.vmem %s0, %s419
          %s421 = smul.u32 6, %s24
        $region60: #{learned_simulator_forward.11} parent=55 // pred_fallthru
          _
        // Predicated region
        $region61: #{learned_simulator_forward.11} parent=55 // pred_check
          %p422 = pneg %p70
        $region62: #{learned_simulator_forward.11} parent=55 // pred_check_branch
          %424 = sbr.rel (%p422) target = $region64
        $region63: #{learned_simulator_forward.11} parent=55 // pred_region
          %s425 = smul.u32 6, %s24
          %p426 = scmp.lt.s32.totalorder %s425, 23
          %s427 = scalar_select %p426, %s425, 23
          %s428 = smul.addr %s427, 4
          %s429 = scalar_lea.vmem %s1, %s428
          %s430 = smul.u32 6, %s24
        $region64: #{learned_simulator_forward.11} parent=55 // pred_fallthru
          _
        // Predicated region
        $region65: #{learned_simulator_forward.11} parent=55 // pred_check
          %p431 = pneg %p96
        $region66: #{learned_simulator_forward.11} parent=55 // pred_check_branch
          %433 = sbr.rel (%p431) target = $region68
        $region67: #{learned_simulator_forward.11} parent=55 // pred_region
          %s434 = smul.u32 6, %s24
          %p435 = scmp.lt.s32.totalorder %s434, 23
          %s436 = scalar_select %p435, %s434, 23
          %s437 = smul.addr %s436, 4
          %s438 = scalar_lea.vmem %s2, %s437
          %s439 = smul.u32 6, %s24
        $region68: #{learned_simulator_forward.11} parent=55 // pred_fallthru
          _
      $region56: #{learned_simulator_forward.11} parent=5 // pred_fallthru
        _
      %p440 = scmp.le.s32.totalorder 1, %s24
      %p441 = scmp.lt.s32.totalorder %s24, 5
      %p442 = pnand %p440, %p441
      %p443 = pneg %p442
      // Predicated region
      $region69: #{learned_simulator_forward.11} parent=5 // pred_check
        _
      $region70: #{learned_simulator_forward.11} parent=5 // pred_check_branch
        %445 = sbr.rel (%p442) target = $region72
      $region71: #{learned_simulator_forward.11} parent=5 // pred_region
        %s446 = ssub.s32 %s24, 1
        %s447 = smul.u32 6, %s29
        %p448 = scmp.lt.s32.totalorder %s447, 23
        %s449 = scalar_select %p448, %s447, 23
        %s450 = smul.addr %s449, 4
        %s451 = scalar_lea.vmem %s0, %s450
        %p452 = pneg %p50
        %p453 = pneg %p47
        %s454 = smul.u32 6, %s29
        %p455 = scmp.lt.s32.totalorder %s454, 23
        %s456 = scalar_select %p455, %s454, 23
        %s457 = smul.addr %s456, 4
        %s458 = scalar_lea.vmem %s1, %s457
        %p459 = pneg %p76
        %p460 = pneg %p73
        %s461 = smul.u32 6, %s29
        %p462 = scmp.lt.s32.totalorder %s461, 23
        %s463 = scalar_select %p462, %s461, 23
        %s464 = smul.addr %s463, 4
        %s465 = scalar_lea.vmem %s2, %s464
        %p466 = pneg %p102
        %p467 = pneg %p99
        %p468 = pneg %p123
        %p469 = pneg %p120
        %p470 = pneg %p144
        %p471 = pneg %p141
        %p472 = pneg %p165
        %p473 = pneg %p162
        %p474 = pneg %p186
        %p475 = pneg %p183
        %p476 = pneg %p207
        %p477 = pneg %p204
        %p478 = pneg %p228
        %p479 = pneg %p225
        %p480 = pneg %p249
        %p481 = pneg %p246
        %p482 = pneg %p270
        %p483 = pneg %p267
        %p484 = pneg %p291
        %p485 = pneg %p288
        %p486 = pneg %p312
        %p487 = pneg %p309
        %p488 = pneg %p338
        %p489 = pneg %p335
        %s490 = sand.u32 %s325, 1
        %s491 = scalar_lea.sflag [#allocation3], %s490
        %s492 = sand.u32 %s325, 1
        %s493 = smul.addr %s492, 24
        %s494 = scalar_lea.vmem [#allocation2], %s493
        %p495 = pneg %p364
        %p496 = pneg %p361
        %s497 = smul.u32 6, %s29
        %p498 = scmp.lt.s32.totalorder %s497, 23
        %s499 = scalar_select %p498, %s497, 23
        %s500 = smul.addr %s499, 8
        %s501 = scalar_lea.vmem %s14, %s500
        %s502 = smul.u32 6, %s29
        %p503 = scmp.lt.s32.totalorder %s502, 23
        %s504 = scalar_select %p503, %s502, 23
        %s505 = smul.addr %s504, 4
        %s506 = scalar_lea.vmem %s0, %s505
        %s507 = smul.u32 6, %s29
        %s508 = smul.u32 6, %s29
        %p509 = scmp.lt.s32.totalorder %s508, 23
        %s510 = scalar_select %p509, %s508, 23
        %s511 = smul.addr %s510, 4
        %s512 = scalar_lea.vmem %s1, %s511
        %s513 = smul.u32 6, %s29
        %s514 = smul.u32 6, %s29
        %p515 = scmp.lt.s32.totalorder %s514, 23
        %s516 = scalar_select %p515, %s514, 23
        %s517 = smul.addr %s516, 4
        %s518 = scalar_lea.vmem %s2, %s517
        %s519 = smul.u32 6, %s29
        %s520 = smul.u32 6, %s29
        %s521 = smul.u32 6, %s29
        %p522 = scmp.lt.s32.totalorder %s521, 23
        %s523 = scalar_select %p522, %s521, 23
        %s524 = smul.addr %s523, 8
        %s525 = scalar_lea.vmem %s14, %s524
        %s526 = smul.u32 6, %s29
        %v528 = vld [vmem:[%s506] sm:$0xf]
        %v529 = vld [vmem:[%s506 + $0x4] sm:$0xf]
        %v530 = vld [vmem:[%s506 + $0x8] sm:$0xf]
        %v531 = vld [vmem:[%s506 + $0xc] sm:$0xf]
        %v532 = vld [vmem:[%s506 + $0x10] sm:$0xf]
        %v533 = vld [vmem:[%s506 + $0x14] sm:$0xf]
        %v534 = vld [vmem:[%s3] sm:$0xf]
        %v535 = vld [vmem:[%s3 + $0x4] sm:$0xf]
        %v536 = vld [vmem:[%s3 + $0x8] sm:$0xf]
        %v537 = vld [vmem:[%s3 + $0xc] sm:$0xf]
        %v538 = vld [vmem:[%s3 + $0x10] sm:$0xf]
        %v539 = vld [vmem:[%s3 + $0x14] sm:$0xf]
        %v540 = vld [vmem:[%s3 + $0x18] sm:$0xf]
        %v541 = vld [vmem:[%s3 + $0x1c] sm:$0xf]
        %v542 = vld [vmem:[%s3 + $0x20] sm:$0xf]
        %v543 = vld [vmem:[%s3 + $0x24] sm:$0xf]
        %v544 = vld [vmem:[%s3 + $0x28] sm:$0xf]
        %v545 = vld [vmem:[%s3 + $0x2c] sm:$0xf]
        %v546 = vld [vmem:[%s3 + $0x30] sm:$0xf]
        %v547 = vld [vmem:[%s3 + $0x34] sm:$0xf]
        %v548 = vld [vmem:[%s3 + $0x38] sm:$0xf]
        %v549 = vld [vmem:[%s3 + $0x3c] sm:$0xf]
        %v550 = vld [vmem:[%s512] sm:$0xf]
        %v551 = vld [vmem:[%s512 + $0x4] sm:$0xf]
        %v552 = vld [vmem:[%s512 + $0x8] sm:$0xf]
        %v553 = vld [vmem:[%s512 + $0xc] sm:$0xf]
        %v554 = vld [vmem:[%s512 + $0x10] sm:$0xf]
        %v555 = vld [vmem:[%s512 + $0x14] sm:$0xf]
        %v556 = vld [vmem:[%s4] sm:$0xf]
        %v557 = vld [vmem:[%s4 + $0x4] sm:$0xf]
        %v558 = vld [vmem:[%s4 + $0x8] sm:$0xf]
        %v559 = vld [vmem:[%s4 + $0xc] sm:$0xf]
        %v560 = vld [vmem:[%s4 + $0x10] sm:$0xf]
        %v561 = vld [vmem:[%s4 + $0x14] sm:$0xf]
        %v562 = vld [vmem:[%s4 + $0x18] sm:$0xf]
        %v563 = vld [vmem:[%s4 + $0x1c] sm:$0xf]
        %v564 = vld [vmem:[%s4 + $0x20] sm:$0xf]
        %v565 = vld [vmem:[%s4 + $0x24] sm:$0xf]
        %v566 = vld [vmem:[%s4 + $0x28] sm:$0xf]
        %v567 = vld [vmem:[%s4 + $0x2c] sm:$0xf]
        %v568 = vld [vmem:[%s4 + $0x30] sm:$0xf]
        %v569 = vld [vmem:[%s4 + $0x34] sm:$0xf]
        %v570 = vld [vmem:[%s4 + $0x38] sm:$0xf]
        %v571 = vld [vmem:[%s4 + $0x3c] sm:$0xf]
        %v578 = vunpack.c.l.b16 %v550
        %v579 = vunpack.c.l.b16 %v551
        %v580 = vunpack.c.l.b16 %v552
        %v581 = vunpack.c.l.b16 %v553
        %v582 = vunpack.c.l.b16 %v554
        %v583 = vunpack.c.l.b16 %v555
        %v584 = vpack.c.b16 %v579, %v578
        %v585 = vpack.c.b16 %v581, %v580
        %v586 = vpack.c.b16 %v583, %v582
        %v606 = vunpack.c.l.b16 %v556
        %v607 = vunpack.c.l.b16 %v557
        %v608 = vunpack.c.l.b16 %v558
        %v609 = vunpack.c.l.b16 %v559
        %v610 = vunpack.c.l.b16 %v560
        %v611 = vunpack.c.l.b16 %v561
        %v612 = vunpack.c.l.b16 %v562
        %v613 = vunpack.c.l.b16 %v563
        %v614 = vunpack.c.l.b16 %v564
        %v615 = vunpack.c.l.b16 %v565
        %v616 = vunpack.c.l.b16 %v566
        %v617 = vunpack.c.l.b16 %v567
        %v618 = vunpack.c.l.b16 %v568
        %v619 = vunpack.c.l.b16 %v569
        %v620 = vunpack.c.l.b16 %v570
        %v621 = vunpack.c.l.b16 %v571
        %v622 = vpack.c.b16 %v607, %v606
        %v623 = vpack.c.b16 %v609, %v608
        %v624 = vpack.c.b16 %v611, %v610
        %v625 = vpack.c.b16 %v613, %v612
        %v626 = vpack.c.b16 %v615, %v614
        %v627 = vpack.c.b16 %v617, %v616
        %v628 = vpack.c.b16 %v619, %v618
        %v629 = vpack.c.b16 %v621, %v620
        %638 = vmatprep.subr.bf16.mxu0 0
        %639 = vmatpush1.bf16.msra.mxu0 %v629
        %640 = vmatprep.subr.bf16.mxu0 0
        %641 = vmatpush1.bf16.msra.mxu0 %v628
        %642 = vmatprep.subr.bf16.mxu0 0
        %643 = vmatpush1.bf16.msra.mxu0 %v627
        %644 = vmatprep.subr.bf16.mxu0 0
        %645 = vmatpush1.bf16.msra.mxu0 %v626
        %646 = vmatprep.subr.bf16.mxu0 0
        %647 = vmatpush1.bf16.msra.mxu0 %v625
        %648 = vmatprep.subr.bf16.mxu0 0
        %649 = vmatpush1.bf16.msra.mxu0 %v624
        %650 = vmatprep.subr.bf16.mxu0 0
        %651 = vmatpush1.bf16.msra.mxu0 %v623
        %652 = vmatprep.subr.bf16.mxu0 0
        %653 = vmatpush1.bf16.msra.mxu0 %v622
        %654 = vmatprep.subr.bf16.mxu0 0
        %655 = vmatpush2.bf16.msra.mxu0 0
        %656 = vmatprep.subr.bf16.mxu0 0
        %657 = vmatpush2.bf16.msra.mxu0 0
        %658 = vmatprep.subr.bf16.mxu0 0
        %659 = vmatpush2.bf16.msra.mxu0 0
        %660 = vmatprep.subr.bf16.mxu0 0
        %661 = vmatpush2.bf16.msra.mxu0 0
        %662 = vmatprep.subr.bf16.mxu0 0
        %663 = vmatpush2.bf16.msra.mxu0 0
        %664 = vmatprep.subr.bf16.mxu0 0
        %665 = vmatpush2.bf16.msra.mxu0 0
        %666 = vmatprep.subr.bf16.mxu0 0
        %667 = vmatpush2.bf16.msra.mxu0 0
        %668 = vmatprep.subr.bf16.mxu0 0
        %669 = vmatpush2.bf16.msra.mxu0 0
        %670 = vmatprep.mubr.bf16.mxu0 0
        %671 = vmatmul.mubr.bf16.gmra.mxu0 %v584
        %v672 = vpop.f32.mrf.mxu0
        %v673 = vadd.f32 0.0, %v672
        %v674 = vpop.f32.mrf.mxu0
        %v675 = vpop.f32.mrf.mxu0
        %v676 = vadd.f32 0.0, %v675
        %v677 = vpop.f32.mrf.mxu0
        %678 = vmatprep.mubr.bf16.mxu0 0
        %679 = vmatmul.mubr.bf16.gmra.mxu0 %v585
        %v680 = vpop.f32.mrf.mxu0
        %v681 = vadd.f32 0.0, %v680
        %v682 = vpop.f32.mrf.mxu0
        %v683 = vpop.f32.mrf.mxu0
        %v684 = vadd.f32 0.0, %v683
        %v685 = vpop.f32.mrf.mxu0
        %686 = vmatprep.mubr.bf16.mxu0 0
        %687 = vmatmul.mubr.bf16.gmra.mxu0 %v586
        %v688 = vpop.f32.mrf.mxu0
        %v689 = vadd.f32 0.0, %v688
        %v690 = vpop.f32.mrf.mxu0
        %v691 = vpop.f32.mrf.mxu0
        %v692 = vadd.f32 0.0, %v691
        %v693 = vpop.f32.mrf.mxu0
        %694 = vdwg.mxu0
        %v701 = vunpack.c.l.b16 %v528
        %v702 = vunpack.c.l.b16 %v529
        %v703 = vunpack.c.l.b16 %v530
        %v704 = vunpack.c.l.b16 %v531
        %v705 = vunpack.c.l.b16 %v532
        %v706 = vunpack.c.l.b16 %v533
        %v707 = vpack.c.b16 %v702, %v701
        %v708 = vpack.c.b16 %v704, %v703
        %v709 = vpack.c.b16 %v706, %v705
        %v729 = vunpack.c.l.b16 %v534
        %v730 = vunpack.c.l.b16 %v535
        %v731 = vunpack.c.l.b16 %v536
        %v732 = vunpack.c.l.b16 %v537
        %v733 = vunpack.c.l.b16 %v538
        %v734 = vunpack.c.l.b16 %v539
        %v735 = vunpack.c.l.b16 %v540
        %v736 = vunpack.c.l.b16 %v541
        %v737 = vunpack.c.l.b16 %v542
        %v738 = vunpack.c.l.b16 %v543
        %v739 = vunpack.c.l.b16 %v544
        %v740 = vunpack.c.l.b16 %v545
        %v741 = vunpack.c.l.b16 %v546
        %v742 = vunpack.c.l.b16 %v547
        %v743 = vunpack.c.l.b16 %v548
        %v744 = vunpack.c.l.b16 %v549
        %v745 = vpack.c.b16 %v730, %v729
        %v746 = vpack.c.b16 %v732, %v731
        %v747 = vpack.c.b16 %v734, %v733
        %v748 = vpack.c.b16 %v736, %v735
        %v749 = vpack.c.b16 %v738, %v737
        %v750 = vpack.c.b16 %v740, %v739
        %v751 = vpack.c.b16 %v742, %v741
        %v752 = vpack.c.b16 %v744, %v743
        %761 = vmatprep.subr.bf16.mxu0 0
        %762 = vmatpush1.bf16.msra.mxu0 %v752
        %763 = vmatprep.subr.bf16.mxu0 0
        %764 = vmatpush1.bf16.msra.mxu0 %v751
        %765 = vmatprep.subr.bf16.mxu0 0
        %766 = vmatpush1.bf16.msra.mxu0 %v750
        %767 = vmatprep.subr.bf16.mxu0 0
        %768 = vmatpush1.bf16.msra.mxu0 %v749
        %769 = vmatprep.subr.bf16.mxu0 0
        %770 = vmatpush1.bf16.msra.mxu0 %v748
        %771 = vmatprep.subr.bf16.mxu0 0
        %772 = vmatpush1.bf16.msra.mxu0 %v747
        %773 = vmatprep.subr.bf16.mxu0 0
        %774 = vmatpush1.bf16.msra.mxu0 %v746
        %775 = vmatprep.subr.bf16.mxu0 0
        %776 = vmatpush1.bf16.msra.mxu0 %v745
        %777 = vmatprep.subr.bf16.mxu0 0
        %778 = vmatpush2.bf16.msra.mxu0 0
        %779 = vmatprep.subr.bf16.mxu0 0
        %780 = vmatpush2.bf16.msra.mxu0 0
        %781 = vmatprep.subr.bf16.mxu0 0
        %782 = vmatpush2.bf16.msra.mxu0 0
        %783 = vmatprep.subr.bf16.mxu0 0
        %784 = vmatpush2.bf16.msra.mxu0 0
        %785 = vmatprep.subr.bf16.mxu0 0
        %786 = vmatpush2.bf16.msra.mxu0 0
        %787 = vmatprep.subr.bf16.mxu0 0
        %788 = vmatpush2.bf16.msra.mxu0 0
        %789 = vmatprep.subr.bf16.mxu0 0
        %790 = vmatpush2.bf16.msra.mxu0 0
        %791 = vmatprep.subr.bf16.mxu0 0
        %792 = vmatpush2.bf16.msra.mxu0 0
        %793 = vmatprep.mubr.bf16.mxu0 0
        %794 = vmatmul.mubr.bf16.gmra.mxu0 %v707
        %v795 = vpop.f32.mrf.mxu0
        %v796 = vadd.f32 %v673, %v795
        %v797 = vpop.f32.mrf.mxu0
        %v798 = vpop.f32.mrf.mxu0
        %v799 = vadd.f32 %v676, %v798
        %v800 = vpop.f32.mrf.mxu0
        %801 = vmatprep.mubr.bf16.mxu0 0
        %802 = vmatmul.mubr.bf16.gmra.mxu0 %v708
        %v803 = vpop.f32.mrf.mxu0
        %v804 = vadd.f32 %v681, %v803
        %v805 = vpop.f32.mrf.mxu0
        %v806 = vpop.f32.mrf.mxu0
        %v807 = vadd.f32 %v684, %v806
        %v808 = vpop.f32.mrf.mxu0
        %809 = vmatprep.mubr.bf16.mxu0 0
        %810 = vmatmul.mubr.bf16.gmra.mxu0 %v709
        %v811 = vpop.f32.mrf.mxu0
        %v812 = vadd.f32 %v689, %v811
        %v813 = vpop.f32.mrf.mxu0
        %v814 = vpop.f32.mrf.mxu0
        %v815 = vadd.f32 %v692, %v814
        %v816 = vpop.f32.mrf.mxu0
        %817 = vdwg.mxu0
        %v818 = vld [vmem:[%s518] sm:$0xf]
        %v819 = vld [vmem:[%s518 + $0x4] sm:$0xf]
        %v820 = vld [vmem:[%s518 + $0x8] sm:$0xf]
        %v821 = vld [vmem:[%s518 + $0xc] sm:$0xf]
        %v822 = vld [vmem:[%s518 + $0x10] sm:$0xf]
        %v823 = vld [vmem:[%s518 + $0x14] sm:$0xf]
        %v824 = vld [vmem:[%s5] sm:$0xf]
        %v825 = vld [vmem:[%s5 + $0x4] sm:$0xf]
        %v826 = vld [vmem:[%s5 + $0x8] sm:$0xf]
        %v827 = vld [vmem:[%s5 + $0xc] sm:$0xf]
        %v828 = vld [vmem:[%s5 + $0x10] sm:$0xf]
        %v829 = vld [vmem:[%s5 + $0x14] sm:$0xf]
        %v830 = vld [vmem:[%s5 + $0x18] sm:$0xf]
        %v831 = vld [vmem:[%s5 + $0x1c] sm:$0xf]
        %v832 = vld [vmem:[%s5 + $0x20] sm:$0xf]
        %v833 = vld [vmem:[%s5 + $0x24] sm:$0xf]
        %v834 = vld [vmem:[%s5 + $0x28] sm:$0xf]
        %v835 = vld [vmem:[%s5 + $0x2c] sm:$0xf]
        %v836 = vld [vmem:[%s5 + $0x30] sm:$0xf]
        %v837 = vld [vmem:[%s5 + $0x34] sm:$0xf]
        %v838 = vld [vmem:[%s5 + $0x38] sm:$0xf]
        %v839 = vld [vmem:[%s5 + $0x3c] sm:$0xf]
        %v846 = vunpack.c.l.b16 %v818
        %v847 = vunpack.c.l.b16 %v819
        %v848 = vunpack.c.l.b16 %v820
        %v849 = vunpack.c.l.b16 %v821
        %v850 = vunpack.c.l.b16 %v822
        %v851 = vunpack.c.l.b16 %v823
        %v852 = vpack.c.b16 %v847, %v846
        %v853 = vpack.c.b16 %v849, %v848
        %v854 = vpack.c.b16 %v851, %v850
        %v874 = vunpack.c.l.b16 %v824
        %v875 = vunpack.c.l.b16 %v825
        %v876 = vunpack.c.l.b16 %v826
        %v877 = vunpack.c.l.b16 %v827
        %v878 = vunpack.c.l.b16 %v828
        %v879 = vunpack.c.l.b16 %v829
        %v880 = vunpack.c.l.b16 %v830
        %v881 = vunpack.c.l.b16 %v831
        %v882 = vunpack.c.l.b16 %v832
        %v883 = vunpack.c.l.b16 %v833
        %v884 = vunpack.c.l.b16 %v834
        %v885 = vunpack.c.l.b16 %v835
        %v886 = vunpack.c.l.b16 %v836
        %v887 = vunpack.c.l.b16 %v837
        %v888 = vunpack.c.l.b16 %v838
        %v889 = vunpack.c.l.b16 %v839
        %v890 = vpack.c.b16 %v875, %v874
        %v891 = vpack.c.b16 %v877, %v876
        %v892 = vpack.c.b16 %v879, %v878
        %v893 = vpack.c.b16 %v881, %v880
        %v894 = vpack.c.b16 %v883, %v882
        %v895 = vpack.c.b16 %v885, %v884
        %v896 = vpack.c.b16 %v887, %v886
        %v897 = vpack.c.b16 %v889, %v888
        %906 = vmatprep.subr.bf16.mxu0 0
        %907 = vmatpush1.bf16.msra.mxu0 %v897
        %908 = vmatprep.subr.bf16.mxu0 0
        %909 = vmatpush1.bf16.msra.mxu0 %v896
        %910 = vmatprep.subr.bf16.mxu0 0
        %911 = vmatpush1.bf16.msra.mxu0 %v895
        %912 = vmatprep.subr.bf16.mxu0 0
        %913 = vmatpush1.bf16.msra.mxu0 %v894
        %914 = vmatprep.subr.bf16.mxu0 0
        %915 = vmatpush1.bf16.msra.mxu0 %v893
        %916 = vmatprep.subr.bf16.mxu0 0
        %917 = vmatpush1.bf16.msra.mxu0 %v892
        %918 = vmatprep.subr.bf16.mxu0 0
        %919 = vmatpush1.bf16.msra.mxu0 %v891
        %920 = vmatprep.subr.bf16.mxu0 0
        %921 = vmatpush1.bf16.msra.mxu0 %v890
        %922 = vmatprep.subr.bf16.mxu0 0
        %923 = vmatpush2.bf16.msra.mxu0 0
        %924 = vmatprep.subr.bf16.mxu0 0
        %925 = vmatpush2.bf16.msra.mxu0 0
        %926 = vmatprep.subr.bf16.mxu0 0
        %927 = vmatpush2.bf16.msra.mxu0 0
        %928 = vmatprep.subr.bf16.mxu0 0
        %929 = vmatpush2.bf16.msra.mxu0 0
        %930 = vmatprep.subr.bf16.mxu0 0
        %931 = vmatpush2.bf16.msra.mxu0 0
        %932 = vmatprep.subr.bf16.mxu0 0
        %933 = vmatpush2.bf16.msra.mxu0 0
        %934 = vmatprep.subr.bf16.mxu0 0
        %935 = vmatpush2.bf16.msra.mxu0 0
        %936 = vmatprep.subr.bf16.mxu0 0
        %937 = vmatpush2.bf16.msra.mxu0 0
        %938 = vmatprep.mubr.bf16.mxu0 0
        %939 = vmatmul.mubr.bf16.gmra.mxu0 %v852
        %v940 = vpop.f32.mrf.mxu0
        %v941 = vadd.f32 0.0, %v940
        %v942 = vpop.f32.mrf.mxu0
        %v943 = vpop.f32.mrf.mxu0
        %v944 = vadd.f32 0.0, %v943
        %v945 = vpop.f32.mrf.mxu0
        %946 = vmatprep.mubr.bf16.mxu0 0
        %947 = vmatmul.mubr.bf16.gmra.mxu0 %v853
        %v948 = vpop.f32.mrf.mxu0
        %v949 = vadd.f32 0.0, %v948
        %v950 = vpop.f32.mrf.mxu0
        %v951 = vpop.f32.mrf.mxu0
        %v952 = vadd.f32 0.0, %v951
        %v953 = vpop.f32.mrf.mxu0
        %954 = vmatprep.mubr.bf16.mxu0 0
        %955 = vmatmul.mubr.bf16.gmra.mxu0 %v854
        %v956 = vpop.f32.mrf.mxu0
        %v957 = vadd.f32 0.0, %v956
        %v958 = vpop.f32.mrf.mxu0
        %v959 = vpop.f32.mrf.mxu0
        %v960 = vadd.f32 0.0, %v959
        %v961 = vpop.f32.mrf.mxu0
        %962 = vdwg.mxu0
        %v963 = vadd.f32 %v796, %v941
        %v964 = vadd.f32 %v799, %v944
        %v965 = vadd.f32 %v804, %v949
        %v966 = vadd.f32 %v807, %v952
        %v967 = vadd.f32 %v812, %v957
        %v968 = vadd.f32 %v815, %v960
        %v969 = vld [vmem:[%s6] sm:$0x1]
        %v971 = vlaneseq
        %v972 = vshrl.u32 %v971, 7
        %v973 = vsub.s32 0, %v972
        %v974 = vrot.slane %v969, %v973
        %v976 = vadd.f32 %v963, %v974
        %v977 = vadd.f32 %v964, %v974
        %v978 = vadd.f32 %v965, %v974
        %v979 = vadd.f32 %v966, %v974
        %v980 = vadd.f32 %v967, %v974
        %v981 = vadd.f32 %v968, %v974
        %v982 = vmax.f32 %v976, 0.0
        %v983 = vmax.f32 %v977, 0.0
        %v984 = vmax.f32 %v978, 0.0
        %v985 = vmax.f32 %v979, 0.0
        %v986 = vmax.f32 %v980, 0.0
        %v987 = vmax.f32 %v981, 0.0
        %v988 = vpack.c.bf16 %v983, %v982
        %v989 = vpack.c.bf16 %v985, %v984
        %v990 = vpack.c.bf16 %v987, %v986
        %v991 = vld [vmem:[%s7] sm:$0xf]
        %v992 = vld [vmem:[%s7 + $0x4] sm:$0xf]
        %v993 = vld [vmem:[%s7 + $0x8] sm:$0xf]
        %v994 = vld [vmem:[%s7 + $0xc] sm:$0xf]
        %v995 = vld [vmem:[%s7 + $0x10] sm:$0xf]
        %v996 = vld [vmem:[%s7 + $0x14] sm:$0xf]
        %v997 = vld [vmem:[%s7 + $0x18] sm:$0xf]
        %v998 = vld [vmem:[%s7 + $0x1c] sm:$0xf]
        %v999 = vld [vmem:[%s7 + $0x20] sm:$0xf]
        %v1000 = vld [vmem:[%s7 + $0x24] sm:$0xf]
        %v1001 = vld [vmem:[%s7 + $0x28] sm:$0xf]
        %v1002 = vld [vmem:[%s7 + $0x2c] sm:$0xf]
        %v1003 = vld [vmem:[%s7 + $0x30] sm:$0xf]
        %v1004 = vld [vmem:[%s7 + $0x34] sm:$0xf]
        %v1005 = vld [vmem:[%s7 + $0x38] sm:$0xf]
        %v1006 = vld [vmem:[%s7 + $0x3c] sm:$0xf]
        %v1007 = vld [vmem:[%s8] sm:$0x1]
        %v1009 = vlaneseq
        %v1010 = vshrl.u32 %v1009, 7
        %v1011 = vsub.s32 0, %v1010
        %v1012 = vrot.slane %v1007, %v1011
        %v1030 = vunpack.c.l.b16 %v991
        %v1031 = vunpack.c.l.b16 %v992
        %v1032 = vunpack.c.l.b16 %v993
        %v1033 = vunpack.c.l.b16 %v994
        %v1034 = vunpack.c.l.b16 %v995
        %v1035 = vunpack.c.l.b16 %v996
        %v1036 = vunpack.c.l.b16 %v997
        %v1037 = vunpack.c.l.b16 %v998
        %v1038 = vunpack.c.l.b16 %v999
        %v1039 = vunpack.c.l.b16 %v1000
        %v1040 = vunpack.c.l.b16 %v1001
        %v1041 = vunpack.c.l.b16 %v1002
        %v1042 = vunpack.c.l.b16 %v1003
        %v1043 = vunpack.c.l.b16 %v1004
        %v1044 = vunpack.c.l.b16 %v1005
        %v1045 = vunpack.c.l.b16 %v1006
        %v1046 = vpack.c.b16 %v1031, %v1030
        %v1047 = vpack.c.b16 %v1033, %v1032
        %v1048 = vpack.c.b16 %v1035, %v1034
        %v1049 = vpack.c.b16 %v1037, %v1036
        %v1050 = vpack.c.b16 %v1039, %v1038
        %v1051 = vpack.c.b16 %v1041, %v1040
        %v1052 = vpack.c.b16 %v1043, %v1042
        %v1053 = vpack.c.b16 %v1045, %v1044
        %1062 = vmatprep.subr.bf16.mxu0 0
        %1063 = vmatpush1.bf16.msra.mxu0 %v1053
        %1064 = vmatprep.subr.bf16.mxu0 0
        %1065 = vmatpush1.bf16.msra.mxu0 %v1052
        %1066 = vmatprep.subr.bf16.mxu0 0
        %1067 = vmatpush1.bf16.msra.mxu0 %v1051
        %1068 = vmatprep.subr.bf16.mxu0 0
        %1069 = vmatpush1.bf16.msra.mxu0 %v1050
        %1070 = vmatprep.subr.bf16.mxu0 0
        %1071 = vmatpush1.bf16.msra.mxu0 %v1049
        %1072 = vmatprep.subr.bf16.mxu0 0
        %1073 = vmatpush1.bf16.msra.mxu0 %v1048
        %1074 = vmatprep.subr.bf16.mxu0 0
        %1075 = vmatpush1.bf16.msra.mxu0 %v1047
        %1076 = vmatprep.subr.bf16.mxu0 0
        %1077 = vmatpush1.bf16.msra.mxu0 %v1046
        %1078 = vmatprep.subr.bf16.mxu0 0
        %1079 = vmatpush2.bf16.msra.mxu0 0
        %1080 = vmatprep.subr.bf16.mxu0 0
        %1081 = vmatpush2.bf16.msra.mxu0 0
        %1082 = vmatprep.subr.bf16.mxu0 0
        %1083 = vmatpush2.bf16.msra.mxu0 0
        %1084 = vmatprep.subr.bf16.mxu0 0
        %1085 = vmatpush2.bf16.msra.mxu0 0
        %1086 = vmatprep.subr.bf16.mxu0 0
        %1087 = vmatpush2.bf16.msra.mxu0 0
        %1088 = vmatprep.subr.bf16.mxu0 0
        %1089 = vmatpush2.bf16.msra.mxu0 0
        %1090 = vmatprep.subr.bf16.mxu0 0
        %1091 = vmatpush2.bf16.msra.mxu0 0
        %1092 = vmatprep.subr.bf16.mxu0 0
        %1093 = vmatpush2.bf16.msra.mxu0 0
        %1094 = vmatprep.mubr.bf16.mxu0 0
        %1095 = vmatmul.mubr.bf16.gmra.mxu0 %v988
        %v1096 = vpop.f32.mrf.mxu0
        %v1097 = vadd.f32 %v1012, %v1096
        %v1098 = vpop.f32.mrf.mxu0
        %v1099 = vpop.f32.mrf.mxu0
        %v1100 = vadd.f32 %v1012, %v1099
        %v1101 = vpop.f32.mrf.mxu0
        %1102 = vmatprep.mubr.bf16.mxu0 0
        %1103 = vmatmul.mubr.bf16.gmra.mxu0 %v989
        %v1104 = vpop.f32.mrf.mxu0
        %v1105 = vadd.f32 %v1012, %v1104
        %v1106 = vpop.f32.mrf.mxu0
        %v1107 = vpop.f32.mrf.mxu0
        %v1108 = vadd.f32 %v1012, %v1107
        %v1109 = vpop.f32.mrf.mxu0
        %1110 = vmatprep.mubr.bf16.mxu0 0
        %1111 = vmatmul.mubr.bf16.gmra.mxu0 %v990
        %v1112 = vpop.f32.mrf.mxu0
        %v1113 = vadd.f32 %v1012, %v1112
        %v1114 = vpop.f32.mrf.mxu0
        %v1115 = vpop.f32.mrf.mxu0
        %v1116 = vadd.f32 %v1012, %v1115
        %v1117 = vpop.f32.mrf.mxu0
        %1118 = vdwg.mxu0
        %v1119 = vmax.f32 %v1097, 0.0
        %v1120 = vmax.f32 %v1100, 0.0
        %v1121 = vmax.f32 %v1105, 0.0
        %v1122 = vmax.f32 %v1108, 0.0
        %v1123 = vmax.f32 %v1113, 0.0
        %v1124 = vmax.f32 %v1116, 0.0
        %v1125 = vpack.c.bf16 %v1120, %v1119
        %v1126 = vpack.c.bf16 %v1122, %v1121
        %v1127 = vpack.c.bf16 %v1124, %v1123
        %v1128 = vld [vmem:[%s9] sm:$0xf]
        %v1129 = vld [vmem:[%s9 + $0x4] sm:$0xf]
        %v1130 = vld [vmem:[%s9 + $0x8] sm:$0xf]
        %v1131 = vld [vmem:[%s9 + $0xc] sm:$0xf]
        %v1132 = vld [vmem:[%s9 + $0x10] sm:$0xf]
        %v1133 = vld [vmem:[%s9 + $0x14] sm:$0xf]
        %v1134 = vld [vmem:[%s9 + $0x18] sm:$0xf]
        %v1135 = vld [vmem:[%s9 + $0x1c] sm:$0xf]
        %v1136 = vld [vmem:[%s9 + $0x20] sm:$0xf]
        %v1137 = vld [vmem:[%s9 + $0x24] sm:$0xf]
        %v1138 = vld [vmem:[%s9 + $0x28] sm:$0xf]
        %v1139 = vld [vmem:[%s9 + $0x2c] sm:$0xf]
        %v1140 = vld [vmem:[%s9 + $0x30] sm:$0xf]
        %v1141 = vld [vmem:[%s9 + $0x34] sm:$0xf]
        %v1142 = vld [vmem:[%s9 + $0x38] sm:$0xf]
        %v1143 = vld [vmem:[%s9 + $0x3c] sm:$0xf]
        %v1144 = vld [vmem:[%s10] sm:$0x1]
        %v1146 = vlaneseq
        %v1147 = vshrl.u32 %v1146, 7
        %v1148 = vsub.s32 0, %v1147
        %v1149 = vrot.slane %v1144, %v1148
        %v1167 = vunpack.c.l.b16 %v1128
        %v1168 = vunpack.c.l.b16 %v1129
        %v1169 = vunpack.c.l.b16 %v1130
        %v1170 = vunpack.c.l.b16 %v1131
        %v1171 = vunpack.c.l.b16 %v1132
        %v1172 = vunpack.c.l.b16 %v1133
        %v1173 = vunpack.c.l.b16 %v1134
        %v1174 = vunpack.c.l.b16 %v1135
        %v1175 = vunpack.c.l.b16 %v1136
        %v1176 = vunpack.c.l.b16 %v1137
        %v1177 = vunpack.c.l.b16 %v1138
        %v1178 = vunpack.c.l.b16 %v1139
        %v1179 = vunpack.c.l.b16 %v1140
        %v1180 = vunpack.c.l.b16 %v1141
        %v1181 = vunpack.c.l.b16 %v1142
        %v1182 = vunpack.c.l.b16 %v1143
        %v1183 = vpack.c.b16 %v1168, %v1167
        %v1184 = vpack.c.b16 %v1170, %v1169
        %v1185 = vpack.c.b16 %v1172, %v1171
        %v1186 = vpack.c.b16 %v1174, %v1173
        %v1187 = vpack.c.b16 %v1176, %v1175
        %v1188 = vpack.c.b16 %v1178, %v1177
        %v1189 = vpack.c.b16 %v1180, %v1179
        %v1190 = vpack.c.b16 %v1182, %v1181
        %1199 = vmatprep.subr.bf16.mxu0 0
        %1200 = vmatpush1.bf16.msra.mxu0 %v1190
        %1201 = vmatprep.subr.bf16.mxu0 0
        %1202 = vmatpush1.bf16.msra.mxu0 %v1189
        %1203 = vmatprep.subr.bf16.mxu0 0
        %1204 = vmatpush1.bf16.msra.mxu0 %v1188
        %1205 = vmatprep.subr.bf16.mxu0 0
        %1206 = vmatpush1.bf16.msra.mxu0 %v1187
        %1207 = vmatprep.subr.bf16.mxu0 0
        %1208 = vmatpush1.bf16.msra.mxu0 %v1186
        %1209 = vmatprep.subr.bf16.mxu0 0
        %1210 = vmatpush1.bf16.msra.mxu0 %v1185
        %1211 = vmatprep.subr.bf16.mxu0 0
        %1212 = vmatpush1.bf16.msra.mxu0 %v1184
        %1213 = vmatprep.subr.bf16.mxu0 0
        %1214 = vmatpush1.bf16.msra.mxu0 %v1183
        %1215 = vmatprep.subr.bf16.mxu0 0
        %1216 = vmatpush2.bf16.msra.mxu0 0
        %1217 = vmatprep.subr.bf16.mxu0 0
        %1218 = vmatpush2.bf16.msra.mxu0 0
        %1219 = vmatprep.subr.bf16.mxu0 0
        %1220 = vmatpush2.bf16.msra.mxu0 0
        %1221 = vmatprep.subr.bf16.mxu0 0
        %1222 = vmatpush2.bf16.msra.mxu0 0
        %1223 = vmatprep.subr.bf16.mxu0 0
        %1224 = vmatpush2.bf16.msra.mxu0 0
        %1225 = vmatprep.subr.bf16.mxu0 0
        %1226 = vmatpush2.bf16.msra.mxu0 0
        %1227 = vmatprep.subr.bf16.mxu0 0
        %1228 = vmatpush2.bf16.msra.mxu0 0
        %1229 = vmatprep.subr.bf16.mxu0 0
        %1230 = vmatpush2.bf16.msra.mxu0 0
        %1231 = vmatprep.mubr.bf16.mxu0 0
        %1232 = vmatmul.mubr.bf16.gmra.mxu0 %v1125
        %v1233 = vpop.f32.mrf.mxu0
        %v1234 = vadd.f32 %v1149, %v1233
        %v1235 = vpop.f32.mrf.mxu0
        %v1236 = vpop.f32.mrf.mxu0
        %v1237 = vadd.f32 %v1149, %v1236
        %v1238 = vpop.f32.mrf.mxu0
        %1239 = vmatprep.mubr.bf16.mxu0 0
        %1240 = vmatmul.mubr.bf16.gmra.mxu0 %v1126
        %v1241 = vpop.f32.mrf.mxu0
        %v1242 = vadd.f32 %v1149, %v1241
        %v1243 = vpop.f32.mrf.mxu0
        %v1244 = vpop.f32.mrf.mxu0
        %v1245 = vadd.f32 %v1149, %v1244
        %v1246 = vpop.f32.mrf.mxu0
        %1247 = vmatprep.mubr.bf16.mxu0 0
        %1248 = vmatmul.mubr.bf16.gmra.mxu0 %v1127
        %v1249 = vpop.f32.mrf.mxu0
        %v1250 = vadd.f32 %v1149, %v1249
        %v1251 = vpop.f32.mrf.mxu0
        %v1252 = vpop.f32.mrf.mxu0
        %v1253 = vadd.f32 %v1149, %v1252
        %v1254 = vpop.f32.mrf.mxu0
        %1255 = vdwg.mxu0
        %1256 = vadd.xlane.f32.xlu0 %v1234
        %v1257 = vpop.xlane.xlu0 %1256
        %1258 = vadd.xlane.f32.xlu0 %v1237
        %v1259 = vpop.xlane.xlu0 %1258
        %1260 = vadd.xlane.f32.xlu0 %v1242
        %v1261 = vpop.xlane.xlu0 %1260
        %1262 = vadd.xlane.f32.xlu0 %v1245
        %v1263 = vpop.xlane.xlu0 %1262
        %1264 = vadd.xlane.f32.xlu0 %v1250
        %v1265 = vpop.xlane.xlu0 %1264
        %1266 = vadd.xlane.f32.xlu0 %v1253
        %v1267 = vpop.xlane.xlu0 %1266
        %v1268 = vrcp.pop 128.0
        %v1269 = vmul.f32 %v1257, %v1268
        %v1270 = vmul.f32 %v1259, %v1268
        %v1271 = vmul.f32 %v1261, %v1268
        %v1272 = vmul.f32 %v1263, %v1268
        %v1273 = vmul.f32 %v1265, %v1268
        %v1274 = vmul.f32 %v1267, %v1268
        %v1275 = vsub.f32 %v1234, %v1269
        %v1276 = vsub.f32 %v1237, %v1270
        %v1277 = vsub.f32 %v1242, %v1271
        %v1278 = vsub.f32 %v1245, %v1272
        %v1279 = vsub.f32 %v1250, %v1273
        %v1280 = vsub.f32 %v1253, %v1274
        %v1281 = vmul.f32 %v1275, %v1275
        %v1282 = vmul.f32 %v1276, %v1276
        %v1283 = vmul.f32 %v1277, %v1277
        %v1284 = vmul.f32 %v1278, %v1278
        %v1285 = vmul.f32 %v1279, %v1279
        %v1286 = vmul.f32 %v1280, %v1280
        %1287 = vadd.xlane.f32.xlu0 %v1281
        %v1288 = vpop.xlane.xlu0 %1287
        %1289 = vadd.xlane.f32.xlu0 %v1282
        %v1290 = vpop.xlane.xlu0 %1289
        %1291 = vadd.xlane.f32.xlu0 %v1283
        %v1292 = vpop.xlane.xlu0 %1291
        %1293 = vadd.xlane.f32.xlu0 %v1284
        %v1294 = vpop.xlane.xlu0 %1293
        %1295 = vadd.xlane.f32.xlu0 %v1285
        %v1296 = vpop.xlane.xlu0 %1295
        %1297 = vadd.xlane.f32.xlu0 %v1286
        %v1298 = vpop.xlane.xlu0 %1297
        %v1299 = vmul.f32 %v1288, 0.0078125
        %v1300 = vmul.f32 %v1290, 0.0078125
        %v1301 = vmul.f32 %v1292, 0.0078125
        %v1302 = vmul.f32 %v1294, 0.0078125
        %v1303 = vmul.f32 %v1296, 0.0078125
        %v1304 = vmul.f32 %v1298, 0.0078125
        %v1305 = vadd.f32 %v1299, 1e-05
        %v1306 = vadd.f32 %v1300, 1e-05
        %v1307 = vadd.f32 %v1301, 1e-05
        %v1308 = vadd.f32 %v1302, 1e-05
        %v1309 = vadd.f32 %v1303, 1e-05
        %v1310 = vadd.f32 %v1304, 1e-05
        %v1311 = vrsqrt.pop %v1305
        %v1312 = vrsqrt.pop %v1306
        %v1313 = vrsqrt.pop %v1307
        %v1314 = vrsqrt.pop %v1308
        %v1315 = vrsqrt.pop %v1309
        %v1316 = vrsqrt.pop %v1310
        %v1317 = vmul.f32 %v1275, %v1311
        %v1318 = vmul.f32 %v1276, %v1312
        %v1319 = vmul.f32 %v1277, %v1313
        %v1320 = vmul.f32 %v1278, %v1314
        %v1321 = vmul.f32 %v1279, %v1315
        %v1322 = vmul.f32 %v1280, %v1316
        %v1323 = vld [vmem:[%s11] sm:$0x1]
        %v1325 = vlaneseq
        %v1326 = vshrl.u32 %v1325, 7
        %v1327 = vsub.s32 0, %v1326
        %v1328 = vrot.slane %v1323, %v1327
        %v1330 = vmul.f32 %v1317, %v1328
        %v1331 = vmul.f32 %v1318, %v1328
        %v1332 = vmul.f32 %v1319, %v1328
        %v1333 = vmul.f32 %v1320, %v1328
        %v1334 = vmul.f32 %v1321, %v1328
        %v1335 = vmul.f32 %v1322, %v1328
        %v1336 = vld [vmem:[%s12] sm:$0x1]
        %v1338 = vlaneseq
        %v1339 = vshrl.u32 %v1338, 7
        %v1340 = vsub.s32 0, %v1339
        %v1341 = vrot.slane %v1336, %v1340
        %v1343 = vadd.f32 %v1330, %v1341
        %v1344 = vadd.f32 %v1331, %v1341
        %v1345 = vadd.f32 %v1332, %v1341
        %v1346 = vadd.f32 %v1333, %v1341
        %v1347 = vadd.f32 %v1334, %v1341
        %v1348 = vadd.f32 %v1335, %v1341
        %s1349 = smul.u32 %s29, 48
        %v1350 = vlaneseq
        %v1351 = vshrl.u32 %v1350, 7
        %v1352 = vadd.s32 %v1351, 8
        %v1353 = vadd.s32 %v1351, 16
        %v1354 = vadd.s32 %v1351, 24
        %v1355 = vadd.s32 %v1351, 32
        %v1356 = vadd.s32 %v1351, 40
        %v1357 = vstv %s1349
        %v1358 = vadd.s32 %v1357, %v1351
        %v1359 = vadd.s32 %v1357, %v1352
        %v1360 = vadd.s32 %v1357, %v1353
        %v1361 = vadd.s32 %v1357, %v1354
        %v1362 = vadd.s32 %v1357, %v1355
        %v1363 = vadd.s32 %v1357, %v1356
        %vm1364 = vcmp.lt.s32.totalorder %v1358, 192
        %vm1365 = vcmp.lt.s32.totalorder %v1359, 192
        %vm1366 = vcmp.lt.s32.totalorder %v1360, 192
        %vm1367 = vcmp.lt.s32.totalorder %v1361, 192
        %vm1368 = vcmp.lt.s32.totalorder %v1362, 192
        %vm1369 = vcmp.lt.s32.totalorder %v1363, 192
        %v1370 = vsel %vm1364, %v1343, 0.0
        %v1371 = vsel %vm1365, %v1344, 0.0
        %v1372 = vsel %vm1366, %v1345, 0.0
        %v1373 = vsel %vm1367, %v1346, 0.0
        %v1374 = vsel %vm1368, %v1347, 0.0
        %v1375 = vsel %vm1369, %v1348, 0.0
        %1376 = vst [vmem:[%s525] sm:$0xff] %v1370
        %1377 = vst [vmem:[%s525 + $0x8] sm:$0xff] %v1371
        %1378 = vst [vmem:[%s525 + $0x10] sm:$0xff] %v1372
        %1379 = vst [vmem:[%s525 + $0x18] sm:$0xff] %v1373
        %1380 = vst [vmem:[%s525 + $0x20] sm:$0xff] %v1374
        %1381 = vst [vmem:[%s525 + $0x28] sm:$0xff] %v1375
        %v1382 = vld [vmem:[%s518] sm:$0xf]
        %v1383 = vld [vmem:[%s518 + $0x4] sm:$0xf]
        %v1384 = vld [vmem:[%s518 + $0x8] sm:$0xf]
        %v1385 = vld [vmem:[%s518 + $0xc] sm:$0xf]
        %v1386 = vld [vmem:[%s518 + $0x10] sm:$0xf]
        %v1387 = vld [vmem:[%s518 + $0x14] sm:$0xf]
        %v1388 = vunpack.c.l.bf16 %v1382
        %v1389 = vunpack.c.l.bf16 %v1383
        %v1390 = vunpack.c.l.bf16 %v1384
        %v1391 = vunpack.c.l.bf16 %v1385
        %v1392 = vunpack.c.l.bf16 %v1386
        %v1393 = vunpack.c.l.bf16 %v1387
        %v1394 = vadd.f32 %v1343, %v1388
        %v1395 = vadd.f32 %v1344, %v1389
        %v1396 = vadd.f32 %v1345, %v1390
        %v1397 = vadd.f32 %v1346, %v1391
        %v1398 = vadd.f32 %v1347, %v1392
        %v1399 = vadd.f32 %v1348, %v1393
        %v1400 = vpack.c.bf16 %v1395, %v1394
        %v1401 = vpack.c.bf16 %v1397, %v1396
        %v1402 = vpack.c.bf16 %v1399, %v1398
        %v1406 = vunpack.c.l.b16 %v1400
        %v1407 = vunpack.c.h.b16 %v1400
        %v1408 = vunpack.c.l.b16 %v1401
        %v1409 = vunpack.c.h.b16 %v1401
        %v1410 = vunpack.c.l.b16 %v1402
        %v1411 = vunpack.c.h.b16 %v1402
        %v1412 = vpack.c.b16 %v1406, %v1406
        %v1413 = vpack.c.b16 %v1407, %v1407
        %v1414 = vpack.c.b16 %v1408, %v1408
        %v1415 = vpack.c.b16 %v1409, %v1409
        %v1416 = vpack.c.b16 %v1410, %v1410
        %v1417 = vpack.c.b16 %v1411, %v1411
        %1424 = vst [vmem:[%s494] sm:$0xf] %v1412
        %1425 = vst [vmem:[%s494 + $0x4] sm:$0xf] %v1413
        %1426 = vst [vmem:[%s494 + $0x8] sm:$0xf] %v1414
        %1427 = vst [vmem:[%s494 + $0xc] sm:$0xf] %v1415
        %1428 = vst [vmem:[%s494 + $0x10] sm:$0xf] %v1416
        %1429 = vst [vmem:[%s494 + $0x14] sm:$0xf] %v1417
        %s1430 = sand.u32 %s325, 1
        %s1431 = scalar_lea.sflag [#allocation3], %s1430
        %s1432 = sand.u32 %s325, 1
        %s1433 = smul.addr %s1432, 24
        %s1434 = scalar_lea.vmem [#allocation2], %s1433
        %s1435 = smul.u32 6, %s29
        %p1436 = scmp.lt.s32.totalorder %s1435, 23
        %s1437 = scalar_select %p1436, %s1435, 23
        %s1438 = smul.addr %s1437, 8
        %s1439 = scalar_lea.vmem %s14, %s1438
        // Predicated region
        $region73: #{learned_simulator_forward.11} parent=71 // pred_check
          %p1440 = pneg %p335
        $region74: #{learned_simulator_forward.11} parent=71 // pred_check_branch
          %1442 = sbr.rel (%p1440) target = $region76
        $region75: #{learned_simulator_forward.11} parent=71 // pred_region
          %s1443 = smul.u32 6, %s29
          %s1445 = ssub.s32 384, 384
          %1446 = vsyncadd %s1431, %s1445
          %s1447 = smul.addr %s1443, 64
          %s1448 = scalar_lea.hbm %s13, %s1447
          %s1449 = sshll.u32 %s1434, 4
          %s1450 = int_to_ptr.vmem [resolvable:$true] %s1449
          %1455 = dma.vmem_to_hbm [thread:$0]  %s1450, 384, %s1448, %s1431, 64, 64, 4
        $region76: #{learned_simulator_forward.11} parent=71 // pred_fallthru
          _
        // Predicated region
        $region77: #{learned_simulator_forward.11} parent=71 // pred_check
          %p1456 = pneg %p361
        $region78: #{learned_simulator_forward.11} parent=71 // pred_check_branch
          %1458 = sbr.rel (%p1456) target = $region80
        $region79: #{learned_simulator_forward.11} parent=71 // pred_region
          %s1459 = smul.u32 6, %s29
        $region80: #{learned_simulator_forward.11} parent=71 // pred_fallthru
          _
      $region72: #{learned_simulator_forward.11} parent=5 // pred_fallthru
        _
      %p1460 = scmp.le.s32.totalorder 2, %s24
      // Predicated region
      $region81: #{learned_simulator_forward.11} parent=5 // pred_check
        %p1461 = pneg %p1460
      $region82: #{learned_simulator_forward.11} parent=5 // pred_check_branch
        %1463 = sbr.rel (%p1461) target = $region84
      $region83: #{learned_simulator_forward.11} parent=5 // pred_region
        %s1464 = ssub.s32 %s24, 2
        // Predicated region
        $region85: #{learned_simulator_forward.11} parent=83 // pred_check
          %p1465 = pneg %p341
        $region86: #{learned_simulator_forward.11} parent=83 // pred_check_branch
          %1467 = sbr.rel (%p1465) target = $region88
        $region87: #{learned_simulator_forward.11} parent=83 // pred_region
          %s1468 = sand.u32 %s326, 1
          %s1469 = scalar_lea.sflag [#allocation3], %s1468
          %s1470 = sand.u32 %s326, 1
          %s1471 = smul.addr %s1470, 24
          %s1472 = scalar_lea.vmem [#allocation2], %s1471
          %1473 = dma.done %s1469, 384
        $region88: #{learned_simulator_forward.11} parent=83 // pred_fallthru
          _
        // Predicated region
        $region89: #{learned_simulator_forward.11} parent=83 // pred_check
          %p1474 = pneg %p367
        $region90: #{learned_simulator_forward.11} parent=83 // pred_check_branch
          %1476 = sbr.rel (%p1474) target = $region92
        $region91: #{learned_simulator_forward.11} parent=83 // pred_region
          %s1477 = smul.u32 6, %s30
          %p1478 = scmp.lt.s32.totalorder %s1477, 23
          %s1479 = scalar_select %p1478, %s1477, 23
          %s1480 = smul.addr %s1479, 8
          %s1481 = scalar_lea.vmem %s14, %s1480
        $region92: #{learned_simulator_forward.11} parent=83 // pred_fallthru
          _
      $region84: #{learned_simulator_forward.11} parent=5 // pred_fallthru
        _
    $region6: #{learned_simulator_forward.11} parent=1 // loop_footer
      %s28 = sadd.s32 1, %s24
    $region7: #{learned_simulator_forward.11} parent=1 // loop_footer_branch
      %23 = sbr.rel target = $region3
    $region8: #{learned_simulator_forward.11} parent=1 // loop_exit
      _
    %1482 = vsyncpa [#allocation3], 1
    %s1483 = scalar_lea.sflag [#allocation3], 1
    %1484 = vsyncpa %s1483, 1

// kernel: learned_simulator_forward.13
$region0: #{learned_simulator_forward.13}
  #allocation0 [shape = 'u32[]', space=smem, size = 0x4, offset = 0x4, fixed_abs, tag = 'smem constant byte address 0x4 - core index']
  #allocation1 [shape = 'u32[144,128]{1,0:T(1,128)}', space=vmem, size = 0x12000, scoped, tag = 'internal scratch']
  %s0 = inlined_call_operand.vmem [shape: bf16[64,128], index: 0, kind: input, shape index: {}]
  %s1 = inlined_call_operand.vmem [shape: bf16[128,128], index: 1, kind: input, shape index: {}]
  %s2 = inlined_call_operand.vmem [shape: f32[1,128], index: 2, kind: input, shape index: {}, may-alias: {2,4,6}]
  %s3 = inlined_call_operand.vmem [shape: bf16[128,128], index: 3, kind: input, shape index: {}]
  %s4 = inlined_call_operand.vmem [shape: f32[1,128], index: 4, kind: input, shape index: {}, may-alias: {2,4,6}]
  %s5 = inlined_call_operand.vmem [shape: bf16[128,128], index: 5, kind: input, shape index: {}]
  %s6 = inlined_call_operand.vmem [shape: f32[1,128], index: 6, kind: input, shape index: {}, may-alias: {2,4,6}]
  %s7 = inlined_call_operand.vmem [shape: f32[64,128], index: 7, kind: output, shape index: {}]
  %s8 = sld [smem:[#allocation0]]
  $region61: #{learned_simulator_forward.13} parent=0
    _
  %s10 = ssub.s32 1, %s8
  %s11 = scalar_select 0, %s10, %s8
  loop: start=0, step=1, limit=6
  $region2: #{learned_simulator_forward.13} parent=0 // loop_pre_header
    _
  $region3: #{learned_simulator_forward.13} parent=0 // loop_header
    %s13 = sphi 0, %s17
    %p14 = scmp.ge.s32.totalorder %s13, 6
    %s23 = sphi 0, %s25
    %s26 = sphi 0, %s23
    %s27 = sphi 0, %s26
    %s43 = sphi 0, %s27
    %s47 = sphi 0, %s47
    %s49 = sphi 0, %s47
    %s50 = sphi 0, %s49
    %s64 = sphi 0, %s50
    %s68 = sphi 0, %s68
    %s70 = sphi 0, %s68
    %s71 = sphi 0, %s70
    %s85 = sphi 0, %s71
    %s89 = sphi 0, %s89
    %s91 = sphi 0, %s89
    %s92 = sphi 0, %s91
    %s106 = sphi 0, %s92
    %s110 = sphi 0, %s110
    %s112 = sphi 0, %s110
    %s113 = sphi 0, %s112
    %s127 = sphi 0, %s113
    %s131 = sphi 0, %s131
    %s133 = sphi 0, %s131
    %s134 = sphi 0, %s133
    %s148 = sphi 0, %s134
    %s152 = sphi 0, %s152
    %s154 = sphi 0, %s152
    %s155 = sphi 0, %s154
    %s169 = sphi 0, %s155
    %s175 = sphi 0, %s177
    %s178 = sphi 0, %s175
    %s179 = sphi 0, %s178
    %s195 = sphi 0, %s179
  $region4: #{learned_simulator_forward.13} parent=0 // loop_header_branch
    %16 = sbr.rel (%p14) target = $region8
  $region5: #{learned_simulator_forward.13} parent=0 // loop_body
    %s18 = ssub.s32 %s13, 1
    %s19 = ssub.s32 %s13, 2
    %s20 = sadd.s32 %s13, 1
    %s21 = ssub.s32 %s13, %s20
    %p22 = scmp.eq.s32.totalorder %s21, 0
    %s24 = sadd.s32 %s23, 1
    %s25 = scalar_select %p22, %s23, %s24
    %p28 = pneg %p22
    %p29 = scmp.eq.s32.totalorder %s13, 3
    %p30 = por %p28, %p29
    %p31 = scmp.ne.s32.totalorder %s23, %s26
    %p32 = scmp.eq.s32.totalorder %s13, 0
    %p33 = por %p31, %p32
    %p34 = scmp.ne.s32.totalorder %s23, %s26
    %p35 = scmp.eq.s32.totalorder %s18, 3
    %p36 = por %p34, %p35
    %p37 = scmp.ne.s32.totalorder %s26, %s27
    %p38 = scmp.eq.s32.totalorder %s18, 0
    %p39 = por %p37, %p38
    %p40 = scmp.ne.s32.totalorder %s26, %s27
    %p41 = scmp.eq.s32.totalorder %s19, 3
    %p42 = por %p40, %p41
    %p44 = scmp.ne.s32.totalorder %s27, %s43
    %p45 = scmp.eq.s32.totalorder %s19, 0
    %p46 = por %p44, %p45
    %s48 = sadd.s32 %s47, 1
    %p51 = scmp.eq.s32.totalorder %s13, 3
    %p52 = scmp.ne.s32.totalorder %s47, %s49
    %p53 = scmp.eq.s32.totalorder %s13, 0
    %p54 = por %p52, %p53
    %p55 = scmp.ne.s32.totalorder %s47, %s49
    %p56 = scmp.eq.s32.totalorder %s18, 3
    %p57 = por %p55, %p56
    %p58 = scmp.ne.s32.totalorder %s49, %s50
    %p59 = scmp.eq.s32.totalorder %s18, 0
    %p60 = por %p58, %p59
    %p61 = scmp.ne.s32.totalorder %s49, %s50
    %p62 = scmp.eq.s32.totalorder %s19, 3
    %p63 = por %p61, %p62
    %p65 = scmp.ne.s32.totalorder %s50, %s64
    %p66 = scmp.eq.s32.totalorder %s19, 0
    %p67 = por %p65, %p66
    %s69 = sadd.s32 %s68, 1
    %p72 = scmp.eq.s32.totalorder %s13, 3
    %p73 = scmp.ne.s32.totalorder %s68, %s70
    %p74 = scmp.eq.s32.totalorder %s13, 0
    %p75 = por %p73, %p74
    %p76 = scmp.ne.s32.totalorder %s68, %s70
    %p77 = scmp.eq.s32.totalorder %s18, 3
    %p78 = por %p76, %p77
    %p79 = scmp.ne.s32.totalorder %s70, %s71
    %p80 = scmp.eq.s32.totalorder %s18, 0
    %p81 = por %p79, %p80
    %p82 = scmp.ne.s32.totalorder %s70, %s71
    %p83 = scmp.eq.s32.totalorder %s19, 3
    %p84 = por %p82, %p83
    %p86 = scmp.ne.s32.totalorder %s71, %s85
    %p87 = scmp.eq.s32.totalorder %s19, 0
    %p88 = por %p86, %p87
    %s90 = sadd.s32 %s89, 1
    %p93 = scmp.eq.s32.totalorder %s13, 3
    %p94 = scmp.ne.s32.totalorder %s89, %s91
    %p95 = scmp.eq.s32.totalorder %s13, 0
    %p96 = por %p94, %p95
    %p97 = scmp.ne.s32.totalorder %s89, %s91
    %p98 = scmp.eq.s32.totalorder %s18, 3
    %p99 = por %p97, %p98
    %p100 = scmp.ne.s32.totalorder %s91, %s92
    %p101 = scmp.eq.s32.totalorder %s18, 0
    %p102 = por %p100, %p101
    %p103 = scmp.ne.s32.totalorder %s91, %s92
    %p104 = scmp.eq.s32.totalorder %s19, 3
    %p105 = por %p103, %p104
    %p107 = scmp.ne.s32.totalorder %s92, %s106
    %p108 = scmp.eq.s32.totalorder %s19, 0
    %p109 = por %p107, %p108
    %s111 = sadd.s32 %s110, 1
    %p114 = scmp.eq.s32.totalorder %s13, 3
    %p115 = scmp.ne.s32.totalorder %s110, %s112
    %p116 = scmp.eq.s32.totalorder %s13, 0
    %p117 = por %p115, %p116
    %p118 = scmp.ne.s32.totalorder %s110, %s112
    %p119 = scmp.eq.s32.totalorder %s18, 3
    %p120 = por %p118, %p119
    %p121 = scmp.ne.s32.totalorder %s112, %s113
    %p122 = scmp.eq.s32.totalorder %s18, 0
    %p123 = por %p121, %p122
    %p124 = scmp.ne.s32.totalorder %s112, %s113
    %p125 = scmp.eq.s32.totalorder %s19, 3
    %p126 = por %p124, %p125
    %p128 = scmp.ne.s32.totalorder %s113, %s127
    %p129 = scmp.eq.s32.totalorder %s19, 0
    %p130 = por %p128, %p129
    %s132 = sadd.s32 %s131, 1
    %p135 = scmp.eq.s32.totalorder %s13, 3
    %p136 = scmp.ne.s32.totalorder %s131, %s133
    %p137 = scmp.eq.s32.totalorder %s13, 0
    %p138 = por %p136, %p137
    %p139 = scmp.ne.s32.totalorder %s131, %s133
    %p140 = scmp.eq.s32.totalorder %s18, 3
    %p141 = por %p139, %p140
    %p142 = scmp.ne.s32.totalorder %s133, %s134
    %p143 = scmp.eq.s32.totalorder %s18, 0
    %p144 = por %p142, %p143
    %p145 = scmp.ne.s32.totalorder %s133, %s134
    %p146 = scmp.eq.s32.totalorder %s19, 3
    %p147 = por %p145, %p146
    %p149 = scmp.ne.s32.totalorder %s134, %s148
    %p150 = scmp.eq.s32.totalorder %s19, 0
    %p151 = por %p149, %p150
    %s153 = sadd.s32 %s152, 1
    %p156 = scmp.eq.s32.totalorder %s13, 3
    %p157 = scmp.ne.s32.totalorder %s152, %s154
    %p158 = scmp.eq.s32.totalorder %s13, 0
    %p159 = por %p157, %p158
    %p160 = scmp.ne.s32.totalorder %s152, %s154
    %p161 = scmp.eq.s32.totalorder %s18, 3
    %p162 = por %p160, %p161
    %p163 = scmp.ne.s32.totalorder %s154, %s155
    %p164 = scmp.eq.s32.totalorder %s18, 0
    %p165 = por %p163, %p164
    %p166 = scmp.ne.s32.totalorder %s154, %s155
    %p167 = scmp.eq.s32.totalorder %s19, 3
    %p168 = por %p166, %p167
    %p170 = scmp.ne.s32.totalorder %s155, %s169
    %p171 = scmp.eq.s32.totalorder %s19, 0
    %p172 = por %p170, %p171
    %s173 = ssub.s32 %s13, %s20
    %p174 = scmp.eq.s32.totalorder %s173, 0
    %s176 = sadd.s32 %s175, 1
    %s177 = scalar_select %p174, %s175, %s176
    %p180 = pneg %p174
    %p181 = scmp.eq.s32.totalorder %s13, 3
    %p182 = por %p180, %p181
    %p183 = scmp.ne.s32.totalorder %s175, %s178
    %p184 = scmp.eq.s32.totalorder %s13, 0
    %p185 = por %p183, %p184
    %p186 = scmp.ne.s32.totalorder %s175, %s178
    %p187 = scmp.eq.s32.totalorder %s18, 3
    %p188 = por %p186, %p187
    %p189 = scmp.ne.s32.totalorder %s178, %s179
    %p190 = scmp.eq.s32.totalorder %s18, 0
    %p191 = por %p189, %p190
    %p192 = scmp.ne.s32.totalorder %s178, %s179
    %p193 = scmp.eq.s32.totalorder %s19, 3
    %p194 = por %p192, %p193
    %p196 = scmp.ne.s32.totalorder %s179, %s195
    %p197 = scmp.eq.s32.totalorder %s19, 0
    %p198 = por %p196, %p197
    %p199 = scmp.le.s32.totalorder 1, %s13
    %p200 = scmp.lt.s32.totalorder %s13, 5
    %p201 = pnand %p199, %p200
    %p202 = pneg %p201
    // Predicated region
    $region9: #{learned_simulator_forward.13} parent=5 // pred_check
      _
    $region10: #{learned_simulator_forward.13} parent=5 // pred_check_branch
      %204 = sbr.rel (%p201) target = $region12
    $region11: #{learned_simulator_forward.13} parent=5 // pred_region
      %s205 = ssub.s32 %s13, 1
      // Predicated region
      $region13: #{learned_simulator_forward.13} parent=11 // pred_check
        %p206 = pneg %p60
      $region14: #{learned_simulator_forward.13} parent=11 // pred_check_branch
        %208 = sbr.rel (%p206) target = $region16
      $region15: #{learned_simulator_forward.13} parent=11 // pred_region
        _
      $region16: #{learned_simulator_forward.13} parent=11 // pred_fallthru
        _
      // Predicated region
      $region17: #{learned_simulator_forward.13} parent=11 // pred_check
        %p209 = pneg %p81
      $region18: #{learned_simulator_forward.13} parent=11 // pred_check_branch
        %211 = sbr.rel (%p209) target = $region20
      $region19: #{learned_simulator_forward.13} parent=11 // pred_region
        _
      $region20: #{learned_simulator_forward.13} parent=11 // pred_fallthru
        _
      // Predicated region
      $region21: #{learned_simulator_forward.13} parent=11 // pred_check
        %p212 = pneg %p102
      $region22: #{learned_simulator_forward.13} parent=11 // pred_check_branch
        %214 = sbr.rel (%p212) target = $region24
      $region23: #{learned_simulator_forward.13} parent=11 // pred_region
        _
      $region24: #{learned_simulator_forward.13} parent=11 // pred_fallthru
        _
      // Predicated region
      $region25: #{learned_simulator_forward.13} parent=11 // pred_check
        %p215 = pneg %p123
      $region26: #{learned_simulator_forward.13} parent=11 // pred_check_branch
        %217 = sbr.rel (%p215) target = $region28
      $region27: #{learned_simulator_forward.13} parent=11 // pred_region
        _
      $region28: #{learned_simulator_forward.13} parent=11 // pred_fallthru
        _
      // Predicated region
      $region29: #{learned_simulator_forward.13} parent=11 // pred_check
        %p218 = pneg %p144
      $region30: #{learned_simulator_forward.13} parent=11 // pred_check_branch
        %220 = sbr.rel (%p218) target = $region32
      $region31: #{learned_simulator_forward.13} parent=11 // pred_region
        _
      $region32: #{learned_simulator_forward.13} parent=11 // pred_fallthru
        _
      // Predicated region
      $region33: #{learned_simulator_forward.13} parent=11 // pred_check
        %p221 = pneg %p165
      $region34: #{learned_simulator_forward.13} parent=11 // pred_check_branch
        %223 = sbr.rel (%p221) target = $region36
      $region35: #{learned_simulator_forward.13} parent=11 // pred_region
        _
      $region36: #{learned_simulator_forward.13} parent=11 // pred_fallthru
        _
    $region12: #{learned_simulator_forward.13} parent=5 // pred_fallthru
      _
    %p224 = scmp.lt.s32.totalorder %s13, 4
    // Predicated region
    $region37: #{learned_simulator_forward.13} parent=5 // pred_check
      %p225 = pneg %p224
    $region38: #{learned_simulator_forward.13} parent=5 // pred_check_branch
      %227 = sbr.rel (%p225) target = $region40
    $region39: #{learned_simulator_forward.13} parent=5 // pred_region
      // Predicated region
      $region41: #{learned_simulator_forward.13} parent=39 // pred_check
        %p228 = pneg %p33
      $region42: #{learned_simulator_forward.13} parent=39 // pred_check_branch
        %230 = sbr.rel (%p228) target = $region44
      $region43: #{learned_simulator_forward.13} parent=39 // pred_region
        %s231 = smul.u32 2, %s13
        %p232 = scmp.lt.s32.totalorder %s231, 7
        %s233 = scalar_select %p232, %s231, 7
        %s234 = smul.addr %s233, 4
        %s235 = scalar_lea.vmem %s0, %s234
        %s236 = smul.u32 2, %s13
      $region44: #{learned_simulator_forward.13} parent=39 // pred_fallthru
        _
    $region40: #{learned_simulator_forward.13} parent=5 // pred_fallthru
      _
    %p237 = scmp.le.s32.totalorder 1, %s13
    %p238 = scmp.lt.s32.totalorder %s13, 5
    %p239 = pnand %p237, %p238
    %p240 = pneg %p239
    // Predicated region
    $region45: #{learned_simulator_forward.13} parent=5 // pred_check
      _
    $region46: #{learned_simulator_forward.13} parent=5 // pred_check_branch
      %242 = sbr.rel (%p239) target = $region48
    $region47: #{learned_simulator_forward.13} parent=5 // pred_region
      %s243 = ssub.s32 %s13, 1
      %s244 = smul.u32 2, %s18
      %p245 = scmp.lt.s32.totalorder %s244, 7
      %s246 = scalar_select %p245, %s244, 7
      %s247 = smul.addr %s246, 4
      %s248 = scalar_lea.vmem %s0, %s247
      %p249 = pneg %p39
      %p250 = pneg %p36
      %p251 = pneg %p60
      %p252 = pneg %p57
      %p253 = pneg %p81
      %p254 = pneg %p78
      %p255 = pneg %p102
      %p256 = pneg %p99
      %p257 = pneg %p123
      %p258 = pneg %p120
      %p259 = pneg %p144
      %p260 = pneg %p141
      %p261 = pneg %p165
      %p262 = pneg %p162
      %p263 = pneg %p191
      %p264 = pneg %p188
      %s265 = smul.u32 2, %s18
      %p266 = scmp.lt.s32.totalorder %s265, 7
      %s267 = scalar_select %p266, %s265, 7
      %s268 = smul.addr %s267, 8
      %s269 = scalar_lea.vmem %s7, %s268
      %s270 = smul.u32 2, %s18
      %p271 = scmp.lt.s32.totalorder %s270, 7
      %s272 = scalar_select %p271, %s270, 7
      %s273 = smul.addr %s272, 4
      %s274 = scalar_lea.vmem %s0, %s273
      %s275 = smul.u32 2, %s18
      %s276 = smul.u32 2, %s18
      %p277 = scmp.lt.s32.totalorder %s276, 7
      %s278 = scalar_select %p277, %s276, 7
      %s279 = smul.addr %s278, 8
      %s280 = scalar_lea.vmem %s7, %s279
      %s281 = smul.u32 2, %s18
      %v283 = vld [vmem:[%s274] sm:$0xf]
      %v284 = vld [vmem:[%s274 + $0x4] sm:$0xf]
      %v285 = vld [vmem:[%s1] sm:$0xf]
      %v286 = vld [vmem:[%s1 + $0x4] sm:$0xf]
      %v287 = vld [vmem:[%s1 + $0x8] sm:$0xf]
      %v288 = vld [vmem:[%s1 + $0xc] sm:$0xf]
      %v289 = vld [vmem:[%s1 + $0x10] sm:$0xf]
      %v290 = vld [vmem:[%s1 + $0x14] sm:$0xf]
      %v291 = vld [vmem:[%s1 + $0x18] sm:$0xf]
      %v292 = vld [vmem:[%s1 + $0x1c] sm:$0xf]
      %v293 = vld [vmem:[%s1 + $0x20] sm:$0xf]
      %v294 = vld [vmem:[%s1 + $0x24] sm:$0xf]
      %v295 = vld [vmem:[%s1 + $0x28] sm:$0xf]
      %v296 = vld [vmem:[%s1 + $0x2c] sm:$0xf]
      %v297 = vld [vmem:[%s1 + $0x30] sm:$0xf]
      %v298 = vld [vmem:[%s1 + $0x34] sm:$0xf]
      %v299 = vld [vmem:[%s1 + $0x38] sm:$0xf]
      %v300 = vld [vmem:[%s1 + $0x3c] sm:$0xf]
      %v301 = vld [vmem:[%s2] sm:$0x1]
      %v303 = vlaneseq
      %v304 = vshrl.u32 %v303, 7
      %v305 = vsub.s32 0, %v304
      %v306 = vrot.slane %v301, %v305
      %v310 = vunpack.c.l.b16 %v283
      %v311 = vunpack.c.l.b16 %v284
      %v312 = vpack.c.b16 %v311, %v310
      %v330 = vunpack.c.l.b16 %v285
      %v331 = vunpack.c.l.b16 %v286
      %v332 = vunpack.c.l.b16 %v287
      %v333 = vunpack.c.l.b16 %v288
      %v334 = vunpack.c.l.b16 %v289
      %v335 = vunpack.c.l.b16 %v290
      %v336 = vunpack.c.l.b16 %v291
      %v337 = vunpack.c.l.b16 %v292
      %v338 = vunpack.c.l.b16 %v293
      %v339 = vunpack.c.l.b16 %v294
      %v340 = vunpack.c.l.b16 %v295
      %v341 = vunpack.c.l.b16 %v296
      %v342 = vunpack.c.l.b16 %v297
      %v343 = vunpack.c.l.b16 %v298
      %v344 = vunpack.c.l.b16 %v299
      %v345 = vunpack.c.l.b16 %v300
      %v346 = vpack.c.b16 %v331, %v330
      %v347 = vpack.c.b16 %v333, %v332
      %v348 = vpack.c.b16 %v335, %v334
      %v349 = vpack.c.b16 %v337, %v336
      %v350 = vpack.c.b16 %v339, %v338
      %v351 = vpack.c.b16 %v341, %v340
      %v352 = vpack.c.b16 %v343, %v342
      %v353 = vpack.c.b16 %v345, %v344
      %362 = vmatprep.subr.bf16.mxu0 0
      %363 = vmatpush1.bf16.msra.mxu0 %v353
      %364 = vmatprep.subr.bf16.mxu0 0
      %365 = vmatpush1.bf16.msra.mxu0 %v352
      %366 = vmatprep.subr.bf16.mxu0 0
      %367 = vmatpush1.bf16.msra.mxu0 %v351
      %368 = vmatprep.subr.bf16.mxu0 0
      %369 = vmatpush1.bf16.msra.mxu0 %v350
      %370 = vmatprep.subr.bf16.mxu0 0
      %371 = vmatpush1.bf16.msra.mxu0 %v349
      %372 = vmatprep.subr.bf16.mxu0 0
      %373 = vmatpush1.bf16.msra.mxu0 %v348
      %374 = vmatprep.subr.bf16.mxu0 0
      %375 = vmatpush1.bf16.msra.mxu0 %v347
      %376 = vmatprep.subr.bf16.mxu0 0
      %377 = vmatpush1.bf16.msra.mxu0 %v346
      %378 = vmatprep.subr.bf16.mxu0 0
      %379 = vmatpush2.bf16.msra.mxu0 0
      %380 = vmatprep.subr.bf16.mxu0 0
      %381 = vmatpush2.bf16.msra.mxu0 0
      %382 = vmatprep.subr.bf16.mxu0 0
      %383 = vmatpush2.bf16.msra.mxu0 0
      %384 = vmatprep.subr.bf16.mxu0 0
      %385 = vmatpush2.bf16.msra.mxu0 0
      %386 = vmatprep.subr.bf16.mxu0 0
      %387 = vmatpush2.bf16.msra.mxu0 0
      %388 = vmatprep.subr.bf16.mxu0 0
      %389 = vmatpush2.bf16.msra.mxu0 0
      %390 = vmatprep.subr.bf16.mxu0 0
      %391 = vmatpush2.bf16.msra.mxu0 0
      %392 = vmatprep.subr.bf16.mxu0 0
      %393 = vmatpush2.bf16.msra.mxu0 0
      %394 = vmatprep.mubr.bf16.mxu0 0
      %395 = vmatmul.mubr.bf16.gmra.mxu0 %v312
      %v396 = vpop.f32.mrf.mxu0
      %v397 = vadd.f32 %v306, %v396
      %v398 = vpop.f32.mrf.mxu0
      %v399 = vpop.f32.mrf.mxu0
      %v400 = vadd.f32 %v306, %v399
      %v401 = vpop.f32.mrf.mxu0
      %402 = vdwg.mxu0
      %v403 = vmax.f32 %v397, 0.0
      %v404 = vmax.f32 %v400, 0.0
      %v405 = vpack.c.bf16 %v404, %v403
      %v406 = vld [vmem:[%s3] sm:$0xf]
      %v407 = vld [vmem:[%s3 + $0x4] sm:$0xf]
      %v408 = vld [vmem:[%s3 + $0x8] sm:$0xf]
      %v409 = vld [vmem:[%s3 + $0xc] sm:$0xf]
      %v410 = vld [vmem:[%s3 + $0x10] sm:$0xf]
      %v411 = vld [vmem:[%s3 + $0x14] sm:$0xf]
      %v412 = vld [vmem:[%s3 + $0x18] sm:$0xf]
      %v413 = vld [vmem:[%s3 + $0x1c] sm:$0xf]
      %v414 = vld [vmem:[%s3 + $0x20] sm:$0xf]
      %v415 = vld [vmem:[%s3 + $0x24] sm:$0xf]
      %v416 = vld [vmem:[%s3 + $0x28] sm:$0xf]
      %v417 = vld [vmem:[%s3 + $0x2c] sm:$0xf]
      %v418 = vld [vmem:[%s3 + $0x30] sm:$0xf]
      %v419 = vld [vmem:[%s3 + $0x34] sm:$0xf]
      %v420 = vld [vmem:[%s3 + $0x38] sm:$0xf]
      %v421 = vld [vmem:[%s3 + $0x3c] sm:$0xf]
      %v422 = vld [vmem:[%s4] sm:$0x1]
      %v424 = vlaneseq
      %v425 = vshrl.u32 %v424, 7
      %v426 = vsub.s32 0, %v425
      %v427 = vrot.slane %v422, %v426
      %v445 = vunpack.c.l.b16 %v406
      %v446 = vunpack.c.l.b16 %v407
      %v447 = vunpack.c.l.b16 %v408
      %v448 = vunpack.c.l.b16 %v409
      %v449 = vunpack.c.l.b16 %v410
      %v450 = vunpack.c.l.b16 %v411
      %v451 = vunpack.c.l.b16 %v412
      %v452 = vunpack.c.l.b16 %v413
      %v453 = vunpack.c.l.b16 %v414
      %v454 = vunpack.c.l.b16 %v415
      %v455 = vunpack.c.l.b16 %v416
      %v456 = vunpack.c.l.b16 %v417
      %v457 = vunpack.c.l.b16 %v418
      %v458 = vunpack.c.l.b16 %v419
      %v459 = vunpack.c.l.b16 %v420
      %v460 = vunpack.c.l.b16 %v421
      %v461 = vpack.c.b16 %v446, %v445
      %v462 = vpack.c.b16 %v448, %v447
      %v463 = vpack.c.b16 %v450, %v449
      %v464 = vpack.c.b16 %v452, %v451
      %v465 = vpack.c.b16 %v454, %v453
      %v466 = vpack.c.b16 %v456, %v455
      %v467 = vpack.c.b16 %v458, %v457
      %v468 = vpack.c.b16 %v460, %v459
      %477 = vmatprep.subr.bf16.mxu0 0
      %478 = vmatpush1.bf16.msra.mxu0 %v468
      %479 = vmatprep.subr.bf16.mxu0 0
      %480 = vmatpush1.bf16.msra.mxu0 %v467
      %481 = vmatprep.subr.bf16.mxu0 0
      %482 = vmatpush1.bf16.msra.mxu0 %v466
      %483 = vmatprep.subr.bf16.mxu0 0
      %484 = vmatpush1.bf16.msra.mxu0 %v465
      %485 = vmatprep.subr.bf16.mxu0 0
      %486 = vmatpush1.bf16.msra.mxu0 %v464
      %487 = vmatprep.subr.bf16.mxu0 0
      %488 = vmatpush1.bf16.msra.mxu0 %v463
      %489 = vmatprep.subr.bf16.mxu0 0
      %490 = vmatpush1.bf16.msra.mxu0 %v462
      %491 = vmatprep.subr.bf16.mxu0 0
      %492 = vmatpush1.bf16.msra.mxu0 %v461
      %493 = vmatprep.subr.bf16.mxu0 0
      %494 = vmatpush2.bf16.msra.mxu0 0
      %495 = vmatprep.subr.bf16.mxu0 0
      %496 = vmatpush2.bf16.msra.mxu0 0
      %497 = vmatprep.subr.bf16.mxu0 0
      %498 = vmatpush2.bf16.msra.mxu0 0
      %499 = vmatprep.subr.bf16.mxu0 0
      %500 = vmatpush2.bf16.msra.mxu0 0
      %501 = vmatprep.subr.bf16.mxu0 0
      %502 = vmatpush2.bf16.msra.mxu0 0
      %503 = vmatprep.subr.bf16.mxu0 0
      %504 = vmatpush2.bf16.msra.mxu0 0
      %505 = vmatprep.subr.bf16.mxu0 0
      %506 = vmatpush2.bf16.msra.mxu0 0
      %507 = vmatprep.subr.bf16.mxu0 0
      %508 = vmatpush2.bf16.msra.mxu0 0
      %509 = vmatprep.mubr.bf16.mxu0 0
      %510 = vmatmul.mubr.bf16.gmra.mxu0 %v405
      %v511 = vpop.f32.mrf.mxu0
      %v512 = vadd.f32 %v427, %v511
      %v513 = vpop.f32.mrf.mxu0
      %v514 = vpop.f32.mrf.mxu0
      %v515 = vadd.f32 %v427, %v514
      %v516 = vpop.f32.mrf.mxu0
      %517 = vdwg.mxu0
      %v518 = vmax.f32 %v512, 0.0
      %v519 = vmax.f32 %v515, 0.0
      %v520 = vpack.c.bf16 %v519, %v518
      %v521 = vld [vmem:[%s5] sm:$0xf]
      %v522 = vld [vmem:[%s5 + $0x4] sm:$0xf]
      %v523 = vld [vmem:[%s5 + $0x8] sm:$0xf]
      %v524 = vld [vmem:[%s5 + $0xc] sm:$0xf]
      %v525 = vld [vmem:[%s5 + $0x10] sm:$0xf]
      %v526 = vld [vmem:[%s5 + $0x14] sm:$0xf]
      %v527 = vld [vmem:[%s5 + $0x18] sm:$0xf]
      %v528 = vld [vmem:[%s5 + $0x1c] sm:$0xf]
      %v529 = vld [vmem:[%s5 + $0x20] sm:$0xf]
      %v530 = vld [vmem:[%s5 + $0x24] sm:$0xf]
      %v531 = vld [vmem:[%s5 + $0x28] sm:$0xf]
      %v532 = vld [vmem:[%s5 + $0x2c] sm:$0xf]
      %v533 = vld [vmem:[%s5 + $0x30] sm:$0xf]
      %v534 = vld [vmem:[%s5 + $0x34] sm:$0xf]
      %v535 = vld [vmem:[%s5 + $0x38] sm:$0xf]
      %v536 = vld [vmem:[%s5 + $0x3c] sm:$0xf]
      %v537 = vld [vmem:[%s6] sm:$0x1]
      %v539 = vlaneseq
      %v540 = vshrl.u32 %v539, 7
      %v541 = vsub.s32 0, %v540
      %v542 = vrot.slane %v537, %v541
      %v560 = vunpack.c.l.b16 %v521
      %v561 = vunpack.c.l.b16 %v522
      %v562 = vunpack.c.l.b16 %v523
      %v563 = vunpack.c.l.b16 %v524
      %v564 = vunpack.c.l.b16 %v525
      %v565 = vunpack.c.l.b16 %v526
      %v566 = vunpack.c.l.b16 %v527
      %v567 = vunpack.c.l.b16 %v528
      %v568 = vunpack.c.l.b16 %v529
      %v569 = vunpack.c.l.b16 %v530
      %v570 = vunpack.c.l.b16 %v531
      %v571 = vunpack.c.l.b16 %v532
      %v572 = vunpack.c.l.b16 %v533
      %v573 = vunpack.c.l.b16 %v534
      %v574 = vunpack.c.l.b16 %v535
      %v575 = vunpack.c.l.b16 %v536
      %v576 = vpack.c.b16 %v561, %v560
      %v577 = vpack.c.b16 %v563, %v562
      %v578 = vpack.c.b16 %v565, %v564
      %v579 = vpack.c.b16 %v567, %v566
      %v580 = vpack.c.b16 %v569, %v568
      %v581 = vpack.c.b16 %v571, %v570
      %v582 = vpack.c.b16 %v573, %v572
      %v583 = vpack.c.b16 %v575, %v574
      %592 = vmatprep.subr.bf16.mxu0 0
      %593 = vmatpush1.bf16.msra.mxu0 %v583
      %594 = vmatprep.subr.bf16.mxu0 0
      %595 = vmatpush1.bf16.msra.mxu0 %v582
      %596 = vmatprep.subr.bf16.mxu0 0
      %597 = vmatpush1.bf16.msra.mxu0 %v581
      %598 = vmatprep.subr.bf16.mxu0 0
      %599 = vmatpush1.bf16.msra.mxu0 %v580
      %600 = vmatprep.subr.bf16.mxu0 0
      %601 = vmatpush1.bf16.msra.mxu0 %v579
      %602 = vmatprep.subr.bf16.mxu0 0
      %603 = vmatpush1.bf16.msra.mxu0 %v578
      %604 = vmatprep.subr.bf16.mxu0 0
      %605 = vmatpush1.bf16.msra.mxu0 %v577
      %606 = vmatprep.subr.bf16.mxu0 0
      %607 = vmatpush1.bf16.msra.mxu0 %v576
      %608 = vmatprep.subr.bf16.mxu0 0
      %609 = vmatpush2.bf16.msra.mxu0 0
      %610 = vmatprep.subr.bf16.mxu0 0
      %611 = vmatpush2.bf16.msra.mxu0 0
      %612 = vmatprep.subr.bf16.mxu0 0
      %613 = vmatpush2.bf16.msra.mxu0 0
      %614 = vmatprep.subr.bf16.mxu0 0
      %615 = vmatpush2.bf16.msra.mxu0 0
      %616 = vmatprep.subr.bf16.mxu0 0
      %617 = vmatpush2.bf16.msra.mxu0 0
      %618 = vmatprep.subr.bf16.mxu0 0
      %619 = vmatpush2.bf16.msra.mxu0 0
      %620 = vmatprep.subr.bf16.mxu0 0
      %621 = vmatpush2.bf16.msra.mxu0 0
      %622 = vmatprep.subr.bf16.mxu0 0
      %623 = vmatpush2.bf16.msra.mxu0 0
      %624 = vmatprep.mubr.bf16.mxu0 0
      %625 = vmatmul.mubr.bf16.gmra.mxu0 %v520
      %v626 = vpop.f32.mrf.mxu0
      %v627 = vadd.f32 %v542, %v626
      %v628 = vpop.f32.mrf.mxu0
      %v629 = vpop.f32.mrf.mxu0
      %v630 = vadd.f32 %v542, %v629
      %v631 = vpop.f32.mrf.mxu0
      %632 = vdwg.mxu0
      %633 = vst [vmem:[%s280] sm:$0xff] %v627
      %634 = vst [vmem:[%s280 + $0x8] sm:$0xff] %v630
      %s635 = smul.u32 2, %s18
      %p636 = scmp.lt.s32.totalorder %s635, 7
      %s637 = scalar_select %p636, %s635, 7
      %s638 = smul.addr %s637, 8
      %s639 = scalar_lea.vmem %s7, %s638
      // Predicated region
      $region49: #{learned_simulator_forward.13} parent=47 // pred_check
        %p640 = pneg %p188
      $region50: #{learned_simulator_forward.13} parent=47 // pred_check_branch
        %642 = sbr.rel (%p640) target = $region52
      $region51: #{learned_simulator_forward.13} parent=47 // pred_region
        %s643 = smul.u32 2, %s18
      $region52: #{learned_simulator_forward.13} parent=47 // pred_fallthru
        _
    $region48: #{learned_simulator_forward.13} parent=5 // pred_fallthru
      _
    %p644 = scmp.le.s32.totalorder 2, %s13
    // Predicated region
    $region53: #{learned_simulator_forward.13} parent=5 // pred_check
      %p645 = pneg %p644
    $region54: #{learned_simulator_forward.13} parent=5 // pred_check_branch
      %647 = sbr.rel (%p645) target = $region56
    $region55: #{learned_simulator_forward.13} parent=5 // pred_region
      %s648 = ssub.s32 %s13, 2
      // Predicated region
      $region57: #{learned_simulator_forward.13} parent=55 // pred_check
        %p649 = pneg %p194
      $region58: #{learned_simulator_forward.13} parent=55 // pred_check_branch
        %651 = sbr.rel (%p649) target = $region60
      $region59: #{learned_simulator_forward.13} parent=55 // pred_region
        %s652 = smul.u32 2, %s19
        %p653 = scmp.lt.s32.totalorder %s652, 7
        %s654 = scalar_select %p653, %s652, 7
        %s655 = smul.addr %s654, 8
        %s656 = scalar_lea.vmem %s7, %s655
      $region60: #{learned_simulator_forward.13} parent=55 // pred_fallthru
        _
    $region56: #{learned_simulator_forward.13} parent=5 // pred_fallthru
      _
  $region6: #{learned_simulator_forward.13} parent=0 // loop_footer
    %s17 = sadd.s32 1, %s13
  $region7: #{learned_simulator_forward.13} parent=0 // loop_footer_branch
    %12 = sbr.rel target = $region3
  $region8: #{learned_simulator_forward.13} parent=0 // loop_exit
    _

</llo_original>
